<compile_context>
chip_gen: v6e
topology: v6e:2x2x1
jax: 0.10.0
libtpu: 0.0.40
codegen_flags: <defaults>
</compile_context>

<pallas_src>
import functools

import jax
import jax.numpy as jnp
import numpy as np
from jax.experimental import pallas as pl
from jax.experimental.pallas import tpu as pltpu

PAD_ID = 0


# ---------------------------------------------------------------------------
# Kernel 1: stacked LSTM recurrence (time-major), one batch block per grid step
# ---------------------------------------------------------------------------
def _lstm_stack_kernel(maxlen_ref, len_ref, emb_ref, wih_ref, whh_ref, b_ref,
                       out_ref, seq_ref, gx_ref, h_ref, c_ref,
                       *, t_chunk, unroll, gate_bf16):
    T, Bb, H = emb_ref.shape
    L = wih_ref.shape[0]
    n_chunks = T // t_chunk
    lengths = len_ref[...]                                   # (Bb, 1) int32
    t_max = maxlen_ref[pl.program_id(0)]                     # SMEM scalar: longest seq in block

    # Timesteps past the block's max length are never touched by the recurrence;
    # pre-zero them (only when there is padding) so fc sees exactly 0 there.
    @pl.when(t_max < T)
    def _():
        out_ref[...] = jnp.zeros_like(out_ref)

    for layer in range(L):                                   # static unroll over layers
        w_ih_l = wih_ref[layer]                              # (H, 4H) bf16, resident
        w_hh_l = whh_ref[layer]                              # (H, 4H) bf16, resident
        bias_l = b_ref[layer]                                # (1, 4H) f32
        h_ref[...] = jnp.zeros_like(h_ref)
        c_ref[...] = jnp.zeros_like(c_ref)
        is_last = layer == L - 1

        for chunk in range(n_chunks):                        # static; VMEM-bounded gx hoist
            t0 = chunk * t_chunk

            @pl.when(t0 < t_max)                             # skip fully-padded time chunks
            def _(t0=t0, layer=layer, is_last=is_last,
                  w_ih_l=w_ih_l, w_hh_l=w_hh_l, bias_l=bias_l):
                # ---- hoisted input-to-hidden projection for this chunk:
                #      one (t_chunk*Bb, H) x (H, 4H) bf16 MXU matmul, f32 accumulation.
                if layer == 0:
                    x = emb_ref[t0:t0 + t_chunk].reshape(t_chunk * Bb, H)
                else:
                    x = seq_ref[t0 * Bb:(t0 + t_chunk) * Bb, :]
                gx_ref[...] = (jnp.dot(x.astype(jnp.bfloat16), w_ih_l,
                                       preferred_element_type=jnp.float32)
                               + bias_l)                     # (t_chunk*Bb, 4H) f32

                def step(tt, carry):
                    h, c = carry                             # f32 (Bb, H) carried in vregs
                    row0 = pl.multiple_of(tt * Bb, Bb)
                    gates = (gx_ref[pl.ds(row0, Bb), :]
                             + jnp.dot(h.astype(jnp.bfloat16), w_hh_l,
                                       preferred_element_type=jnp.float32))  # (Bb, 4H) f32
                    if gate_bf16:                            # bf16 EUP on v6e/v7x
                        g16 = gates.astype(jnp.bfloat16)
                        i_g = jax.nn.sigmoid(g16[:, 0 * H:1 * H]).astype(jnp.float32)
                        f_g = jax.nn.sigmoid(g16[:, 1 * H:2 * H]).astype(jnp.float32)
                        g_g = jnp.tanh(g16[:, 2 * H:3 * H]).astype(jnp.float32)
                        o_g = jax.nn.sigmoid(g16[:, 3 * H:4 * H]).astype(jnp.float32)
                    else:                                    # f32 gates (v5e and older)
                        i_g = jax.nn.sigmoid(gates[:, 0 * H:1 * H])
                        f_g = jax.nn.sigmoid(gates[:, 1 * H:2 * H])
                        g_g = jnp.tanh(gates[:, 2 * H:3 * H])
                        o_g = jax.nn.sigmoid(gates[:, 3 * H:4 * H])
                    c_new = f_g * c + i_g * g_g              # cell math stays f32
                    h_new = o_g * jnp.tanh(c_new)
                    t_cur = t0 + tt
                    live = jnp.broadcast_to(t_cur < lengths, (Bb, H))   # one broadcast / step
                    h = jnp.where(live, h_new, h)            # freeze state past length
                    c = jnp.where(live, c_new, c)
                    y = jnp.where(live, h_new, 0.0)          # packed-seq: padded steps -> 0
                    if is_last:
                        out_ref[t_cur] = y                   # final layer -> kernel output
                    else:
                        seq_ref[pl.ds(pl.multiple_of(t_cur * Bb, Bb), Bb), :] = y
                    return h, c

                h_out, c_out = jax.lax.fori_loop(
                    0, t_chunk, step, (h_ref[...], c_ref[...]), unroll=unroll)
                h_ref[...] = h_out                           # persist across chunks / pl.when
                c_ref[...] = c_out


# ---------------------------------------------------------------------------
# Kernel 2: fc + log_softmax over (time_block, batch_block) of time-major features,
#           writing a batch-major (Bp, T, V) output (no HBM transpose needed)
# ---------------------------------------------------------------------------
def _fc_log_softmax_kernel(feat_ref, wfc_ref, bfc_ref, out_ref):
    t2, b2, H = feat_ref.shape
    feats = feat_ref[...].reshape(t2 * b2, H)                # time-major rows (b2 % 8 == 0)
    logits = (jnp.dot(feats.astype(jnp.bfloat16), wfc_ref[...],
                      preferred_element_type=jnp.float32)
              + bfc_ref[...])                                # (t2*b2, V) f32
    shifted = logits - jnp.max(logits, axis=-1, keepdims=True)
    logp = shifted - jnp.log(jnp.sum(jnp.exp(shifted), axis=-1, keepdims=True))
    # Scatter the time-major row groups into the batch-major output block; the
    # "transpose" happens with these in-VMEM lane-dense stores, never in HBM.
    for t in range(t2):
        out_ref[:, t, :] = logp[t * b2:(t + 1) * b2, :]


# ---------------------------------------------------------------------------
# Helpers / wrapper
# ---------------------------------------------------------------------------
def _pick_block(total, cap):
    """Largest multiple-of-8 divisor of `total` that is <= cap (requires total % 8 == 0)."""
    blk = max(8, (min(cap, total) // 8) * 8)
    while total % blk:
        blk -= 8
    return blk


def _pick_chunk(total, cap):
    """Largest divisor of `total` <= cap (>= 8); falls back to `total` (full hoist)."""
    if total <= cap:
        return total
    for c in range(cap, 7, -1):
        if total % c == 0:
            return c
    return total


def _unroll_for(t_chunk):
    if t_chunk <= 32:
        return True
    for u in (8, 4, 2):
        if t_chunk % u == 0:
            return u
    return 1


def _use_bf16_gates():
    """bf16 VPU/EUP exists on v6e/v7x; keep f32 nonlinearities on v5e and older."""
    try:
        kind = jax.devices()[0].device_kind.lower()
    except Exception:
        return False
    return not any(s in kind for s in ("v2", "v3", "v4", "v5"))


def _vmem_limit(nbytes):
    """Scoped-VMEM limit: requested bytes + headroom, capped by physical VMEM."""
    try:
        phys = int(pltpu.get_tpu_info().vmem_capacity_bytes)
    except Exception:
        phys = 64 << 20                                      # v7x-safe fallback
    want = int(1.25 * nbytes) + (4 << 20)
    return int(max(16 << 20, min(want, phys - (2 << 20))))


def make_params(vocab_size, embed_dim, n_hidden, n_layers, key):
    assert embed_dim == n_hidden, "stacked weight layout assumes embed_dim == n_hidden"
    ks = jax.random.split(key, 6)
    s = 0.1
    embed_tbl = s * jax.random.normal(ks[0], (vocab_size, embed_dim), jnp.float32)
    w_ih = s * jax.random.normal(ks[1], (n_layers, embed_dim, 4 * n_hidden), jnp.float32)
    w_hh = s * jax.random.normal(ks[2], (n_layers, n_hidden, 4 * n_hidden), jnp.float32)
    bias = s * jax.random.normal(ks[3], (n_layers, 1, 4 * n_hidden), jnp.float32)  # b_ih + b_hh
    w_fc = s * jax.random.normal(ks[4], (n_hidden, vocab_size), jnp.float32)
    b_fc = s * jax.random.normal(ks[5], (1, vocab_size), jnp.float32)
    return embed_tbl, w_ih, w_hh, bias, w_fc, b_fc


@functools.partial(jax.jit, static_argnames=("lstm_batch_block", "lstm_time_chunk",
                                             "fc_batch_block", "fc_time_block"))
def lstm_model_forward(x_ids, embed_tbl, w_ih, w_hh, bias, w_fc, b_fc,
                       *, lstm_batch_block=128, lstm_time_chunk=64,
                       fc_batch_block=64, fc_time_block=64):
    """Forward pass of LstmModel. x_ids: (B, T) int32, right-padded with PAD_ID."""
    B, T = x_ids.shape
    L, H, H4 = w_ih.shape
    V = w_fc.shape[1]

    # ---- bf16 copies of the matmul weights (f32 accumulation happens in-kernel)
    w_ih16 = w_ih.astype(jnp.bfloat16)
    w_hh16 = w_hh.astype(jnp.bfloat16)
    w_fc16 = w_fc.astype(jnp.bfloat16)

    # ---- pad batch to a sublane multiple; padded rows get length 0 and are sliced off
    Bp = max(8, -(-B // 8) * 8)
    x_pad = jnp.pad(x_ids, ((0, Bp - B), (0, 0)), constant_values=PAD_ID)
    lengths = jnp.sum((x_pad != PAD_ID).astype(jnp.int32), axis=1)          # (Bp,)

    # ---- embedding gather, directly time-major (transpose the small id matrix,
    #      not the (B,T,H) activation tensor).  dropout(embed(x)) is identity in eval.
    emb = jnp.take(embed_tbl, x_pad.T, axis=0).astype(jnp.float32)          # (T, Bp, H)

    # ---- kernel 1: stacked LSTM recurrence, gridded over batch blocks
    b_blk = _pick_block(Bp, lstm_batch_block)
    n_bblk = Bp // b_blk
    t_chunk = _pick_chunk(T, lstm_time_chunk)
    unroll = _unroll_for(t_chunk)
    gate_bf16 = _use_bf16_gates()
    maxlen_blk = jnp.max(lengths.reshape(n_bblk, b_blk), axis=1).astype(jnp.int32)

    lstm_bytes = (4 * 2 * 2 * T * b_blk * H                  # emb + out blocks, double-buffered
                  + 2 * 2 * (w_ih16.size + w_hh16.size)      # bf16 weights, double-buffered
                  + 4 * 2 * (bias.size + Bp)                 # bias + lengths
                  + 4 * T * b_blk * H                        # inter-layer seq scratch
                  + 4 * t_chunk * b_blk * H4                 # hoisted-gates chunk scratch
                  + 4 * 2 * b_blk * H)                       # h, c
    seq_tbh = pl.pallas_call(
        functools.partial(_lstm_stack_kernel, t_chunk=t_chunk, unroll=unroll,
                          gate_bf16=gate_bf16),
        out_shape=jax.ShapeDtypeStruct((T, Bp, H), jnp.float32),
        grid_spec=pltpu.PrefetchScalarGridSpec(
            num_scalar_prefetch=1,                            # per-block max length -> SMEM
            grid=(n_bblk,),
            in_specs=[
                pl.BlockSpec((b_blk, 1), lambda j, ml: (j, 0)),        # lengths
                pl.BlockSpec((T, b_blk, H), lambda j, ml: (0, j, 0)),  # embedded inputs
                pl.BlockSpec((L, H, H4), lambda j, ml: (0, 0, 0)),     # w_ih bf16 (resident)
                pl.BlockSpec((L, H, H4), lambda j, ml: (0, 0, 0)),     # w_hh bf16 (resident)
                pl.BlockSpec((L, 1, H4), lambda j, ml: (0, 0, 0)),     # bias (resident)
            ],
            out_specs=pl.BlockSpec((T, b_blk, H), lambda j, ml: (0, j, 0)),
            scratch_shapes=[
                pltpu.VMEM((T * b_blk, H), jnp.float32),      # inter-layer sequence
                pltpu.VMEM((t_chunk * b_blk, H4), jnp.float32),  # hoisted x@W_ih + b (chunk)
                pltpu.VMEM((b_blk, H), jnp.float32),          # h (chunk-boundary storage)
                pltpu.VMEM((b_blk, H), jnp.float32),          # c (chunk-boundary storage)
            ]),
        compiler_params=pltpu.CompilerParams(
            dimension_semantics=("parallel",),
            vmem_limit_bytes=_vmem_limit(lstm_bytes)),
    )(maxlen_blk, lengths[:, None], emb, w_ih16, w_hh16, bias)

    # ---- kernel 2: fc + log_softmax, (batch, time) grid, W_fc resident, batch-major output
    b2 = _pick_block(Bp, fc_batch_block)
    t2 = _pick_block(T, fc_time_block) if (T % 8 == 0 and T > fc_time_block) else T
    fc_bytes = (4 * 2 * t2 * b2 * H                          # feature blocks
                + 2 * 2 * H * V + 4 * 2 * V                  # w_fc bf16 + b_fc
                + 4 * 2 * b2 * t2 * V                        # output blocks
                + 4 * t2 * b2 * V)                           # logits temporary
    logp = pl.pallas_call(
        _fc_log_softmax_kernel,
        out_shape=jax.ShapeDtypeStruct((Bp, T, V), jnp.float32),
        grid=(Bp // b2, T // t2),
        in_specs=[
            pl.BlockSpec((t2, b2, H), lambda i, j: (j, i, 0)),  # time-major feature block
            pl.BlockSpec((H, V), lambda i, j: (0, 0)),          # w_fc bf16 (resident)
            pl.BlockSpec((1, V), lambda i, j: (0, 0)),          # b_fc (resident)
        ],
        out_specs=pl.BlockSpec((b2, t2, V), lambda i, j: (i, j, 0)),   # batch-major output
        compiler_params=pltpu.CompilerParams(
            dimension_semantics=("parallel", "parallel"),
            vmem_limit_bytes=_vmem_limit(fc_bytes)),
    )(seq_tbh, w_fc16, b_fc)

    return logp[:B]                                          # (B, T, V) batch-first


# ---------------------------------------------------------------------------
# Pure-JAX reference (for sanity checking)
# ---------------------------------------------------------------------------
def reference_forward(x_ids, embed_tbl, w_ih, w_hh, bias, w_fc, b_fc):
    B, T = x_ids.shape
    L, H, _ = w_ih.shape
    emb = embed_tbl[x_ids]                                   # (B, T, H)
    lengths = (x_ids != PAD_ID).sum(axis=1)
    mask = (jnp.arange(T)[None, :] < lengths[:, None]).astype(jnp.float32)
    seq = emb
    for l in range(L):
        h = jnp.zeros((B, H), jnp.float32)
        c = jnp.zeros((B, H), jnp.float32)
        outs = []
        for t in range(T):
            g = seq[:, t, :] @ w_ih[l] + h @ w_hh[l] + bias[l]
            i_g = jax.nn.sigmoid(g[:, :H])
            f_g = jax.nn.sigmoid(g[:, H:2 * H])
            g_g = jnp.tanh(g[:, 2 * H:3 * H])
            o_g = jax.nn.sigmoid(g[:, 3 * H:])
            c_new = f_g * c + i_g * g_g
            h_new = o_g * jnp.tanh(c_new)
            m = mask[:, t:t + 1]
            h = m * h_new + (1.0 - m) * h
            c = m * c_new + (1.0 - m) * c
            outs.append(m * h_new)
        seq = jnp.stack(outs, axis=1)
    logits = seq @ w_fc + b_fc[0]
    return jax.nn.log_softmax(logits, axis=-1)


if __name__ == "__main__":
    vocab_size = 256
    embed_dim = n_hidden = 128
    n_layers = 2               # small instance of the module (defaults are 4 layers / 128 hidden)
    B, T = 5, 16               # B is deliberately not a multiple of 8 (exercises batch padding)

    key = jax.random.PRNGKey(0)
    pkey, xkey = jax.random.split(key)
    params = make_params(vocab_size, embed_dim, n_hidden, n_layers, pkey)

    # right-padded token ids with pad_id=0 (pack_padded_sequence convention)
    seq_lens = np.array([16, 9, 16, 3, 12], dtype=np.int32)
    ids = np.array(jax.random.randint(xkey, (B, T), 1, vocab_size),
                   dtype=np.int32, copy=True)                  # writable host copy
    for bi in range(B):
        ids[bi, seq_lens[bi]:] = PAD_ID
    x = jnp.asarray(ids, dtype=jnp.int32)

    out = lstm_model_forward(x, *params)
    out = jax.block_until_ready(out)

    assert out.shape == (B, T, vocab_size)
    assert bool(jnp.all(jnp.isfinite(out)))
    # log_softmax rows must normalize: logsumexp over vocab ~ 0
    norm_err = float(jnp.max(jnp.abs(jax.scipy.special.logsumexp(out, axis=-1))))
    assert norm_err < 1e-3, norm_err

    ref = reference_forward(x, *params)
    # bf16 matmul operands / gates vs. the f32 reference -> slightly looser tolerance
    np.testing.assert_allclose(np.asarray(out), np.asarray(ref), rtol=3e-2, atol=3e-2)

    print("KERNEL_OK")
</pallas_src>

<mosaic_0001>
module attributes {stable_mosaic.version = 11 : i64} {
  func.func @_fc_log_softmax_kernel(%arg0: i32, %arg1: i32, %arg2: memref<16x8x128xf32, #tpu.memory_space<vmem>>, %arg3: memref<128x256xbf16, #tpu.memory_space<vmem>>, %arg4: memref<1x256xf32, #tpu.memory_space<vmem>>, %arg5: memref<8x16x256xf32, #tpu.memory_space<vmem>>) attributes {dimension_semantics = [#tpu.dimension_semantics<parallel>, #tpu.dimension_semantics<parallel>], iteration_bounds = array<i64: 1, 1>, scalar_prefetch = 0 : i64, scratch_operands = 0 : i64, tpu.core_type = #tpu.core_type<tc>, window_params = [{transform_indices = @transform_0, window_bounds = array<i64: 16, 8, 128>}, {pipeline_mode = #tpu.pipeline_mode<synchronous>, transform_indices = @transform_1, window_bounds = array<i64: 128, 256>}, {pipeline_mode = #tpu.pipeline_mode<synchronous>, transform_indices = @transform_2, window_bounds = array<i64: 1, 256>}, {transform_indices = @transform_3, window_bounds = array<i64: 8, 16, 256>}]} {
    %c0 = arith.constant 0 : index
    %c0_0 = arith.constant 0 : index
    %c0_1 = arith.constant 0 : index
    %0 = vector.load %arg2[%c0, %c0_0, %c0_1] : memref<16x8x128xf32, #tpu.memory_space<vmem>>, vector<16x8x128xf32>
    %1 = vector.shape_cast %0 : vector<16x8x128xf32> to vector<128x128xf32>
    %2 = arith.truncf %1 : vector<128x128xf32> to vector<128x128xbf16>
    %c0_2 = arith.constant 0 : index
    %c0_3 = arith.constant 0 : index
    %3 = vector.load %arg3[%c0_2, %c0_3] : memref<128x256xbf16, #tpu.memory_space<vmem>>, vector<128x256xbf16>
    %cst = arith.constant dense<0.000000e+00> : vector<128x256xf32>
    %4 = tpu.matmul %2, %3, %cst {dimension_numbers = #tpu.dot_dimension_numbers<[1], [0], [0], [1], [0, 0, 1, 1], [], []>} : vector<128x128xbf16>, vector<128x256xbf16>, vector<128x256xf32> -> vector<128x256xf32>
    %c0_4 = arith.constant 0 : index
    %c0_5 = arith.constant 0 : index
    %5 = vector.load %arg4[%c0_4, %c0_5] : memref<1x256xf32, #tpu.memory_space<vmem>>, vector<1x256xf32>
    %6 = vector.broadcast %5 : vector<1x256xf32> to vector<128x256xf32>
    %7 = arith.addf %4, %6 : vector<128x256xf32>
    %cst_6 = arith.constant dense<0xFF800000> : vector<128xf32>
    %8 = vector.multi_reduction <maximumf>, %7, %cst_6 [1] : vector<128x256xf32> to vector<128xf32>
    %9 = vector.shape_cast %8 : vector<128xf32> to vector<128x1xf32>
    %10 = vector.broadcast %9 : vector<128x1xf32> to vector<128x256xf32>
    %11 = arith.subf %7, %10 : vector<128x256xf32>
    %12 = math.exp %11 : vector<128x256xf32>
    %cst_7 = arith.constant dense<0.000000e+00> : vector<128xf32>
    %13 = vector.multi_reduction <add>, %12, %cst_7 [1] : vector<128x256xf32> to vector<128xf32>
    %14 = vector.shape_cast %13 : vector<128xf32> to vector<128x1xf32>
    %15 = math.log %14 : vector<128x1xf32>
    %16 = vector.broadcast %15 : vector<128x1xf32> to vector<128x256xf32>
    %17 = arith.subf %11, %16 : vector<128x256xf32>
    %18 = vector.extract_strided_slice %17 {offsets = [0, 0], sizes = [8, 256], strides = [1, 1]} : vector<128x256xf32> to vector<8x256xf32>
    %c0_8 = arith.constant 0 : index
    %c0_9 = arith.constant 0 : index
    %c0_10 = arith.constant 0 : index
    %19 = vector.load %arg5[%c0_8, %c0_9, %c0_10] : memref<8x16x256xf32, #tpu.memory_space<vmem>>, vector<8x1x256xf32>
    %20 = vector.shape_cast %19 : vector<8x1x256xf32> to vector<8x256xf32>
    %21 = vector.shape_cast %18 : vector<8x256xf32> to vector<8x1x256xf32>
    tpu.vector_store %arg5[%c0_8, %c0_9, %c0_10], %21 {strides = array<i32>} : memref<8x16x256xf32, #tpu.memory_space<vmem>>, vector<8x1x256xf32>,
    %22 = vector.extract_strided_slice %17 {offsets = [8, 0], sizes = [8, 256], strides = [1, 1]} : vector<128x256xf32> to vector<8x256xf32>
    %c0_11 = arith.constant 0 : index
    %c1 = arith.constant 1 : index
    %c0_12 = arith.constant 0 : index
    %23 = vector.load %arg5[%c0_11, %c1, %c0_12] : memref<8x16x256xf32, #tpu.memory_space<vmem>>, vector<8x1x256xf32>
    %24 = vector.shape_cast %23 : vector<8x1x256xf32> to vector<8x256xf32>
    %25 = vector.shape_cast %22 : vector<8x256xf32> to vector<8x1x256xf32>
    tpu.vector_store %arg5[%c0_11, %c1, %c0_12], %25 {strides = array<i32>} : memref<8x16x256xf32, #tpu.memory_space<vmem>>, vector<8x1x256xf32>,
    %26 = vector.extract_strided_slice %17 {offsets = [16, 0], sizes = [8, 256], strides = [1, 1]} : vector<128x256xf32> to vector<8x256xf32>
    %c0_13 = arith.constant 0 : index
    %c2 = arith.constant 2 : index
    %c0_14 = arith.constant 0 : index
    %27 = vector.load %arg5[%c0_13, %c2, %c0_14] : memref<8x16x256xf32, #tpu.memory_space<vmem>>, vector<8x1x256xf32>
    %28 = vector.shape_cast %27 : vector<8x1x256xf32> to vector<8x256xf32>
    %29 = vector.shape_cast %26 : vector<8x256xf32> to vector<8x1x256xf32>
    tpu.vector_store %arg5[%c0_13, %c2, %c0_14], %29 {strides = array<i32>} : memref<8x16x256xf32, #tpu.memory_space<vmem>>, vector<8x1x256xf32>,
    %30 = vector.extract_strided_slice %17 {offsets = [24, 0], sizes = [8, 256], strides = [1, 1]} : vector<128x256xf32> to vector<8x256xf32>
    %c0_15 = arith.constant 0 : index
    %c3 = arith.constant 3 : index
    %c0_16 = arith.constant 0 : index
    %31 = vector.load %arg5[%c0_15, %c3, %c0_16] : memref<8x16x256xf32, #tpu.memory_space<vmem>>, vector<8x1x256xf32>
    %32 = vector.shape_cast %31 : vector<8x1x256xf32> to vector<8x256xf32>
    %33 = vector.shape_cast %30 : vector<8x256xf32> to vector<8x1x256xf32>
    tpu.vector_store %arg5[%c0_15, %c3, %c0_16], %33 {strides = array<i32>} : memref<8x16x256xf32, #tpu.memory_space<vmem>>, vector<8x1x256xf32>,
    %34 = vector.extract_strided_slice %17 {offsets = [32, 0], sizes = [8, 256], strides = [1, 1]} : vector<128x256xf32> to vector<8x256xf32>
    %c0_17 = arith.constant 0 : index
    %c4 = arith.constant 4 : index
    %c0_18 = arith.constant 0 : index
    %35 = vector.load %arg5[%c0_17, %c4, %c0_18] : memref<8x16x256xf32, #tpu.memory_space<vmem>>, vector<8x1x256xf32>
    %36 = vector.shape_cast %35 : vector<8x1x256xf32> to vector<8x256xf32>
    %37 = vector.shape_cast %34 : vector<8x256xf32> to vector<8x1x256xf32>
    tpu.vector_store %arg5[%c0_17, %c4, %c0_18], %37 {strides = array<i32>} : memref<8x16x256xf32, #tpu.memory_space<vmem>>, vector<8x1x256xf32>,
    %38 = vector.extract_strided_slice %17 {offsets = [40, 0], sizes = [8, 256], strides = [1, 1]} : vector<128x256xf32> to vector<8x256xf32>
    %c0_19 = arith.constant 0 : index
    %c5 = arith.constant 5 : index
    %c0_20 = arith.constant 0 : index
    %39 = vector.load %arg5[%c0_19, %c5, %c0_20] : memref<8x16x256xf32, #tpu.memory_space<vmem>>, vector<8x1x256xf32>
    %40 = vector.shape_cast %39 : vector<8x1x256xf32> to vector<8x256xf32>
    %41 = vector.shape_cast %38 : vector<8x256xf32> to vector<8x1x256xf32>
    tpu.vector_store %arg5[%c0_19, %c5, %c0_20], %41 {strides = array<i32>} : memref<8x16x256xf32, #tpu.memory_space<vmem>>, vector<8x1x256xf32>,
    %42 = vector.extract_strided_slice %17 {offsets = [48, 0], sizes = [8, 256], strides = [1, 1]} : vector<128x256xf32> to vector<8x256xf32>
    %c0_21 = arith.constant 0 : index
    %c6 = arith.constant 6 : index
    %c0_22 = arith.constant 0 : index
    %43 = vector.load %arg5[%c0_21, %c6, %c0_22] : memref<8x16x256xf32, #tpu.memory_space<vmem>>, vector<8x1x256xf32>
    %44 = vector.shape_cast %43 : vector<8x1x256xf32> to vector<8x256xf32>
    %45 = vector.shape_cast %42 : vector<8x256xf32> to vector<8x1x256xf32>
    tpu.vector_store %arg5[%c0_21, %c6, %c0_22], %45 {strides = array<i32>} : memref<8x16x256xf32, #tpu.memory_space<vmem>>, vector<8x1x256xf32>,
    %46 = vector.extract_strided_slice %17 {offsets = [56, 0], sizes = [8, 256], strides = [1, 1]} : vector<128x256xf32> to vector<8x256xf32>
    %c0_23 = arith.constant 0 : index
    %c7 = arith.constant 7 : index
    %c0_24 = arith.constant 0 : index
    %47 = vector.load %arg5[%c0_23, %c7, %c0_24] : memref<8x16x256xf32, #tpu.memory_space<vmem>>, vector<8x1x256xf32>
    %48 = vector.shape_cast %47 : vector<8x1x256xf32> to vector<8x256xf32>
    %49 = vector.shape_cast %46 : vector<8x256xf32> to vector<8x1x256xf32>
    tpu.vector_store %arg5[%c0_23, %c7, %c0_24], %49 {strides = array<i32>} : memref<8x16x256xf32, #tpu.memory_space<vmem>>, vector<8x1x256xf32>,
    %50 = vector.extract_strided_slice %17 {offsets = [64, 0], sizes = [8, 256], strides = [1, 1]} : vector<128x256xf32> to vector<8x256xf32>
    %c0_25 = arith.constant 0 : index
    %c8 = arith.constant 8 : index
    %c0_26 = arith.constant 0 : index
    %51 = vector.load %arg5[%c0_25, %c8, %c0_26] : memref<8x16x256xf32, #tpu.memory_space<vmem>>, vector<8x1x256xf32>
    %52 = vector.shape_cast %51 : vector<8x1x256xf32> to vector<8x256xf32>
    %53 = vector.shape_cast %50 : vector<8x256xf32> to vector<8x1x256xf32>
    tpu.vector_store %arg5[%c0_25, %c8, %c0_26], %53 {strides = array<i32>} : memref<8x16x256xf32, #tpu.memory_space<vmem>>, vector<8x1x256xf32>,
    %54 = vector.extract_strided_slice %17 {offsets = [72, 0], sizes = [8, 256], strides = [1, 1]} : vector<128x256xf32> to vector<8x256xf32>
    %c0_27 = arith.constant 0 : index
    %c9 = arith.constant 9 : index
    %c0_28 = arith.constant 0 : index
    %55 = vector.load %arg5[%c0_27, %c9, %c0_28] : memref<8x16x256xf32, #tpu.memory_space<vmem>>, vector<8x1x256xf32>
    %56 = vector.shape_cast %55 : vector<8x1x256xf32> to vector<8x256xf32>
    %57 = vector.shape_cast %54 : vector<8x256xf32> to vector<8x1x256xf32>
    tpu.vector_store %arg5[%c0_27, %c9, %c0_28], %57 {strides = array<i32>} : memref<8x16x256xf32, #tpu.memory_space<vmem>>, vector<8x1x256xf32>,
    %58 = vector.extract_strided_slice %17 {offsets = [80, 0], sizes = [8, 256], strides = [1, 1]} : vector<128x256xf32> to vector<8x256xf32>
    %c0_29 = arith.constant 0 : index
    %c10 = arith.constant 10 : index
    %c0_30 = arith.constant 0 : index
    %59 = vector.load %arg5[%c0_29, %c10, %c0_30] : memref<8x16x256xf32, #tpu.memory_space<vmem>>, vector<8x1x256xf32>
    %60 = vector.shape_cast %59 : vector<8x1x256xf32> to vector<8x256xf32>
    %61 = vector.shape_cast %58 : vector<8x256xf32> to vector<8x1x256xf32>
    tpu.vector_store %arg5[%c0_29, %c10, %c0_30], %61 {strides = array<i32>} : memref<8x16x256xf32, #tpu.memory_space<vmem>>, vector<8x1x256xf32>,
    %62 = vector.extract_strided_slice %17 {offsets = [88, 0], sizes = [8, 256], strides = [1, 1]} : vector<128x256xf32> to vector<8x256xf32>
    %c0_31 = arith.constant 0 : index
    %c11 = arith.constant 11 : index
    %c0_32 = arith.constant 0 : index
    %63 = vector.load %arg5[%c0_31, %c11, %c0_32] : memref<8x16x256xf32, #tpu.memory_space<vmem>>, vector<8x1x256xf32>
    %64 = vector.shape_cast %63 : vector<8x1x256xf32> to vector<8x256xf32>
    %65 = vector.shape_cast %62 : vector<8x256xf32> to vector<8x1x256xf32>
    tpu.vector_store %arg5[%c0_31, %c11, %c0_32], %65 {strides = array<i32>} : memref<8x16x256xf32, #tpu.memory_space<vmem>>, vector<8x1x256xf32>,
    %66 = vector.extract_strided_slice %17 {offsets = [96, 0], sizes = [8, 256], strides = [1, 1]} : vector<128x256xf32> to vector<8x256xf32>
    %c0_33 = arith.constant 0 : index
    %c12 = arith.constant 12 : index
    %c0_34 = arith.constant 0 : index
    %67 = vector.load %arg5[%c0_33, %c12, %c0_34] : memref<8x16x256xf32, #tpu.memory_space<vmem>>, vector<8x1x256xf32>
    %68 = vector.shape_cast %67 : vector<8x1x256xf32> to vector<8x256xf32>
    %69 = vector.shape_cast %66 : vector<8x256xf32> to vector<8x1x256xf32>
    tpu.vector_store %arg5[%c0_33, %c12, %c0_34], %69 {strides = array<i32>} : memref<8x16x256xf32, #tpu.memory_space<vmem>>, vector<8x1x256xf32>,
    %70 = vector.extract_strided_slice %17 {offsets = [104, 0], sizes = [8, 256], strides = [1, 1]} : vector<128x256xf32> to vector<8x256xf32>
    %c0_35 = arith.constant 0 : index
    %c13 = arith.constant 13 : index
    %c0_36 = arith.constant 0 : index
    %71 = vector.load %arg5[%c0_35, %c13, %c0_36] : memref<8x16x256xf32, #tpu.memory_space<vmem>>, vector<8x1x256xf32>
    %72 = vector.shape_cast %71 : vector<8x1x256xf32> to vector<8x256xf32>
    %73 = vector.shape_cast %70 : vector<8x256xf32> to vector<8x1x256xf32>
    tpu.vector_store %arg5[%c0_35, %c13, %c0_36], %73 {strides = array<i32>} : memref<8x16x256xf32, #tpu.memory_space<vmem>>, vector<8x1x256xf32>,
    %74 = vector.extract_strided_slice %17 {offsets = [112, 0], sizes = [8, 256], strides = [1, 1]} : vector<128x256xf32> to vector<8x256xf32>
    %c0_37 = arith.constant 0 : index
    %c14 = arith.constant 14 : index
    %c0_38 = arith.constant 0 : index
    %75 = vector.load %arg5[%c0_37, %c14, %c0_38] : memref<8x16x256xf32, #tpu.memory_space<vmem>>, vector<8x1x256xf32>
    %76 = vector.shape_cast %75 : vector<8x1x256xf32> to vector<8x256xf32>
    %77 = vector.shape_cast %74 : vector<8x256xf32> to vector<8x1x256xf32>
    tpu.vector_store %arg5[%c0_37, %c14, %c0_38], %77 {strides = array<i32>} : memref<8x16x256xf32, #tpu.memory_space<vmem>>, vector<8x1x256xf32>,
    %78 = vector.extract_strided_slice %17 {offsets = [120, 0], sizes = [8, 256], strides = [1, 1]} : vector<128x256xf32> to vector<8x256xf32>
    %c0_39 = arith.constant 0 : index
    %c15 = arith.constant 15 : index
    %c0_40 = arith.constant 0 : index
    %79 = vector.load %arg5[%c0_39, %c15, %c0_40] : memref<8x16x256xf32, #tpu.memory_space<vmem>>, vector<8x1x256xf32>
    %80 = vector.shape_cast %79 : vector<8x1x256xf32> to vector<8x256xf32>
    %81 = vector.shape_cast %78 : vector<8x256xf32> to vector<8x1x256xf32>
    tpu.vector_store %arg5[%c0_39, %c15, %c0_40], %81 {strides = array<i32>} : memref<8x16x256xf32, #tpu.memory_space<vmem>>, vector<8x1x256xf32>,
    return
  }
  func.func @transform_0(%arg0: i32, %arg1: i32) -> (i32, i32, i32) {
    %c0_i32 = arith.constant 0 : i32
    %c0_i32_0 = arith.constant 0 : i32
    return %arg1, %arg0, %c0_i32 : i32, i32, i32
  }
  func.func @transform_1(%arg0: i32, %arg1: i32) -> (i32, i32) {
    %c0_i32 = arith.constant 0 : i32
    %c0_i32_0 = arith.constant 0 : i32
    %c0_i32_1 = arith.constant 0 : i32
    return %c0_i32, %c0_i32_0 : i32, i32
  }
  func.func @transform_2(%arg0: i32, %arg1: i32) -> (i32, i32) {
    %c0_i32 = arith.constant 0 : i32
    %c0_i32_0 = arith.constant 0 : i32
    %c0_i32_1 = arith.constant 0 : i32
    return %c0_i32, %c0_i32_0 : i32, i32
  }
  func.func @transform_3(%arg0: i32, %arg1: i32) -> (i32, i32, i32) {
    %c0_i32 = arith.constant 0 : i32
    %c0_i32_0 = arith.constant 0 : i32
    return %arg0, %arg1, %c0_i32 : i32, i32, i32
  }
}

module attributes {stable_mosaic.version = 11 : i64} {
  func.func @_lstm_stack_kernel(%arg0: i32, %arg1: memref<1xi32, #tpu.memory_space<smem>>, %arg2: memref<8x1xi32, #tpu.memory_space<vmem>>, %arg3: memref<16x8x128xf32, #tpu.memory_space<vmem>>, %arg4: memref<2x128x512xbf16, #tpu.memory_space<vmem>>, %arg5: memref<2x128x512xbf16, #tpu.memory_space<vmem>>, %arg6: memref<2x1x512xf32, #tpu.memory_space<vmem>>, %arg7: memref<16x8x128xf32, #tpu.memory_space<vmem>>, %arg8: memref<128x128xf32, #tpu.memory_space<vmem>>, %arg9: memref<128x512xf32, #tpu.memory_space<vmem>>, %arg10: memref<8x128xf32, #tpu.memory_space<vmem>>, %arg11: memref<8x128xf32, #tpu.memory_space<vmem>>) attributes {dimension_semantics = [#tpu.dimension_semantics<parallel>], iteration_bounds = array<i64: 1>, scalar_prefetch = 1 : i64, scratch_operands = 4 : i64, tpu.core_type = #tpu.core_type<tc>, window_params = [{transform_indices = @transform_0, window_bounds = array<i64: 8, 1>}, {transform_indices = @transform_1, window_bounds = array<i64: 16, 8, 128>}, {pipeline_mode = #tpu.pipeline_mode<synchronous>, transform_indices = @transform_2, window_bounds = array<i64: 2, 128, 512>}, {pipeline_mode = #tpu.pipeline_mode<synchronous>, transform_indices = @transform_3, window_bounds = array<i64: 2, 128, 512>}, {pipeline_mode = #tpu.pipeline_mode<synchronous>, transform_indices = @transform_4, window_bounds = array<i64: 2, 1, 512>}, {transform_indices = @transform_5, window_bounds = array<i64: 16, 8, 128>}]} {
    %c0 = arith.constant 0 : index
    %c0_0 = arith.constant 0 : index
    %0 = vector.load %arg2[%c0, %c0_0] : memref<8x1xi32, #tpu.memory_space<vmem>>, vector<8x1xi32>
    %1 = arith.index_cast %arg0 : i32 to index
    %2 = memref.load %arg1[%1] : memref<1xi32, #tpu.memory_space<smem>>
    %c16_i32 = arith.constant 16 : i32
    %3 = arith.cmpi slt, %2, %c16_i32 : i32
    %4 = arith.extui %3 : i1 to i32
    %c0_i32 = arith.constant 0 : i32
    %5 = arith.cmpi ne, %4, %c0_i32 : i32
    scf.if %5 {
      %cst_33 = arith.constant 0.000000e+00 : f32
      %32 = vector.broadcast %cst_33 : f32 to vector<16x8x128xf32>
      %c0_34 = arith.constant 0 : index
      %c0_35 = arith.constant 0 : index
      %c0_36 = arith.constant 0 : index
      %33 = vector.load %arg7[%c0_34, %c0_35, %c0_36] : memref<16x8x128xf32, #tpu.memory_space<vmem>>, vector<16x8x128xf32>
      tpu.vector_store %arg7[%c0_34, %c0_35, %c0_36], %32 {strides = array<i32>} : memref<16x8x128xf32, #tpu.memory_space<vmem>>, vector<16x8x128xf32>,
    } else {
    }
    %c0_1 = arith.constant 0 : index
    %c0_2 = arith.constant 0 : index
    %c0_3 = arith.constant 0 : index
    %6 = vector.load %arg4[%c0_1, %c0_2, %c0_3] : memref<2x128x512xbf16, #tpu.memory_space<vmem>>, vector<1x128x512xbf16>
    %7 = vector.shape_cast %6 : vector<1x128x512xbf16> to vector<128x512xbf16>
    %c0_4 = arith.constant 0 : index
    %c0_5 = arith.constant 0 : index
    %c0_6 = arith.constant 0 : index
    %8 = vector.load %arg5[%c0_4, %c0_5, %c0_6] : memref<2x128x512xbf16, #tpu.memory_space<vmem>>, vector<1x128x512xbf16>
    %9 = vector.shape_cast %8 : vector<1x128x512xbf16> to vector<128x512xbf16>
    %c0_7 = arith.constant 0 : index
    %c0_8 = arith.constant 0 : index
    %c0_9 = arith.constant 0 : index
    %10 = vector.load %arg6[%c0_7, %c0_8, %c0_9] : memref<2x1x512xf32, #tpu.memory_space<vmem>>, vector<1x1x512xf32>
    %11 = vector.shape_cast %10 : vector<1x1x512xf32> to vector<1x512xf32>
    %cst = arith.constant 0.000000e+00 : f32
    %12 = vector.broadcast %cst : f32 to vector<8x128xf32>
    %c0_10 = arith.constant 0 : index
    %c0_11 = arith.constant 0 : index
    %13 = vector.load %arg10[%c0_10, %c0_11] : memref<8x128xf32, #tpu.memory_space<vmem>>, vector<8x128xf32>
    tpu.vector_store %arg10[%c0_10, %c0_11], %12 {strides = array<i32>} : memref<8x128xf32, #tpu.memory_space<vmem>>, vector<8x128xf32>,
    %cst_12 = arith.constant 0.000000e+00 : f32
    %14 = vector.broadcast %cst_12 : f32 to vector<8x128xf32>
    %c0_13 = arith.constant 0 : index
    %c0_14 = arith.constant 0 : index
    %15 = vector.load %arg11[%c0_13, %c0_14] : memref<8x128xf32, #tpu.memory_space<vmem>>, vector<8x128xf32>
    tpu.vector_store %arg11[%c0_13, %c0_14], %14 {strides = array<i32>} : memref<8x128xf32, #tpu.memory_space<vmem>>, vector<8x128xf32>,
    %c0_i32_15 = arith.constant 0 : i32
    %16 = arith.cmpi sgt, %2, %c0_i32_15 : i32
    %17 = arith.extui %16 : i1 to i32
    %c0_i32_16 = arith.constant 0 : i32
    %18 = arith.cmpi ne, %17, %c0_i32_16 : i32
    scf.if %18 {
      %c0_33 = arith.constant 0 : index
      %c0_34 = arith.constant 0 : index
      %c0_35 = arith.constant 0 : index
      %32 = vector.load %arg3[%c0_33, %c0_34, %c0_35] : memref<16x8x128xf32, #tpu.memory_space<vmem>>, vector<16x8x128xf32>
      %33 = vector.shape_cast %32 : vector<16x8x128xf32> to vector<128x128xf32>
      %34 = arith.truncf %33 : vector<128x128xf32> to vector<128x128xbf16>
      %cst_36 = arith.constant dense<0.000000e+00> : vector<128x512xf32>
      %35 = tpu.matmul %34, %7, %cst_36 {dimension_numbers = #tpu.dot_dimension_numbers<[1], [0], [0], [1], [0, 0, 1, 1], [], []>} : vector<128x128xbf16>, vector<128x512xbf16>, vector<128x512xf32> -> vector<128x512xf32>
      %36 = vector.broadcast %11 : vector<1x512xf32> to vector<128x512xf32>
      %37 = arith.addf %35, %36 : vector<128x512xf32>
      %c0_37 = arith.constant 0 : index
      %c0_38 = arith.constant 0 : index
      %38 = vector.load %arg9[%c0_37, %c0_38] : memref<128x512xf32, #tpu.memory_space<vmem>>, vector<128x512xf32>
      tpu.vector_store %arg9[%c0_37, %c0_38], %37 {strides = array<i32>} : memref<128x512xf32, #tpu.memory_space<vmem>>, vector<128x512xf32>,
      %c0_39 = arith.constant 0 : index
      %c0_40 = arith.constant 0 : index
      %39 = vector.load %arg10[%c0_39, %c0_40] : memref<8x128xf32, #tpu.memory_space<vmem>>, vector<8x128xf32>
      %c0_41 = arith.constant 0 : index
      %c0_42 = arith.constant 0 : index
      %40 = vector.load %arg11[%c0_41, %c0_42] : memref<8x128xf32, #tpu.memory_space<vmem>>, vector<8x128xf32>
      %c0_i32_43 = arith.constant 0 : i32
      %c8_i32 = arith.constant 8 : i32
      %41 = arith.muli %c0_i32_43, %c8_i32 : i32
      %42 = tpu.assume_multiple %41, 8 : i32
      %43 = arith.index_cast %42 : i32 to index
      %c0_44 = arith.constant 0 : index
      %44 = vector.load %arg9[%43, %c0_44] : memref<128x512xf32, #tpu.memory_space<vmem>>, vector<8x512xf32>
      %45 = arith.truncf %39 : vector<8x128xf32> to vector<8x128xbf16>
      %cst_45 = arith.constant dense<0.000000e+00> : vector<8x512xf32>
      %46 = tpu.matmul %45, %9, %cst_45 {dimension_numbers = #tpu.dot_dimension_numbers<[1], [0], [0], [1], [0, 0, 1, 1], [], []>} : vector<8x128xbf16>, vector<128x512xbf16>, vector<8x512xf32> -> vector<8x512xf32>
      %47 = arith.addf %44, %46 : vector<8x512xf32>
      %48 = arith.truncf %47 : vector<8x512xf32> to vector<8x512xbf16>
      %49 = vector.extract_strided_slice %48 {offsets = [0, 0], sizes = [8, 128], strides = [1, 1]} : vector<8x512xbf16> to vector<8x128xbf16>
      %50 = arith.negf %49 : vector<8x128xbf16>
      %51 = math.exp %50 : vector<8x128xbf16>
      %cst_46 = arith.constant 1.000000e+00 : bf16
      %52 = vector.broadcast %cst_46 : bf16 to vector<8x128xbf16>
      %53 = arith.addf %52, %51 : vector<8x128xbf16>
      %54 = arith.divf %52, %53 : vector<8x128xbf16>
      %55 = arith.extf %54 : vector<8x128xbf16> to vector<8x128xf32>
      %56 = vector.extract_strided_slice %48 {offsets = [0, 128], sizes = [8, 128], strides = [1, 1]} : vector<8x512xbf16> to vector<8x128xbf16>
      %57 = arith.negf %56 : vector<8x128xbf16>
      %58 = math.exp %57 : vector<8x128xbf16>
      %cst_47 = arith.constant 1.000000e+00 : bf16
      %59 = vector.broadcast %cst_47 : bf16 to vector<8x128xbf16>
      %60 = arith.addf %59, %58 : vector<8x128xbf16>
      %61 = arith.divf %59, %60 : vector<8x128xbf16>
      %62 = arith.extf %61 : vector<8x128xbf16> to vector<8x128xf32>
      %63 = vector.extract_strided_slice %48 {offsets = [0, 256], sizes = [8, 128], strides = [1, 1]} : vector<8x512xbf16> to vector<8x128xbf16>
      %64 = math.tanh %63 : vector<8x128xbf16>
      %65 = arith.extf %64 : vector<8x128xbf16> to vector<8x128xf32>
      %66 = vector.extract_strided_slice %48 {offsets = [0, 384], sizes = [8, 128], strides = [1, 1]} : vector<8x512xbf16> to vector<8x128xbf16>
      %67 = arith.negf %66 : vector<8x128xbf16>
      %68 = math.exp %67 : vector<8x128xbf16>
      %cst_48 = arith.constant 1.000000e+00 : bf16
      %69 = vector.broadcast %cst_48 : bf16 to vector<8x128xbf16>
      %70 = arith.addf %69, %68 : vector<8x128xbf16>
      %71 = arith.divf %69, %70 : vector<8x128xbf16>
      %72 = arith.extf %71 : vector<8x128xbf16> to vector<8x128xf32>
      %73 = arith.mulf %62, %40 : vector<8x128xf32>
      %74 = arith.mulf %55, %65 : vector<8x128xf32>
      %75 = arith.addf %73, %74 : vector<8x128xf32>
      %76 = math.tanh %75 : vector<8x128xf32>
      %77 = arith.mulf %72, %76 : vector<8x128xf32>
      %c0_i32_49 = arith.constant 0 : i32
      %78 = arith.addi %c0_i32_49, %c0_i32_43 : i32
      %79 = vector.broadcast %78 : i32 to vector<8x1xi32>
      %80 = arith.cmpi slt, %79, %0 : vector<8x1xi32>
      %81 = vector.shape_cast %80 : vector<8x1xi1> to vector<8x1xi1>
      %82 = vector.broadcast %81 : vector<8x1xi1> to vector<8x128xi1>
      %83 = arith.select %82, %77, %39 : vector<8x128xi1>, vector<8x128xf32>
      %84 = arith.select %82, %75, %40 : vector<8x128xi1>, vector<8x128xf32>
      %cst_50 = arith.constant 0.000000e+00 : f32
      %85 = vector.broadcast %cst_50 : f32 to vector<8x128xf32>
      %86 = arith.select %82, %77, %85 : vector<8x128xi1>, vector<8x128xf32>
      %c8_i32_51 = arith.constant 8 : i32
      %87 = arith.muli %78, %c8_i32_51 : i32
      %88 = tpu.assume_multiple %87, 8 : i32
      %89 = arith.index_cast %88 : i32 to index
      %c0_52 = arith.constant 0 : index
      %90 = vector.load %arg8[%89, %c0_52] : memref<128x128xf32, #tpu.memory_space<vmem>>, vector<8x128xf32>
      tpu.vector_store %arg8[%89, %c0_52], %86 {strides = array<i32>} : memref<128x128xf32, #tpu.memory_space<vmem>>, vector<8x128xf32>,
      %c1_i32 = arith.constant 1 : i32
      %c8_i32_53 = arith.constant 8 : i32
      %91 = arith.muli %c1_i32, %c8_i32_53 : i32
      %92 = tpu.assume_multiple %91, 8 : i32
      %93 = arith.index_cast %92 : i32 to index
      %c0_54 = arith.constant 0 : index
      %94 = vector.load %arg9[%93, %c0_54] : memref<128x512xf32, #tpu.memory_space<vmem>>, vector<8x512xf32>
      %95 = arith.truncf %83 : vector<8x128xf32> to vector<8x128xbf16>
      %cst_55 = arith.constant dense<0.000000e+00> : vector<8x512xf32>
      %96 = tpu.matmul %95, %9, %cst_55 {dimension_numbers = #tpu.dot_dimension_numbers<[1], [0], [0], [1], [0, 0, 1, 1], [], []>} : vector<8x128xbf16>, vector<128x512xbf16>, vector<8x512xf32> -> vector<8x512xf32>
      %97 = arith.addf %94, %96 : vector<8x512xf32>
      %98 = arith.truncf %97 : vector<8x512xf32> to vector<8x512xbf16>
      %99 = vector.extract_strided_slice %98 {offsets = [0, 0], sizes = [8, 128], strides = [1, 1]} : vector<8x512xbf16> to vector<8x128xbf16>
      %100 = arith.negf %99 : vector<8x128xbf16>
      %101 = math.exp %100 : vector<8x128xbf16>
      %cst_56 = arith.constant 1.000000e+00 : bf16
      %102 = vector.broadcast %cst_56 : bf16 to vector<8x128xbf16>
      %103 = arith.addf %102, %101 : vector<8x128xbf16>
      %104 = arith.divf %102, %103 : vector<8x128xbf16>
      %105 = arith.extf %104 : vector<8x128xbf16> to vector<8x128xf32>
      %106 = vector.extract_strided_slice %98 {offsets = [0, 128], sizes = [8, 128], strides = [1, 1]} : vector<8x512xbf16> to vector<8x128xbf16>
      %107 = arith.negf %106 : vector<8x128xbf16>
      %108 = math.exp %107 : vector<8x128xbf16>
      %cst_57 = arith.constant 1.000000e+00 : bf16
      %109 = vector.broadcast %cst_57 : bf16 to vector<8x128xbf16>
      %110 = arith.addf %109, %108 : vector<8x128xbf16>
      %111 = arith.divf %109, %110 : vector<8x128xbf16>
      %112 = arith.extf %111 : vector<8x128xbf16> to vector<8x128xf32>
      %113 = vector.extract_strided_slice %98 {offsets = [0, 256], sizes = [8, 128], strides = [1, 1]} : vector<8x512xbf16> to vector<8x128xbf16>
      %114 = math.tanh %113 : vector<8x128xbf16>
      %115 = arith.extf %114 : vector<8x128xbf16> to vector<8x128xf32>
      %116 = vector.extract_strided_slice %98 {offsets = [0, 384], sizes = [8, 128], strides = [1, 1]} : vector<8x512xbf16> to vector<8x128xbf16>
      %117 = arith.negf %116 : vector<8x128xbf16>
      %118 = math.exp %117 : vector<8x128xbf16>
      %cst_58 = arith.constant 1.000000e+00 : bf16
      %119 = vector.broadcast %cst_58 : bf16 to vector<8x128xbf16>
      %120 = arith.addf %119, %118 : vector<8x128xbf16>
      %121 = arith.divf %119, %120 : vector<8x128xbf16>
      %122 = arith.extf %121 : vector<8x128xbf16> to vector<8x128xf32>
      %123 = arith.mulf %112, %84 : vector<8x128xf32>
      %124 = arith.mulf %105, %115 : vector<8x128xf32>
      %125 = arith.addf %123, %124 : vector<8x128xf32>
      %126 = math.tanh %125 : vector<8x128xf32>
      %127 = arith.mulf %122, %126 : vector<8x128xf32>
      %c0_i32_59 = arith.constant 0 : i32
      %128 = arith.addi %c0_i32_59, %c1_i32 : i32
      %129 = vector.broadcast %128 : i32 to vector<8x1xi32>
      %130 = arith.cmpi slt, %129, %0 : vector<8x1xi32>
      %131 = vector.shape_cast %130 : vector<8x1xi1> to vector<8x1xi1>
      %132 = vector.broadcast %131 : vector<8x1xi1> to vector<8x128xi1>
      %133 = arith.select %132, %127, %83 : vector<8x128xi1>, vector<8x128xf32>
      %134 = arith.select %132, %125, %84 : vector<8x128xi1>, vector<8x128xf32>
      %cst_60 = arith.constant 0.000000e+00 : f32
      %135 = vector.broadcast %cst_60 : f32 to vector<8x128xf32>
      %136 = arith.select %132, %127, %135 : vector<8x128xi1>, vector<8x128xf32>
      %c8_i32_61 = arith.constant 8 : i32
      %137 = arith.muli %128, %c8_i32_61 : i32
      %138 = tpu.assume_multiple %137, 8 : i32
      %139 = arith.index_cast %138 : i32 to index
      %c0_62 = arith.constant 0 : index
      %140 = vector.load %arg8[%139, %c0_62] : memref<128x128xf32, #tpu.memory_space<vmem>>, vector<8x128xf32>
      tpu.vector_store %arg8[%139, %c0_62], %136 {strides = array<i32>} : memref<128x128xf32, #tpu.memory_space<vmem>>, vector<8x128xf32>,
      %c2_i32 = arith.constant 2 : i32
      %c8_i32_63 = arith.constant 8 : i32
      %141 = arith.muli %c2_i32, %c8_i32_63 : i32
      %142 = tpu.assume_multiple %141, 8 : i32
      %143 = arith.index_cast %142 : i32 to index
      %c0_64 = arith.constant 0 : index
      %144 = vector.load %arg9[%143, %c0_64] : memref<128x512xf32, #tpu.memory_space<vmem>>, vector<8x512xf32>
      %145 = arith.truncf %133 : vector<8x128xf32> to vector<8x128xbf16>
      %cst_65 = arith.constant dense<0.000000e+00> : vector<8x512xf32>
      %146 = tpu.matmul %145, %9, %cst_65 {dimension_numbers = #tpu.dot_dimension_numbers<[1], [0], [0], [1], [0, 0, 1, 1], [], []>} : vector<8x128xbf16>, vector<128x512xbf16>, vector<8x512xf32> -> vector<8x512xf32>
      %147 = arith.addf %144, %146 : vector<8x512xf32>
      %148 = arith.truncf %147 : vector<8x512xf32> to vector<8x512xbf16>
      %149 = vector.extract_strided_slice %148 {offsets = [0, 0], sizes = [8, 128], strides = [1, 1]} : vector<8x512xbf16> to vector<8x128xbf16>
      %150 = arith.negf %149 : vector<8x128xbf16>
      %151 = math.exp %150 : vector<8x128xbf16>
      %cst_66 = arith.constant 1.000000e+00 : bf16
      %152 = vector.broadcast %cst_66 : bf16 to vector<8x128xbf16>
      %153 = arith.addf %152, %151 : vector<8x128xbf16>
      %154 = arith.divf %152, %153 : vector<8x128xbf16>
      %155 = arith.extf %154 : vector<8x128xbf16> to vector<8x128xf32>
      %156 = vector.extract_strided_slice %148 {offsets = [0, 128], sizes = [8, 128], strides = [1, 1]} : vector<8x512xbf16> to vector<8x128xbf16>
      %157 = arith.negf %156 : vector<8x128xbf16>
      %158 = math.exp %157 : vector<8x128xbf16>
      %cst_67 = arith.constant 1.000000e+00 : bf16
      %159 = vector.broadcast %cst_67 : bf16 to vector<8x128xbf16>
      %160 = arith.addf %159, %158 : vector<8x128xbf16>
      %161 = arith.divf %159, %160 : vector<8x128xbf16>
      %162 = arith.extf %161 : vector<8x128xbf16> to vector<8x128xf32>
      %163 = vector.extract_strided_slice %148 {offsets = [0, 256], sizes = [8, 128], strides = [1, 1]} : vector<8x512xbf16> to vector<8x128xbf16>
      %164 = math.tanh %163 : vector<8x128xbf16>
      %165 = arith.extf %164 : vector<8x128xbf16> to vector<8x128xf32>
      %166 = vector.extract_strided_slice %148 {offsets = [0, 384], sizes = [8, 128], strides = [1, 1]} : vector<8x512xbf16> to vector<8x128xbf16>
      %167 = arith.negf %166 : vector<8x128xbf16>
      %168 = math.exp %167 : vector<8x128xbf16>
      %cst_68 = arith.constant 1.000000e+00 : bf16
      %169 = vector.broadcast %cst_68 : bf16 to vector<8x128xbf16>
      %170 = arith.addf %169, %168 : vector<8x128xbf16>
      %171 = arith.divf %169, %170 : vector<8x128xbf16>
      %172 = arith.extf %171 : vector<8x128xbf16> to vector<8x128xf32>
      %173 = arith.mulf %162, %134 : vector<8x128xf32>
      %174 = arith.mulf %155, %165 : vector<8x128xf32>
      %175 = arith.addf %173, %174 : vector<8x128xf32>
      %176 = math.tanh %175 : vector<8x128xf32>
      %177 = arith.mulf %172, %176 : vector<8x128xf32>
      %c0_i32_69 = arith.constant 0 : i32
      %178 = arith.addi %c0_i32_69, %c2_i32 : i32
      %179 = vector.broadcast %178 : i32 to vector<8x1xi32>
      %180 = arith.cmpi slt, %179, %0 : vector<8x1xi32>
      %181 = vector.shape_cast %180 : vector<8x1xi1> to vector<8x1xi1>
      %182 = vector.broadcast %181 : vector<8x1xi1> to vector<8x128xi1>
      %183 = arith.select %182, %177, %133 : vector<8x128xi1>, vector<8x128xf32>
      %184 = arith.select %182, %175, %134 : vector<8x128xi1>, vector<8x128xf32>
      %cst_70 = arith.constant 0.000000e+00 : f32
      %185 = vector.broadcast %cst_70 : f32 to vector<8x128xf32>
      %186 = arith.select %182, %177, %185 : vector<8x128xi1>, vector<8x128xf32>
      %c8_i32_71 = arith.constant 8 : i32
      %187 = arith.muli %178, %c8_i32_71 : i32
      %188 = tpu.assume_multiple %187, 8 : i32
      %189 = arith.index_cast %188 : i32 to index
      %c0_72 = arith.constant 0 : index
      %190 = vector.load %arg8[%189, %c0_72] : memref<128x128xf32, #tpu.memory_space<vmem>>, vector<8x128xf32>
      tpu.vector_store %arg8[%189, %c0_72], %186 {strides = array<i32>} : memref<128x128xf32, #tpu.memory_space<vmem>>, vector<8x128xf32>,
      %c3_i32 = arith.constant 3 : i32
      %c8_i32_73 = arith.constant 8 : i32
      %191 = arith.muli %c3_i32, %c8_i32_73 : i32
      %192 = tpu.assume_multiple %191, 8 : i32
      %193 = arith.index_cast %192 : i32 to index
      %c0_74 = arith.constant 0 : index
      %194 = vector.load %arg9[%193, %c0_74] : memref<128x512xf32, #tpu.memory_space<vmem>>, vector<8x512xf32>
      %195 = arith.truncf %183 : vector<8x128xf32> to vector<8x128xbf16>
      %cst_75 = arith.constant dense<0.000000e+00> : vector<8x512xf32>
      %196 = tpu.matmul %195, %9, %cst_75 {dimension_numbers = #tpu.dot_dimension_numbers<[1], [0], [0], [1], [0, 0, 1, 1], [], []>} : vector<8x128xbf16>, vector<128x512xbf16>, vector<8x512xf32> -> vector<8x512xf32>
      %197 = arith.addf %194, %196 : vector<8x512xf32>
      %198 = arith.truncf %197 : vector<8x512xf32> to vector<8x512xbf16>
      %199 = vector.extract_strided_slice %198 {offsets = [0, 0], sizes = [8, 128], strides = [1, 1]} : vector<8x512xbf16> to vector<8x128xbf16>
      %200 = arith.negf %199 : vector<8x128xbf16>
      %201 = math.exp %200 : vector<8x128xbf16>
      %cst_76 = arith.constant 1.000000e+00 : bf16
      %202 = vector.broadcast %cst_76 : bf16 to vector<8x128xbf16>
      %203 = arith.addf %202, %201 : vector<8x128xbf16>
      %204 = arith.divf %202, %203 : vector<8x128xbf16>
      %205 = arith.extf %204 : vector<8x128xbf16> to vector<8x128xf32>
      %206 = vector.extract_strided_slice %198 {offsets = [0, 128], sizes = [8, 128], strides = [1, 1]} : vector<8x512xbf16> to vector<8x128xbf16>
      %207 = arith.negf %206 : vector<8x128xbf16>
      %208 = math.exp %207 : vector<8x128xbf16>
      %cst_77 = arith.constant 1.000000e+00 : bf16
      %209 = vector.broadcast %cst_77 : bf16 to vector<8x128xbf16>
      %210 = arith.addf %209, %208 : vector<8x128xbf16>
      %211 = arith.divf %209, %210 : vector<8x128xbf16>
      %212 = arith.extf %211 : vector<8x128xbf16> to vector<8x128xf32>
      %213 = vector.extract_strided_slice %198 {offsets = [0, 256], sizes = [8, 128], strides = [1, 1]} : vector<8x512xbf16> to vector<8x128xbf16>
      %214 = math.tanh %213 : vector<8x128xbf16>
      %215 = arith.extf %214 : vector<8x128xbf16> to vector<8x128xf32>
      %216 = vector.extract_strided_slice %198 {offsets = [0, 384], sizes = [8, 128], strides = [1, 1]} : vector<8x512xbf16> to vector<8x128xbf16>
      %217 = arith.negf %216 : vector<8x128xbf16>
      %218 = math.exp %217 : vector<8x128xbf16>
      %cst_78 = arith.constant 1.000000e+00 : bf16
      %219 = vector.broadcast %cst_78 : bf16 to vector<8x128xbf16>
      %220 = arith.addf %219, %218 : vector<8x128xbf16>
      %221 = arith.divf %219, %220 : vector<8x128xbf16>
      %222 = arith.extf %221 : vector<8x128xbf16> to vector<8x128xf32>
      %223 = arith.mulf %212, %184 : vector<8x128xf32>
      %224 = arith.mulf %205, %215 : vector<8x128xf32>
      %225 = arith.addf %223, %224 : vector<8x128xf32>
      %226 = math.tanh %225 : vector<8x128xf32>
      %227 = arith.mulf %222, %226 : vector<8x128xf32>
      %c0_i32_79 = arith.constant 0 : i32
      %228 = arith.addi %c0_i32_79, %c3_i32 : i32
      %229 = vector.broadcast %228 : i32 to vector<8x1xi32>
      %230 = arith.cmpi slt, %229, %0 : vector<8x1xi32>
      %231 = vector.shape_cast %230 : vector<8x1xi1> to vector<8x1xi1>
      %232 = vector.broadcast %231 : vector<8x1xi1> to vector<8x128xi1>
      %233 = arith.select %232, %227, %183 : vector<8x128xi1>, vector<8x128xf32>
      %234 = arith.select %232, %225, %184 : vector<8x128xi1>, vector<8x128xf32>
      %cst_80 = arith.constant 0.000000e+00 : f32
      %235 = vector.broadcast %cst_80 : f32 to vector<8x128xf32>
      %236 = arith.select %232, %227, %235 : vector<8x128xi1>, vector<8x128xf32>
      %c8_i32_81 = arith.constant 8 : i32
      %237 = arith.muli %228, %c8_i32_81 : i32
      %238 = tpu.assume_multiple %237, 8 : i32
      %239 = arith.index_cast %238 : i32 to index
      %c0_82 = arith.constant 0 : index
      %240 = vector.load %arg8[%239, %c0_82] : memref<128x128xf32, #tpu.memory_space<vmem>>, vector<8x128xf32>
      tpu.vector_store %arg8[%239, %c0_82], %236 {strides = array<i32>} : memref<128x128xf32, #tpu.memory_space<vmem>>, vector<8x128xf32>,
      %c4_i32 = arith.constant 4 : i32
      %c8_i32_83 = arith.constant 8 : i32
      %241 = arith.muli %c4_i32, %c8_i32_83 : i32
      %242 = tpu.assume_multiple %241, 8 : i32
      %243 = arith.index_cast %242 : i32 to index
      %c0_84 = arith.constant 0 : index
      %244 = vector.load %arg9[%243, %c0_84] : memref<128x512xf32, #tpu.memory_space<vmem>>, vector<8x512xf32>
      %245 = arith.truncf %233 : vector<8x128xf32> to vector<8x128xbf16>
      %cst_85 = arith.constant dense<0.000000e+00> : vector<8x512xf32>
      %246 = tpu.matmul %245, %9, %cst_85 {dimension_numbers = #tpu.dot_dimension_numbers<[1], [0], [0], [1], [0, 0, 1, 1], [], []>} : vector<8x128xbf16>, vector<128x512xbf16>, vector<8x512xf32> -> vector<8x512xf32>
      %247 = arith.addf %244, %246 : vector<8x512xf32>
      %248 = arith.truncf %247 : vector<8x512xf32> to vector<8x512xbf16>
      %249 = vector.extract_strided_slice %248 {offsets = [0, 0], sizes = [8, 128], strides = [1, 1]} : vector<8x512xbf16> to vector<8x128xbf16>
      %250 = arith.negf %249 : vector<8x128xbf16>
      %251 = math.exp %250 : vector<8x128xbf16>
      %cst_86 = arith.constant 1.000000e+00 : bf16
      %252 = vector.broadcast %cst_86 : bf16 to vector<8x128xbf16>
      %253 = arith.addf %252, %251 : vector<8x128xbf16>
      %254 = arith.divf %252, %253 : vector<8x128xbf16>
      %255 = arith.extf %254 : vector<8x128xbf16> to vector<8x128xf32>
      %256 = vector.extract_strided_slice %248 {offsets = [0, 128], sizes = [8, 128], strides = [1, 1]} : vector<8x512xbf16> to vector<8x128xbf16>
      %257 = arith.negf %256 : vector<8x128xbf16>
      %258 = math.exp %257 : vector<8x128xbf16>
      %cst_87 = arith.constant 1.000000e+00 : bf16
      %259 = vector.broadcast %cst_87 : bf16 to vector<8x128xbf16>
      %260 = arith.addf %259, %258 : vector<8x128xbf16>
      %261 = arith.divf %259, %260 : vector<8x128xbf16>
      %262 = arith.extf %261 : vector<8x128xbf16> to vector<8x128xf32>
      %263 = vector.extract_strided_slice %248 {offsets = [0, 256], sizes = [8, 128], strides = [1, 1]} : vector<8x512xbf16> to vector<8x128xbf16>
      %264 = math.tanh %263 : vector<8x128xbf16>
      %265 = arith.extf %264 : vector<8x128xbf16> to vector<8x128xf32>
      %266 = vector.extract_strided_slice %248 {offsets = [0, 384], sizes = [8, 128], strides = [1, 1]} : vector<8x512xbf16> to vector<8x128xbf16>
      %267 = arith.negf %266 : vector<8x128xbf16>
      %268 = math.exp %267 : vector<8x128xbf16>
      %cst_88 = arith.constant 1.000000e+00 : bf16
      %269 = vector.broadcast %cst_88 : bf16 to vector<8x128xbf16>
      %270 = arith.addf %269, %268 : vector<8x128xbf16>
      %271 = arith.divf %269, %270 : vector<8x128xbf16>
      %272 = arith.extf %271 : vector<8x128xbf16> to vector<8x128xf32>
      %273 = arith.mulf %262, %234 : vector<8x128xf32>
      %274 = arith.mulf %255, %265 : vector<8x128xf32>
      %275 = arith.addf %273, %274 : vector<8x128xf32>
      %276 = math.tanh %275 : vector<8x128xf32>
      %277 = arith.mulf %272, %276 : vector<8x128xf32>
      %c0_i32_89 = arith.constant 0 : i32
      %278 = arith.addi %c0_i32_89, %c4_i32 : i32
      %279 = vector.broadcast %278 : i32 to vector<8x1xi32>
      %280 = arith.cmpi slt, %279, %0 : vector<8x1xi32>
      %281 = vector.shape_cast %280 : vector<8x1xi1> to vector<8x1xi1>
      %282 = vector.broadcast %281 : vector<8x1xi1> to vector<8x128xi1>
      %283 = arith.select %282, %277, %233 : vector<8x128xi1>, vector<8x128xf32>
      %284 = arith.select %282, %275, %234 : vector<8x128xi1>, vector<8x128xf32>
      %cst_90 = arith.constant 0.000000e+00 : f32
      %285 = vector.broadcast %cst_90 : f32 to vector<8x128xf32>
      %286 = arith.select %282, %277, %285 : vector<8x128xi1>, vector<8x128xf32>
      %c8_i32_91 = arith.constant 8 : i32
      %287 = arith.muli %278, %c8_i32_91 : i32
      %288 = tpu.assume_multiple %287, 8 : i32
      %289 = arith.index_cast %288 : i32 to index
      %c0_92 = arith.constant 0 : index
      %290 = vector.load %arg8[%289, %c0_92] : memref<128x128xf32, #tpu.memory_space<vmem>>, vector<8x128xf32>
      tpu.vector_store %arg8[%289, %c0_92], %286 {strides = array<i32>} : memref<128x128xf32, #tpu.memory_space<vmem>>, vector<8x128xf32>,
      %c5_i32 = arith.constant 5 : i32
      %c8_i32_93 = arith.constant 8 : i32
      %291 = arith.muli %c5_i32, %c8_i32_93 : i32
      %292 = tpu.assume_multiple %291, 8 : i32
      %293 = arith.index_cast %292 : i32 to index
      %c0_94 = arith.constant 0 : index
      %294 = vector.load %arg9[%293, %c0_94] : memref<128x512xf32, #tpu.memory_space<vmem>>, vector<8x512xf32>
      %295 = arith.truncf %283 : vector<8x128xf32> to vector<8x128xbf16>
      %cst_95 = arith.constant dense<0.000000e+00> : vector<8x512xf32>
      %296 = tpu.matmul %295, %9, %cst_95 {dimension_numbers = #tpu.dot_dimension_numbers<[1], [0], [0], [1], [0, 0, 1, 1], [], []>} : vector<8x128xbf16>, vector<128x512xbf16>, vector<8x512xf32> -> vector<8x512xf32>
      %297 = arith.addf %294, %296 : vector<8x512xf32>
      %298 = arith.truncf %297 : vector<8x512xf32> to vector<8x512xbf16>
      %299 = vector.extract_strided_slice %298 {offsets = [0, 0], sizes = [8, 128], strides = [1, 1]} : vector<8x512xbf16> to vector<8x128xbf16>
      %300 = arith.negf %299 : vector<8x128xbf16>
      %301 = math.exp %300 : vector<8x128xbf16>
      %cst_96 = arith.constant 1.000000e+00 : bf16
      %302 = vector.broadcast %cst_96 : bf16 to vector<8x128xbf16>
      %303 = arith.addf %302, %301 : vector<8x128xbf16>
      %304 = arith.divf %302, %303 : vector<8x128xbf16>
      %305 = arith.extf %304 : vector<8x128xbf16> to vector<8x128xf32>
      %306 = vector.extract_strided_slice %298 {offsets = [0, 128], sizes = [8, 128], strides = [1, 1]} : vector<8x512xbf16> to vector<8x128xbf16>
      %307 = arith.negf %306 : vector<8x128xbf16>
      %308 = math.exp %307 : vector<8x128xbf16>
      %cst_97 = arith.constant 1.000000e+00 : bf16
      %309 = vector.broadcast %cst_97 : bf16 to vector<8x128xbf16>
      %310 = arith.addf %309, %308 : vector<8x128xbf16>
      %311 = arith.divf %309, %310 : vector<8x128xbf16>
      %312 = arith.extf %311 : vector<8x128xbf16> to vector<8x128xf32>
      %313 = vector.extract_strided_slice %298 {offsets = [0, 256], sizes = [8, 128], strides = [1, 1]} : vector<8x512xbf16> to vector<8x128xbf16>
      %314 = math.tanh %313 : vector<8x128xbf16>
      %315 = arith.extf %314 : vector<8x128xbf16> to vector<8x128xf32>
      %316 = vector.extract_strided_slice %298 {offsets = [0, 384], sizes = [8, 128], strides = [1, 1]} : vector<8x512xbf16> to vector<8x128xbf16>
      %317 = arith.negf %316 : vector<8x128xbf16>
      %318 = math.exp %317 : vector<8x128xbf16>
      %cst_98 = arith.constant 1.000000e+00 : bf16
      %319 = vector.broadcast %cst_98 : bf16 to vector<8x128xbf16>
      %320 = arith.addf %319, %318 : vector<8x128xbf16>
      %321 = arith.divf %319, %320 : vector<8x128xbf16>
      %322 = arith.extf %321 : vector<8x128xbf16> to vector<8x128xf32>
      %323 = arith.mulf %312, %284 : vector<8x128xf32>
      %324 = arith.mulf %305, %315 : vector<8x128xf32>
      %325 = arith.addf %323, %324 : vector<8x128xf32>
      %326 = math.tanh %325 : vector<8x128xf32>
      %327 = arith.mulf %322, %326 : vector<8x128xf32>
      %c0_i32_99 = arith.constant 0 : i32
      %328 = arith.addi %c0_i32_99, %c5_i32 : i32
      %329 = vector.broadcast %328 : i32 to vector<8x1xi32>
      %330 = arith.cmpi slt, %329, %0 : vector<8x1xi32>
      %331 = vector.shape_cast %330 : vector<8x1xi1> to vector<8x1xi1>
      %332 = vector.broadcast %331 : vector<8x1xi1> to vector<8x128xi1>
      %333 = arith.select %332, %327, %283 : vector<8x128xi1>, vector<8x128xf32>
      %334 = arith.select %332, %325, %284 : vector<8x128xi1>, vector<8x128xf32>
      %cst_100 = arith.constant 0.000000e+00 : f32
      %335 = vector.broadcast %cst_100 : f32 to vector<8x128xf32>
      %336 = arith.select %332, %327, %335 : vector<8x128xi1>, vector<8x128xf32>
      %c8_i32_101 = arith.constant 8 : i32
      %337 = arith.muli %328, %c8_i32_101 : i32
      %338 = tpu.assume_multiple %337, 8 : i32
      %339 = arith.index_cast %338 : i32 to index
      %c0_102 = arith.constant 0 : index
      %340 = vector.load %arg8[%339, %c0_102] : memref<128x128xf32, #tpu.memory_space<vmem>>, vector<8x128xf32>
      tpu.vector_store %arg8[%339, %c0_102], %336 {strides = array<i32>} : memref<128x128xf32, #tpu.memory_space<vmem>>, vector<8x128xf32>,
      %c6_i32 = arith.constant 6 : i32
      %c8_i32_103 = arith.constant 8 : i32
      %341 = arith.muli %c6_i32, %c8_i32_103 : i32
      %342 = tpu.assume_multiple %341, 8 : i32
      %343 = arith.index_cast %342 : i32 to index
      %c0_104 = arith.constant 0 : index
      %344 = vector.load %arg9[%343, %c0_104] : memref<128x512xf32, #tpu.memory_space<vmem>>, vector<8x512xf32>
      %345 = arith.truncf %333 : vector<8x128xf32> to vector<8x128xbf16>
      %cst_105 = arith.constant dense<0.000000e+00> : vector<8x512xf32>
      %346 = tpu.matmul %345, %9, %cst_105 {dimension_numbers = #tpu.dot_dimension_numbers<[1], [0], [0], [1], [0, 0, 1, 1], [], []>} : vector<8x128xbf16>, vector<128x512xbf16>, vector<8x512xf32> -> vector<8x512xf32>
      %347 = arith.addf %344, %346 : vector<8x512xf32>
      %348 = arith.truncf %347 : vector<8x512xf32> to vector<8x512xbf16>
      %349 = vector.extract_strided_slice %348 {offsets = [0, 0], sizes = [8, 128], strides = [1, 1]} : vector<8x512xbf16> to vector<8x128xbf16>
      %350 = arith.negf %349 : vector<8x128xbf16>
      %351 = math.exp %350 : vector<8x128xbf16>
      %cst_106 = arith.constant 1.000000e+00 : bf16
      %352 = vector.broadcast %cst_106 : bf16 to vector<8x128xbf16>
      %353 = arith.addf %352, %351 : vector<8x128xbf16>
      %354 = arith.divf %352, %353 : vector<8x128xbf16>
      %355 = arith.extf %354 : vector<8x128xbf16> to vector<8x128xf32>
      %356 = vector.extract_strided_slice %348 {offsets = [0, 128], sizes = [8, 128], strides = [1, 1]} : vector<8x512xbf16> to vector<8x128xbf16>
      %357 = arith.negf %356 : vector<8x128xbf16>
      %358 = math.exp %357 : vector<8x128xbf16>
      %cst_107 = arith.constant 1.000000e+00 : bf16
      %359 = vector.broadcast %cst_107 : bf16 to vector<8x128xbf16>
      %360 = arith.addf %359, %358 : vector<8x128xbf16>
      %361 = arith.divf %359, %360 : vector<8x128xbf16>
      %362 = arith.extf %361 : vector<8x128xbf16> to vector<8x128xf32>
      %363 = vector.extract_strided_slice %348 {offsets = [0, 256], sizes = [8, 128], strides = [1, 1]} : vector<8x512xbf16> to vector<8x128xbf16>
      %364 = math.tanh %363 : vector<8x128xbf16>
      %365 = arith.extf %364 : vector<8x128xbf16> to vector<8x128xf32>
      %366 = vector.extract_strided_slice %348 {offsets = [0, 384], sizes = [8, 128], strides = [1, 1]} : vector<8x512xbf16> to vector<8x128xbf16>
      %367 = arith.negf %366 : vector<8x128xbf16>
      %368 = math.exp %367 : vector<8x128xbf16>
      %cst_108 = arith.constant 1.000000e+00 : bf16
      %369 = vector.broadcast %cst_108 : bf16 to vector<8x128xbf16>
      %370 = arith.addf %369, %368 : vector<8x128xbf16>
      %371 = arith.divf %369, %370 : vector<8x128xbf16>
      %372 = arith.extf %371 : vector<8x128xbf16> to vector<8x128xf32>
      %373 = arith.mulf %362, %334 : vector<8x128xf32>
      %374 = arith.mulf %355, %365 : vector<8x128xf32>
      %375 = arith.addf %373, %374 : vector<8x128xf32>
      %376 = math.tanh %375 : vector<8x128xf32>
      %377 = arith.mulf %372, %376 : vector<8x128xf32>
      %c0_i32_109 = arith.constant 0 : i32
      %378 = arith.addi %c0_i32_109, %c6_i32 : i32
      %379 = vector.broadcast %378 : i32 to vector<8x1xi32>
      %380 = arith.cmpi slt, %379, %0 : vector<8x1xi32>
      %381 = vector.shape_cast %380 : vector<8x1xi1> to vector<8x1xi1>
      %382 = vector.broadcast %381 : vector<8x1xi1> to vector<8x128xi1>
      %383 = arith.select %382, %377, %333 : vector<8x128xi1>, vector<8x128xf32>
      %384 = arith.select %382, %375, %334 : vector<8x128xi1>, vector<8x128xf32>
      %cst_110 = arith.constant 0.000000e+00 : f32
      %385 = vector.broadcast %cst_110 : f32 to vector<8x128xf32>
      %386 = arith.select %382, %377, %385 : vector<8x128xi1>, vector<8x128xf32>
      %c8_i32_111 = arith.constant 8 : i32
      %387 = arith.muli %378, %c8_i32_111 : i32
      %388 = tpu.assume_multiple %387, 8 : i32
      %389 = arith.index_cast %388 : i32 to index
      %c0_112 = arith.constant 0 : index
      %390 = vector.load %arg8[%389, %c0_112] : memref<128x128xf32, #tpu.memory_space<vmem>>, vector<8x128xf32>
      tpu.vector_store %arg8[%389, %c0_112], %386 {strides = array<i32>} : memref<128x128xf32, #tpu.memory_space<vmem>>, vector<8x128xf32>,
      %c7_i32 = arith.constant 7 : i32
      %c8_i32_113 = arith.constant 8 : i32
      %391 = arith.muli %c7_i32, %c8_i32_113 : i32
      %392 = tpu.assume_multiple %391, 8 : i32
      %393 = arith.index_cast %392 : i32 to index
      %c0_114 = arith.constant 0 : index
      %394 = vector.load %arg9[%393, %c0_114] : memref<128x512xf32, #tpu.memory_space<vmem>>, vector<8x512xf32>
      %395 = arith.truncf %383 : vector<8x128xf32> to vector<8x128xbf16>
      %cst_115 = arith.constant dense<0.000000e+00> : vector<8x512xf32>
      %396 = tpu.matmul %395, %9, %cst_115 {dimension_numbers = #tpu.dot_dimension_numbers<[1], [0], [0], [1], [0, 0, 1, 1], [], []>} : vector<8x128xbf16>, vector<128x512xbf16>, vector<8x512xf32> -> vector<8x512xf32>
      %397 = arith.addf %394, %396 : vector<8x512xf32>
      %398 = arith.truncf %397 : vector<8x512xf32> to vector<8x512xbf16>
      %399 = vector.extract_strided_slice %398 {offsets = [0, 0], sizes = [8, 128], strides = [1, 1]} : vector<8x512xbf16> to vector<8x128xbf16>
      %400 = arith.negf %399 : vector<8x128xbf16>
      %401 = math.exp %400 : vector<8x128xbf16>
      %cst_116 = arith.constant 1.000000e+00 : bf16
      %402 = vector.broadcast %cst_116 : bf16 to vector<8x128xbf16>
      %403 = arith.addf %402, %401 : vector<8x128xbf16>
      %404 = arith.divf %402, %403 : vector<8x128xbf16>
      %405 = arith.extf %404 : vector<8x128xbf16> to vector<8x128xf32>
      %406 = vector.extract_strided_slice %398 {offsets = [0, 128], sizes = [8, 128], strides = [1, 1]} : vector<8x512xbf16> to vector<8x128xbf16>
      %407 = arith.negf %406 : vector<8x128xbf16>
      %408 = math.exp %407 : vector<8x128xbf16>
      %cst_117 = arith.constant 1.000000e+00 : bf16
      %409 = vector.broadcast %cst_117 : bf16 to vector<8x128xbf16>
      %410 = arith.addf %409, %408 : vector<8x128xbf16>
      %411 = arith.divf %409, %410 : vector<8x128xbf16>
      %412 = arith.extf %411 : vector<8x128xbf16> to vector<8x128xf32>
      %413 = vector.extract_strided_slice %398 {offsets = [0, 256], sizes = [8, 128], strides = [1, 1]} : vector<8x512xbf16> to vector<8x128xbf16>
      %414 = math.tanh %413 : vector<8x128xbf16>
      %415 = arith.extf %414 : vector<8x128xbf16> to vector<8x128xf32>
      %416 = vector.extract_strided_slice %398 {offsets = [0, 384], sizes = [8, 128], strides = [1, 1]} : vector<8x512xbf16> to vector<8x128xbf16>
      %417 = arith.negf %416 : vector<8x128xbf16>
      %418 = math.exp %417 : vector<8x128xbf16>
      %cst_118 = arith.constant 1.000000e+00 : bf16
      %419 = vector.broadcast %cst_118 : bf16 to vector<8x128xbf16>
      %420 = arith.addf %419, %418 : vector<8x128xbf16>
      %421 = arith.divf %419, %420 : vector<8x128xbf16>
      %422 = arith.extf %421 : vector<8x128xbf16> to vector<8x128xf32>
      %423 = arith.mulf %412, %384 : vector<8x128xf32>
      %424 = arith.mulf %405, %415 : vector<8x128xf32>
      %425 = arith.addf %423, %424 : vector<8x128xf32>
      %426 = math.tanh %425 : vector<8x128xf32>
      %427 = arith.mulf %422, %426 : vector<8x128xf32>
      %c0_i32_119 = arith.constant 0 : i32
      %428 = arith.addi %c0_i32_119, %c7_i32 : i32
      %429 = vector.broadcast %428 : i32 to vector<8x1xi32>
      %430 = arith.cmpi slt, %429, %0 : vector<8x1xi32>
      %431 = vector.shape_cast %430 : vector<8x1xi1> to vector<8x1xi1>
      %432 = vector.broadcast %431 : vector<8x1xi1> to vector<8x128xi1>
      %433 = arith.select %432, %427, %383 : vector<8x128xi1>, vector<8x128xf32>
      %434 = arith.select %432, %425, %384 : vector<8x128xi1>, vector<8x128xf32>
      %cst_120 = arith.constant 0.000000e+00 : f32
      %435 = vector.broadcast %cst_120 : f32 to vector<8x128xf32>
      %436 = arith.select %432, %427, %435 : vector<8x128xi1>, vector<8x128xf32>
      %c8_i32_121 = arith.constant 8 : i32
      %437 = arith.muli %428, %c8_i32_121 : i32
      %438 = tpu.assume_multiple %437, 8 : i32
      %439 = arith.index_cast %438 : i32 to index
      %c0_122 = arith.constant 0 : index
      %440 = vector.load %arg8[%439, %c0_122] : memref<128x128xf32, #tpu.memory_space<vmem>>, vector<8x128xf32>
      tpu.vector_store %arg8[%439, %c0_122], %436 {strides = array<i32>} : memref<128x128xf32, #tpu.memory_space<vmem>>, vector<8x128xf32>,
      %c8_i32_123 = arith.constant 8 : i32
      %c8_i32_124 = arith.constant 8 : i32
      %441 = arith.muli %c8_i32_123, %c8_i32_124 : i32
      %442 = tpu.assume_multiple %441, 8 : i32
      %443 = arith.index_cast %442 : i32 to index
      %c0_125 = arith.constant 0 : index
      %444 = vector.load %arg9[%443, %c0_125] : memref<128x512xf32, #tpu.memory_space<vmem>>, vector<8x512xf32>
      %445 = arith.truncf %433 : vector<8x128xf32> to vector<8x128xbf16>
      %cst_126 = arith.constant dense<0.000000e+00> : vector<8x512xf32>
      %446 = tpu.matmul %445, %9, %cst_126 {dimension_numbers = #tpu.dot_dimension_numbers<[1], [0], [0], [1], [0, 0, 1, 1], [], []>} : vector<8x128xbf16>, vector<128x512xbf16>, vector<8x512xf32> -> vector<8x512xf32>
      %447 = arith.addf %444, %446 : vector<8x512xf32>
      %448 = arith.truncf %447 : vector<8x512xf32> to vector<8x512xbf16>
      %449 = vector.extract_strided_slice %448 {offsets = [0, 0], sizes = [8, 128], strides = [1, 1]} : vector<8x512xbf16> to vector<8x128xbf16>
      %450 = arith.negf %449 : vector<8x128xbf16>
      %451 = math.exp %450 : vector<8x128xbf16>
      %cst_127 = arith.constant 1.000000e+00 : bf16
      %452 = vector.broadcast %cst_127 : bf16 to vector<8x128xbf16>
      %453 = arith.addf %452, %451 : vector<8x128xbf16>
      %454 = arith.divf %452, %453 : vector<8x128xbf16>
      %455 = arith.extf %454 : vector<8x128xbf16> to vector<8x128xf32>
      %456 = vector.extract_strided_slice %448 {offsets = [0, 128], sizes = [8, 128], strides = [1, 1]} : vector<8x512xbf16> to vector<8x128xbf16>
      %457 = arith.negf %456 : vector<8x128xbf16>
      %458 = math.exp %457 : vector<8x128xbf16>
      %cst_128 = arith.constant 1.000000e+00 : bf16
      %459 = vector.broadcast %cst_128 : bf16 to vector<8x128xbf16>
      %460 = arith.addf %459, %458 : vector<8x128xbf16>
      %461 = arith.divf %459, %460 : vector<8x128xbf16>
      %462 = arith.extf %461 : vector<8x128xbf16> to vector<8x128xf32>
      %463 = vector.extract_strided_slice %448 {offsets = [0, 256], sizes = [8, 128], strides = [1, 1]} : vector<8x512xbf16> to vector<8x128xbf16>
      %464 = math.tanh %463 : vector<8x128xbf16>
      %465 = arith.extf %464 : vector<8x128xbf16> to vector<8x128xf32>
      %466 = vector.extract_strided_slice %448 {offsets = [0, 384], sizes = [8, 128], strides = [1, 1]} : vector<8x512xbf16> to vector<8x128xbf16>
      %467 = arith.negf %466 : vector<8x128xbf16>
      %468 = math.exp %467 : vector<8x128xbf16>
      %cst_129 = arith.constant 1.000000e+00 : bf16
      %469 = vector.broadcast %cst_129 : bf16 to vector<8x128xbf16>
      %470 = arith.addf %469, %468 : vector<8x128xbf16>
      %471 = arith.divf %469, %470 : vector<8x128xbf16>
      %472 = arith.extf %471 : vector<8x128xbf16> to vector<8x128xf32>
      %473 = arith.mulf %462, %434 : vector<8x128xf32>
      %474 = arith.mulf %455, %465 : vector<8x128xf32>
      %475 = arith.addf %473, %474 : vector<8x128xf32>
      %476 = math.tanh %475 : vector<8x128xf32>
      %477 = arith.mulf %472, %476 : vector<8x128xf32>
      %c0_i32_130 = arith.constant 0 : i32
      %478 = arith.addi %c0_i32_130, %c8_i32_123 : i32
      %479 = vector.broadcast %478 : i32 to vector<8x1xi32>
      %480 = arith.cmpi slt, %479, %0 : vector<8x1xi32>
      %481 = vector.shape_cast %480 : vector<8x1xi1> to vector<8x1xi1>
      %482 = vector.broadcast %481 : vector<8x1xi1> to vector<8x128xi1>
      %483 = arith.select %482, %477, %433 : vector<8x128xi1>, vector<8x128xf32>
      %484 = arith.select %482, %475, %434 : vector<8x128xi1>, vector<8x128xf32>
      %cst_131 = arith.constant 0.000000e+00 : f32
      %485 = vector.broadcast %cst_131 : f32 to vector<8x128xf32>
      %486 = arith.select %482, %477, %485 : vector<8x128xi1>, vector<8x128xf32>
      %c8_i32_132 = arith.constant 8 : i32
      %487 = arith.muli %478, %c8_i32_132 : i32
      %488 = tpu.assume_multiple %487, 8 : i32
      %489 = arith.index_cast %488 : i32 to index
      %c0_133 = arith.constant 0 : index
      %490 = vector.load %arg8[%489, %c0_133] : memref<128x128xf32, #tpu.memory_space<vmem>>, vector<8x128xf32>
      tpu.vector_store %arg8[%489, %c0_133], %486 {strides = array<i32>} : memref<128x128xf32, #tpu.memory_space<vmem>>, vector<8x128xf32>,
      %c9_i32 = arith.constant 9 : i32
      %c8_i32_134 = arith.constant 8 : i32
      %491 = arith.muli %c9_i32, %c8_i32_134 : i32
      %492 = tpu.assume_multiple %491, 8 : i32
      %493 = arith.index_cast %492 : i32 to index
      %c0_135 = arith.constant 0 : index
      %494 = vector.load %arg9[%493, %c0_135] : memref<128x512xf32, #tpu.memory_space<vmem>>, vector<8x512xf32>
      %495 = arith.truncf %483 : vector<8x128xf32> to vector<8x128xbf16>
      %cst_136 = arith.constant dense<0.000000e+00> : vector<8x512xf32>
      %496 = tpu.matmul %495, %9, %cst_136 {dimension_numbers = #tpu.dot_dimension_numbers<[1], [0], [0], [1], [0, 0, 1, 1], [], []>} : vector<8x128xbf16>, vector<128x512xbf16>, vector<8x512xf32> -> vector<8x512xf32>
      %497 = arith.addf %494, %496 : vector<8x512xf32>
      %498 = arith.truncf %497 : vector<8x512xf32> to vector<8x512xbf16>
      %499 = vector.extract_strided_slice %498 {offsets = [0, 0], sizes = [8, 128], strides = [1, 1]} : vector<8x512xbf16> to vector<8x128xbf16>
      %500 = arith.negf %499 : vector<8x128xbf16>
      %501 = math.exp %500 : vector<8x128xbf16>
      %cst_137 = arith.constant 1.000000e+00 : bf16
      %502 = vector.broadcast %cst_137 : bf16 to vector<8x128xbf16>
      %503 = arith.addf %502, %501 : vector<8x128xbf16>
      %504 = arith.divf %502, %503 : vector<8x128xbf16>
      %505 = arith.extf %504 : vector<8x128xbf16> to vector<8x128xf32>
      %506 = vector.extract_strided_slice %498 {offsets = [0, 128], sizes = [8, 128], strides = [1, 1]} : vector<8x512xbf16> to vector<8x128xbf16>
      %507 = arith.negf %506 : vector<8x128xbf16>
      %508 = math.exp %507 : vector<8x128xbf16>
      %cst_138 = arith.constant 1.000000e+00 : bf16
      %509 = vector.broadcast %cst_138 : bf16 to vector<8x128xbf16>
      %510 = arith.addf %509, %508 : vector<8x128xbf16>
      %511 = arith.divf %509, %510 : vector<8x128xbf16>
      %512 = arith.extf %511 : vector<8x128xbf16> to vector<8x128xf32>
      %513 = vector.extract_strided_slice %498 {offsets = [0, 256], sizes = [8, 128], strides = [1, 1]} : vector<8x512xbf16> to vector<8x128xbf16>
      %514 = math.tanh %513 : vector<8x128xbf16>
      %515 = arith.extf %514 : vector<8x128xbf16> to vector<8x128xf32>
      %516 = vector.extract_strided_slice %498 {offsets = [0, 384], sizes = [8, 128], strides = [1, 1]} : vector<8x512xbf16> to vector<8x128xbf16>
      %517 = arith.negf %516 : vector<8x128xbf16>
      %518 = math.exp %517 : vector<8x128xbf16>
      %cst_139 = arith.constant 1.000000e+00 : bf16
      %519 = vector.broadcast %cst_139 : bf16 to vector<8x128xbf16>
      %520 = arith.addf %519, %518 : vector<8x128xbf16>
      %521 = arith.divf %519, %520 : vector<8x128xbf16>
      %522 = arith.extf %521 : vector<8x128xbf16> to vector<8x128xf32>
      %523 = arith.mulf %512, %484 : vector<8x128xf32>
      %524 = arith.mulf %505, %515 : vector<8x128xf32>
      %525 = arith.addf %523, %524 : vector<8x128xf32>
      %526 = math.tanh %525 : vector<8x128xf32>
      %527 = arith.mulf %522, %526 : vector<8x128xf32>
      %c0_i32_140 = arith.constant 0 : i32
      %528 = arith.addi %c0_i32_140, %c9_i32 : i32
      %529 = vector.broadcast %528 : i32 to vector<8x1xi32>
      %530 = arith.cmpi slt, %529, %0 : vector<8x1xi32>
      %531 = vector.shape_cast %530 : vector<8x1xi1> to vector<8x1xi1>
      %532 = vector.broadcast %531 : vector<8x1xi1> to vector<8x128xi1>
      %533 = arith.select %532, %527, %483 : vector<8x128xi1>, vector<8x128xf32>
      %534 = arith.select %532, %525, %484 : vector<8x128xi1>, vector<8x128xf32>
      %cst_141 = arith.constant 0.000000e+00 : f32
      %535 = vector.broadcast %cst_141 : f32 to vector<8x128xf32>
      %536 = arith.select %532, %527, %535 : vector<8x128xi1>, vector<8x128xf32>
      %c8_i32_142 = arith.constant 8 : i32
      %537 = arith.muli %528, %c8_i32_142 : i32
      %538 = tpu.assume_multiple %537, 8 : i32
      %539 = arith.index_cast %538 : i32 to index
      %c0_143 = arith.constant 0 : index
      %540 = vector.load %arg8[%539, %c0_143] : memref<128x128xf32, #tpu.memory_space<vmem>>, vector<8x128xf32>
      tpu.vector_store %arg8[%539, %c0_143], %536 {strides = array<i32>} : memref<128x128xf32, #tpu.memory_space<vmem>>, vector<8x128xf32>,
      %c10_i32 = arith.constant 10 : i32
      %c8_i32_144 = arith.constant 8 : i32
      %541 = arith.muli %c10_i32, %c8_i32_144 : i32
      %542 = tpu.assume_multiple %541, 8 : i32
      %543 = arith.index_cast %542 : i32 to index
      %c0_145 = arith.constant 0 : index
      %544 = vector.load %arg9[%543, %c0_145] : memref<128x512xf32, #tpu.memory_space<vmem>>, vector<8x512xf32>
      %545 = arith.truncf %533 : vector<8x128xf32> to vector<8x128xbf16>
      %cst_146 = arith.constant dense<0.000000e+00> : vector<8x512xf32>
      %546 = tpu.matmul %545, %9, %cst_146 {dimension_numbers = #tpu.dot_dimension_numbers<[1], [0], [0], [1], [0, 0, 1, 1], [], []>} : vector<8x128xbf16>, vector<128x512xbf16>, vector<8x512xf32> -> vector<8x512xf32>
      %547 = arith.addf %544, %546 : vector<8x512xf32>
      %548 = arith.truncf %547 : vector<8x512xf32> to vector<8x512xbf16>
      %549 = vector.extract_strided_slice %548 {offsets = [0, 0], sizes = [8, 128], strides = [1, 1]} : vector<8x512xbf16> to vector<8x128xbf16>
      %550 = arith.negf %549 : vector<8x128xbf16>
      %551 = math.exp %550 : vector<8x128xbf16>
      %cst_147 = arith.constant 1.000000e+00 : bf16
      %552 = vector.broadcast %cst_147 : bf16 to vector<8x128xbf16>
      %553 = arith.addf %552, %551 : vector<8x128xbf16>
      %554 = arith.divf %552, %553 : vector<8x128xbf16>
      %555 = arith.extf %554 : vector<8x128xbf16> to vector<8x128xf32>
      %556 = vector.extract_strided_slice %548 {offsets = [0, 128], sizes = [8, 128], strides = [1, 1]} : vector<8x512xbf16> to vector<8x128xbf16>
      %557 = arith.negf %556 : vector<8x128xbf16>
      %558 = math.exp %557 : vector<8x128xbf16>
      %cst_148 = arith.constant 1.000000e+00 : bf16
      %559 = vector.broadcast %cst_148 : bf16 to vector<8x128xbf16>
      %560 = arith.addf %559, %558 : vector<8x128xbf16>
      %561 = arith.divf %559, %560 : vector<8x128xbf16>
      %562 = arith.extf %561 : vector<8x128xbf16> to vector<8x128xf32>
      %563 = vector.extract_strided_slice %548 {offsets = [0, 256], sizes = [8, 128], strides = [1, 1]} : vector<8x512xbf16> to vector<8x128xbf16>
      %564 = math.tanh %563 : vector<8x128xbf16>
      %565 = arith.extf %564 : vector<8x128xbf16> to vector<8x128xf32>
      %566 = vector.extract_strided_slice %548 {offsets = [0, 384], sizes = [8, 128], strides = [1, 1]} : vector<8x512xbf16> to vector<8x128xbf16>
      %567 = arith.negf %566 : vector<8x128xbf16>
      %568 = math.exp %567 : vector<8x128xbf16>
      %cst_149 = arith.constant 1.000000e+00 : bf16
      %569 = vector.broadcast %cst_149 : bf16 to vector<8x128xbf16>
      %570 = arith.addf %569, %568 : vector<8x128xbf16>
      %571 = arith.divf %569, %570 : vector<8x128xbf16>
      %572 = arith.extf %571 : vector<8x128xbf16> to vector<8x128xf32>
      %573 = arith.mulf %562, %534 : vector<8x128xf32>
      %574 = arith.mulf %555, %565 : vector<8x128xf32>
      %575 = arith.addf %573, %574 : vector<8x128xf32>
      %576 = math.tanh %575 : vector<8x128xf32>
      %577 = arith.mulf %572, %576 : vector<8x128xf32>
      %c0_i32_150 = arith.constant 0 : i32
      %578 = arith.addi %c0_i32_150, %c10_i32 : i32
      %579 = vector.broadcast %578 : i32 to vector<8x1xi32>
      %580 = arith.cmpi slt, %579, %0 : vector<8x1xi32>
      %581 = vector.shape_cast %580 : vector<8x1xi1> to vector<8x1xi1>
      %582 = vector.broadcast %581 : vector<8x1xi1> to vector<8x128xi1>
      %583 = arith.select %582, %577, %533 : vector<8x128xi1>, vector<8x128xf32>
      %584 = arith.select %582, %575, %534 : vector<8x128xi1>, vector<8x128xf32>
      %cst_151 = arith.constant 0.000000e+00 : f32
      %585 = vector.broadcast %cst_151 : f32 to vector<8x128xf32>
      %586 = arith.select %582, %577, %585 : vector<8x128xi1>, vector<8x128xf32>
      %c8_i32_152 = arith.constant 8 : i32
      %587 = arith.muli %578, %c8_i32_152 : i32
      %588 = tpu.assume_multiple %587, 8 : i32
      %589 = arith.index_cast %588 : i32 to index
      %c0_153 = arith.constant 0 : index
      %590 = vector.load %arg8[%589, %c0_153] : memref<128x128xf32, #tpu.memory_space<vmem>>, vector<8x128xf32>
      tpu.vector_store %arg8[%589, %c0_153], %586 {strides = array<i32>} : memref<128x128xf32, #tpu.memory_space<vmem>>, vector<8x128xf32>,
      %c11_i32 = arith.constant 11 : i32
      %c8_i32_154 = arith.constant 8 : i32
      %591 = arith.muli %c11_i32, %c8_i32_154 : i32
      %592 = tpu.assume_multiple %591, 8 : i32
      %593 = arith.index_cast %592 : i32 to index
      %c0_155 = arith.constant 0 : index
      %594 = vector.load %arg9[%593, %c0_155] : memref<128x512xf32, #tpu.memory_space<vmem>>, vector<8x512xf32>
      %595 = arith.truncf %583 : vector<8x128xf32> to vector<8x128xbf16>
      %cst_156 = arith.constant dense<0.000000e+00> : vector<8x512xf32>
      %596 = tpu.matmul %595, %9, %cst_156 {dimension_numbers = #tpu.dot_dimension_numbers<[1], [0], [0], [1], [0, 0, 1, 1], [], []>} : vector<8x128xbf16>, vector<128x512xbf16>, vector<8x512xf32> -> vector<8x512xf32>
      %597 = arith.addf %594, %596 : vector<8x512xf32>
      %598 = arith.truncf %597 : vector<8x512xf32> to vector<8x512xbf16>
      %599 = vector.extract_strided_slice %598 {offsets = [0, 0], sizes = [8, 128], strides = [1, 1]} : vector<8x512xbf16> to vector<8x128xbf16>
      %600 = arith.negf %599 : vector<8x128xbf16>
      %601 = math.exp %600 : vector<8x128xbf16>
      %cst_157 = arith.constant 1.000000e+00 : bf16
      %602 = vector.broadcast %cst_157 : bf16 to vector<8x128xbf16>
      %603 = arith.addf %602, %601 : vector<8x128xbf16>
      %604 = arith.divf %602, %603 : vector<8x128xbf16>
      %605 = arith.extf %604 : vector<8x128xbf16> to vector<8x128xf32>
      %606 = vector.extract_strided_slice %598 {offsets = [0, 128], sizes = [8, 128], strides = [1, 1]} : vector<8x512xbf16> to vector<8x128xbf16>
      %607 = arith.negf %606 : vector<8x128xbf16>
      %608 = math.exp %607 : vector<8x128xbf16>
      %cst_158 = arith.constant 1.000000e+00 : bf16
      %609 = vector.broadcast %cst_158 : bf16 to vector<8x128xbf16>
      %610 = arith.addf %609, %608 : vector<8x128xbf16>
      %611 = arith.divf %609, %610 : vector<8x128xbf16>
      %612 = arith.extf %611 : vector<8x128xbf16> to vector<8x128xf32>
      %613 = vector.extract_strided_slice %598 {offsets = [0, 256], sizes = [8, 128], strides = [1, 1]} : vector<8x512xbf16> to vector<8x128xbf16>
      %614 = math.tanh %613 : vector<8x128xbf16>
      %615 = arith.extf %614 : vector<8x128xbf16> to vector<8x128xf32>
      %616 = vector.extract_strided_slice %598 {offsets = [0, 384], sizes = [8, 128], strides = [1, 1]} : vector<8x512xbf16> to vector<8x128xbf16>
      %617 = arith.negf %616 : vector<8x128xbf16>
      %618 = math.exp %617 : vector<8x128xbf16>
      %cst_159 = arith.constant 1.000000e+00 : bf16
      %619 = vector.broadcast %cst_159 : bf16 to vector<8x128xbf16>
      %620 = arith.addf %619, %618 : vector<8x128xbf16>
      %621 = arith.divf %619, %620 : vector<8x128xbf16>
      %622 = arith.extf %621 : vector<8x128xbf16> to vector<8x128xf32>
      %623 = arith.mulf %612, %584 : vector<8x128xf32>
      %624 = arith.mulf %605, %615 : vector<8x128xf32>
      %625 = arith.addf %623, %624 : vector<8x128xf32>
      %626 = math.tanh %625 : vector<8x128xf32>
      %627 = arith.mulf %622, %626 : vector<8x128xf32>
      %c0_i32_160 = arith.constant 0 : i32
      %628 = arith.addi %c0_i32_160, %c11_i32 : i32
      %629 = vector.broadcast %628 : i32 to vector<8x1xi32>
      %630 = arith.cmpi slt, %629, %0 : vector<8x1xi32>
      %631 = vector.shape_cast %630 : vector<8x1xi1> to vector<8x1xi1>
      %632 = vector.broadcast %631 : vector<8x1xi1> to vector<8x128xi1>
      %633 = arith.select %632, %627, %583 : vector<8x128xi1>, vector<8x128xf32>
      %634 = arith.select %632, %625, %584 : vector<8x128xi1>, vector<8x128xf32>
      %cst_161 = arith.constant 0.000000e+00 : f32
      %635 = vector.broadcast %cst_161 : f32 to vector<8x128xf32>
      %636 = arith.select %632, %627, %635 : vector<8x128xi1>, vector<8x128xf32>
      %c8_i32_162 = arith.constant 8 : i32
      %637 = arith.muli %628, %c8_i32_162 : i32
      %638 = tpu.assume_multiple %637, 8 : i32
      %639 = arith.index_cast %638 : i32 to index
      %c0_163 = arith.constant 0 : index
      %640 = vector.load %arg8[%639, %c0_163] : memref<128x128xf32, #tpu.memory_space<vmem>>, vector<8x128xf32>
      tpu.vector_store %arg8[%639, %c0_163], %636 {strides = array<i32>} : memref<128x128xf32, #tpu.memory_space<vmem>>, vector<8x128xf32>,
      %c12_i32 = arith.constant 12 : i32
      %c8_i32_164 = arith.constant 8 : i32
      %641 = arith.muli %c12_i32, %c8_i32_164 : i32
      %642 = tpu.assume_multiple %641, 8 : i32
      %643 = arith.index_cast %642 : i32 to index
      %c0_165 = arith.constant 0 : index
      %644 = vector.load %arg9[%643, %c0_165] : memref<128x512xf32, #tpu.memory_space<vmem>>, vector<8x512xf32>
      %645 = arith.truncf %633 : vector<8x128xf32> to vector<8x128xbf16>
      %cst_166 = arith.constant dense<0.000000e+00> : vector<8x512xf32>
      %646 = tpu.matmul %645, %9, %cst_166 {dimension_numbers = #tpu.dot_dimension_numbers<[1], [0], [0], [1], [0, 0, 1, 1], [], []>} : vector<8x128xbf16>, vector<128x512xbf16>, vector<8x512xf32> -> vector<8x512xf32>
      %647 = arith.addf %644, %646 : vector<8x512xf32>
      %648 = arith.truncf %647 : vector<8x512xf32> to vector<8x512xbf16>
      %649 = vector.extract_strided_slice %648 {offsets = [0, 0], sizes = [8, 128], strides = [1, 1]} : vector<8x512xbf16> to vector<8x128xbf16>
      %650 = arith.negf %649 : vector<8x128xbf16>
      %651 = math.exp %650 : vector<8x128xbf16>
      %cst_167 = arith.constant 1.000000e+00 : bf16
      %652 = vector.broadcast %cst_167 : bf16 to vector<8x128xbf16>
      %653 = arith.addf %652, %651 : vector<8x128xbf16>
      %654 = arith.divf %652, %653 : vector<8x128xbf16>
      %655 = arith.extf %654 : vector<8x128xbf16> to vector<8x128xf32>
      %656 = vector.extract_strided_slice %648 {offsets = [0, 128], sizes = [8, 128], strides = [1, 1]} : vector<8x512xbf16> to vector<8x128xbf16>
      %657 = arith.negf %656 : vector<8x128xbf16>
      %658 = math.exp %657 : vector<8x128xbf16>
      %cst_168 = arith.constant 1.000000e+00 : bf16
      %659 = vector.broadcast %cst_168 : bf16 to vector<8x128xbf16>
      %660 = arith.addf %659, %658 : vector<8x128xbf16>
      %661 = arith.divf %659, %660 : vector<8x128xbf16>
      %662 = arith.extf %661 : vector<8x128xbf16> to vector<8x128xf32>
      %663 = vector.extract_strided_slice %648 {offsets = [0, 256], sizes = [8, 128], strides = [1, 1]} : vector<8x512xbf16> to vector<8x128xbf16>
      %664 = math.tanh %663 : vector<8x128xbf16>
      %665 = arith.extf %664 : vector<8x128xbf16> to vector<8x128xf32>
      %666 = vector.extract_strided_slice %648 {offsets = [0, 384], sizes = [8, 128], strides = [1, 1]} : vector<8x512xbf16> to vector<8x128xbf16>
      %667 = arith.negf %666 : vector<8x128xbf16>
      %668 = math.exp %667 : vector<8x128xbf16>
      %cst_169 = arith.constant 1.000000e+00 : bf16
      %669 = vector.broadcast %cst_169 : bf16 to vector<8x128xbf16>
      %670 = arith.addf %669, %668 : vector<8x128xbf16>
      %671 = arith.divf %669, %670 : vector<8x128xbf16>
      %672 = arith.extf %671 : vector<8x128xbf16> to vector<8x128xf32>
      %673 = arith.mulf %662, %634 : vector<8x128xf32>
      %674 = arith.mulf %655, %665 : vector<8x128xf32>
      %675 = arith.addf %673, %674 : vector<8x128xf32>
      %676 = math.tanh %675 : vector<8x128xf32>
      %677 = arith.mulf %672, %676 : vector<8x128xf32>
      %c0_i32_170 = arith.constant 0 : i32
      %678 = arith.addi %c0_i32_170, %c12_i32 : i32
      %679 = vector.broadcast %678 : i32 to vector<8x1xi32>
      %680 = arith.cmpi slt, %679, %0 : vector<8x1xi32>
      %681 = vector.shape_cast %680 : vector<8x1xi1> to vector<8x1xi1>
      %682 = vector.broadcast %681 : vector<8x1xi1> to vector<8x128xi1>
      %683 = arith.select %682, %677, %633 : vector<8x128xi1>, vector<8x128xf32>
      %684 = arith.select %682, %675, %634 : vector<8x128xi1>, vector<8x128xf32>
      %cst_171 = arith.constant 0.000000e+00 : f32
      %685 = vector.broadcast %cst_171 : f32 to vector<8x128xf32>
      %686 = arith.select %682, %677, %685 : vector<8x128xi1>, vector<8x128xf32>
      %c8_i32_172 = arith.constant 8 : i32
      %687 = arith.muli %678, %c8_i32_172 : i32
      %688 = tpu.assume_multiple %687, 8 : i32
      %689 = arith.index_cast %688 : i32 to index
      %c0_173 = arith.constant 0 : index
      %690 = vector.load %arg8[%689, %c0_173] : memref<128x128xf32, #tpu.memory_space<vmem>>, vector<8x128xf32>
      tpu.vector_store %arg8[%689, %c0_173], %686 {strides = array<i32>} : memref<128x128xf32, #tpu.memory_space<vmem>>, vector<8x128xf32>,
      %c13_i32 = arith.constant 13 : i32
      %c8_i32_174 = arith.constant 8 : i32
      %691 = arith.muli %c13_i32, %c8_i32_174 : i32
      %692 = tpu.assume_multiple %691, 8 : i32
      %693 = arith.index_cast %692 : i32 to index
      %c0_175 = arith.constant 0 : index
      %694 = vector.load %arg9[%693, %c0_175] : memref<128x512xf32, #tpu.memory_space<vmem>>, vector<8x512xf32>
      %695 = arith.truncf %683 : vector<8x128xf32> to vector<8x128xbf16>
      %cst_176 = arith.constant dense<0.000000e+00> : vector<8x512xf32>
      %696 = tpu.matmul %695, %9, %cst_176 {dimension_numbers = #tpu.dot_dimension_numbers<[1], [0], [0], [1], [0, 0, 1, 1], [], []>} : vector<8x128xbf16>, vector<128x512xbf16>, vector<8x512xf32> -> vector<8x512xf32>
      %697 = arith.addf %694, %696 : vector<8x512xf32>
      %698 = arith.truncf %697 : vector<8x512xf32> to vector<8x512xbf16>
      %699 = vector.extract_strided_slice %698 {offsets = [0, 0], sizes = [8, 128], strides = [1, 1]} : vector<8x512xbf16> to vector<8x128xbf16>
      %700 = arith.negf %699 : vector<8x128xbf16>
      %701 = math.exp %700 : vector<8x128xbf16>
      %cst_177 = arith.constant 1.000000e+00 : bf16
      %702 = vector.broadcast %cst_177 : bf16 to vector<8x128xbf16>
      %703 = arith.addf %702, %701 : vector<8x128xbf16>
      %704 = arith.divf %702, %703 : vector<8x128xbf16>
      %705 = arith.extf %704 : vector<8x128xbf16> to vector<8x128xf32>
      %706 = vector.extract_strided_slice %698 {offsets = [0, 128], sizes = [8, 128], strides = [1, 1]} : vector<8x512xbf16> to vector<8x128xbf16>
      %707 = arith.negf %706 : vector<8x128xbf16>
      %708 = math.exp %707 : vector<8x128xbf16>
      %cst_178 = arith.constant 1.000000e+00 : bf16
      %709 = vector.broadcast %cst_178 : bf16 to vector<8x128xbf16>
      %710 = arith.addf %709, %708 : vector<8x128xbf16>
      %711 = arith.divf %709, %710 : vector<8x128xbf16>
      %712 = arith.extf %711 : vector<8x128xbf16> to vector<8x128xf32>
      %713 = vector.extract_strided_slice %698 {offsets = [0, 256], sizes = [8, 128], strides = [1, 1]} : vector<8x512xbf16> to vector<8x128xbf16>
      %714 = math.tanh %713 : vector<8x128xbf16>
      %715 = arith.extf %714 : vector<8x128xbf16> to vector<8x128xf32>
      %716 = vector.extract_strided_slice %698 {offsets = [0, 384], sizes = [8, 128], strides = [1, 1]} : vector<8x512xbf16> to vector<8x128xbf16>
      %717 = arith.negf %716 : vector<8x128xbf16>
      %718 = math.exp %717 : vector<8x128xbf16>
      %cst_179 = arith.constant 1.000000e+00 : bf16
      %719 = vector.broadcast %cst_179 : bf16 to vector<8x128xbf16>
      %720 = arith.addf %719, %718 : vector<8x128xbf16>
      %721 = arith.divf %719, %720 : vector<8x128xbf16>
      %722 = arith.extf %721 : vector<8x128xbf16> to vector<8x128xf32>
      %723 = arith.mulf %712, %684 : vector<8x128xf32>
      %724 = arith.mulf %705, %715 : vector<8x128xf32>
      %725 = arith.addf %723, %724 : vector<8x128xf32>
      %726 = math.tanh %725 : vector<8x128xf32>
      %727 = arith.mulf %722, %726 : vector<8x128xf32>
      %c0_i32_180 = arith.constant 0 : i32
      %728 = arith.addi %c0_i32_180, %c13_i32 : i32
      %729 = vector.broadcast %728 : i32 to vector<8x1xi32>
      %730 = arith.cmpi slt, %729, %0 : vector<8x1xi32>
      %731 = vector.shape_cast %730 : vector<8x1xi1> to vector<8x1xi1>
      %732 = vector.broadcast %731 : vector<8x1xi1> to vector<8x128xi1>
      %733 = arith.select %732, %727, %683 : vector<8x128xi1>, vector<8x128xf32>
      %734 = arith.select %732, %725, %684 : vector<8x128xi1>, vector<8x128xf32>
      %cst_181 = arith.constant 0.000000e+00 : f32
      %735 = vector.broadcast %cst_181 : f32 to vector<8x128xf32>
      %736 = arith.select %732, %727, %735 : vector<8x128xi1>, vector<8x128xf32>
      %c8_i32_182 = arith.constant 8 : i32
      %737 = arith.muli %728, %c8_i32_182 : i32
      %738 = tpu.assume_multiple %737, 8 : i32
      %739 = arith.index_cast %738 : i32 to index
      %c0_183 = arith.constant 0 : index
      %740 = vector.load %arg8[%739, %c0_183] : memref<128x128xf32, #tpu.memory_space<vmem>>, vector<8x128xf32>
      tpu.vector_store %arg8[%739, %c0_183], %736 {strides = array<i32>} : memref<128x128xf32, #tpu.memory_space<vmem>>, vector<8x128xf32>,
      %c14_i32 = arith.constant 14 : i32
      %c8_i32_184 = arith.constant 8 : i32
      %741 = arith.muli %c14_i32, %c8_i32_184 : i32
      %742 = tpu.assume_multiple %741, 8 : i32
      %743 = arith.index_cast %742 : i32 to index
      %c0_185 = arith.constant 0 : index
      %744 = vector.load %arg9[%743, %c0_185] : memref<128x512xf32, #tpu.memory_space<vmem>>, vector<8x512xf32>
      %745 = arith.truncf %733 : vector<8x128xf32> to vector<8x128xbf16>
      %cst_186 = arith.constant dense<0.000000e+00> : vector<8x512xf32>
      %746 = tpu.matmul %745, %9, %cst_186 {dimension_numbers = #tpu.dot_dimension_numbers<[1], [0], [0], [1], [0, 0, 1, 1], [], []>} : vector<8x128xbf16>, vector<128x512xbf16>, vector<8x512xf32> -> vector<8x512xf32>
      %747 = arith.addf %744, %746 : vector<8x512xf32>
      %748 = arith.truncf %747 : vector<8x512xf32> to vector<8x512xbf16>
      %749 = vector.extract_strided_slice %748 {offsets = [0, 0], sizes = [8, 128], strides = [1, 1]} : vector<8x512xbf16> to vector<8x128xbf16>
      %750 = arith.negf %749 : vector<8x128xbf16>
      %751 = math.exp %750 : vector<8x128xbf16>
      %cst_187 = arith.constant 1.000000e+00 : bf16
      %752 = vector.broadcast %cst_187 : bf16 to vector<8x128xbf16>
      %753 = arith.addf %752, %751 : vector<8x128xbf16>
      %754 = arith.divf %752, %753 : vector<8x128xbf16>
      %755 = arith.extf %754 : vector<8x128xbf16> to vector<8x128xf32>
      %756 = vector.extract_strided_slice %748 {offsets = [0, 128], sizes = [8, 128], strides = [1, 1]} : vector<8x512xbf16> to vector<8x128xbf16>
      %757 = arith.negf %756 : vector<8x128xbf16>
      %758 = math.exp %757 : vector<8x128xbf16>
      %cst_188 = arith.constant 1.000000e+00 : bf16
      %759 = vector.broadcast %cst_188 : bf16 to vector<8x128xbf16>
      %760 = arith.addf %759, %758 : vector<8x128xbf16>
      %761 = arith.divf %759, %760 : vector<8x128xbf16>
      %762 = arith.extf %761 : vector<8x128xbf16> to vector<8x128xf32>
      %763 = vector.extract_strided_slice %748 {offsets = [0, 256], sizes = [8, 128], strides = [1, 1]} : vector<8x512xbf16> to vector<8x128xbf16>
      %764 = math.tanh %763 : vector<8x128xbf16>
      %765 = arith.extf %764 : vector<8x128xbf16> to vector<8x128xf32>
      %766 = vector.extract_strided_slice %748 {offsets = [0, 384], sizes = [8, 128], strides = [1, 1]} : vector<8x512xbf16> to vector<8x128xbf16>
      %767 = arith.negf %766 : vector<8x128xbf16>
      %768 = math.exp %767 : vector<8x128xbf16>
      %cst_189 = arith.constant 1.000000e+00 : bf16
      %769 = vector.broadcast %cst_189 : bf16 to vector<8x128xbf16>
      %770 = arith.addf %769, %768 : vector<8x128xbf16>
      %771 = arith.divf %769, %770 : vector<8x128xbf16>
      %772 = arith.extf %771 : vector<8x128xbf16> to vector<8x128xf32>
      %773 = arith.mulf %762, %734 : vector<8x128xf32>
      %774 = arith.mulf %755, %765 : vector<8x128xf32>
      %775 = arith.addf %773, %774 : vector<8x128xf32>
      %776 = math.tanh %775 : vector<8x128xf32>
      %777 = arith.mulf %772, %776 : vector<8x128xf32>
      %c0_i32_190 = arith.constant 0 : i32
      %778 = arith.addi %c0_i32_190, %c14_i32 : i32
      %779 = vector.broadcast %778 : i32 to vector<8x1xi32>
      %780 = arith.cmpi slt, %779, %0 : vector<8x1xi32>
      %781 = vector.shape_cast %780 : vector<8x1xi1> to vector<8x1xi1>
      %782 = vector.broadcast %781 : vector<8x1xi1> to vector<8x128xi1>
      %783 = arith.select %782, %777, %733 : vector<8x128xi1>, vector<8x128xf32>
      %784 = arith.select %782, %775, %734 : vector<8x128xi1>, vector<8x128xf32>
      %cst_191 = arith.constant 0.000000e+00 : f32
      %785 = vector.broadcast %cst_191 : f32 to vector<8x128xf32>
      %786 = arith.select %782, %777, %785 : vector<8x128xi1>, vector<8x128xf32>
      %c8_i32_192 = arith.constant 8 : i32
      %787 = arith.muli %778, %c8_i32_192 : i32
      %788 = tpu.assume_multiple %787, 8 : i32
      %789 = arith.index_cast %788 : i32 to index
      %c0_193 = arith.constant 0 : index
      %790 = vector.load %arg8[%789, %c0_193] : memref<128x128xf32, #tpu.memory_space<vmem>>, vector<8x128xf32>
      tpu.vector_store %arg8[%789, %c0_193], %786 {strides = array<i32>} : memref<128x128xf32, #tpu.memory_space<vmem>>, vector<8x128xf32>,
      %c15_i32 = arith.constant 15 : i32
      %c8_i32_194 = arith.constant 8 : i32
      %791 = arith.muli %c15_i32, %c8_i32_194 : i32
      %792 = tpu.assume_multiple %791, 8 : i32
      %793 = arith.index_cast %792 : i32 to index
      %c0_195 = arith.constant 0 : index
      %794 = vector.load %arg9[%793, %c0_195] : memref<128x512xf32, #tpu.memory_space<vmem>>, vector<8x512xf32>
      %795 = arith.truncf %783 : vector<8x128xf32> to vector<8x128xbf16>
      %cst_196 = arith.constant dense<0.000000e+00> : vector<8x512xf32>
      %796 = tpu.matmul %795, %9, %cst_196 {dimension_numbers = #tpu.dot_dimension_numbers<[1], [0], [0], [1], [0, 0, 1, 1], [], []>} : vector<8x128xbf16>, vector<128x512xbf16>, vector<8x512xf32> -> vector<8x512xf32>
      %797 = arith.addf %794, %796 : vector<8x512xf32>
      %798 = arith.truncf %797 : vector<8x512xf32> to vector<8x512xbf16>
      %799 = vector.extract_strided_slice %798 {offsets = [0, 0], sizes = [8, 128], strides = [1, 1]} : vector<8x512xbf16> to vector<8x128xbf16>
      %800 = arith.negf %799 : vector<8x128xbf16>
      %801 = math.exp %800 : vector<8x128xbf16>
      %cst_197 = arith.constant 1.000000e+00 : bf16
      %802 = vector.broadcast %cst_197 : bf16 to vector<8x128xbf16>
      %803 = arith.addf %802, %801 : vector<8x128xbf16>
      %804 = arith.divf %802, %803 : vector<8x128xbf16>
      %805 = arith.extf %804 : vector<8x128xbf16> to vector<8x128xf32>
      %806 = vector.extract_strided_slice %798 {offsets = [0, 128], sizes = [8, 128], strides = [1, 1]} : vector<8x512xbf16> to vector<8x128xbf16>
      %807 = arith.negf %806 : vector<8x128xbf16>
      %808 = math.exp %807 : vector<8x128xbf16>
      %cst_198 = arith.constant 1.000000e+00 : bf16
      %809 = vector.broadcast %cst_198 : bf16 to vector<8x128xbf16>
      %810 = arith.addf %809, %808 : vector<8x128xbf16>
      %811 = arith.divf %809, %810 : vector<8x128xbf16>
      %812 = arith.extf %811 : vector<8x128xbf16> to vector<8x128xf32>
      %813 = vector.extract_strided_slice %798 {offsets = [0, 256], sizes = [8, 128], strides = [1, 1]} : vector<8x512xbf16> to vector<8x128xbf16>
      %814 = math.tanh %813 : vector<8x128xbf16>
      %815 = arith.extf %814 : vector<8x128xbf16> to vector<8x128xf32>
      %816 = vector.extract_strided_slice %798 {offsets = [0, 384], sizes = [8, 128], strides = [1, 1]} : vector<8x512xbf16> to vector<8x128xbf16>
      %817 = arith.negf %816 : vector<8x128xbf16>
      %818 = math.exp %817 : vector<8x128xbf16>
      %cst_199 = arith.constant 1.000000e+00 : bf16
      %819 = vector.broadcast %cst_199 : bf16 to vector<8x128xbf16>
      %820 = arith.addf %819, %818 : vector<8x128xbf16>
      %821 = arith.divf %819, %820 : vector<8x128xbf16>
      %822 = arith.extf %821 : vector<8x128xbf16> to vector<8x128xf32>
      %823 = arith.mulf %812, %784 : vector<8x128xf32>
      %824 = arith.mulf %805, %815 : vector<8x128xf32>
      %825 = arith.addf %823, %824 : vector<8x128xf32>
      %826 = math.tanh %825 : vector<8x128xf32>
      %827 = arith.mulf %822, %826 : vector<8x128xf32>
      %c0_i32_200 = arith.constant 0 : i32
      %828 = arith.addi %c0_i32_200, %c15_i32 : i32
      %829 = vector.broadcast %828 : i32 to vector<8x1xi32>
      %830 = arith.cmpi slt, %829, %0 : vector<8x1xi32>
      %831 = vector.shape_cast %830 : vector<8x1xi1> to vector<8x1xi1>
      %832 = vector.broadcast %831 : vector<8x1xi1> to vector<8x128xi1>
      %833 = arith.select %832, %827, %783 : vector<8x128xi1>, vector<8x128xf32>
      %834 = arith.select %832, %825, %784 : vector<8x128xi1>, vector<8x128xf32>
      %cst_201 = arith.constant 0.000000e+00 : f32
      %835 = vector.broadcast %cst_201 : f32 to vector<8x128xf32>
      %836 = arith.select %832, %827, %835 : vector<8x128xi1>, vector<8x128xf32>
      %c8_i32_202 = arith.constant 8 : i32
      %837 = arith.muli %828, %c8_i32_202 : i32
      %838 = tpu.assume_multiple %837, 8 : i32
      %839 = arith.index_cast %838 : i32 to index
      %c0_203 = arith.constant 0 : index
      %840 = vector.load %arg8[%839, %c0_203] : memref<128x128xf32, #tpu.memory_space<vmem>>, vector<8x128xf32>
      tpu.vector_store %arg8[%839, %c0_203], %836 {strides = array<i32>} : memref<128x128xf32, #tpu.memory_space<vmem>>, vector<8x128xf32>,
      %c16_i32_204 = arith.constant 16 : i32
      %c0_205 = arith.constant 0 : index
      %c0_206 = arith.constant 0 : index
      %841 = vector.load %arg10[%c0_205, %c0_206] : memref<8x128xf32, #tpu.memory_space<vmem>>, vector<8x128xf32>
      tpu.vector_store %arg10[%c0_205, %c0_206], %833 {strides = array<i32>} : memref<8x128xf32, #tpu.memory_space<vmem>>, vector<8x128xf32>,
      %c0_207 = arith.constant 0 : index
      %c0_208 = arith.constant 0 : index
      %842 = vector.load %arg11[%c0_207, %c0_208] : memref<8x128xf32, #tpu.memory_space<vmem>>, vector<8x128xf32>
      tpu.vector_store %arg11[%c0_207, %c0_208], %834 {strides = array<i32>} : memref<8x128xf32, #tpu.memory_space<vmem>>, vector<8x128xf32>,
    } else {
    }
    %c1 = arith.constant 1 : index
    %c0_17 = arith.constant 0 : index
    %c0_18 = arith.constant 0 : index
    %19 = vector.load %arg4[%c1, %c0_17, %c0_18] : memref<2x128x512xbf16, #tpu.memory_space<vmem>>, vector<1x128x512xbf16>
    %20 = vector.shape_cast %19 : vector<1x128x512xbf16> to vector<128x512xbf16>
    %c1_19 = arith.constant 1 : index
    %c0_20 = arith.constant 0 : index
    %c0_21 = arith.constant 0 : index
    %21 = vector.load %arg5[%c1_19, %c0_20, %c0_21] : memref<2x128x512xbf16, #tpu.memory_space<vmem>>, vector<1x128x512xbf16>
    %22 = vector.shape_cast %21 : vector<1x128x512xbf16> to vector<128x512xbf16>
    %c1_22 = arith.constant 1 : index
    %c0_23 = arith.constant 0 : index
    %c0_24 = arith.constant 0 : index
    %23 = vector.load %arg6[%c1_22, %c0_23, %c0_24] : memref<2x1x512xf32, #tpu.memory_space<vmem>>, vector<1x1x512xf32>
    %24 = vector.shape_cast %23 : vector<1x1x512xf32> to vector<1x512xf32>
    %cst_25 = arith.constant 0.000000e+00 : f32
    %25 = vector.broadcast %cst_25 : f32 to vector<8x128xf32>
    %c0_26 = arith.constant 0 : index
    %c0_27 = arith.constant 0 : index
    %26 = vector.load %arg10[%c0_26, %c0_27] : memref<8x128xf32, #tpu.memory_space<vmem>>, vector<8x128xf32>
    tpu.vector_store %arg10[%c0_26, %c0_27], %25 {strides = array<i32>} : memref<8x128xf32, #tpu.memory_space<vmem>>, vector<8x128xf32>,
    %cst_28 = arith.constant 0.000000e+00 : f32
    %27 = vector.broadcast %cst_28 : f32 to vector<8x128xf32>
    %c0_29 = arith.constant 0 : index
    %c0_30 = arith.constant 0 : index
    %28 = vector.load %arg11[%c0_29, %c0_30] : memref<8x128xf32, #tpu.memory_space<vmem>>, vector<8x128xf32>
    tpu.vector_store %arg11[%c0_29, %c0_30], %27 {strides = array<i32>} : memref<8x128xf32, #tpu.memory_space<vmem>>, vector<8x128xf32>,
    %c0_i32_31 = arith.constant 0 : i32
    %29 = arith.cmpi sgt, %2, %c0_i32_31 : i32
    %30 = arith.extui %29 : i1 to i32
    %c0_i32_32 = arith.constant 0 : i32
    %31 = arith.cmpi ne, %30, %c0_i32_32 : i32
    scf.if %31 {
      %c0_33 = arith.constant 0 : index
      %c0_34 = arith.constant 0 : index
      %32 = vector.load %arg8[%c0_33, %c0_34] : memref<128x128xf32, #tpu.memory_space<vmem>>, vector<128x128xf32>
      %33 = arith.truncf %32 : vector<128x128xf32> to vector<128x128xbf16>
      %cst_35 = arith.constant dense<0.000000e+00> : vector<128x512xf32>
      %34 = tpu.matmul %33, %20, %cst_35 {dimension_numbers = #tpu.dot_dimension_numbers<[1], [0], [0], [1], [0, 0, 1, 1], [], []>} : vector<128x128xbf16>, vector<128x512xbf16>, vector<128x512xf32> -> vector<128x512xf32>
      %35 = vector.broadcast %24 : vector<1x512xf32> to vector<128x512xf32>
      %36 = arith.addf %34, %35 : vector<128x512xf32>
      %c0_36 = arith.constant 0 : index
      %c0_37 = arith.constant 0 : index
      %37 = vector.load %arg9[%c0_36, %c0_37] : memref<128x512xf32, #tpu.memory_space<vmem>>, vector<128x512xf32>
      tpu.vector_store %arg9[%c0_36, %c0_37], %36 {strides = array<i32>} : memref<128x512xf32, #tpu.memory_space<vmem>>, vector<128x512xf32>,
      %c0_38 = arith.constant 0 : index
      %c0_39 = arith.constant 0 : index
      %38 = vector.load %arg10[%c0_38, %c0_39] : memref<8x128xf32, #tpu.memory_space<vmem>>, vector<8x128xf32>
      %c0_40 = arith.constant 0 : index
      %c0_41 = arith.constant 0 : index
      %39 = vector.load %arg11[%c0_40, %c0_41] : memref<8x128xf32, #tpu.memory_space<vmem>>, vector<8x128xf32>
      %c0_i32_42 = arith.constant 0 : i32
      %c8_i32 = arith.constant 8 : i32
      %40 = arith.muli %c0_i32_42, %c8_i32 : i32
      %41 = tpu.assume_multiple %40, 8 : i32
      %42 = arith.index_cast %41 : i32 to index
      %c0_43 = arith.constant 0 : index
      %43 = vector.load %arg9[%42, %c0_43] : memref<128x512xf32, #tpu.memory_space<vmem>>, vector<8x512xf32>
      %44 = arith.truncf %38 : vector<8x128xf32> to vector<8x128xbf16>
      %cst_44 = arith.constant dense<0.000000e+00> : vector<8x512xf32>
      %45 = tpu.matmul %44, %22, %cst_44 {dimension_numbers = #tpu.dot_dimension_numbers<[1], [0], [0], [1], [0, 0, 1, 1], [], []>} : vector<8x128xbf16>, vector<128x512xbf16>, vector<8x512xf32> -> vector<8x512xf32>
      %46 = arith.addf %43, %45 : vector<8x512xf32>
      %47 = arith.truncf %46 : vector<8x512xf32> to vector<8x512xbf16>
      %48 = vector.extract_strided_slice %47 {offsets = [0, 0], sizes = [8, 128], strides = [1, 1]} : vector<8x512xbf16> to vector<8x128xbf16>
      %49 = arith.negf %48 : vector<8x128xbf16>
      %50 = math.exp %49 : vector<8x128xbf16>
      %cst_45 = arith.constant 1.000000e+00 : bf16
      %51 = vector.broadcast %cst_45 : bf16 to vector<8x128xbf16>
      %52 = arith.addf %51, %50 : vector<8x128xbf16>
      %53 = arith.divf %51, %52 : vector<8x128xbf16>
      %54 = arith.extf %53 : vector<8x128xbf16> to vector<8x128xf32>
      %55 = vector.extract_strided_slice %47 {offsets = [0, 128], sizes = [8, 128], strides = [1, 1]} : vector<8x512xbf16> to vector<8x128xbf16>
      %56 = arith.negf %55 : vector<8x128xbf16>
      %57 = math.exp %56 : vector<8x128xbf16>
      %cst_46 = arith.constant 1.000000e+00 : bf16
      %58 = vector.broadcast %cst_46 : bf16 to vector<8x128xbf16>
      %59 = arith.addf %58, %57 : vector<8x128xbf16>
      %60 = arith.divf %58, %59 : vector<8x128xbf16>
      %61 = arith.extf %60 : vector<8x128xbf16> to vector<8x128xf32>
      %62 = vector.extract_strided_slice %47 {offsets = [0, 256], sizes = [8, 128], strides = [1, 1]} : vector<8x512xbf16> to vector<8x128xbf16>
      %63 = math.tanh %62 : vector<8x128xbf16>
      %64 = arith.extf %63 : vector<8x128xbf16> to vector<8x128xf32>
      %65 = vector.extract_strided_slice %47 {offsets = [0, 384], sizes = [8, 128], strides = [1, 1]} : vector<8x512xbf16> to vector<8x128xbf16>
      %66 = arith.negf %65 : vector<8x128xbf16>
      %67 = math.exp %66 : vector<8x128xbf16>
      %cst_47 = arith.constant 1.000000e+00 : bf16
      %68 = vector.broadcast %cst_47 : bf16 to vector<8x128xbf16>
      %69 = arith.addf %68, %67 : vector<8x128xbf16>
      %70 = arith.divf %68, %69 : vector<8x128xbf16>
      %71 = arith.extf %70 : vector<8x128xbf16> to vector<8x128xf32>
      %72 = arith.mulf %61, %39 : vector<8x128xf32>
      %73 = arith.mulf %54, %64 : vector<8x128xf32>
      %74 = arith.addf %72, %73 : vector<8x128xf32>
      %75 = math.tanh %74 : vector<8x128xf32>
      %76 = arith.mulf %71, %75 : vector<8x128xf32>
      %c0_i32_48 = arith.constant 0 : i32
      %77 = arith.addi %c0_i32_48, %c0_i32_42 : i32
      %78 = vector.broadcast %77 : i32 to vector<8x1xi32>
      %79 = arith.cmpi slt, %78, %0 : vector<8x1xi32>
      %80 = vector.shape_cast %79 : vector<8x1xi1> to vector<8x1xi1>
      %81 = vector.broadcast %80 : vector<8x1xi1> to vector<8x128xi1>
      %82 = arith.select %81, %76, %38 : vector<8x128xi1>, vector<8x128xf32>
      %83 = arith.select %81, %74, %39 : vector<8x128xi1>, vector<8x128xf32>
      %cst_49 = arith.constant 0.000000e+00 : f32
      %84 = vector.broadcast %cst_49 : f32 to vector<8x128xf32>
      %85 = arith.select %81, %76, %84 : vector<8x128xi1>, vector<8x128xf32>
      %86 = arith.index_cast %77 : i32 to index
      %c0_50 = arith.constant 0 : index
      %c0_51 = arith.constant 0 : index
      %87 = vector.load %arg7[%86, %c0_50, %c0_51] : memref<16x8x128xf32, #tpu.memory_space<vmem>>, vector<1x8x128xf32>
      %88 = vector.shape_cast %87 : vector<1x8x128xf32> to vector<8x128xf32>
      %89 = vector.shape_cast %85 : vector<8x128xf32> to vector<1x8x128xf32>
      tpu.vector_store %arg7[%86, %c0_50, %c0_51], %89 {strides = array<i32>} : memref<16x8x128xf32, #tpu.memory_space<vmem>>, vector<1x8x128xf32>,
      %c1_i32 = arith.constant 1 : i32
      %c8_i32_52 = arith.constant 8 : i32
      %90 = arith.muli %c1_i32, %c8_i32_52 : i32
      %91 = tpu.assume_multiple %90, 8 : i32
      %92 = arith.index_cast %91 : i32 to index
      %c0_53 = arith.constant 0 : index
      %93 = vector.load %arg9[%92, %c0_53] : memref<128x512xf32, #tpu.memory_space<vmem>>, vector<8x512xf32>
      %94 = arith.truncf %82 : vector<8x128xf32> to vector<8x128xbf16>
      %cst_54 = arith.constant dense<0.000000e+00> : vector<8x512xf32>
      %95 = tpu.matmul %94, %22, %cst_54 {dimension_numbers = #tpu.dot_dimension_numbers<[1], [0], [0], [1], [0, 0, 1, 1], [], []>} : vector<8x128xbf16>, vector<128x512xbf16>, vector<8x512xf32> -> vector<8x512xf32>
      %96 = arith.addf %93, %95 : vector<8x512xf32>
      %97 = arith.truncf %96 : vector<8x512xf32> to vector<8x512xbf16>
      %98 = vector.extract_strided_slice %97 {offsets = [0, 0], sizes = [8, 128], strides = [1, 1]} : vector<8x512xbf16> to vector<8x128xbf16>
      %99 = arith.negf %98 : vector<8x128xbf16>
      %100 = math.exp %99 : vector<8x128xbf16>
      %cst_55 = arith.constant 1.000000e+00 : bf16
      %101 = vector.broadcast %cst_55 : bf16 to vector<8x128xbf16>
      %102 = arith.addf %101, %100 : vector<8x128xbf16>
      %103 = arith.divf %101, %102 : vector<8x128xbf16>
      %104 = arith.extf %103 : vector<8x128xbf16> to vector<8x128xf32>
      %105 = vector.extract_strided_slice %97 {offsets = [0, 128], sizes = [8, 128], strides = [1, 1]} : vector<8x512xbf16> to vector<8x128xbf16>
      %106 = arith.negf %105 : vector<8x128xbf16>
      %107 = math.exp %106 : vector<8x128xbf16>
      %cst_56 = arith.constant 1.000000e+00 : bf16
      %108 = vector.broadcast %cst_56 : bf16 to vector<8x128xbf16>
      %109 = arith.addf %108, %107 : vector<8x128xbf16>
      %110 = arith.divf %108, %109 : vector<8x128xbf16>
      %111 = arith.extf %110 : vector<8x128xbf16> to vector<8x128xf32>
      %112 = vector.extract_strided_slice %97 {offsets = [0, 256], sizes = [8, 128], strides = [1, 1]} : vector<8x512xbf16> to vector<8x128xbf16>
      %113 = math.tanh %112 : vector<8x128xbf16>
      %114 = arith.extf %113 : vector<8x128xbf16> to vector<8x128xf32>
      %115 = vector.extract_strided_slice %97 {offsets = [0, 384], sizes = [8, 128], strides = [1, 1]} : vector<8x512xbf16> to vector<8x128xbf16>
      %116 = arith.negf %115 : vector<8x128xbf16>
      %117 = math.exp %116 : vector<8x128xbf16>
      %cst_57 = arith.constant 1.000000e+00 : bf16
      %118 = vector.broadcast %cst_57 : bf16 to vector<8x128xbf16>
      %119 = arith.addf %118, %117 : vector<8x128xbf16>
      %120 = arith.divf %118, %119 : vector<8x128xbf16>
      %121 = arith.extf %120 : vector<8x128xbf16> to vector<8x128xf32>
      %122 = arith.mulf %111, %83 : vector<8x128xf32>
      %123 = arith.mulf %104, %114 : vector<8x128xf32>
      %124 = arith.addf %122, %123 : vector<8x128xf32>
      %125 = math.tanh %124 : vector<8x128xf32>
      %126 = arith.mulf %121, %125 : vector<8x128xf32>
      %c0_i32_58 = arith.constant 0 : i32
      %127 = arith.addi %c0_i32_58, %c1_i32 : i32
      %128 = vector.broadcast %127 : i32 to vector<8x1xi32>
      %129 = arith.cmpi slt, %128, %0 : vector<8x1xi32>
      %130 = vector.shape_cast %129 : vector<8x1xi1> to vector<8x1xi1>
      %131 = vector.broadcast %130 : vector<8x1xi1> to vector<8x128xi1>
      %132 = arith.select %131, %126, %82 : vector<8x128xi1>, vector<8x128xf32>
      %133 = arith.select %131, %124, %83 : vector<8x128xi1>, vector<8x128xf32>
      %cst_59 = arith.constant 0.000000e+00 : f32
      %134 = vector.broadcast %cst_59 : f32 to vector<8x128xf32>
      %135 = arith.select %131, %126, %134 : vector<8x128xi1>, vector<8x128xf32>
      %136 = arith.index_cast %127 : i32 to index
      %c0_60 = arith.constant 0 : index
      %c0_61 = arith.constant 0 : index
      %137 = vector.load %arg7[%136, %c0_60, %c0_61] : memref<16x8x128xf32, #tpu.memory_space<vmem>>, vector<1x8x128xf32>
      %138 = vector.shape_cast %137 : vector<1x8x128xf32> to vector<8x128xf32>
      %139 = vector.shape_cast %135 : vector<8x128xf32> to vector<1x8x128xf32>
      tpu.vector_store %arg7[%136, %c0_60, %c0_61], %139 {strides = array<i32>} : memref<16x8x128xf32, #tpu.memory_space<vmem>>, vector<1x8x128xf32>,
      %c2_i32 = arith.constant 2 : i32
      %c8_i32_62 = arith.constant 8 : i32
      %140 = arith.muli %c2_i32, %c8_i32_62 : i32
      %141 = tpu.assume_multiple %140, 8 : i32
      %142 = arith.index_cast %141 : i32 to index
      %c0_63 = arith.constant 0 : index
      %143 = vector.load %arg9[%142, %c0_63] : memref<128x512xf32, #tpu.memory_space<vmem>>, vector<8x512xf32>
      %144 = arith.truncf %132 : vector<8x128xf32> to vector<8x128xbf16>
      %cst_64 = arith.constant dense<0.000000e+00> : vector<8x512xf32>
      %145 = tpu.matmul %144, %22, %cst_64 {dimension_numbers = #tpu.dot_dimension_numbers<[1], [0], [0], [1], [0, 0, 1, 1], [], []>} : vector<8x128xbf16>, vector<128x512xbf16>, vector<8x512xf32> -> vector<8x512xf32>
      %146 = arith.addf %143, %145 : vector<8x512xf32>
      %147 = arith.truncf %146 : vector<8x512xf32> to vector<8x512xbf16>
      %148 = vector.extract_strided_slice %147 {offsets = [0, 0], sizes = [8, 128], strides = [1, 1]} : vector<8x512xbf16> to vector<8x128xbf16>
      %149 = arith.negf %148 : vector<8x128xbf16>
      %150 = math.exp %149 : vector<8x128xbf16>
      %cst_65 = arith.constant 1.000000e+00 : bf16
      %151 = vector.broadcast %cst_65 : bf16 to vector<8x128xbf16>
      %152 = arith.addf %151, %150 : vector<8x128xbf16>
      %153 = arith.divf %151, %152 : vector<8x128xbf16>
      %154 = arith.extf %153 : vector<8x128xbf16> to vector<8x128xf32>
      %155 = vector.extract_strided_slice %147 {offsets = [0, 128], sizes = [8, 128], strides = [1, 1]} : vector<8x512xbf16> to vector<8x128xbf16>
      %156 = arith.negf %155 : vector<8x128xbf16>
      %157 = math.exp %156 : vector<8x128xbf16>
      %cst_66 = arith.constant 1.000000e+00 : bf16
      %158 = vector.broadcast %cst_66 : bf16 to vector<8x128xbf16>
      %159 = arith.addf %158, %157 : vector<8x128xbf16>
      %160 = arith.divf %158, %159 : vector<8x128xbf16>
      %161 = arith.extf %160 : vector<8x128xbf16> to vector<8x128xf32>
      %162 = vector.extract_strided_slice %147 {offsets = [0, 256], sizes = [8, 128], strides = [1, 1]} : vector<8x512xbf16> to vector<8x128xbf16>
      %163 = math.tanh %162 : vector<8x128xbf16>
      %164 = arith.extf %163 : vector<8x128xbf16> to vector<8x128xf32>
      %165 = vector.extract_strided_slice %147 {offsets = [0, 384], sizes = [8, 128], strides = [1, 1]} : vector<8x512xbf16> to vector<8x128xbf16>
      %166 = arith.negf %165 : vector<8x128xbf16>
      %167 = math.exp %166 : vector<8x128xbf16>
      %cst_67 = arith.constant 1.000000e+00 : bf16
      %168 = vector.broadcast %cst_67 : bf16 to vector<8x128xbf16>
      %169 = arith.addf %168, %167 : vector<8x128xbf16>
      %170 = arith.divf %168, %169 : vector<8x128xbf16>
      %171 = arith.extf %170 : vector<8x128xbf16> to vector<8x128xf32>
      %172 = arith.mulf %161, %133 : vector<8x128xf32>
      %173 = arith.mulf %154, %164 : vector<8x128xf32>
      %174 = arith.addf %172, %173 : vector<8x128xf32>
      %175 = math.tanh %174 : vector<8x128xf32>
      %176 = arith.mulf %171, %175 : vector<8x128xf32>
      %c0_i32_68 = arith.constant 0 : i32
      %177 = arith.addi %c0_i32_68, %c2_i32 : i32
      %178 = vector.broadcast %177 : i32 to vector<8x1xi32>
      %179 = arith.cmpi slt, %178, %0 : vector<8x1xi32>
      %180 = vector.shape_cast %179 : vector<8x1xi1> to vector<8x1xi1>
      %181 = vector.broadcast %180 : vector<8x1xi1> to vector<8x128xi1>
      %182 = arith.select %181, %176, %132 : vector<8x128xi1>, vector<8x128xf32>
      %183 = arith.select %181, %174, %133 : vector<8x128xi1>, vector<8x128xf32>
      %cst_69 = arith.constant 0.000000e+00 : f32
      %184 = vector.broadcast %cst_69 : f32 to vector<8x128xf32>
      %185 = arith.select %181, %176, %184 : vector<8x128xi1>, vector<8x128xf32>
      %186 = arith.index_cast %177 : i32 to index
      %c0_70 = arith.constant 0 : index
      %c0_71 = arith.constant 0 : index
      %187 = vector.load %arg7[%186, %c0_70, %c0_71] : memref<16x8x128xf32, #tpu.memory_space<vmem>>, vector<1x8x128xf32>
      %188 = vector.shape_cast %187 : vector<1x8x128xf32> to vector<8x128xf32>
      %189 = vector.shape_cast %185 : vector<8x128xf32> to vector<1x8x128xf32>
      tpu.vector_store %arg7[%186, %c0_70, %c0_71], %189 {strides = array<i32>} : memref<16x8x128xf32, #tpu.memory_space<vmem>>, vector<1x8x128xf32>,
      %c3_i32 = arith.constant 3 : i32
      %c8_i32_72 = arith.constant 8 : i32
      %190 = arith.muli %c3_i32, %c8_i32_72 : i32
      %191 = tpu.assume_multiple %190, 8 : i32
      %192 = arith.index_cast %191 : i32 to index
      %c0_73 = arith.constant 0 : index
      %193 = vector.load %arg9[%192, %c0_73] : memref<128x512xf32, #tpu.memory_space<vmem>>, vector<8x512xf32>
      %194 = arith.truncf %182 : vector<8x128xf32> to vector<8x128xbf16>
      %cst_74 = arith.constant dense<0.000000e+00> : vector<8x512xf32>
      %195 = tpu.matmul %194, %22, %cst_74 {dimension_numbers = #tpu.dot_dimension_numbers<[1], [0], [0], [1], [0, 0, 1, 1], [], []>} : vector<8x128xbf16>, vector<128x512xbf16>, vector<8x512xf32> -> vector<8x512xf32>
      %196 = arith.addf %193, %195 : vector<8x512xf32>
      %197 = arith.truncf %196 : vector<8x512xf32> to vector<8x512xbf16>
      %198 = vector.extract_strided_slice %197 {offsets = [0, 0], sizes = [8, 128], strides = [1, 1]} : vector<8x512xbf16> to vector<8x128xbf16>
      %199 = arith.negf %198 : vector<8x128xbf16>
      %200 = math.exp %199 : vector<8x128xbf16>
      %cst_75 = arith.constant 1.000000e+00 : bf16
      %201 = vector.broadcast %cst_75 : bf16 to vector<8x128xbf16>
      %202 = arith.addf %201, %200 : vector<8x128xbf16>
      %203 = arith.divf %201, %202 : vector<8x128xbf16>
      %204 = arith.extf %203 : vector<8x128xbf16> to vector<8x128xf32>
      %205 = vector.extract_strided_slice %197 {offsets = [0, 128], sizes = [8, 128], strides = [1, 1]} : vector<8x512xbf16> to vector<8x128xbf16>
      %206 = arith.negf %205 : vector<8x128xbf16>
      %207 = math.exp %206 : vector<8x128xbf16>
      %cst_76 = arith.constant 1.000000e+00 : bf16
      %208 = vector.broadcast %cst_76 : bf16 to vector<8x128xbf16>
      %209 = arith.addf %208, %207 : vector<8x128xbf16>
      %210 = arith.divf %208, %209 : vector<8x128xbf16>
      %211 = arith.extf %210 : vector<8x128xbf16> to vector<8x128xf32>
      %212 = vector.extract_strided_slice %197 {offsets = [0, 256], sizes = [8, 128], strides = [1, 1]} : vector<8x512xbf16> to vector<8x128xbf16>
      %213 = math.tanh %212 : vector<8x128xbf16>
      %214 = arith.extf %213 : vector<8x128xbf16> to vector<8x128xf32>
      %215 = vector.extract_strided_slice %197 {offsets = [0, 384], sizes = [8, 128], strides = [1, 1]} : vector<8x512xbf16> to vector<8x128xbf16>
      %216 = arith.negf %215 : vector<8x128xbf16>
      %217 = math.exp %216 : vector<8x128xbf16>
      %cst_77 = arith.constant 1.000000e+00 : bf16
      %218 = vector.broadcast %cst_77 : bf16 to vector<8x128xbf16>
      %219 = arith.addf %218, %217 : vector<8x128xbf16>
      %220 = arith.divf %218, %219 : vector<8x128xbf16>
      %221 = arith.extf %220 : vector<8x128xbf16> to vector<8x128xf32>
      %222 = arith.mulf %211, %183 : vector<8x128xf32>
      %223 = arith.mulf %204, %214 : vector<8x128xf32>
      %224 = arith.addf %222, %223 : vector<8x128xf32>
      %225 = math.tanh %224 : vector<8x128xf32>
      %226 = arith.mulf %221, %225 : vector<8x128xf32>
      %c0_i32_78 = arith.constant 0 : i32
      %227 = arith.addi %c0_i32_78, %c3_i32 : i32
      %228 = vector.broadcast %227 : i32 to vector<8x1xi32>
      %229 = arith.cmpi slt, %228, %0 : vector<8x1xi32>
      %230 = vector.shape_cast %229 : vector<8x1xi1> to vector<8x1xi1>
      %231 = vector.broadcast %230 : vector<8x1xi1> to vector<8x128xi1>
      %232 = arith.select %231, %226, %182 : vector<8x128xi1>, vector<8x128xf32>
      %233 = arith.select %231, %224, %183 : vector<8x128xi1>, vector<8x128xf32>
      %cst_79 = arith.constant 0.000000e+00 : f32
      %234 = vector.broadcast %cst_79 : f32 to vector<8x128xf32>
      %235 = arith.select %231, %226, %234 : vector<8x128xi1>, vector<8x128xf32>
      %236 = arith.index_cast %227 : i32 to index
      %c0_80 = arith.constant 0 : index
      %c0_81 = arith.constant 0 : index
      %237 = vector.load %arg7[%236, %c0_80, %c0_81] : memref<16x8x128xf32, #tpu.memory_space<vmem>>, vector<1x8x128xf32>
      %238 = vector.shape_cast %237 : vector<1x8x128xf32> to vector<8x128xf32>
      %239 = vector.shape_cast %235 : vector<8x128xf32> to vector<1x8x128xf32>
      tpu.vector_store %arg7[%236, %c0_80, %c0_81], %239 {strides = array<i32>} : memref<16x8x128xf32, #tpu.memory_space<vmem>>, vector<1x8x128xf32>,
      %c4_i32 = arith.constant 4 : i32
      %c8_i32_82 = arith.constant 8 : i32
      %240 = arith.muli %c4_i32, %c8_i32_82 : i32
      %241 = tpu.assume_multiple %240, 8 : i32
      %242 = arith.index_cast %241 : i32 to index
      %c0_83 = arith.constant 0 : index
      %243 = vector.load %arg9[%242, %c0_83] : memref<128x512xf32, #tpu.memory_space<vmem>>, vector<8x512xf32>
      %244 = arith.truncf %232 : vector<8x128xf32> to vector<8x128xbf16>
      %cst_84 = arith.constant dense<0.000000e+00> : vector<8x512xf32>
      %245 = tpu.matmul %244, %22, %cst_84 {dimension_numbers = #tpu.dot_dimension_numbers<[1], [0], [0], [1], [0, 0, 1, 1], [], []>} : vector<8x128xbf16>, vector<128x512xbf16>, vector<8x512xf32> -> vector<8x512xf32>
      %246 = arith.addf %243, %245 : vector<8x512xf32>
      %247 = arith.truncf %246 : vector<8x512xf32> to vector<8x512xbf16>
      %248 = vector.extract_strided_slice %247 {offsets = [0, 0], sizes = [8, 128], strides = [1, 1]} : vector<8x512xbf16> to vector<8x128xbf16>
      %249 = arith.negf %248 : vector<8x128xbf16>
      %250 = math.exp %249 : vector<8x128xbf16>
      %cst_85 = arith.constant 1.000000e+00 : bf16
      %251 = vector.broadcast %cst_85 : bf16 to vector<8x128xbf16>
      %252 = arith.addf %251, %250 : vector<8x128xbf16>
      %253 = arith.divf %251, %252 : vector<8x128xbf16>
      %254 = arith.extf %253 : vector<8x128xbf16> to vector<8x128xf32>
      %255 = vector.extract_strided_slice %247 {offsets = [0, 128], sizes = [8, 128], strides = [1, 1]} : vector<8x512xbf16> to vector<8x128xbf16>
      %256 = arith.negf %255 : vector<8x128xbf16>
      %257 = math.exp %256 : vector<8x128xbf16>
      %cst_86 = arith.constant 1.000000e+00 : bf16
      %258 = vector.broadcast %cst_86 : bf16 to vector<8x128xbf16>
      %259 = arith.addf %258, %257 : vector<8x128xbf16>
      %260 = arith.divf %258, %259 : vector<8x128xbf16>
      %261 = arith.extf %260 : vector<8x128xbf16> to vector<8x128xf32>
      %262 = vector.extract_strided_slice %247 {offsets = [0, 256], sizes = [8, 128], strides = [1, 1]} : vector<8x512xbf16> to vector<8x128xbf16>
      %263 = math.tanh %262 : vector<8x128xbf16>
      %264 = arith.extf %263 : vector<8x128xbf16> to vector<8x128xf32>
      %265 = vector.extract_strided_slice %247 {offsets = [0, 384], sizes = [8, 128], strides = [1, 1]} : vector<8x512xbf16> to vector<8x128xbf16>
      %266 = arith.negf %265 : vector<8x128xbf16>
      %267 = math.exp %266 : vector<8x128xbf16>
      %cst_87 = arith.constant 1.000000e+00 : bf16
      %268 = vector.broadcast %cst_87 : bf16 to vector<8x128xbf16>
      %269 = arith.addf %268, %267 : vector<8x128xbf16>
      %270 = arith.divf %268, %269 : vector<8x128xbf16>
      %271 = arith.extf %270 : vector<8x128xbf16> to vector<8x128xf32>
      %272 = arith.mulf %261, %233 : vector<8x128xf32>
      %273 = arith.mulf %254, %264 : vector<8x128xf32>
      %274 = arith.addf %272, %273 : vector<8x128xf32>
      %275 = math.tanh %274 : vector<8x128xf32>
      %276 = arith.mulf %271, %275 : vector<8x128xf32>
      %c0_i32_88 = arith.constant 0 : i32
      %277 = arith.addi %c0_i32_88, %c4_i32 : i32
      %278 = vector.broadcast %277 : i32 to vector<8x1xi32>
      %279 = arith.cmpi slt, %278, %0 : vector<8x1xi32>
      %280 = vector.shape_cast %279 : vector<8x1xi1> to vector<8x1xi1>
      %281 = vector.broadcast %280 : vector<8x1xi1> to vector<8x128xi1>
      %282 = arith.select %281, %276, %232 : vector<8x128xi1>, vector<8x128xf32>
      %283 = arith.select %281, %274, %233 : vector<8x128xi1>, vector<8x128xf32>
      %cst_89 = arith.constant 0.000000e+00 : f32
      %284 = vector.broadcast %cst_89 : f32 to vector<8x128xf32>
      %285 = arith.select %281, %276, %284 : vector<8x128xi1>, vector<8x128xf32>
      %286 = arith.index_cast %277 : i32 to index
      %c0_90 = arith.constant 0 : index
      %c0_91 = arith.constant 0 : index
      %287 = vector.load %arg7[%286, %c0_90, %c0_91] : memref<16x8x128xf32, #tpu.memory_space<vmem>>, vector<1x8x128xf32>
      %288 = vector.shape_cast %287 : vector<1x8x128xf32> to vector<8x128xf32>
      %289 = vector.shape_cast %285 : vector<8x128xf32> to vector<1x8x128xf32>
      tpu.vector_store %arg7[%286, %c0_90, %c0_91], %289 {strides = array<i32>} : memref<16x8x128xf32, #tpu.memory_space<vmem>>, vector<1x8x128xf32>,
      %c5_i32 = arith.constant 5 : i32
      %c8_i32_92 = arith.constant 8 : i32
      %290 = arith.muli %c5_i32, %c8_i32_92 : i32
      %291 = tpu.assume_multiple %290, 8 : i32
      %292 = arith.index_cast %291 : i32 to index
      %c0_93 = arith.constant 0 : index
      %293 = vector.load %arg9[%292, %c0_93] : memref<128x512xf32, #tpu.memory_space<vmem>>, vector<8x512xf32>
      %294 = arith.truncf %282 : vector<8x128xf32> to vector<8x128xbf16>
      %cst_94 = arith.constant dense<0.000000e+00> : vector<8x512xf32>
      %295 = tpu.matmul %294, %22, %cst_94 {dimension_numbers = #tpu.dot_dimension_numbers<[1], [0], [0], [1], [0, 0, 1, 1], [], []>} : vector<8x128xbf16>, vector<128x512xbf16>, vector<8x512xf32> -> vector<8x512xf32>
      %296 = arith.addf %293, %295 : vector<8x512xf32>
      %297 = arith.truncf %296 : vector<8x512xf32> to vector<8x512xbf16>
      %298 = vector.extract_strided_slice %297 {offsets = [0, 0], sizes = [8, 128], strides = [1, 1]} : vector<8x512xbf16> to vector<8x128xbf16>
      %299 = arith.negf %298 : vector<8x128xbf16>
      %300 = math.exp %299 : vector<8x128xbf16>
      %cst_95 = arith.constant 1.000000e+00 : bf16
      %301 = vector.broadcast %cst_95 : bf16 to vector<8x128xbf16>
      %302 = arith.addf %301, %300 : vector<8x128xbf16>
      %303 = arith.divf %301, %302 : vector<8x128xbf16>
      %304 = arith.extf %303 : vector<8x128xbf16> to vector<8x128xf32>
      %305 = vector.extract_strided_slice %297 {offsets = [0, 128], sizes = [8, 128], strides = [1, 1]} : vector<8x512xbf16> to vector<8x128xbf16>
      %306 = arith.negf %305 : vector<8x128xbf16>
      %307 = math.exp %306 : vector<8x128xbf16>
      %cst_96 = arith.constant 1.000000e+00 : bf16
      %308 = vector.broadcast %cst_96 : bf16 to vector<8x128xbf16>
      %309 = arith.addf %308, %307 : vector<8x128xbf16>
      %310 = arith.divf %308, %309 : vector<8x128xbf16>
      %311 = arith.extf %310 : vector<8x128xbf16> to vector<8x128xf32>
      %312 = vector.extract_strided_slice %297 {offsets = [0, 256], sizes = [8, 128], strides = [1, 1]} : vector<8x512xbf16> to vector<8x128xbf16>
      %313 = math.tanh %312 : vector<8x128xbf16>
      %314 = arith.extf %313 : vector<8x128xbf16> to vector<8x128xf32>
      %315 = vector.extract_strided_slice %297 {offsets = [0, 384], sizes = [8, 128], strides = [1, 1]} : vector<8x512xbf16> to vector<8x128xbf16>
      %316 = arith.negf %315 : vector<8x128xbf16>
      %317 = math.exp %316 : vector<8x128xbf16>
      %cst_97 = arith.constant 1.000000e+00 : bf16
      %318 = vector.broadcast %cst_97 : bf16 to vector<8x128xbf16>
      %319 = arith.addf %318, %317 : vector<8x128xbf16>
      %320 = arith.divf %318, %319 : vector<8x128xbf16>
      %321 = arith.extf %320 : vector<8x128xbf16> to vector<8x128xf32>
      %322 = arith.mulf %311, %283 : vector<8x128xf32>
      %323 = arith.mulf %304, %314 : vector<8x128xf32>
      %324 = arith.addf %322, %323 : vector<8x128xf32>
      %325 = math.tanh %324 : vector<8x128xf32>
      %326 = arith.mulf %321, %325 : vector<8x128xf32>
      %c0_i32_98 = arith.constant 0 : i32
      %327 = arith.addi %c0_i32_98, %c5_i32 : i32
      %328 = vector.broadcast %327 : i32 to vector<8x1xi32>
      %329 = arith.cmpi slt, %328, %0 : vector<8x1xi32>
      %330 = vector.shape_cast %329 : vector<8x1xi1> to vector<8x1xi1>
      %331 = vector.broadcast %330 : vector<8x1xi1> to vector<8x128xi1>
      %332 = arith.select %331, %326, %282 : vector<8x128xi1>, vector<8x128xf32>
      %333 = arith.select %331, %324, %283 : vector<8x128xi1>, vector<8x128xf32>
      %cst_99 = arith.constant 0.000000e+00 : f32
      %334 = vector.broadcast %cst_99 : f32 to vector<8x128xf32>
      %335 = arith.select %331, %326, %334 : vector<8x128xi1>, vector<8x128xf32>
      %336 = arith.index_cast %327 : i32 to index
      %c0_100 = arith.constant 0 : index
      %c0_101 = arith.constant 0 : index
      %337 = vector.load %arg7[%336, %c0_100, %c0_101] : memref<16x8x128xf32, #tpu.memory_space<vmem>>, vector<1x8x128xf32>
      %338 = vector.shape_cast %337 : vector<1x8x128xf32> to vector<8x128xf32>
      %339 = vector.shape_cast %335 : vector<8x128xf32> to vector<1x8x128xf32>
      tpu.vector_store %arg7[%336, %c0_100, %c0_101], %339 {strides = array<i32>} : memref<16x8x128xf32, #tpu.memory_space<vmem>>, vector<1x8x128xf32>,
      %c6_i32 = arith.constant 6 : i32
      %c8_i32_102 = arith.constant 8 : i32
      %340 = arith.muli %c6_i32, %c8_i32_102 : i32
      %341 = tpu.assume_multiple %340, 8 : i32
      %342 = arith.index_cast %341 : i32 to index
      %c0_103 = arith.constant 0 : index
      %343 = vector.load %arg9[%342, %c0_103] : memref<128x512xf32, #tpu.memory_space<vmem>>, vector<8x512xf32>
      %344 = arith.truncf %332 : vector<8x128xf32> to vector<8x128xbf16>
      %cst_104 = arith.constant dense<0.000000e+00> : vector<8x512xf32>
      %345 = tpu.matmul %344, %22, %cst_104 {dimension_numbers = #tpu.dot_dimension_numbers<[1], [0], [0], [1], [0, 0, 1, 1], [], []>} : vector<8x128xbf16>, vector<128x512xbf16>, vector<8x512xf32> -> vector<8x512xf32>
      %346 = arith.addf %343, %345 : vector<8x512xf32>
      %347 = arith.truncf %346 : vector<8x512xf32> to vector<8x512xbf16>
      %348 = vector.extract_strided_slice %347 {offsets = [0, 0], sizes = [8, 128], strides = [1, 1]} : vector<8x512xbf16> to vector<8x128xbf16>
      %349 = arith.negf %348 : vector<8x128xbf16>
      %350 = math.exp %349 : vector<8x128xbf16>
      %cst_105 = arith.constant 1.000000e+00 : bf16
      %351 = vector.broadcast %cst_105 : bf16 to vector<8x128xbf16>
      %352 = arith.addf %351, %350 : vector<8x128xbf16>
      %353 = arith.divf %351, %352 : vector<8x128xbf16>
      %354 = arith.extf %353 : vector<8x128xbf16> to vector<8x128xf32>
      %355 = vector.extract_strided_slice %347 {offsets = [0, 128], sizes = [8, 128], strides = [1, 1]} : vector<8x512xbf16> to vector<8x128xbf16>
      %356 = arith.negf %355 : vector<8x128xbf16>
      %357 = math.exp %356 : vector<8x128xbf16>
      %cst_106 = arith.constant 1.000000e+00 : bf16
      %358 = vector.broadcast %cst_106 : bf16 to vector<8x128xbf16>
      %359 = arith.addf %358, %357 : vector<8x128xbf16>
      %360 = arith.divf %358, %359 : vector<8x128xbf16>
      %361 = arith.extf %360 : vector<8x128xbf16> to vector<8x128xf32>
      %362 = vector.extract_strided_slice %347 {offsets = [0, 256], sizes = [8, 128], strides = [1, 1]} : vector<8x512xbf16> to vector<8x128xbf16>
      %363 = math.tanh %362 : vector<8x128xbf16>
      %364 = arith.extf %363 : vector<8x128xbf16> to vector<8x128xf32>
      %365 = vector.extract_strided_slice %347 {offsets = [0, 384], sizes = [8, 128], strides = [1, 1]} : vector<8x512xbf16> to vector<8x128xbf16>
      %366 = arith.negf %365 : vector<8x128xbf16>
      %367 = math.exp %366 : vector<8x128xbf16>
      %cst_107 = arith.constant 1.000000e+00 : bf16
      %368 = vector.broadcast %cst_107 : bf16 to vector<8x128xbf16>
      %369 = arith.addf %368, %367 : vector<8x128xbf16>
      %370 = arith.divf %368, %369 : vector<8x128xbf16>
      %371 = arith.extf %370 : vector<8x128xbf16> to vector<8x128xf32>
      %372 = arith.mulf %361, %333 : vector<8x128xf32>
      %373 = arith.mulf %354, %364 : vector<8x128xf32>
      %374 = arith.addf %372, %373 : vector<8x128xf32>
      %375 = math.tanh %374 : vector<8x128xf32>
      %376 = arith.mulf %371, %375 : vector<8x128xf32>
      %c0_i32_108 = arith.constant 0 : i32
      %377 = arith.addi %c0_i32_108, %c6_i32 : i32
      %378 = vector.broadcast %377 : i32 to vector<8x1xi32>
      %379 = arith.cmpi slt, %378, %0 : vector<8x1xi32>
      %380 = vector.shape_cast %379 : vector<8x1xi1> to vector<8x1xi1>
      %381 = vector.broadcast %380 : vector<8x1xi1> to vector<8x128xi1>
      %382 = arith.select %381, %376, %332 : vector<8x128xi1>, vector<8x128xf32>
      %383 = arith.select %381, %374, %333 : vector<8x128xi1>, vector<8x128xf32>
      %cst_109 = arith.constant 0.000000e+00 : f32
      %384 = vector.broadcast %cst_109 : f32 to vector<8x128xf32>
      %385 = arith.select %381, %376, %384 : vector<8x128xi1>, vector<8x128xf32>
      %386 = arith.index_cast %377 : i32 to index
      %c0_110 = arith.constant 0 : index
      %c0_111 = arith.constant 0 : index
      %387 = vector.load %arg7[%386, %c0_110, %c0_111] : memref<16x8x128xf32, #tpu.memory_space<vmem>>, vector<1x8x128xf32>
      %388 = vector.shape_cast %387 : vector<1x8x128xf32> to vector<8x128xf32>
      %389 = vector.shape_cast %385 : vector<8x128xf32> to vector<1x8x128xf32>
      tpu.vector_store %arg7[%386, %c0_110, %c0_111], %389 {strides = array<i32>} : memref<16x8x128xf32, #tpu.memory_space<vmem>>, vector<1x8x128xf32>,
      %c7_i32 = arith.constant 7 : i32
      %c8_i32_112 = arith.constant 8 : i32
      %390 = arith.muli %c7_i32, %c8_i32_112 : i32
      %391 = tpu.assume_multiple %390, 8 : i32
      %392 = arith.index_cast %391 : i32 to index
      %c0_113 = arith.constant 0 : index
      %393 = vector.load %arg9[%392, %c0_113] : memref<128x512xf32, #tpu.memory_space<vmem>>, vector<8x512xf32>
      %394 = arith.truncf %382 : vector<8x128xf32> to vector<8x128xbf16>
      %cst_114 = arith.constant dense<0.000000e+00> : vector<8x512xf32>
      %395 = tpu.matmul %394, %22, %cst_114 {dimension_numbers = #tpu.dot_dimension_numbers<[1], [0], [0], [1], [0, 0, 1, 1], [], []>} : vector<8x128xbf16>, vector<128x512xbf16>, vector<8x512xf32> -> vector<8x512xf32>
      %396 = arith.addf %393, %395 : vector<8x512xf32>
      %397 = arith.truncf %396 : vector<8x512xf32> to vector<8x512xbf16>
      %398 = vector.extract_strided_slice %397 {offsets = [0, 0], sizes = [8, 128], strides = [1, 1]} : vector<8x512xbf16> to vector<8x128xbf16>
      %399 = arith.negf %398 : vector<8x128xbf16>
      %400 = math.exp %399 : vector<8x128xbf16>
      %cst_115 = arith.constant 1.000000e+00 : bf16
      %401 = vector.broadcast %cst_115 : bf16 to vector<8x128xbf16>
      %402 = arith.addf %401, %400 : vector<8x128xbf16>
      %403 = arith.divf %401, %402 : vector<8x128xbf16>
      %404 = arith.extf %403 : vector<8x128xbf16> to vector<8x128xf32>
      %405 = vector.extract_strided_slice %397 {offsets = [0, 128], sizes = [8, 128], strides = [1, 1]} : vector<8x512xbf16> to vector<8x128xbf16>
      %406 = arith.negf %405 : vector<8x128xbf16>
      %407 = math.exp %406 : vector<8x128xbf16>
      %cst_116 = arith.constant 1.000000e+00 : bf16
      %408 = vector.broadcast %cst_116 : bf16 to vector<8x128xbf16>
      %409 = arith.addf %408, %407 : vector<8x128xbf16>
      %410 = arith.divf %408, %409 : vector<8x128xbf16>
      %411 = arith.extf %410 : vector<8x128xbf16> to vector<8x128xf32>
      %412 = vector.extract_strided_slice %397 {offsets = [0, 256], sizes = [8, 128], strides = [1, 1]} : vector<8x512xbf16> to vector<8x128xbf16>
      %413 = math.tanh %412 : vector<8x128xbf16>
      %414 = arith.extf %413 : vector<8x128xbf16> to vector<8x128xf32>
      %415 = vector.extract_strided_slice %397 {offsets = [0, 384], sizes = [8, 128], strides = [1, 1]} : vector<8x512xbf16> to vector<8x128xbf16>
      %416 = arith.negf %415 : vector<8x128xbf16>
      %417 = math.exp %416 : vector<8x128xbf16>
      %cst_117 = arith.constant 1.000000e+00 : bf16
      %418 = vector.broadcast %cst_117 : bf16 to vector<8x128xbf16>
      %419 = arith.addf %418, %417 : vector<8x128xbf16>
      %420 = arith.divf %418, %419 : vector<8x128xbf16>
      %421 = arith.extf %420 : vector<8x128xbf16> to vector<8x128xf32>
      %422 = arith.mulf %411, %383 : vector<8x128xf32>
      %423 = arith.mulf %404, %414 : vector<8x128xf32>
      %424 = arith.addf %422, %423 : vector<8x128xf32>
      %425 = math.tanh %424 : vector<8x128xf32>
      %426 = arith.mulf %421, %425 : vector<8x128xf32>
      %c0_i32_118 = arith.constant 0 : i32
      %427 = arith.addi %c0_i32_118, %c7_i32 : i32
      %428 = vector.broadcast %427 : i32 to vector<8x1xi32>
      %429 = arith.cmpi slt, %428, %0 : vector<8x1xi32>
      %430 = vector.shape_cast %429 : vector<8x1xi1> to vector<8x1xi1>
      %431 = vector.broadcast %430 : vector<8x1xi1> to vector<8x128xi1>
      %432 = arith.select %431, %426, %382 : vector<8x128xi1>, vector<8x128xf32>
      %433 = arith.select %431, %424, %383 : vector<8x128xi1>, vector<8x128xf32>
      %cst_119 = arith.constant 0.000000e+00 : f32
      %434 = vector.broadcast %cst_119 : f32 to vector<8x128xf32>
      %435 = arith.select %431, %426, %434 : vector<8x128xi1>, vector<8x128xf32>
      %436 = arith.index_cast %427 : i32 to index
      %c0_120 = arith.constant 0 : index
      %c0_121 = arith.constant 0 : index
      %437 = vector.load %arg7[%436, %c0_120, %c0_121] : memref<16x8x128xf32, #tpu.memory_space<vmem>>, vector<1x8x128xf32>
      %438 = vector.shape_cast %437 : vector<1x8x128xf32> to vector<8x128xf32>
      %439 = vector.shape_cast %435 : vector<8x128xf32> to vector<1x8x128xf32>
      tpu.vector_store %arg7[%436, %c0_120, %c0_121], %439 {strides = array<i32>} : memref<16x8x128xf32, #tpu.memory_space<vmem>>, vector<1x8x128xf32>,
      %c8_i32_122 = arith.constant 8 : i32
      %c8_i32_123 = arith.constant 8 : i32
      %440 = arith.muli %c8_i32_122, %c8_i32_123 : i32
      %441 = tpu.assume_multiple %440, 8 : i32
      %442 = arith.index_cast %441 : i32 to index
      %c0_124 = arith.constant 0 : index
      %443 = vector.load %arg9[%442, %c0_124] : memref<128x512xf32, #tpu.memory_space<vmem>>, vector<8x512xf32>
      %444 = arith.truncf %432 : vector<8x128xf32> to vector<8x128xbf16>
      %cst_125 = arith.constant dense<0.000000e+00> : vector<8x512xf32>
      %445 = tpu.matmul %444, %22, %cst_125 {dimension_numbers = #tpu.dot_dimension_numbers<[1], [0], [0], [1], [0, 0, 1, 1], [], []>} : vector<8x128xbf16>, vector<128x512xbf16>, vector<8x512xf32> -> vector<8x512xf32>
      %446 = arith.addf %443, %445 : vector<8x512xf32>
      %447 = arith.truncf %446 : vector<8x512xf32> to vector<8x512xbf16>
      %448 = vector.extract_strided_slice %447 {offsets = [0, 0], sizes = [8, 128], strides = [1, 1]} : vector<8x512xbf16> to vector<8x128xbf16>
      %449 = arith.negf %448 : vector<8x128xbf16>
      %450 = math.exp %449 : vector<8x128xbf16>
      %cst_126 = arith.constant 1.000000e+00 : bf16
      %451 = vector.broadcast %cst_126 : bf16 to vector<8x128xbf16>
      %452 = arith.addf %451, %450 : vector<8x128xbf16>
      %453 = arith.divf %451, %452 : vector<8x128xbf16>
      %454 = arith.extf %453 : vector<8x128xbf16> to vector<8x128xf32>
      %455 = vector.extract_strided_slice %447 {offsets = [0, 128], sizes = [8, 128], strides = [1, 1]} : vector<8x512xbf16> to vector<8x128xbf16>
      %456 = arith.negf %455 : vector<8x128xbf16>
      %457 = math.exp %456 : vector<8x128xbf16>
      %cst_127 = arith.constant 1.000000e+00 : bf16
      %458 = vector.broadcast %cst_127 : bf16 to vector<8x128xbf16>
      %459 = arith.addf %458, %457 : vector<8x128xbf16>
      %460 = arith.divf %458, %459 : vector<8x128xbf16>
      %461 = arith.extf %460 : vector<8x128xbf16> to vector<8x128xf32>
      %462 = vector.extract_strided_slice %447 {offsets = [0, 256], sizes = [8, 128], strides = [1, 1]} : vector<8x512xbf16> to vector<8x128xbf16>
      %463 = math.tanh %462 : vector<8x128xbf16>
      %464 = arith.extf %463 : vector<8x128xbf16> to vector<8x128xf32>
      %465 = vector.extract_strided_slice %447 {offsets = [0, 384], sizes = [8, 128], strides = [1, 1]} : vector<8x512xbf16> to vector<8x128xbf16>
      %466 = arith.negf %465 : vector<8x128xbf16>
      %467 = math.exp %466 : vector<8x128xbf16>
      %cst_128 = arith.constant 1.000000e+00 : bf16
      %468 = vector.broadcast %cst_128 : bf16 to vector<8x128xbf16>
      %469 = arith.addf %468, %467 : vector<8x128xbf16>
      %470 = arith.divf %468, %469 : vector<8x128xbf16>
      %471 = arith.extf %470 : vector<8x128xbf16> to vector<8x128xf32>
      %472 = arith.mulf %461, %433 : vector<8x128xf32>
      %473 = arith.mulf %454, %464 : vector<8x128xf32>
      %474 = arith.addf %472, %473 : vector<8x128xf32>
      %475 = math.tanh %474 : vector<8x128xf32>
      %476 = arith.mulf %471, %475 : vector<8x128xf32>
      %c0_i32_129 = arith.constant 0 : i32
      %477 = arith.addi %c0_i32_129, %c8_i32_122 : i32
      %478 = vector.broadcast %477 : i32 to vector<8x1xi32>
      %479 = arith.cmpi slt, %478, %0 : vector<8x1xi32>
      %480 = vector.shape_cast %479 : vector<8x1xi1> to vector<8x1xi1>
      %481 = vector.broadcast %480 : vector<8x1xi1> to vector<8x128xi1>
      %482 = arith.select %481, %476, %432 : vector<8x128xi1>, vector<8x128xf32>
      %483 = arith.select %481, %474, %433 : vector<8x128xi1>, vector<8x128xf32>
      %cst_130 = arith.constant 0.000000e+00 : f32
      %484 = vector.broadcast %cst_130 : f32 to vector<8x128xf32>
      %485 = arith.select %481, %476, %484 : vector<8x128xi1>, vector<8x128xf32>
      %486 = arith.index_cast %477 : i32 to index
      %c0_131 = arith.constant 0 : index
      %c0_132 = arith.constant 0 : index
      %487 = vector.load %arg7[%486, %c0_131, %c0_132] : memref<16x8x128xf32, #tpu.memory_space<vmem>>, vector<1x8x128xf32>
      %488 = vector.shape_cast %487 : vector<1x8x128xf32> to vector<8x128xf32>
      %489 = vector.shape_cast %485 : vector<8x128xf32> to vector<1x8x128xf32>
      tpu.vector_store %arg7[%486, %c0_131, %c0_132], %489 {strides = array<i32>} : memref<16x8x128xf32, #tpu.memory_space<vmem>>, vector<1x8x128xf32>,
      %c9_i32 = arith.constant 9 : i32
      %c8_i32_133 = arith.constant 8 : i32
      %490 = arith.muli %c9_i32, %c8_i32_133 : i32
      %491 = tpu.assume_multiple %490, 8 : i32
      %492 = arith.index_cast %491 : i32 to index
      %c0_134 = arith.constant 0 : index
      %493 = vector.load %arg9[%492, %c0_134] : memref<128x512xf32, #tpu.memory_space<vmem>>, vector<8x512xf32>
      %494 = arith.truncf %482 : vector<8x128xf32> to vector<8x128xbf16>
      %cst_135 = arith.constant dense<0.000000e+00> : vector<8x512xf32>
      %495 = tpu.matmul %494, %22, %cst_135 {dimension_numbers = #tpu.dot_dimension_numbers<[1], [0], [0], [1], [0, 0, 1, 1], [], []>} : vector<8x128xbf16>, vector<128x512xbf16>, vector<8x512xf32> -> vector<8x512xf32>
      %496 = arith.addf %493, %495 : vector<8x512xf32>
      %497 = arith.truncf %496 : vector<8x512xf32> to vector<8x512xbf16>
      %498 = vector.extract_strided_slice %497 {offsets = [0, 0], sizes = [8, 128], strides = [1, 1]} : vector<8x512xbf16> to vector<8x128xbf16>
      %499 = arith.negf %498 : vector<8x128xbf16>
      %500 = math.exp %499 : vector<8x128xbf16>
      %cst_136 = arith.constant 1.000000e+00 : bf16
      %501 = vector.broadcast %cst_136 : bf16 to vector<8x128xbf16>
      %502 = arith.addf %501, %500 : vector<8x128xbf16>
      %503 = arith.divf %501, %502 : vector<8x128xbf16>
      %504 = arith.extf %503 : vector<8x128xbf16> to vector<8x128xf32>
      %505 = vector.extract_strided_slice %497 {offsets = [0, 128], sizes = [8, 128], strides = [1, 1]} : vector<8x512xbf16> to vector<8x128xbf16>
      %506 = arith.negf %505 : vector<8x128xbf16>
      %507 = math.exp %506 : vector<8x128xbf16>
      %cst_137 = arith.constant 1.000000e+00 : bf16
      %508 = vector.broadcast %cst_137 : bf16 to vector<8x128xbf16>
      %509 = arith.addf %508, %507 : vector<8x128xbf16>
      %510 = arith.divf %508, %509 : vector<8x128xbf16>
      %511 = arith.extf %510 : vector<8x128xbf16> to vector<8x128xf32>
      %512 = vector.extract_strided_slice %497 {offsets = [0, 256], sizes = [8, 128], strides = [1, 1]} : vector<8x512xbf16> to vector<8x128xbf16>
      %513 = math.tanh %512 : vector<8x128xbf16>
      %514 = arith.extf %513 : vector<8x128xbf16> to vector<8x128xf32>
      %515 = vector.extract_strided_slice %497 {offsets = [0, 384], sizes = [8, 128], strides = [1, 1]} : vector<8x512xbf16> to vector<8x128xbf16>
      %516 = arith.negf %515 : vector<8x128xbf16>
      %517 = math.exp %516 : vector<8x128xbf16>
      %cst_138 = arith.constant 1.000000e+00 : bf16
      %518 = vector.broadcast %cst_138 : bf16 to vector<8x128xbf16>
      %519 = arith.addf %518, %517 : vector<8x128xbf16>
      %520 = arith.divf %518, %519 : vector<8x128xbf16>
      %521 = arith.extf %520 : vector<8x128xbf16> to vector<8x128xf32>
      %522 = arith.mulf %511, %483 : vector<8x128xf32>
      %523 = arith.mulf %504, %514 : vector<8x128xf32>
      %524 = arith.addf %522, %523 : vector<8x128xf32>
      %525 = math.tanh %524 : vector<8x128xf32>
      %526 = arith.mulf %521, %525 : vector<8x128xf32>
      %c0_i32_139 = arith.constant 0 : i32
      %527 = arith.addi %c0_i32_139, %c9_i32 : i32
      %528 = vector.broadcast %527 : i32 to vector<8x1xi32>
      %529 = arith.cmpi slt, %528, %0 : vector<8x1xi32>
      %530 = vector.shape_cast %529 : vector<8x1xi1> to vector<8x1xi1>
      %531 = vector.broadcast %530 : vector<8x1xi1> to vector<8x128xi1>
      %532 = arith.select %531, %526, %482 : vector<8x128xi1>, vector<8x128xf32>
      %533 = arith.select %531, %524, %483 : vector<8x128xi1>, vector<8x128xf32>
      %cst_140 = arith.constant 0.000000e+00 : f32
      %534 = vector.broadcast %cst_140 : f32 to vector<8x128xf32>
      %535 = arith.select %531, %526, %534 : vector<8x128xi1>, vector<8x128xf32>
      %536 = arith.index_cast %527 : i32 to index
      %c0_141 = arith.constant 0 : index
      %c0_142 = arith.constant 0 : index
      %537 = vector.load %arg7[%536, %c0_141, %c0_142] : memref<16x8x128xf32, #tpu.memory_space<vmem>>, vector<1x8x128xf32>
      %538 = vector.shape_cast %537 : vector<1x8x128xf32> to vector<8x128xf32>
      %539 = vector.shape_cast %535 : vector<8x128xf32> to vector<1x8x128xf32>
      tpu.vector_store %arg7[%536, %c0_141, %c0_142], %539 {strides = array<i32>} : memref<16x8x128xf32, #tpu.memory_space<vmem>>, vector<1x8x128xf32>,
      %c10_i32 = arith.constant 10 : i32
      %c8_i32_143 = arith.constant 8 : i32
      %540 = arith.muli %c10_i32, %c8_i32_143 : i32
      %541 = tpu.assume_multiple %540, 8 : i32
      %542 = arith.index_cast %541 : i32 to index
      %c0_144 = arith.constant 0 : index
      %543 = vector.load %arg9[%542, %c0_144] : memref<128x512xf32, #tpu.memory_space<vmem>>, vector<8x512xf32>
      %544 = arith.truncf %532 : vector<8x128xf32> to vector<8x128xbf16>
      %cst_145 = arith.constant dense<0.000000e+00> : vector<8x512xf32>
      %545 = tpu.matmul %544, %22, %cst_145 {dimension_numbers = #tpu.dot_dimension_numbers<[1], [0], [0], [1], [0, 0, 1, 1], [], []>} : vector<8x128xbf16>, vector<128x512xbf16>, vector<8x512xf32> -> vector<8x512xf32>
      %546 = arith.addf %543, %545 : vector<8x512xf32>
      %547 = arith.truncf %546 : vector<8x512xf32> to vector<8x512xbf16>
      %548 = vector.extract_strided_slice %547 {offsets = [0, 0], sizes = [8, 128], strides = [1, 1]} : vector<8x512xbf16> to vector<8x128xbf16>
      %549 = arith.negf %548 : vector<8x128xbf16>
      %550 = math.exp %549 : vector<8x128xbf16>
      %cst_146 = arith.constant 1.000000e+00 : bf16
      %551 = vector.broadcast %cst_146 : bf16 to vector<8x128xbf16>
      %552 = arith.addf %551, %550 : vector<8x128xbf16>
      %553 = arith.divf %551, %552 : vector<8x128xbf16>
      %554 = arith.extf %553 : vector<8x128xbf16> to vector<8x128xf32>
      %555 = vector.extract_strided_slice %547 {offsets = [0, 128], sizes = [8, 128], strides = [1, 1]} : vector<8x512xbf16> to vector<8x128xbf16>
      %556 = arith.negf %555 : vector<8x128xbf16>
      %557 = math.exp %556 : vector<8x128xbf16>
      %cst_147 = arith.constant 1.000000e+00 : bf16
      %558 = vector.broadcast %cst_147 : bf16 to vector<8x128xbf16>
      %559 = arith.addf %558, %557 : vector<8x128xbf16>
      %560 = arith.divf %558, %559 : vector<8x128xbf16>
      %561 = arith.extf %560 : vector<8x128xbf16> to vector<8x128xf32>
      %562 = vector.extract_strided_slice %547 {offsets = [0, 256], sizes = [8, 128], strides = [1, 1]} : vector<8x512xbf16> to vector<8x128xbf16>
      %563 = math.tanh %562 : vector<8x128xbf16>
      %564 = arith.extf %563 : vector<8x128xbf16> to vector<8x128xf32>
      %565 = vector.extract_strided_slice %547 {offsets = [0, 384], sizes = [8, 128], strides = [1, 1]} : vector<8x512xbf16> to vector<8x128xbf16>
      %566 = arith.negf %565 : vector<8x128xbf16>
      %567 = math.exp %566 : vector<8x128xbf16>
      %cst_148 = arith.constant 1.000000e+00 : bf16
      %568 = vector.broadcast %cst_148 : bf16 to vector<8x128xbf16>
      %569 = arith.addf %568, %567 : vector<8x128xbf16>
      %570 = arith.divf %568, %569 : vector<8x128xbf16>
      %571 = arith.extf %570 : vector<8x128xbf16> to vector<8x128xf32>
      %572 = arith.mulf %561, %533 : vector<8x128xf32>
      %573 = arith.mulf %554, %564 : vector<8x128xf32>
      %574 = arith.addf %572, %573 : vector<8x128xf32>
      %575 = math.tanh %574 : vector<8x128xf32>
      %576 = arith.mulf %571, %575 : vector<8x128xf32>
      %c0_i32_149 = arith.constant 0 : i32
      %577 = arith.addi %c0_i32_149, %c10_i32 : i32
      %578 = vector.broadcast %577 : i32 to vector<8x1xi32>
      %579 = arith.cmpi slt, %578, %0 : vector<8x1xi32>
      %580 = vector.shape_cast %579 : vector<8x1xi1> to vector<8x1xi1>
      %581 = vector.broadcast %580 : vector<8x1xi1> to vector<8x128xi1>
      %582 = arith.select %581, %576, %532 : vector<8x128xi1>, vector<8x128xf32>
      %583 = arith.select %581, %574, %533 : vector<8x128xi1>, vector<8x128xf32>
      %cst_150 = arith.constant 0.000000e+00 : f32
      %584 = vector.broadcast %cst_150 : f32 to vector<8x128xf32>
      %585 = arith.select %581, %576, %584 : vector<8x128xi1>, vector<8x128xf32>
      %586 = arith.index_cast %577 : i32 to index
      %c0_151 = arith.constant 0 : index
      %c0_152 = arith.constant 0 : index
      %587 = vector.load %arg7[%586, %c0_151, %c0_152] : memref<16x8x128xf32, #tpu.memory_space<vmem>>, vector<1x8x128xf32>
      %588 = vector.shape_cast %587 : vector<1x8x128xf32> to vector<8x128xf32>
      %589 = vector.shape_cast %585 : vector<8x128xf32> to vector<1x8x128xf32>
      tpu.vector_store %arg7[%586, %c0_151, %c0_152], %589 {strides = array<i32>} : memref<16x8x128xf32, #tpu.memory_space<vmem>>, vector<1x8x128xf32>,
      %c11_i32 = arith.constant 11 : i32
      %c8_i32_153 = arith.constant 8 : i32
      %590 = arith.muli %c11_i32, %c8_i32_153 : i32
      %591 = tpu.assume_multiple %590, 8 : i32
      %592 = arith.index_cast %591 : i32 to index
      %c0_154 = arith.constant 0 : index
      %593 = vector.load %arg9[%592, %c0_154] : memref<128x512xf32, #tpu.memory_space<vmem>>, vector<8x512xf32>
      %594 = arith.truncf %582 : vector<8x128xf32> to vector<8x128xbf16>
      %cst_155 = arith.constant dense<0.000000e+00> : vector<8x512xf32>
      %595 = tpu.matmul %594, %22, %cst_155 {dimension_numbers = #tpu.dot_dimension_numbers<[1], [0], [0], [1], [0, 0, 1, 1], [], []>} : vector<8x128xbf16>, vector<128x512xbf16>, vector<8x512xf32> -> vector<8x512xf32>
      %596 = arith.addf %593, %595 : vector<8x512xf32>
      %597 = arith.truncf %596 : vector<8x512xf32> to vector<8x512xbf16>
      %598 = vector.extract_strided_slice %597 {offsets = [0, 0], sizes = [8, 128], strides = [1, 1]} : vector<8x512xbf16> to vector<8x128xbf16>
      %599 = arith.negf %598 : vector<8x128xbf16>
      %600 = math.exp %599 : vector<8x128xbf16>
      %cst_156 = arith.constant 1.000000e+00 : bf16
      %601 = vector.broadcast %cst_156 : bf16 to vector<8x128xbf16>
      %602 = arith.addf %601, %600 : vector<8x128xbf16>
      %603 = arith.divf %601, %602 : vector<8x128xbf16>
      %604 = arith.extf %603 : vector<8x128xbf16> to vector<8x128xf32>
      %605 = vector.extract_strided_slice %597 {offsets = [0, 128], sizes = [8, 128], strides = [1, 1]} : vector<8x512xbf16> to vector<8x128xbf16>
      %606 = arith.negf %605 : vector<8x128xbf16>
      %607 = math.exp %606 : vector<8x128xbf16>
      %cst_157 = arith.constant 1.000000e+00 : bf16
      %608 = vector.broadcast %cst_157 : bf16 to vector<8x128xbf16>
      %609 = arith.addf %608, %607 : vector<8x128xbf16>
      %610 = arith.divf %608, %609 : vector<8x128xbf16>
      %611 = arith.extf %610 : vector<8x128xbf16> to vector<8x128xf32>
      %612 = vector.extract_strided_slice %597 {offsets = [0, 256], sizes = [8, 128], strides = [1, 1]} : vector<8x512xbf16> to vector<8x128xbf16>
      %613 = math.tanh %612 : vector<8x128xbf16>
      %614 = arith.extf %613 : vector<8x128xbf16> to vector<8x128xf32>
      %615 = vector.extract_strided_slice %597 {offsets = [0, 384], sizes = [8, 128], strides = [1, 1]} : vector<8x512xbf16> to vector<8x128xbf16>
      %616 = arith.negf %615 : vector<8x128xbf16>
      %617 = math.exp %616 : vector<8x128xbf16>
      %cst_158 = arith.constant 1.000000e+00 : bf16
      %618 = vector.broadcast %cst_158 : bf16 to vector<8x128xbf16>
      %619 = arith.addf %618, %617 : vector<8x128xbf16>
      %620 = arith.divf %618, %619 : vector<8x128xbf16>
      %621 = arith.extf %620 : vector<8x128xbf16> to vector<8x128xf32>
      %622 = arith.mulf %611, %583 : vector<8x128xf32>
      %623 = arith.mulf %604, %614 : vector<8x128xf32>
      %624 = arith.addf %622, %623 : vector<8x128xf32>
      %625 = math.tanh %624 : vector<8x128xf32>
      %626 = arith.mulf %621, %625 : vector<8x128xf32>
      %c0_i32_159 = arith.constant 0 : i32
      %627 = arith.addi %c0_i32_159, %c11_i32 : i32
      %628 = vector.broadcast %627 : i32 to vector<8x1xi32>
      %629 = arith.cmpi slt, %628, %0 : vector<8x1xi32>
      %630 = vector.shape_cast %629 : vector<8x1xi1> to vector<8x1xi1>
      %631 = vector.broadcast %630 : vector<8x1xi1> to vector<8x128xi1>
      %632 = arith.select %631, %626, %582 : vector<8x128xi1>, vector<8x128xf32>
      %633 = arith.select %631, %624, %583 : vector<8x128xi1>, vector<8x128xf32>
      %cst_160 = arith.constant 0.000000e+00 : f32
      %634 = vector.broadcast %cst_160 : f32 to vector<8x128xf32>
      %635 = arith.select %631, %626, %634 : vector<8x128xi1>, vector<8x128xf32>
      %636 = arith.index_cast %627 : i32 to index
      %c0_161 = arith.constant 0 : index
      %c0_162 = arith.constant 0 : index
      %637 = vector.load %arg7[%636, %c0_161, %c0_162] : memref<16x8x128xf32, #tpu.memory_space<vmem>>, vector<1x8x128xf32>
      %638 = vector.shape_cast %637 : vector<1x8x128xf32> to vector<8x128xf32>
      %639 = vector.shape_cast %635 : vector<8x128xf32> to vector<1x8x128xf32>
      tpu.vector_store %arg7[%636, %c0_161, %c0_162], %639 {strides = array<i32>} : memref<16x8x128xf32, #tpu.memory_space<vmem>>, vector<1x8x128xf32>,
      %c12_i32 = arith.constant 12 : i32
      %c8_i32_163 = arith.constant 8 : i32
      %640 = arith.muli %c12_i32, %c8_i32_163 : i32
      %641 = tpu.assume_multiple %640, 8 : i32
      %642 = arith.index_cast %641 : i32 to index
      %c0_164 = arith.constant 0 : index
      %643 = vector.load %arg9[%642, %c0_164] : memref<128x512xf32, #tpu.memory_space<vmem>>, vector<8x512xf32>
      %644 = arith.truncf %632 : vector<8x128xf32> to vector<8x128xbf16>
      %cst_165 = arith.constant dense<0.000000e+00> : vector<8x512xf32>
      %645 = tpu.matmul %644, %22, %cst_165 {dimension_numbers = #tpu.dot_dimension_numbers<[1], [0], [0], [1], [0, 0, 1, 1], [], []>} : vector<8x128xbf16>, vector<128x512xbf16>, vector<8x512xf32> -> vector<8x512xf32>
      %646 = arith.addf %643, %645 : vector<8x512xf32>
      %647 = arith.truncf %646 : vector<8x512xf32> to vector<8x512xbf16>
      %648 = vector.extract_strided_slice %647 {offsets = [0, 0], sizes = [8, 128], strides = [1, 1]} : vector<8x512xbf16> to vector<8x128xbf16>
      %649 = arith.negf %648 : vector<8x128xbf16>
      %650 = math.exp %649 : vector<8x128xbf16>
      %cst_166 = arith.constant 1.000000e+00 : bf16
      %651 = vector.broadcast %cst_166 : bf16 to vector<8x128xbf16>
      %652 = arith.addf %651, %650 : vector<8x128xbf16>
      %653 = arith.divf %651, %652 : vector<8x128xbf16>
      %654 = arith.extf %653 : vector<8x128xbf16> to vector<8x128xf32>
      %655 = vector.extract_strided_slice %647 {offsets = [0, 128], sizes = [8, 128], strides = [1, 1]} : vector<8x512xbf16> to vector<8x128xbf16>
      %656 = arith.negf %655 : vector<8x128xbf16>
      %657 = math.exp %656 : vector<8x128xbf16>
      %cst_167 = arith.constant 1.000000e+00 : bf16
      %658 = vector.broadcast %cst_167 : bf16 to vector<8x128xbf16>
      %659 = arith.addf %658, %657 : vector<8x128xbf16>
      %660 = arith.divf %658, %659 : vector<8x128xbf16>
      %661 = arith.extf %660 : vector<8x128xbf16> to vector<8x128xf32>
      %662 = vector.extract_strided_slice %647 {offsets = [0, 256], sizes = [8, 128], strides = [1, 1]} : vector<8x512xbf16> to vector<8x128xbf16>
      %663 = math.tanh %662 : vector<8x128xbf16>
      %664 = arith.extf %663 : vector<8x128xbf16> to vector<8x128xf32>
      %665 = vector.extract_strided_slice %647 {offsets = [0, 384], sizes = [8, 128], strides = [1, 1]} : vector<8x512xbf16> to vector<8x128xbf16>
      %666 = arith.negf %665 : vector<8x128xbf16>
      %667 = math.exp %666 : vector<8x128xbf16>
      %cst_168 = arith.constant 1.000000e+00 : bf16
      %668 = vector.broadcast %cst_168 : bf16 to vector<8x128xbf16>
      %669 = arith.addf %668, %667 : vector<8x128xbf16>
      %670 = arith.divf %668, %669 : vector<8x128xbf16>
      %671 = arith.extf %670 : vector<8x128xbf16> to vector<8x128xf32>
      %672 = arith.mulf %661, %633 : vector<8x128xf32>
      %673 = arith.mulf %654, %664 : vector<8x128xf32>
      %674 = arith.addf %672, %673 : vector<8x128xf32>
      %675 = math.tanh %674 : vector<8x128xf32>
      %676 = arith.mulf %671, %675 : vector<8x128xf32>
      %c0_i32_169 = arith.constant 0 : i32
      %677 = arith.addi %c0_i32_169, %c12_i32 : i32
      %678 = vector.broadcast %677 : i32 to vector<8x1xi32>
      %679 = arith.cmpi slt, %678, %0 : vector<8x1xi32>
      %680 = vector.shape_cast %679 : vector<8x1xi1> to vector<8x1xi1>
      %681 = vector.broadcast %680 : vector<8x1xi1> to vector<8x128xi1>
      %682 = arith.select %681, %676, %632 : vector<8x128xi1>, vector<8x128xf32>
      %683 = arith.select %681, %674, %633 : vector<8x128xi1>, vector<8x128xf32>
      %cst_170 = arith.constant 0.000000e+00 : f32
      %684 = vector.broadcast %cst_170 : f32 to vector<8x128xf32>
      %685 = arith.select %681, %676, %684 : vector<8x128xi1>, vector<8x128xf32>
      %686 = arith.index_cast %677 : i32 to index
      %c0_171 = arith.constant 0 : index
      %c0_172 = arith.constant 0 : index
      %687 = vector.load %arg7[%686, %c0_171, %c0_172] : memref<16x8x128xf32, #tpu.memory_space<vmem>>, vector<1x8x128xf32>
      %688 = vector.shape_cast %687 : vector<1x8x128xf32> to vector<8x128xf32>
      %689 = vector.shape_cast %685 : vector<8x128xf32> to vector<1x8x128xf32>
      tpu.vector_store %arg7[%686, %c0_171, %c0_172], %689 {strides = array<i32>} : memref<16x8x128xf32, #tpu.memory_space<vmem>>, vector<1x8x128xf32>,
      %c13_i32 = arith.constant 13 : i32
      %c8_i32_173 = arith.constant 8 : i32
      %690 = arith.muli %c13_i32, %c8_i32_173 : i32
      %691 = tpu.assume_multiple %690, 8 : i32
      %692 = arith.index_cast %691 : i32 to index
      %c0_174 = arith.constant 0 : index
      %693 = vector.load %arg9[%692, %c0_174] : memref<128x512xf32, #tpu.memory_space<vmem>>, vector<8x512xf32>
      %694 = arith.truncf %682 : vector<8x128xf32> to vector<8x128xbf16>
      %cst_175 = arith.constant dense<0.000000e+00> : vector<8x512xf32>
      %695 = tpu.matmul %694, %22, %cst_175 {dimension_numbers = #tpu.dot_dimension_numbers<[1], [0], [0], [1], [0, 0, 1, 1], [], []>} : vector<8x128xbf16>, vector<128x512xbf16>, vector<8x512xf32> -> vector<8x512xf32>
      %696 = arith.addf %693, %695 : vector<8x512xf32>
      %697 = arith.truncf %696 : vector<8x512xf32> to vector<8x512xbf16>
      %698 = vector.extract_strided_slice %697 {offsets = [0, 0], sizes = [8, 128], strides = [1, 1]} : vector<8x512xbf16> to vector<8x128xbf16>
      %699 = arith.negf %698 : vector<8x128xbf16>
      %700 = math.exp %699 : vector<8x128xbf16>
      %cst_176 = arith.constant 1.000000e+00 : bf16
      %701 = vector.broadcast %cst_176 : bf16 to vector<8x128xbf16>
      %702 = arith.addf %701, %700 : vector<8x128xbf16>
      %703 = arith.divf %701, %702 : vector<8x128xbf16>
      %704 = arith.extf %703 : vector<8x128xbf16> to vector<8x128xf32>
      %705 = vector.extract_strided_slice %697 {offsets = [0, 128], sizes = [8, 128], strides = [1, 1]} : vector<8x512xbf16> to vector<8x128xbf16>
      %706 = arith.negf %705 : vector<8x128xbf16>
      %707 = math.exp %706 : vector<8x128xbf16>
      %cst_177 = arith.constant 1.000000e+00 : bf16
      %708 = vector.broadcast %cst_177 : bf16 to vector<8x128xbf16>
      %709 = arith.addf %708, %707 : vector<8x128xbf16>
      %710 = arith.divf %708, %709 : vector<8x128xbf16>
      %711 = arith.extf %710 : vector<8x128xbf16> to vector<8x128xf32>
      %712 = vector.extract_strided_slice %697 {offsets = [0, 256], sizes = [8, 128], strides = [1, 1]} : vector<8x512xbf16> to vector<8x128xbf16>
      %713 = math.tanh %712 : vector<8x128xbf16>
      %714 = arith.extf %713 : vector<8x128xbf16> to vector<8x128xf32>
      %715 = vector.extract_strided_slice %697 {offsets = [0, 384], sizes = [8, 128], strides = [1, 1]} : vector<8x512xbf16> to vector<8x128xbf16>
      %716 = arith.negf %715 : vector<8x128xbf16>
      %717 = math.exp %716 : vector<8x128xbf16>
      %cst_178 = arith.constant 1.000000e+00 : bf16
      %718 = vector.broadcast %cst_178 : bf16 to vector<8x128xbf16>
      %719 = arith.addf %718, %717 : vector<8x128xbf16>
      %720 = arith.divf %718, %719 : vector<8x128xbf16>
      %721 = arith.extf %720 : vector<8x128xbf16> to vector<8x128xf32>
      %722 = arith.mulf %711, %683 : vector<8x128xf32>
      %723 = arith.mulf %704, %714 : vector<8x128xf32>
      %724 = arith.addf %722, %723 : vector<8x128xf32>
      %725 = math.tanh %724 : vector<8x128xf32>
      %726 = arith.mulf %721, %725 : vector<8x128xf32>
      %c0_i32_179 = arith.constant 0 : i32
      %727 = arith.addi %c0_i32_179, %c13_i32 : i32
      %728 = vector.broadcast %727 : i32 to vector<8x1xi32>
      %729 = arith.cmpi slt, %728, %0 : vector<8x1xi32>
      %730 = vector.shape_cast %729 : vector<8x1xi1> to vector<8x1xi1>
      %731 = vector.broadcast %730 : vector<8x1xi1> to vector<8x128xi1>
      %732 = arith.select %731, %726, %682 : vector<8x128xi1>, vector<8x128xf32>
      %733 = arith.select %731, %724, %683 : vector<8x128xi1>, vector<8x128xf32>
      %cst_180 = arith.constant 0.000000e+00 : f32
      %734 = vector.broadcast %cst_180 : f32 to vector<8x128xf32>
      %735 = arith.select %731, %726, %734 : vector<8x128xi1>, vector<8x128xf32>
      %736 = arith.index_cast %727 : i32 to index
      %c0_181 = arith.constant 0 : index
      %c0_182 = arith.constant 0 : index
      %737 = vector.load %arg7[%736, %c0_181, %c0_182] : memref<16x8x128xf32, #tpu.memory_space<vmem>>, vector<1x8x128xf32>
      %738 = vector.shape_cast %737 : vector<1x8x128xf32> to vector<8x128xf32>
      %739 = vector.shape_cast %735 : vector<8x128xf32> to vector<1x8x128xf32>
      tpu.vector_store %arg7[%736, %c0_181, %c0_182], %739 {strides = array<i32>} : memref<16x8x128xf32, #tpu.memory_space<vmem>>, vector<1x8x128xf32>,
      %c14_i32 = arith.constant 14 : i32
      %c8_i32_183 = arith.constant 8 : i32
      %740 = arith.muli %c14_i32, %c8_i32_183 : i32
      %741 = tpu.assume_multiple %740, 8 : i32
      %742 = arith.index_cast %741 : i32 to index
      %c0_184 = arith.constant 0 : index
      %743 = vector.load %arg9[%742, %c0_184] : memref<128x512xf32, #tpu.memory_space<vmem>>, vector<8x512xf32>
      %744 = arith.truncf %732 : vector<8x128xf32> to vector<8x128xbf16>
      %cst_185 = arith.constant dense<0.000000e+00> : vector<8x512xf32>
      %745 = tpu.matmul %744, %22, %cst_185 {dimension_numbers = #tpu.dot_dimension_numbers<[1], [0], [0], [1], [0, 0, 1, 1], [], []>} : vector<8x128xbf16>, vector<128x512xbf16>, vector<8x512xf32> -> vector<8x512xf32>
      %746 = arith.addf %743, %745 : vector<8x512xf32>
      %747 = arith.truncf %746 : vector<8x512xf32> to vector<8x512xbf16>
      %748 = vector.extract_strided_slice %747 {offsets = [0, 0], sizes = [8, 128], strides = [1, 1]} : vector<8x512xbf16> to vector<8x128xbf16>
      %749 = arith.negf %748 : vector<8x128xbf16>
      %750 = math.exp %749 : vector<8x128xbf16>
      %cst_186 = arith.constant 1.000000e+00 : bf16
      %751 = vector.broadcast %cst_186 : bf16 to vector<8x128xbf16>
      %752 = arith.addf %751, %750 : vector<8x128xbf16>
      %753 = arith.divf %751, %752 : vector<8x128xbf16>
      %754 = arith.extf %753 : vector<8x128xbf16> to vector<8x128xf32>
      %755 = vector.extract_strided_slice %747 {offsets = [0, 128], sizes = [8, 128], strides = [1, 1]} : vector<8x512xbf16> to vector<8x128xbf16>
      %756 = arith.negf %755 : vector<8x128xbf16>
      %757 = math.exp %756 : vector<8x128xbf16>
      %cst_187 = arith.constant 1.000000e+00 : bf16
      %758 = vector.broadcast %cst_187 : bf16 to vector<8x128xbf16>
      %759 = arith.addf %758, %757 : vector<8x128xbf16>
      %760 = arith.divf %758, %759 : vector<8x128xbf16>
      %761 = arith.extf %760 : vector<8x128xbf16> to vector<8x128xf32>
      %762 = vector.extract_strided_slice %747 {offsets = [0, 256], sizes = [8, 128], strides = [1, 1]} : vector<8x512xbf16> to vector<8x128xbf16>
      %763 = math.tanh %762 : vector<8x128xbf16>
      %764 = arith.extf %763 : vector<8x128xbf16> to vector<8x128xf32>
      %765 = vector.extract_strided_slice %747 {offsets = [0, 384], sizes = [8, 128], strides = [1, 1]} : vector<8x512xbf16> to vector<8x128xbf16>
      %766 = arith.negf %765 : vector<8x128xbf16>
      %767 = math.exp %766 : vector<8x128xbf16>
      %cst_188 = arith.constant 1.000000e+00 : bf16
      %768 = vector.broadcast %cst_188 : bf16 to vector<8x128xbf16>
      %769 = arith.addf %768, %767 : vector<8x128xbf16>
      %770 = arith.divf %768, %769 : vector<8x128xbf16>
      %771 = arith.extf %770 : vector<8x128xbf16> to vector<8x128xf32>
      %772 = arith.mulf %761, %733 : vector<8x128xf32>
      %773 = arith.mulf %754, %764 : vector<8x128xf32>
      %774 = arith.addf %772, %773 : vector<8x128xf32>
      %775 = math.tanh %774 : vector<8x128xf32>
      %776 = arith.mulf %771, %775 : vector<8x128xf32>
      %c0_i32_189 = arith.constant 0 : i32
      %777 = arith.addi %c0_i32_189, %c14_i32 : i32
      %778 = vector.broadcast %777 : i32 to vector<8x1xi32>
      %779 = arith.cmpi slt, %778, %0 : vector<8x1xi32>
      %780 = vector.shape_cast %779 : vector<8x1xi1> to vector<8x1xi1>
      %781 = vector.broadcast %780 : vector<8x1xi1> to vector<8x128xi1>
      %782 = arith.select %781, %776, %732 : vector<8x128xi1>, vector<8x128xf32>
      %783 = arith.select %781, %774, %733 : vector<8x128xi1>, vector<8x128xf32>
      %cst_190 = arith.constant 0.000000e+00 : f32
      %784 = vector.broadcast %cst_190 : f32 to vector<8x128xf32>
      %785 = arith.select %781, %776, %784 : vector<8x128xi1>, vector<8x128xf32>
      %786 = arith.index_cast %777 : i32 to index
      %c0_191 = arith.constant 0 : index
      %c0_192 = arith.constant 0 : index
      %787 = vector.load %arg7[%786, %c0_191, %c0_192] : memref<16x8x128xf32, #tpu.memory_space<vmem>>, vector<1x8x128xf32>
      %788 = vector.shape_cast %787 : vector<1x8x128xf32> to vector<8x128xf32>
      %789 = vector.shape_cast %785 : vector<8x128xf32> to vector<1x8x128xf32>
      tpu.vector_store %arg7[%786, %c0_191, %c0_192], %789 {strides = array<i32>} : memref<16x8x128xf32, #tpu.memory_space<vmem>>, vector<1x8x128xf32>,
      %c15_i32 = arith.constant 15 : i32
      %c8_i32_193 = arith.constant 8 : i32
      %790 = arith.muli %c15_i32, %c8_i32_193 : i32
      %791 = tpu.assume_multiple %790, 8 : i32
      %792 = arith.index_cast %791 : i32 to index
      %c0_194 = arith.constant 0 : index
      %793 = vector.load %arg9[%792, %c0_194] : memref<128x512xf32, #tpu.memory_space<vmem>>, vector<8x512xf32>
      %794 = arith.truncf %782 : vector<8x128xf32> to vector<8x128xbf16>
      %cst_195 = arith.constant dense<0.000000e+00> : vector<8x512xf32>
      %795 = tpu.matmul %794, %22, %cst_195 {dimension_numbers = #tpu.dot_dimension_numbers<[1], [0], [0], [1], [0, 0, 1, 1], [], []>} : vector<8x128xbf16>, vector<128x512xbf16>, vector<8x512xf32> -> vector<8x512xf32>
      %796 = arith.addf %793, %795 : vector<8x512xf32>
      %797 = arith.truncf %796 : vector<8x512xf32> to vector<8x512xbf16>
      %798 = vector.extract_strided_slice %797 {offsets = [0, 0], sizes = [8, 128], strides = [1, 1]} : vector<8x512xbf16> to vector<8x128xbf16>
      %799 = arith.negf %798 : vector<8x128xbf16>
      %800 = math.exp %799 : vector<8x128xbf16>
      %cst_196 = arith.constant 1.000000e+00 : bf16
      %801 = vector.broadcast %cst_196 : bf16 to vector<8x128xbf16>
      %802 = arith.addf %801, %800 : vector<8x128xbf16>
      %803 = arith.divf %801, %802 : vector<8x128xbf16>
      %804 = arith.extf %803 : vector<8x128xbf16> to vector<8x128xf32>
      %805 = vector.extract_strided_slice %797 {offsets = [0, 128], sizes = [8, 128], strides = [1, 1]} : vector<8x512xbf16> to vector<8x128xbf16>
      %806 = arith.negf %805 : vector<8x128xbf16>
      %807 = math.exp %806 : vector<8x128xbf16>
      %cst_197 = arith.constant 1.000000e+00 : bf16
      %808 = vector.broadcast %cst_197 : bf16 to vector<8x128xbf16>
      %809 = arith.addf %808, %807 : vector<8x128xbf16>
      %810 = arith.divf %808, %809 : vector<8x128xbf16>
      %811 = arith.extf %810 : vector<8x128xbf16> to vector<8x128xf32>
      %812 = vector.extract_strided_slice %797 {offsets = [0, 256], sizes = [8, 128], strides = [1, 1]} : vector<8x512xbf16> to vector<8x128xbf16>
      %813 = math.tanh %812 : vector<8x128xbf16>
      %814 = arith.extf %813 : vector<8x128xbf16> to vector<8x128xf32>
      %815 = vector.extract_strided_slice %797 {offsets = [0, 384], sizes = [8, 128], strides = [1, 1]} : vector<8x512xbf16> to vector<8x128xbf16>
      %816 = arith.negf %815 : vector<8x128xbf16>
      %817 = math.exp %816 : vector<8x128xbf16>
      %cst_198 = arith.constant 1.000000e+00 : bf16
      %818 = vector.broadcast %cst_198 : bf16 to vector<8x128xbf16>
      %819 = arith.addf %818, %817 : vector<8x128xbf16>
      %820 = arith.divf %818, %819 : vector<8x128xbf16>
      %821 = arith.extf %820 : vector<8x128xbf16> to vector<8x128xf32>
      %822 = arith.mulf %811, %783 : vector<8x128xf32>
      %823 = arith.mulf %804, %814 : vector<8x128xf32>
      %824 = arith.addf %822, %823 : vector<8x128xf32>
      %825 = math.tanh %824 : vector<8x128xf32>
      %826 = arith.mulf %821, %825 : vector<8x128xf32>
      %c0_i32_199 = arith.constant 0 : i32
      %827 = arith.addi %c0_i32_199, %c15_i32 : i32
      %828 = vector.broadcast %827 : i32 to vector<8x1xi32>
      %829 = arith.cmpi slt, %828, %0 : vector<8x1xi32>
      %830 = vector.shape_cast %829 : vector<8x1xi1> to vector<8x1xi1>
      %831 = vector.broadcast %830 : vector<8x1xi1> to vector<8x128xi1>
      %832 = arith.select %831, %826, %782 : vector<8x128xi1>, vector<8x128xf32>
      %833 = arith.select %831, %824, %783 : vector<8x128xi1>, vector<8x128xf32>
      %cst_200 = arith.constant 0.000000e+00 : f32
      %834 = vector.broadcast %cst_200 : f32 to vector<8x128xf32>
      %835 = arith.select %831, %826, %834 : vector<8x128xi1>, vector<8x128xf32>
      %836 = arith.index_cast %827 : i32 to index
      %c0_201 = arith.constant 0 : index
      %c0_202 = arith.constant 0 : index
      %837 = vector.load %arg7[%836, %c0_201, %c0_202] : memref<16x8x128xf32, #tpu.memory_space<vmem>>, vector<1x8x128xf32>
      %838 = vector.shape_cast %837 : vector<1x8x128xf32> to vector<8x128xf32>
      %839 = vector.shape_cast %835 : vector<8x128xf32> to vector<1x8x128xf32>
      tpu.vector_store %arg7[%836, %c0_201, %c0_202], %839 {strides = array<i32>} : memref<16x8x128xf32, #tpu.memory_space<vmem>>, vector<1x8x128xf32>,
      %c16_i32_203 = arith.constant 16 : i32
      %c0_204 = arith.constant 0 : index
      %c0_205 = arith.constant 0 : index
      %840 = vector.load %arg10[%c0_204, %c0_205] : memref<8x128xf32, #tpu.memory_space<vmem>>, vector<8x128xf32>
      tpu.vector_store %arg10[%c0_204, %c0_205], %832 {strides = array<i32>} : memref<8x128xf32, #tpu.memory_space<vmem>>, vector<8x128xf32>,
      %c0_206 = arith.constant 0 : index
      %c0_207 = arith.constant 0 : index
      %841 = vector.load %arg11[%c0_206, %c0_207] : memref<8x128xf32, #tpu.memory_space<vmem>>, vector<8x128xf32>
      tpu.vector_store %arg11[%c0_206, %c0_207], %833 {strides = array<i32>} : memref<8x128xf32, #tpu.memory_space<vmem>>, vector<8x128xf32>,
    } else {
    }
    return
  }
  func.func @transform_0(%arg0: i32, %arg1: memref<1xi32, #tpu.memory_space<smem>>) -> (i32, i32) {
    %c0_i32 = arith.constant 0 : i32
    %c0_i32_0 = arith.constant 0 : i32
    return %arg0, %c0_i32 : i32, i32
  }
  func.func @transform_1(%arg0: i32, %arg1: memref<1xi32, #tpu.memory_space<smem>>) -> (i32, i32, i32) {
    %c0_i32 = arith.constant 0 : i32
    %c0_i32_0 = arith.constant 0 : i32
    %c0_i32_1 = arith.constant 0 : i32
    return %c0_i32, %arg0, %c0_i32_0 : i32, i32, i32
  }
  func.func @transform_2(%arg0: i32, %arg1: memref<1xi32, #tpu.memory_space<smem>>) -> (i32, i32, i32) {
    %c0_i32 = arith.constant 0 : i32
    %c0_i32_0 = arith.constant 0 : i32
    %c0_i32_1 = arith.constant 0 : i32
    %c0_i32_2 = arith.constant 0 : i32
    return %c0_i32, %c0_i32_0, %c0_i32_1 : i32, i32, i32
  }
  func.func @transform_3(%arg0: i32, %arg1: memref<1xi32, #tpu.memory_space<smem>>) -> (i32, i32, i32) {
    %c0_i32 = arith.constant 0 : i32
    %c0_i32_0 = arith.constant 0 : i32
    %c0_i32_1 = arith.constant 0 : i32
    %c0_i32_2 = arith.constant 0 : i32
    return %c0_i32, %c0_i32_0, %c0_i32_1 : i32, i32, i32
  }
  func.func @transform_4(%arg0: i32, %arg1: memref<1xi32, #tpu.memory_space<smem>>) -> (i32, i32, i32) {
    %c0_i32 = arith.constant 0 : i32
    %c0_i32_0 = arith.constant 0 : i32
    %c0_i32_1 = arith.constant 0 : i32
    %c0_i32_2 = arith.constant 0 : i32
    return %c0_i32, %c0_i32_0, %c0_i32_1 : i32, i32, i32
  }
  func.func @transform_5(%arg0: i32, %arg1: memref<1xi32, #tpu.memory_space<smem>>) -> (i32, i32, i32) {
    %c0_i32 = arith.constant 0 : i32
    %c0_i32_0 = arith.constant 0 : i32
    %c0_i32_1 = arith.constant 0 : i32
    return %c0_i32, %arg0, %c0_i32_0 : i32, i32, i32
  }
}

</mosaic_0001>

<llo_original>
// kernel: lstm_model_forward.3
$region0: #{lstm_model_forward.3}
  #allocation0 [shape = 'u32[]', space=smem, size = 0x4, offset = 0x4, fixed_abs, tag = 'smem constant byte address 0x4 - core index']
  #allocation1 [shape = 'u32[144,128]{1,0:T(1,128)}', space=vmem, size = 0x12000, scoped, tag = 'internal scratch']
  %s0 = inlined_call_operand.vmem [shape: f32[16,8,128], index: 0, kind: input, shape index: {}]
  %s1 = inlined_call_operand.vmem [shape: bf16[128,256], index: 1, kind: input, shape index: {}]
  %s2 = inlined_call_operand.vmem [shape: f32[1,256], index: 2, kind: input, shape index: {}]
  %s3 = inlined_call_operand.vmem [shape: f32[8,16,256], index: 3, kind: output, shape index: {}]
  %s4 = sld [smem:[#allocation0]]
  $region22: #{lstm_model_forward.3} parent=0
    _
  %s6 = ssub.s32 1, %s4
  %s7 = scalar_select 0, %s6, %s4
  // Predicated region
  $region2: #{lstm_model_forward.3} parent=0 // pred_check
    _
  $region3: #{lstm_model_forward.3} parent=0 // pred_check_branch
    %9 = sbr.rel (0) target = $region5
  $region4: #{lstm_model_forward.3} parent=0 // pred_region
    _
  $region5: #{lstm_model_forward.3} parent=0 // pred_fallthru
    _
  // Predicated region
  $region6: #{lstm_model_forward.3} parent=0 // pred_check
    _
  $region7: #{lstm_model_forward.3} parent=0 // pred_check_branch
    %11 = sbr.rel (0) target = $region9
  $region8: #{lstm_model_forward.3} parent=0 // pred_region
    _
  $region9: #{lstm_model_forward.3} parent=0 // pred_fallthru
    _
  // Predicated region
  $region10: #{lstm_model_forward.3} parent=0 // pred_check
    _
  $region11: #{lstm_model_forward.3} parent=0 // pred_check_branch
    %13 = sbr.rel (0) target = $region13
  $region12: #{lstm_model_forward.3} parent=0 // pred_region
    _
  $region13: #{lstm_model_forward.3} parent=0 // pred_fallthru
    _
  %v15 = vld [vmem:[%s0] sm:$0xff]
  %v16 = vld [vmem:[%s0 + $0x8] sm:$0xff]
  %v17 = vld [vmem:[%s0 + $0x10] sm:$0xff]
  %v18 = vld [vmem:[%s0 + $0x18] sm:$0xff]
  %v19 = vld [vmem:[%s0 + $0x20] sm:$0xff]
  %v20 = vld [vmem:[%s0 + $0x28] sm:$0xff]
  %v21 = vld [vmem:[%s0 + $0x30] sm:$0xff]
  %v22 = vld [vmem:[%s0 + $0x38] sm:$0xff]
  %v23 = vld [vmem:[%s0 + $0x40] sm:$0xff]
  %v24 = vld [vmem:[%s0 + $0x48] sm:$0xff]
  %v25 = vld [vmem:[%s0 + $0x50] sm:$0xff]
  %v26 = vld [vmem:[%s0 + $0x58] sm:$0xff]
  %v27 = vld [vmem:[%s0 + $0x60] sm:$0xff]
  %v28 = vld [vmem:[%s0 + $0x68] sm:$0xff]
  %v29 = vld [vmem:[%s0 + $0x70] sm:$0xff]
  %v30 = vld [vmem:[%s0 + $0x78] sm:$0xff]
  %v31 = vpack.c.bf16 %v16, %v15
  %v32 = vpack.c.bf16 %v18, %v17
  %v33 = vpack.c.bf16 %v20, %v19
  %v34 = vpack.c.bf16 %v22, %v21
  %v35 = vpack.c.bf16 %v24, %v23
  %v36 = vpack.c.bf16 %v26, %v25
  %v37 = vpack.c.bf16 %v28, %v27
  %v38 = vpack.c.bf16 %v30, %v29
  %v39 = vld [vmem:[%s1] sm:$0xff]
  %v40 = vld [vmem:[%s1 + $0x8] sm:$0xff]
  %v41 = vld [vmem:[%s1 + $0x10] sm:$0xff]
  %v42 = vld [vmem:[%s1 + $0x18] sm:$0xff]
  %v43 = vld [vmem:[%s1 + $0x20] sm:$0xff]
  %v44 = vld [vmem:[%s1 + $0x28] sm:$0xff]
  %v45 = vld [vmem:[%s1 + $0x30] sm:$0xff]
  %v46 = vld [vmem:[%s1 + $0x38] sm:$0xff]
  %v47 = vld [vmem:[%s1 + $0x40] sm:$0xff]
  %v48 = vld [vmem:[%s1 + $0x48] sm:$0xff]
  %v49 = vld [vmem:[%s1 + $0x50] sm:$0xff]
  %v50 = vld [vmem:[%s1 + $0x58] sm:$0xff]
  %v51 = vld [vmem:[%s1 + $0x60] sm:$0xff]
  %v52 = vld [vmem:[%s1 + $0x68] sm:$0xff]
  %v53 = vld [vmem:[%s1 + $0x70] sm:$0xff]
  %v54 = vld [vmem:[%s1 + $0x78] sm:$0xff]
  %v55 = vld [vmem:[%s2] sm:$0x3]
  %v57 = vlaneseq
  %v58 = vshrl.u32 %v57, 7
  %v59 = vsub.s32 0, %v58
  %v60 = vrot.slane %v55, %v59
  %v61 = vlaneseq
  %v62 = vshrl.u32 %v61, 7
  %v63 = vsub.s32 1, %v62
  %v64 = vrot.slane %v55, %v63
  %v83 = vunpack.c.l.b16 %v39
  %v84 = vunpack.c.h.b16 %v39
  %v85 = vunpack.c.l.b16 %v40
  %v86 = vunpack.c.h.b16 %v40
  %v87 = vunpack.c.l.b16 %v41
  %v88 = vunpack.c.h.b16 %v41
  %v89 = vunpack.c.l.b16 %v42
  %v90 = vunpack.c.h.b16 %v42
  %v91 = vunpack.c.l.b16 %v43
  %v92 = vunpack.c.h.b16 %v43
  %v93 = vunpack.c.l.b16 %v44
  %v94 = vunpack.c.h.b16 %v44
  %v95 = vunpack.c.l.b16 %v45
  %v96 = vunpack.c.h.b16 %v45
  %v97 = vunpack.c.l.b16 %v46
  %v98 = vunpack.c.h.b16 %v46
  %v99 = vunpack.c.l.b16 %v47
  %v100 = vunpack.c.h.b16 %v47
  %v101 = vunpack.c.l.b16 %v48
  %v102 = vunpack.c.h.b16 %v48
  %v103 = vunpack.c.l.b16 %v49
  %v104 = vunpack.c.h.b16 %v49
  %v105 = vunpack.c.l.b16 %v50
  %v106 = vunpack.c.h.b16 %v50
  %v107 = vunpack.c.l.b16 %v51
  %v108 = vunpack.c.h.b16 %v51
  %v109 = vunpack.c.l.b16 %v52
  %v110 = vunpack.c.h.b16 %v52
  %v111 = vunpack.c.l.b16 %v53
  %v112 = vunpack.c.h.b16 %v53
  %v113 = vunpack.c.l.b16 %v54
  %v114 = vunpack.c.h.b16 %v54
  %v115 = vpack.c.b16 %v85, %v83
  %v116 = vpack.c.b16 %v86, %v84
  %v117 = vpack.c.b16 %v89, %v87
  %v118 = vpack.c.b16 %v90, %v88
  %v119 = vpack.c.b16 %v93, %v91
  %v120 = vpack.c.b16 %v94, %v92
  %v121 = vpack.c.b16 %v97, %v95
  %v122 = vpack.c.b16 %v98, %v96
  %v123 = vpack.c.b16 %v101, %v99
  %v124 = vpack.c.b16 %v102, %v100
  %v125 = vpack.c.b16 %v105, %v103
  %v126 = vpack.c.b16 %v106, %v104
  %v127 = vpack.c.b16 %v109, %v107
  %v128 = vpack.c.b16 %v110, %v108
  %v129 = vpack.c.b16 %v113, %v111
  %v130 = vpack.c.b16 %v114, %v112
  %147 = vmatprep.subr.bf16.mxu0 %v130
  %148 = vmatpush1.bf16.msra.mxu0 %v129
  %149 = vmatprep.subr.bf16.mxu0 %v128
  %150 = vmatpush1.bf16.msra.mxu0 %v127
  %151 = vmatprep.subr.bf16.mxu0 %v126
  %152 = vmatpush1.bf16.msra.mxu0 %v125
  %153 = vmatprep.subr.bf16.mxu0 %v124
  %154 = vmatpush1.bf16.msra.mxu0 %v123
  %155 = vmatprep.subr.bf16.mxu0 %v122
  %156 = vmatpush1.bf16.msra.mxu0 %v121
  %157 = vmatprep.subr.bf16.mxu0 %v120
  %158 = vmatpush1.bf16.msra.mxu0 %v119
  %159 = vmatprep.subr.bf16.mxu0 %v118
  %160 = vmatpush1.bf16.msra.mxu0 %v117
  %161 = vmatprep.subr.bf16.mxu0 %v116
  %162 = vmatpush1.bf16.msra.mxu0 %v115
  %163 = vmatprep.subr.bf16.mxu0 0
  %164 = vmatpush2.bf16.msra.mxu0 0
  %165 = vmatprep.subr.bf16.mxu0 0
  %166 = vmatpush2.bf16.msra.mxu0 0
  %167 = vmatprep.subr.bf16.mxu0 0
  %168 = vmatpush2.bf16.msra.mxu0 0
  %169 = vmatprep.subr.bf16.mxu0 0
  %170 = vmatpush2.bf16.msra.mxu0 0
  %171 = vmatprep.subr.bf16.mxu0 0
  %172 = vmatpush2.bf16.msra.mxu0 0
  %173 = vmatprep.subr.bf16.mxu0 0
  %174 = vmatpush2.bf16.msra.mxu0 0
  %175 = vmatprep.subr.bf16.mxu0 0
  %176 = vmatpush2.bf16.msra.mxu0 0
  %177 = vmatprep.subr.bf16.mxu0 0
  %178 = vmatpush2.bf16.msra.mxu0 0
  %179 = vmatprep.mubr.bf16.mxu0 0
  %180 = vmatmul.mubr.bf16.gmra.mxu0 %v31
  %v181 = vpop.f32.mrf.mxu0
  %v182 = vadd.f32 %v60, %v181
  %v183 = vpop.f32.mrf.mxu0
  %v184 = vadd.f32 %v64, %v183
  %v185 = vpop.f32.mrf.mxu0
  %v186 = vadd.f32 %v60, %v185
  %v187 = vpop.f32.mrf.mxu0
  %v188 = vadd.f32 %v64, %v187
  %189 = vmatprep.mubr.bf16.mxu0 0
  %190 = vmatmul.mubr.bf16.gmra.mxu0 %v32
  %v191 = vpop.f32.mrf.mxu0
  %v192 = vadd.f32 %v60, %v191
  %v193 = vpop.f32.mrf.mxu0
  %v194 = vadd.f32 %v64, %v193
  %v195 = vpop.f32.mrf.mxu0
  %v196 = vadd.f32 %v60, %v195
  %v197 = vpop.f32.mrf.mxu0
  %v198 = vadd.f32 %v64, %v197
  %199 = vmatprep.mubr.bf16.mxu0 0
  %200 = vmatmul.mubr.bf16.gmra.mxu0 %v33
  %v201 = vpop.f32.mrf.mxu0
  %v202 = vadd.f32 %v60, %v201
  %v203 = vpop.f32.mrf.mxu0
  %v204 = vadd.f32 %v64, %v203
  %v205 = vpop.f32.mrf.mxu0
  %v206 = vadd.f32 %v60, %v205
  %v207 = vpop.f32.mrf.mxu0
  %v208 = vadd.f32 %v64, %v207
  %209 = vmatprep.mubr.bf16.mxu0 0
  %210 = vmatmul.mubr.bf16.gmra.mxu0 %v34
  %v211 = vpop.f32.mrf.mxu0
  %v212 = vadd.f32 %v60, %v211
  %v213 = vpop.f32.mrf.mxu0
  %v214 = vadd.f32 %v64, %v213
  %v215 = vpop.f32.mrf.mxu0
  %v216 = vadd.f32 %v60, %v215
  %v217 = vpop.f32.mrf.mxu0
  %v218 = vadd.f32 %v64, %v217
  %219 = vmatprep.mubr.bf16.mxu0 0
  %220 = vmatmul.mubr.bf16.gmra.mxu0 %v35
  %v221 = vpop.f32.mrf.mxu0
  %v222 = vadd.f32 %v60, %v221
  %v223 = vpop.f32.mrf.mxu0
  %v224 = vadd.f32 %v64, %v223
  %v225 = vpop.f32.mrf.mxu0
  %v226 = vadd.f32 %v60, %v225
  %v227 = vpop.f32.mrf.mxu0
  %v228 = vadd.f32 %v64, %v227
  %229 = vmatprep.mubr.bf16.mxu0 0
  %230 = vmatmul.mubr.bf16.gmra.mxu0 %v36
  %v231 = vpop.f32.mrf.mxu0
  %v232 = vadd.f32 %v60, %v231
  %v233 = vpop.f32.mrf.mxu0
  %v234 = vadd.f32 %v64, %v233
  %v235 = vpop.f32.mrf.mxu0
  %v236 = vadd.f32 %v60, %v235
  %v237 = vpop.f32.mrf.mxu0
  %v238 = vadd.f32 %v64, %v237
  %239 = vmatprep.mubr.bf16.mxu0 0
  %240 = vmatmul.mubr.bf16.gmra.mxu0 %v37
  %v241 = vpop.f32.mrf.mxu0
  %v242 = vadd.f32 %v60, %v241
  %v243 = vpop.f32.mrf.mxu0
  %v244 = vadd.f32 %v64, %v243
  %v245 = vpop.f32.mrf.mxu0
  %v246 = vadd.f32 %v60, %v245
  %v247 = vpop.f32.mrf.mxu0
  %v248 = vadd.f32 %v64, %v247
  %249 = vmatprep.mubr.bf16.mxu0 0
  %250 = vmatmul.mubr.bf16.gmra.mxu0 %v38
  %v251 = vpop.f32.mrf.mxu0
  %v252 = vadd.f32 %v60, %v251
  %v253 = vpop.f32.mrf.mxu0
  %v254 = vadd.f32 %v64, %v253
  %v255 = vpop.f32.mrf.mxu0
  %v256 = vadd.f32 %v60, %v255
  %v257 = vpop.f32.mrf.mxu0
  %v258 = vadd.f32 %v64, %v257
  %259 = vdwg.mxu0
  %v260 = vmax.f32 %v182, %v184
  %261 = vmax.xlane.f32.xlu0 %v260
  %v262 = vpop.xlane.xlu0 %261
  %v263 = vmax.f32 %v186, %v188
  %264 = vmax.xlane.f32.xlu0 %v263
  %v265 = vpop.xlane.xlu0 %264
  %v266 = vmax.f32 %v192, %v194
  %267 = vmax.xlane.f32.xlu0 %v266
  %v268 = vpop.xlane.xlu0 %267
  %v269 = vmax.f32 %v196, %v198
  %270 = vmax.xlane.f32.xlu0 %v269
  %v271 = vpop.xlane.xlu0 %270
  %v272 = vmax.f32 %v202, %v204
  %273 = vmax.xlane.f32.xlu0 %v272
  %v274 = vpop.xlane.xlu0 %273
  %v275 = vmax.f32 %v206, %v208
  %276 = vmax.xlane.f32.xlu0 %v275
  %v277 = vpop.xlane.xlu0 %276
  %v278 = vmax.f32 %v212, %v214
  %279 = vmax.xlane.f32.xlu0 %v278
  %v280 = vpop.xlane.xlu0 %279
  %v281 = vmax.f32 %v216, %v218
  %282 = vmax.xlane.f32.xlu0 %v281
  %v283 = vpop.xlane.xlu0 %282
  %v284 = vmax.f32 %v222, %v224
  %285 = vmax.xlane.f32.xlu0 %v284
  %v286 = vpop.xlane.xlu0 %285
  %v287 = vmax.f32 %v226, %v228
  %288 = vmax.xlane.f32.xlu0 %v287
  %v289 = vpop.xlane.xlu0 %288
  %v290 = vmax.f32 %v232, %v234
  %291 = vmax.xlane.f32.xlu0 %v290
  %v292 = vpop.xlane.xlu0 %291
  %v293 = vmax.f32 %v236, %v238
  %294 = vmax.xlane.f32.xlu0 %v293
  %v295 = vpop.xlane.xlu0 %294
  %v296 = vmax.f32 %v242, %v244
  %297 = vmax.xlane.f32.xlu0 %v296
  %v298 = vpop.xlane.xlu0 %297
  %v299 = vmax.f32 %v246, %v248
  %300 = vmax.xlane.f32.xlu0 %v299
  %v301 = vpop.xlane.xlu0 %300
  %v302 = vmax.f32 %v252, %v254
  %303 = vmax.xlane.f32.xlu0 %v302
  %v304 = vpop.xlane.xlu0 %303
  %v305 = vmax.f32 %v256, %v258
  %306 = vmax.xlane.f32.xlu0 %v305
  %v307 = vpop.xlane.xlu0 %306
  %v308 = vsub.f32 %v182, %v262
  %v309 = vsub.f32 %v184, %v262
  %v310 = vsub.f32 %v186, %v265
  %v311 = vsub.f32 %v188, %v265
  %v312 = vsub.f32 %v192, %v268
  %v313 = vsub.f32 %v194, %v268
  %v314 = vsub.f32 %v196, %v271
  %v315 = vsub.f32 %v198, %v271
  %v316 = vsub.f32 %v202, %v274
  %v317 = vsub.f32 %v204, %v274
  %v318 = vsub.f32 %v206, %v277
  %v319 = vsub.f32 %v208, %v277
  %v320 = vsub.f32 %v212, %v280
  %v321 = vsub.f32 %v214, %v280
  %v322 = vsub.f32 %v216, %v283
  %v323 = vsub.f32 %v218, %v283
  %v324 = vsub.f32 %v222, %v286
  %v325 = vsub.f32 %v224, %v286
  %v326 = vsub.f32 %v226, %v289
  %v327 = vsub.f32 %v228, %v289
  %v328 = vsub.f32 %v232, %v292
  %v329 = vsub.f32 %v234, %v292
  %v330 = vsub.f32 %v236, %v295
  %v331 = vsub.f32 %v238, %v295
  %v332 = vsub.f32 %v242, %v298
  %v333 = vsub.f32 %v244, %v298
  %v334 = vsub.f32 %v246, %v301
  %v335 = vsub.f32 %v248, %v301
  %v336 = vsub.f32 %v252, %v304
  %v337 = vsub.f32 %v254, %v304
  %v338 = vsub.f32 %v256, %v307
  %v339 = vsub.f32 %v258, %v307
  %v340 = vmul.f32 %v308, 1.442695
  %v341 = vpow.pop %v340
  %v342 = vmul.f32 %v309, 1.442695
  %v343 = vpow.pop %v342
  %v344 = vmul.f32 %v310, 1.442695
  %v345 = vpow.pop %v344
  %v346 = vmul.f32 %v311, 1.442695
  %v347 = vpow.pop %v346
  %v348 = vmul.f32 %v312, 1.442695
  %v349 = vpow.pop %v348
  %v350 = vmul.f32 %v313, 1.442695
  %v351 = vpow.pop %v350
  %v352 = vmul.f32 %v314, 1.442695
  %v353 = vpow.pop %v352
  %v354 = vmul.f32 %v315, 1.442695
  %v355 = vpow.pop %v354
  %v356 = vmul.f32 %v316, 1.442695
  %v357 = vpow.pop %v356
  %v358 = vmul.f32 %v317, 1.442695
  %v359 = vpow.pop %v358
  %v360 = vmul.f32 %v318, 1.442695
  %v361 = vpow.pop %v360
  %v362 = vmul.f32 %v319, 1.442695
  %v363 = vpow.pop %v362
  %v364 = vmul.f32 %v320, 1.442695
  %v365 = vpow.pop %v364
  %v366 = vmul.f32 %v321, 1.442695
  %v367 = vpow.pop %v366
  %v368 = vmul.f32 %v322, 1.442695
  %v369 = vpow.pop %v368
  %v370 = vmul.f32 %v323, 1.442695
  %v371 = vpow.pop %v370
  %v372 = vmul.f32 %v324, 1.442695
  %v373 = vpow.pop %v372
  %v374 = vmul.f32 %v325, 1.442695
  %v375 = vpow.pop %v374
  %v376 = vmul.f32 %v326, 1.442695
  %v377 = vpow.pop %v376
  %v378 = vmul.f32 %v327, 1.442695
  %v379 = vpow.pop %v378
  %v380 = vmul.f32 %v328, 1.442695
  %v381 = vpow.pop %v380
  %v382 = vmul.f32 %v329, 1.442695
  %v383 = vpow.pop %v382
  %v384 = vmul.f32 %v330, 1.442695
  %v385 = vpow.pop %v384
  %v386 = vmul.f32 %v331, 1.442695
  %v387 = vpow.pop %v386
  %v388 = vmul.f32 %v332, 1.442695
  %v389 = vpow.pop %v388
  %v390 = vmul.f32 %v333, 1.442695
  %v391 = vpow.pop %v390
  %v392 = vmul.f32 %v334, 1.442695
  %v393 = vpow.pop %v392
  %v394 = vmul.f32 %v335, 1.442695
  %v395 = vpow.pop %v394
  %v396 = vmul.f32 %v336, 1.442695
  %v397 = vpow.pop %v396
  %v398 = vmul.f32 %v337, 1.442695
  %v399 = vpow.pop %v398
  %v400 = vmul.f32 %v338, 1.442695
  %v401 = vpow.pop %v400
  %v402 = vmul.f32 %v339, 1.442695
  %v403 = vpow.pop %v402
  %v404 = vadd.f32 %v341, %v343
  %405 = vadd.xlane.f32.xlu0 %v404
  %v406 = vpop.xlane.xlu0 %405
  %v407 = vadd.f32 %v345, %v347
  %408 = vadd.xlane.f32.xlu0 %v407
  %v409 = vpop.xlane.xlu0 %408
  %v410 = vadd.f32 %v349, %v351
  %411 = vadd.xlane.f32.xlu0 %v410
  %v412 = vpop.xlane.xlu0 %411
  %v413 = vadd.f32 %v353, %v355
  %414 = vadd.xlane.f32.xlu0 %v413
  %v415 = vpop.xlane.xlu0 %414
  %v416 = vadd.f32 %v357, %v359
  %417 = vadd.xlane.f32.xlu0 %v416
  %v418 = vpop.xlane.xlu0 %417
  %v419 = vadd.f32 %v361, %v363
  %420 = vadd.xlane.f32.xlu0 %v419
  %v421 = vpop.xlane.xlu0 %420
  %v422 = vadd.f32 %v365, %v367
  %423 = vadd.xlane.f32.xlu0 %v422
  %v424 = vpop.xlane.xlu0 %423
  %v425 = vadd.f32 %v369, %v371
  %426 = vadd.xlane.f32.xlu0 %v425
  %v427 = vpop.xlane.xlu0 %426
  %v428 = vadd.f32 %v373, %v375
  %429 = vadd.xlane.f32.xlu0 %v428
  %v430 = vpop.xlane.xlu0 %429
  %v431 = vadd.f32 %v377, %v379
  %432 = vadd.xlane.f32.xlu0 %v431
  %v433 = vpop.xlane.xlu0 %432
  %v434 = vadd.f32 %v381, %v383
  %435 = vadd.xlane.f32.xlu0 %v434
  %v436 = vpop.xlane.xlu0 %435
  %v437 = vadd.f32 %v385, %v387
  %438 = vadd.xlane.f32.xlu0 %v437
  %v439 = vpop.xlane.xlu0 %438
  %v440 = vadd.f32 %v389, %v391
  %441 = vadd.xlane.f32.xlu0 %v440
  %v442 = vpop.xlane.xlu0 %441
  %v443 = vadd.f32 %v393, %v395
  %444 = vadd.xlane.f32.xlu0 %v443
  %v445 = vpop.xlane.xlu0 %444
  %v446 = vadd.f32 %v397, %v399
  %447 = vadd.xlane.f32.xlu0 %v446
  %v448 = vpop.xlane.xlu0 %447
  %v449 = vadd.f32 %v401, %v403
  %450 = vadd.xlane.f32.xlu0 %v449
  %v451 = vpop.xlane.xlu0 %450
  %v452 = vlog2.pop %v406
  %v453 = vmul.f32 %v452, 0.6931472
  %v454 = vlog2.pop %v409
  %v455 = vmul.f32 %v454, 0.6931472
  %v456 = vlog2.pop %v412
  %v457 = vmul.f32 %v456, 0.6931472
  %v458 = vlog2.pop %v415
  %v459 = vmul.f32 %v458, 0.6931472
  %v460 = vlog2.pop %v418
  %v461 = vmul.f32 %v460, 0.6931472
  %v462 = vlog2.pop %v421
  %v463 = vmul.f32 %v462, 0.6931472
  %v464 = vlog2.pop %v424
  %v465 = vmul.f32 %v464, 0.6931472
  %v466 = vlog2.pop %v427
  %v467 = vmul.f32 %v466, 0.6931472
  %v468 = vlog2.pop %v430
  %v469 = vmul.f32 %v468, 0.6931472
  %v470 = vlog2.pop %v433
  %v471 = vmul.f32 %v470, 0.6931472
  %v472 = vlog2.pop %v436
  %v473 = vmul.f32 %v472, 0.6931472
  %v474 = vlog2.pop %v439
  %v475 = vmul.f32 %v474, 0.6931472
  %v476 = vlog2.pop %v442
  %v477 = vmul.f32 %v476, 0.6931472
  %v478 = vlog2.pop %v445
  %v479 = vmul.f32 %v478, 0.6931472
  %v480 = vlog2.pop %v448
  %v481 = vmul.f32 %v480, 0.6931472
  %v482 = vlog2.pop %v451
  %v483 = vmul.f32 %v482, 0.6931472
  %v484 = vsub.f32 %v308, %v453
  %v485 = vsub.f32 %v309, %v453
  %v486 = vsub.f32 %v310, %v455
  %v487 = vsub.f32 %v311, %v455
  %v488 = vsub.f32 %v312, %v457
  %v489 = vsub.f32 %v313, %v457
  %v490 = vsub.f32 %v314, %v459
  %v491 = vsub.f32 %v315, %v459
  %v492 = vsub.f32 %v316, %v461
  %v493 = vsub.f32 %v317, %v461
  %v494 = vsub.f32 %v318, %v463
  %v495 = vsub.f32 %v319, %v463
  %v496 = vsub.f32 %v320, %v465
  %v497 = vsub.f32 %v321, %v465
  %v498 = vsub.f32 %v322, %v467
  %v499 = vsub.f32 %v323, %v467
  %v500 = vsub.f32 %v324, %v469
  %v501 = vsub.f32 %v325, %v469
  %v502 = vsub.f32 %v326, %v471
  %v503 = vsub.f32 %v327, %v471
  %v504 = vsub.f32 %v328, %v473
  %v505 = vsub.f32 %v329, %v473
  %v506 = vsub.f32 %v330, %v475
  %v507 = vsub.f32 %v331, %v475
  %v508 = vsub.f32 %v332, %v477
  %v509 = vsub.f32 %v333, %v477
  %v510 = vsub.f32 %v334, %v479
  %v511 = vsub.f32 %v335, %v479
  %v512 = vsub.f32 %v336, %v481
  %v513 = vsub.f32 %v337, %v481
  %v514 = vsub.f32 %v338, %v483
  %v515 = vsub.f32 %v339, %v483
  %v518 = vcombine.low %v484, %v485
  %v519 = vcombine.high %v484, %v485
  %v521 = vunpack.c.l.s4 1966171168
  %v522 = vunpack.c.0.s8 %v521
  %v523 = vlaneseq
  %v524 = vshrl.u32 %v523, 7
  %v525 = vsub.s32 %v522, %v524
  %v526 = vrot.slane %v518, %v525
  %v528 = vunpack.c.l.s4 1966171168
  %v529 = vunpack.c.0.s8 %v528
  %v530 = vlaneseq
  %v531 = vshrl.u32 %v530, 7
  %v532 = vsub.s32 %v529, %v531
  %v533 = vrot.slane %v519, %v532
  %v534 = vcombine.high %v526, %v526
  %v535 = vcombine.high %v533, %v533
  %v537 = vunpack.c.l.s4 1966171168
  %v538 = vunpack.c.0.s8 %v537
  %v539 = vlaneseq
  %v540 = vshrl.u32 %v539, 7
  %v541 = vsub.s32 %v538, %v540
  %v542 = vrot.slane %v526, %v541
  %v544 = vunpack.c.l.s4 1966171168
  %v545 = vunpack.c.0.s8 %v544
  %v546 = vlaneseq
  %v547 = vshrl.u32 %v546, 7
  %v548 = vsub.s32 %v545, %v547
  %v549 = vrot.slane %v533, %v548
  %v551 = vunpack.c.l.s4 1966171168
  %v552 = vunpack.c.0.s8 %v551
  %v553 = vlaneseq
  %v554 = vshrl.u32 %v553, 7
  %v555 = vsub.s32 %v552, %v554
  %v556 = vrot.slane %v534, %v555
  %v558 = vunpack.c.l.s4 1966171168
  %v559 = vunpack.c.0.s8 %v558
  %v560 = vlaneseq
  %v561 = vshrl.u32 %v560, 7
  %v562 = vsub.s32 %v559, %v561
  %v563 = vrot.slane %v535, %v562
  %v564 = vcombine.high %v542, %v542
  %v565 = vcombine.high %v549, %v549
  %v566 = vcombine.high %v556, %v556
  %v567 = vcombine.high %v563, %v563
  %v576 = vlaneseq
  %vm577 = vcmp.ge.s32.totalorder %v576, 0
  %vm578 = vcmp.lt.s32.totalorder %v576, 256
  %vm579 = vmand %vm577, %vm578
  %580 = vst.msk [vmem:[%s3] ss:$8 sm:$0x3] %vm579, %v542
  %581 = vst.msk [vmem:[%s3] ss:$8 sm:$0x0] %vm579, %v542
  %s582 = scalar_lea.vmem %s3, 32
  %583 = vst.msk [vmem:[%s582] ss:$8 sm:$0x3] %vm579, %v556
  %584 = vst.msk [vmem:[%s582] ss:$8 sm:$0x0] %vm579, %v556
  %s585 = scalar_lea.vmem %s3, 64
  %586 = vst.msk [vmem:[%s585] ss:$8 sm:$0x3] %vm579, %v564
  %587 = vst.msk [vmem:[%s585] ss:$8 sm:$0x0] %vm579, %v564
  %s588 = scalar_lea.vmem %s3, 96
  %589 = vst.msk [vmem:[%s588] ss:$8 sm:$0x3] %vm579, %v566
  %590 = vst.msk [vmem:[%s588] ss:$8 sm:$0x0] %vm579, %v566
  %s591 = scalar_lea.vmem %s3, 128
  %592 = vst.msk [vmem:[%s591] ss:$8 sm:$0x3] %vm579, %v549
  %593 = vst.msk [vmem:[%s591] ss:$8 sm:$0x0] %vm579, %v549
  %s594 = scalar_lea.vmem %s3, 160
  %595 = vst.msk [vmem:[%s594] ss:$8 sm:$0x3] %vm579, %v563
  %596 = vst.msk [vmem:[%s594] ss:$8 sm:$0x0] %vm579, %v563
  %s597 = scalar_lea.vmem %s3, 192
  %598 = vst.msk [vmem:[%s597] ss:$8 sm:$0x3] %vm579, %v565
  %599 = vst.msk [vmem:[%s597] ss:$8 sm:$0x0] %vm579, %v565
  %s600 = scalar_lea.vmem %s3, 224
  %601 = vst.msk [vmem:[%s600] ss:$8 sm:$0x3] %vm579, %v567
  %602 = vst.msk [vmem:[%s600] ss:$8 sm:$0x0] %vm579, %v567
  %v605 = vcombine.low %v486, %v487
  %v606 = vcombine.high %v486, %v487
  %v608 = vunpack.c.l.s4 1966171168
  %v609 = vunpack.c.0.s8 %v608
  %v610 = vlaneseq
  %v611 = vshrl.u32 %v610, 7
  %v612 = vsub.s32 %v609, %v611
  %v613 = vrot.slane %v605, %v612
  %v615 = vunpack.c.l.s4 1966171168
  %v616 = vunpack.c.0.s8 %v615
  %v617 = vlaneseq
  %v618 = vshrl.u32 %v617, 7
  %v619 = vsub.s32 %v616, %v618
  %v620 = vrot.slane %v606, %v619
  %v621 = vcombine.high %v613, %v613
  %v622 = vcombine.high %v620, %v620
  %v624 = vunpack.c.l.s4 1966171168
  %v625 = vunpack.c.0.s8 %v624
  %v626 = vlaneseq
  %v627 = vshrl.u32 %v626, 7
  %v628 = vsub.s32 %v625, %v627
  %v629 = vrot.slane %v613, %v628
  %v631 = vunpack.c.l.s4 1966171168
  %v632 = vunpack.c.0.s8 %v631
  %v633 = vlaneseq
  %v634 = vshrl.u32 %v633, 7
  %v635 = vsub.s32 %v632, %v634
  %v636 = vrot.slane %v620, %v635
  %v638 = vunpack.c.l.s4 1966171168
  %v639 = vunpack.c.0.s8 %v638
  %v640 = vlaneseq
  %v641 = vshrl.u32 %v640, 7
  %v642 = vsub.s32 %v639, %v641
  %v643 = vrot.slane %v621, %v642
  %v645 = vunpack.c.l.s4 1966171168
  %v646 = vunpack.c.0.s8 %v645
  %v647 = vlaneseq
  %v648 = vshrl.u32 %v647, 7
  %v649 = vsub.s32 %v646, %v648
  %v650 = vrot.slane %v622, %v649
  %v651 = vcombine.high %v629, %v629
  %v652 = vcombine.high %v636, %v636
  %v653 = vcombine.high %v643, %v643
  %v654 = vcombine.high %v650, %v650
  %s663 = scalar_lea.vmem %s3, 1
  %664 = vst.msk [vmem:[%s663] ss:$8 sm:$0x3] %vm579, %v629
  %665 = vst.msk [vmem:[%s663] ss:$8 sm:$0x0] %vm579, %v629
  %s666 = scalar_lea.vmem %s3, 33
  %667 = vst.msk [vmem:[%s666] ss:$8 sm:$0x3] %vm579, %v643
  %668 = vst.msk [vmem:[%s666] ss:$8 sm:$0x0] %vm579, %v643
  %s669 = scalar_lea.vmem %s3, 65
  %670 = vst.msk [vmem:[%s669] ss:$8 sm:$0x3] %vm579, %v651
  %671 = vst.msk [vmem:[%s669] ss:$8 sm:$0x0] %vm579, %v651
  %s672 = scalar_lea.vmem %s3, 97
  %673 = vst.msk [vmem:[%s672] ss:$8 sm:$0x3] %vm579, %v653
  %674 = vst.msk [vmem:[%s672] ss:$8 sm:$0x0] %vm579, %v653
  %s675 = scalar_lea.vmem %s3, 129
  %676 = vst.msk [vmem:[%s675] ss:$8 sm:$0x3] %vm579, %v636
  %677 = vst.msk [vmem:[%s675] ss:$8 sm:$0x0] %vm579, %v636
  %s678 = scalar_lea.vmem %s3, 161
  %679 = vst.msk [vmem:[%s678] ss:$8 sm:$0x3] %vm579, %v650
  %680 = vst.msk [vmem:[%s678] ss:$8 sm:$0x0] %vm579, %v650
  %s681 = scalar_lea.vmem %s3, 193
  %682 = vst.msk [vmem:[%s681] ss:$8 sm:$0x3] %vm579, %v652
  %683 = vst.msk [vmem:[%s681] ss:$8 sm:$0x0] %vm579, %v652
  %s684 = scalar_lea.vmem %s3, 225
  %685 = vst.msk [vmem:[%s684] ss:$8 sm:$0x3] %vm579, %v654
  %686 = vst.msk [vmem:[%s684] ss:$8 sm:$0x0] %vm579, %v654
  %v689 = vcombine.low %v488, %v489
  %v690 = vcombine.high %v488, %v489
  %v692 = vunpack.c.l.s4 1966171168
  %v693 = vunpack.c.0.s8 %v692
  %v694 = vlaneseq
  %v695 = vshrl.u32 %v694, 7
  %v696 = vsub.s32 %v693, %v695
  %v697 = vrot.slane %v689, %v696
  %v699 = vunpack.c.l.s4 1966171168
  %v700 = vunpack.c.0.s8 %v699
  %v701 = vlaneseq
  %v702 = vshrl.u32 %v701, 7
  %v703 = vsub.s32 %v700, %v702
  %v704 = vrot.slane %v690, %v703
  %v705 = vcombine.high %v697, %v697
  %v706 = vcombine.high %v704, %v704
  %v708 = vunpack.c.l.s4 1966171168
  %v709 = vunpack.c.0.s8 %v708
  %v710 = vlaneseq
  %v711 = vshrl.u32 %v710, 7
  %v712 = vsub.s32 %v709, %v711
  %v713 = vrot.slane %v697, %v712
  %v715 = vunpack.c.l.s4 1966171168
  %v716 = vunpack.c.0.s8 %v715
  %v717 = vlaneseq
  %v718 = vshrl.u32 %v717, 7
  %v719 = vsub.s32 %v716, %v718
  %v720 = vrot.slane %v704, %v719
  %v722 = vunpack.c.l.s4 1966171168
  %v723 = vunpack.c.0.s8 %v722
  %v724 = vlaneseq
  %v725 = vshrl.u32 %v724, 7
  %v726 = vsub.s32 %v723, %v725
  %v727 = vrot.slane %v705, %v726
  %v729 = vunpack.c.l.s4 1966171168
  %v730 = vunpack.c.0.s8 %v729
  %v731 = vlaneseq
  %v732 = vshrl.u32 %v731, 7
  %v733 = vsub.s32 %v730, %v732
  %v734 = vrot.slane %v706, %v733
  %v735 = vcombine.high %v713, %v713
  %v736 = vcombine.high %v720, %v720
  %v737 = vcombine.high %v727, %v727
  %v738 = vcombine.high %v734, %v734
  %s747 = scalar_lea.vmem %s3, 2
  %748 = vst.msk [vmem:[%s747] ss:$8 sm:$0x3] %vm579, %v713
  %749 = vst.msk [vmem:[%s747] ss:$8 sm:$0x0] %vm579, %v713
  %s750 = scalar_lea.vmem %s3, 34
  %751 = vst.msk [vmem:[%s750] ss:$8 sm:$0x3] %vm579, %v727
  %752 = vst.msk [vmem:[%s750] ss:$8 sm:$0x0] %vm579, %v727
  %s753 = scalar_lea.vmem %s3, 66
  %754 = vst.msk [vmem:[%s753] ss:$8 sm:$0x3] %vm579, %v735
  %755 = vst.msk [vmem:[%s753] ss:$8 sm:$0x0] %vm579, %v735
  %s756 = scalar_lea.vmem %s3, 98
  %757 = vst.msk [vmem:[%s756] ss:$8 sm:$0x3] %vm579, %v737
  %758 = vst.msk [vmem:[%s756] ss:$8 sm:$0x0] %vm579, %v737
  %s759 = scalar_lea.vmem %s3, 130
  %760 = vst.msk [vmem:[%s759] ss:$8 sm:$0x3] %vm579, %v720
  %761 = vst.msk [vmem:[%s759] ss:$8 sm:$0x0] %vm579, %v720
  %s762 = scalar_lea.vmem %s3, 162
  %763 = vst.msk [vmem:[%s762] ss:$8 sm:$0x3] %vm579, %v734
  %764 = vst.msk [vmem:[%s762] ss:$8 sm:$0x0] %vm579, %v734
  %s765 = scalar_lea.vmem %s3, 194
  %766 = vst.msk [vmem:[%s765] ss:$8 sm:$0x3] %vm579, %v736
  %767 = vst.msk [vmem:[%s765] ss:$8 sm:$0x0] %vm579, %v736
  %s768 = scalar_lea.vmem %s3, 226
  %769 = vst.msk [vmem:[%s768] ss:$8 sm:$0x3] %vm579, %v738
  %770 = vst.msk [vmem:[%s768] ss:$8 sm:$0x0] %vm579, %v738
  %v773 = vcombine.low %v490, %v491
  %v774 = vcombine.high %v490, %v491
  %v776 = vunpack.c.l.s4 1966171168
  %v777 = vunpack.c.0.s8 %v776
  %v778 = vlaneseq
  %v779 = vshrl.u32 %v778, 7
  %v780 = vsub.s32 %v777, %v779
  %v781 = vrot.slane %v773, %v780
  %v783 = vunpack.c.l.s4 1966171168
  %v784 = vunpack.c.0.s8 %v783
  %v785 = vlaneseq
  %v786 = vshrl.u32 %v785, 7
  %v787 = vsub.s32 %v784, %v786
  %v788 = vrot.slane %v774, %v787
  %v789 = vcombine.high %v781, %v781
  %v790 = vcombine.high %v788, %v788
  %v792 = vunpack.c.l.s4 1966171168
  %v793 = vunpack.c.0.s8 %v792
  %v794 = vlaneseq
  %v795 = vshrl.u32 %v794, 7
  %v796 = vsub.s32 %v793, %v795
  %v797 = vrot.slane %v781, %v796
  %v799 = vunpack.c.l.s4 1966171168
  %v800 = vunpack.c.0.s8 %v799
  %v801 = vlaneseq
  %v802 = vshrl.u32 %v801, 7
  %v803 = vsub.s32 %v800, %v802
  %v804 = vrot.slane %v788, %v803
  %v806 = vunpack.c.l.s4 1966171168
  %v807 = vunpack.c.0.s8 %v806
  %v808 = vlaneseq
  %v809 = vshrl.u32 %v808, 7
  %v810 = vsub.s32 %v807, %v809
  %v811 = vrot.slane %v789, %v810
  %v813 = vunpack.c.l.s4 1966171168
  %v814 = vunpack.c.0.s8 %v813
  %v815 = vlaneseq
  %v816 = vshrl.u32 %v815, 7
  %v817 = vsub.s32 %v814, %v816
  %v818 = vrot.slane %v790, %v817
  %v819 = vcombine.high %v797, %v797
  %v820 = vcombine.high %v804, %v804
  %v821 = vcombine.high %v811, %v811
  %v822 = vcombine.high %v818, %v818
  %s831 = scalar_lea.vmem %s3, 3
  %832 = vst.msk [vmem:[%s831] ss:$8 sm:$0x3] %vm579, %v797
  %833 = vst.msk [vmem:[%s831] ss:$8 sm:$0x0] %vm579, %v797
  %s834 = scalar_lea.vmem %s3, 35
  %835 = vst.msk [vmem:[%s834] ss:$8 sm:$0x3] %vm579, %v811
  %836 = vst.msk [vmem:[%s834] ss:$8 sm:$0x0] %vm579, %v811
  %s837 = scalar_lea.vmem %s3, 67
  %838 = vst.msk [vmem:[%s837] ss:$8 sm:$0x3] %vm579, %v819
  %839 = vst.msk [vmem:[%s837] ss:$8 sm:$0x0] %vm579, %v819
  %s840 = scalar_lea.vmem %s3, 99
  %841 = vst.msk [vmem:[%s840] ss:$8 sm:$0x3] %vm579, %v821
  %842 = vst.msk [vmem:[%s840] ss:$8 sm:$0x0] %vm579, %v821
  %s843 = scalar_lea.vmem %s3, 131
  %844 = vst.msk [vmem:[%s843] ss:$8 sm:$0x3] %vm579, %v804
  %845 = vst.msk [vmem:[%s843] ss:$8 sm:$0x0] %vm579, %v804
  %s846 = scalar_lea.vmem %s3, 163
  %847 = vst.msk [vmem:[%s846] ss:$8 sm:$0x3] %vm579, %v818
  %848 = vst.msk [vmem:[%s846] ss:$8 sm:$0x0] %vm579, %v818
  %s849 = scalar_lea.vmem %s3, 195
  %850 = vst.msk [vmem:[%s849] ss:$8 sm:$0x3] %vm579, %v820
  %851 = vst.msk [vmem:[%s849] ss:$8 sm:$0x0] %vm579, %v820
  %s852 = scalar_lea.vmem %s3, 227
  %853 = vst.msk [vmem:[%s852] ss:$8 sm:$0x3] %vm579, %v822
  %854 = vst.msk [vmem:[%s852] ss:$8 sm:$0x0] %vm579, %v822
  %v857 = vcombine.low %v492, %v493
  %v858 = vcombine.high %v492, %v493
  %v860 = vunpack.c.l.s4 1966171168
  %v861 = vunpack.c.0.s8 %v860
  %v862 = vlaneseq
  %v863 = vshrl.u32 %v862, 7
  %v864 = vsub.s32 %v861, %v863
  %v865 = vrot.slane %v857, %v864
  %v867 = vunpack.c.l.s4 1966171168
  %v868 = vunpack.c.0.s8 %v867
  %v869 = vlaneseq
  %v870 = vshrl.u32 %v869, 7
  %v871 = vsub.s32 %v868, %v870
  %v872 = vrot.slane %v858, %v871
  %v873 = vcombine.high %v865, %v865
  %v874 = vcombine.high %v872, %v872
  %v876 = vunpack.c.l.s4 1966171168
  %v877 = vunpack.c.0.s8 %v876
  %v878 = vlaneseq
  %v879 = vshrl.u32 %v878, 7
  %v880 = vsub.s32 %v877, %v879
  %v881 = vrot.slane %v865, %v880
  %v883 = vunpack.c.l.s4 1966171168
  %v884 = vunpack.c.0.s8 %v883
  %v885 = vlaneseq
  %v886 = vshrl.u32 %v885, 7
  %v887 = vsub.s32 %v884, %v886
  %v888 = vrot.slane %v872, %v887
  %v890 = vunpack.c.l.s4 1966171168
  %v891 = vunpack.c.0.s8 %v890
  %v892 = vlaneseq
  %v893 = vshrl.u32 %v892, 7
  %v894 = vsub.s32 %v891, %v893
  %v895 = vrot.slane %v873, %v894
  %v897 = vunpack.c.l.s4 1966171168
  %v898 = vunpack.c.0.s8 %v897
  %v899 = vlaneseq
  %v900 = vshrl.u32 %v899, 7
  %v901 = vsub.s32 %v898, %v900
  %v902 = vrot.slane %v874, %v901
  %v903 = vcombine.high %v881, %v881
  %v904 = vcombine.high %v888, %v888
  %v905 = vcombine.high %v895, %v895
  %v906 = vcombine.high %v902, %v902
  %s915 = scalar_lea.vmem %s3, 4
  %916 = vst.msk [vmem:[%s915] ss:$8 sm:$0x3] %vm579, %v881
  %917 = vst.msk [vmem:[%s915] ss:$8 sm:$0x0] %vm579, %v881
  %s918 = scalar_lea.vmem %s3, 36
  %919 = vst.msk [vmem:[%s918] ss:$8 sm:$0x3] %vm579, %v895
  %920 = vst.msk [vmem:[%s918] ss:$8 sm:$0x0] %vm579, %v895
  %s921 = scalar_lea.vmem %s3, 68
  %922 = vst.msk [vmem:[%s921] ss:$8 sm:$0x3] %vm579, %v903
  %923 = vst.msk [vmem:[%s921] ss:$8 sm:$0x0] %vm579, %v903
  %s924 = scalar_lea.vmem %s3, 100
  %925 = vst.msk [vmem:[%s924] ss:$8 sm:$0x3] %vm579, %v905
  %926 = vst.msk [vmem:[%s924] ss:$8 sm:$0x0] %vm579, %v905
  %s927 = scalar_lea.vmem %s3, 132
  %928 = vst.msk [vmem:[%s927] ss:$8 sm:$0x3] %vm579, %v888
  %929 = vst.msk [vmem:[%s927] ss:$8 sm:$0x0] %vm579, %v888
  %s930 = scalar_lea.vmem %s3, 164
  %931 = vst.msk [vmem:[%s930] ss:$8 sm:$0x3] %vm579, %v902
  %932 = vst.msk [vmem:[%s930] ss:$8 sm:$0x0] %vm579, %v902
  %s933 = scalar_lea.vmem %s3, 196
  %934 = vst.msk [vmem:[%s933] ss:$8 sm:$0x3] %vm579, %v904
  %935 = vst.msk [vmem:[%s933] ss:$8 sm:$0x0] %vm579, %v904
  %s936 = scalar_lea.vmem %s3, 228
  %937 = vst.msk [vmem:[%s936] ss:$8 sm:$0x3] %vm579, %v906
  %938 = vst.msk [vmem:[%s936] ss:$8 sm:$0x0] %vm579, %v906
  %v941 = vcombine.low %v494, %v495
  %v942 = vcombine.high %v494, %v495
  %v944 = vunpack.c.l.s4 1966171168
  %v945 = vunpack.c.0.s8 %v944
  %v946 = vlaneseq
  %v947 = vshrl.u32 %v946, 7
  %v948 = vsub.s32 %v945, %v947
  %v949 = vrot.slane %v941, %v948
  %v951 = vunpack.c.l.s4 1966171168
  %v952 = vunpack.c.0.s8 %v951
  %v953 = vlaneseq
  %v954 = vshrl.u32 %v953, 7
  %v955 = vsub.s32 %v952, %v954
  %v956 = vrot.slane %v942, %v955
  %v957 = vcombine.high %v949, %v949
  %v958 = vcombine.high %v956, %v956
  %v960 = vunpack.c.l.s4 1966171168
  %v961 = vunpack.c.0.s8 %v960
  %v962 = vlaneseq
  %v963 = vshrl.u32 %v962, 7
  %v964 = vsub.s32 %v961, %v963
  %v965 = vrot.slane %v949, %v964
  %v967 = vunpack.c.l.s4 1966171168
  %v968 = vunpack.c.0.s8 %v967
  %v969 = vlaneseq
  %v970 = vshrl.u32 %v969, 7
  %v971 = vsub.s32 %v968, %v970
  %v972 = vrot.slane %v956, %v971
  %v974 = vunpack.c.l.s4 1966171168
  %v975 = vunpack.c.0.s8 %v974
  %v976 = vlaneseq
  %v977 = vshrl.u32 %v976, 7
  %v978 = vsub.s32 %v975, %v977
  %v979 = vrot.slane %v957, %v978
  %v981 = vunpack.c.l.s4 1966171168
  %v982 = vunpack.c.0.s8 %v981
  %v983 = vlaneseq
  %v984 = vshrl.u32 %v983, 7
  %v985 = vsub.s32 %v982, %v984
  %v986 = vrot.slane %v958, %v985
  %v987 = vcombine.high %v965, %v965
  %v988 = vcombine.high %v972, %v972
  %v989 = vcombine.high %v979, %v979
  %v990 = vcombine.high %v986, %v986
  %s999 = scalar_lea.vmem %s3, 5
  %1000 = vst.msk [vmem:[%s999] ss:$8 sm:$0x3] %vm579, %v965
  %1001 = vst.msk [vmem:[%s999] ss:$8 sm:$0x0] %vm579, %v965
  %s1002 = scalar_lea.vmem %s3, 37
  %1003 = vst.msk [vmem:[%s1002] ss:$8 sm:$0x3] %vm579, %v979
  %1004 = vst.msk [vmem:[%s1002] ss:$8 sm:$0x0] %vm579, %v979
  %s1005 = scalar_lea.vmem %s3, 69
  %1006 = vst.msk [vmem:[%s1005] ss:$8 sm:$0x3] %vm579, %v987
  %1007 = vst.msk [vmem:[%s1005] ss:$8 sm:$0x0] %vm579, %v987
  %s1008 = scalar_lea.vmem %s3, 101
  %1009 = vst.msk [vmem:[%s1008] ss:$8 sm:$0x3] %vm579, %v989
  %1010 = vst.msk [vmem:[%s1008] ss:$8 sm:$0x0] %vm579, %v989
  %s1011 = scalar_lea.vmem %s3, 133
  %1012 = vst.msk [vmem:[%s1011] ss:$8 sm:$0x3] %vm579, %v972
  %1013 = vst.msk [vmem:[%s1011] ss:$8 sm:$0x0] %vm579, %v972
  %s1014 = scalar_lea.vmem %s3, 165
  %1015 = vst.msk [vmem:[%s1014] ss:$8 sm:$0x3] %vm579, %v986
  %1016 = vst.msk [vmem:[%s1014] ss:$8 sm:$0x0] %vm579, %v986
  %s1017 = scalar_lea.vmem %s3, 197
  %1018 = vst.msk [vmem:[%s1017] ss:$8 sm:$0x3] %vm579, %v988
  %1019 = vst.msk [vmem:[%s1017] ss:$8 sm:$0x0] %vm579, %v988
  %s1020 = scalar_lea.vmem %s3, 229
  %1021 = vst.msk [vmem:[%s1020] ss:$8 sm:$0x3] %vm579, %v990
  %1022 = vst.msk [vmem:[%s1020] ss:$8 sm:$0x0] %vm579, %v990
  %v1025 = vcombine.low %v496, %v497
  %v1026 = vcombine.high %v496, %v497
  %v1028 = vunpack.c.l.s4 1966171168
  %v1029 = vunpack.c.0.s8 %v1028
  %v1030 = vlaneseq
  %v1031 = vshrl.u32 %v1030, 7
  %v1032 = vsub.s32 %v1029, %v1031
  %v1033 = vrot.slane %v1025, %v1032
  %v1035 = vunpack.c.l.s4 1966171168
  %v1036 = vunpack.c.0.s8 %v1035
  %v1037 = vlaneseq
  %v1038 = vshrl.u32 %v1037, 7
  %v1039 = vsub.s32 %v1036, %v1038
  %v1040 = vrot.slane %v1026, %v1039
  %v1041 = vcombine.high %v1033, %v1033
  %v1042 = vcombine.high %v1040, %v1040
  %v1044 = vunpack.c.l.s4 1966171168
  %v1045 = vunpack.c.0.s8 %v1044
  %v1046 = vlaneseq
  %v1047 = vshrl.u32 %v1046, 7
  %v1048 = vsub.s32 %v1045, %v1047
  %v1049 = vrot.slane %v1033, %v1048
  %v1051 = vunpack.c.l.s4 1966171168
  %v1052 = vunpack.c.0.s8 %v1051
  %v1053 = vlaneseq
  %v1054 = vshrl.u32 %v1053, 7
  %v1055 = vsub.s32 %v1052, %v1054
  %v1056 = vrot.slane %v1040, %v1055
  %v1058 = vunpack.c.l.s4 1966171168
  %v1059 = vunpack.c.0.s8 %v1058
  %v1060 = vlaneseq
  %v1061 = vshrl.u32 %v1060, 7
  %v1062 = vsub.s32 %v1059, %v1061
  %v1063 = vrot.slane %v1041, %v1062
  %v1065 = vunpack.c.l.s4 1966171168
  %v1066 = vunpack.c.0.s8 %v1065
  %v1067 = vlaneseq
  %v1068 = vshrl.u32 %v1067, 7
  %v1069 = vsub.s32 %v1066, %v1068
  %v1070 = vrot.slane %v1042, %v1069
  %v1071 = vcombine.high %v1049, %v1049
  %v1072 = vcombine.high %v1056, %v1056
  %v1073 = vcombine.high %v1063, %v1063
  %v1074 = vcombine.high %v1070, %v1070
  %s1083 = scalar_lea.vmem %s3, 6
  %1084 = vst.msk [vmem:[%s1083] ss:$8 sm:$0x3] %vm579, %v1049
  %1085 = vst.msk [vmem:[%s1083] ss:$8 sm:$0x0] %vm579, %v1049
  %s1086 = scalar_lea.vmem %s3, 38
  %1087 = vst.msk [vmem:[%s1086] ss:$8 sm:$0x3] %vm579, %v1063
  %1088 = vst.msk [vmem:[%s1086] ss:$8 sm:$0x0] %vm579, %v1063
  %s1089 = scalar_lea.vmem %s3, 70
  %1090 = vst.msk [vmem:[%s1089] ss:$8 sm:$0x3] %vm579, %v1071
  %1091 = vst.msk [vmem:[%s1089] ss:$8 sm:$0x0] %vm579, %v1071
  %s1092 = scalar_lea.vmem %s3, 102
  %1093 = vst.msk [vmem:[%s1092] ss:$8 sm:$0x3] %vm579, %v1073
  %1094 = vst.msk [vmem:[%s1092] ss:$8 sm:$0x0] %vm579, %v1073
  %s1095 = scalar_lea.vmem %s3, 134
  %1096 = vst.msk [vmem:[%s1095] ss:$8 sm:$0x3] %vm579, %v1056
  %1097 = vst.msk [vmem:[%s1095] ss:$8 sm:$0x0] %vm579, %v1056
  %s1098 = scalar_lea.vmem %s3, 166
  %1099 = vst.msk [vmem:[%s1098] ss:$8 sm:$0x3] %vm579, %v1070
  %1100 = vst.msk [vmem:[%s1098] ss:$8 sm:$0x0] %vm579, %v1070
  %s1101 = scalar_lea.vmem %s3, 198
  %1102 = vst.msk [vmem:[%s1101] ss:$8 sm:$0x3] %vm579, %v1072
  %1103 = vst.msk [vmem:[%s1101] ss:$8 sm:$0x0] %vm579, %v1072
  %s1104 = scalar_lea.vmem %s3, 230
  %1105 = vst.msk [vmem:[%s1104] ss:$8 sm:$0x3] %vm579, %v1074
  %1106 = vst.msk [vmem:[%s1104] ss:$8 sm:$0x0] %vm579, %v1074
  %v1109 = vcombine.low %v498, %v499
  %v1110 = vcombine.high %v498, %v499
  %v1112 = vunpack.c.l.s4 1966171168
  %v1113 = vunpack.c.0.s8 %v1112
  %v1114 = vlaneseq
  %v1115 = vshrl.u32 %v1114, 7
  %v1116 = vsub.s32 %v1113, %v1115
  %v1117 = vrot.slane %v1109, %v1116
  %v1119 = vunpack.c.l.s4 1966171168
  %v1120 = vunpack.c.0.s8 %v1119
  %v1121 = vlaneseq
  %v1122 = vshrl.u32 %v1121, 7
  %v1123 = vsub.s32 %v1120, %v1122
  %v1124 = vrot.slane %v1110, %v1123
  %v1125 = vcombine.high %v1117, %v1117
  %v1126 = vcombine.high %v1124, %v1124
  %v1128 = vunpack.c.l.s4 1966171168
  %v1129 = vunpack.c.0.s8 %v1128
  %v1130 = vlaneseq
  %v1131 = vshrl.u32 %v1130, 7
  %v1132 = vsub.s32 %v1129, %v1131
  %v1133 = vrot.slane %v1117, %v1132
  %v1135 = vunpack.c.l.s4 1966171168
  %v1136 = vunpack.c.0.s8 %v1135
  %v1137 = vlaneseq
  %v1138 = vshrl.u32 %v1137, 7
  %v1139 = vsub.s32 %v1136, %v1138
  %v1140 = vrot.slane %v1124, %v1139
  %v1142 = vunpack.c.l.s4 1966171168
  %v1143 = vunpack.c.0.s8 %v1142
  %v1144 = vlaneseq
  %v1145 = vshrl.u32 %v1144, 7
  %v1146 = vsub.s32 %v1143, %v1145
  %v1147 = vrot.slane %v1125, %v1146
  %v1149 = vunpack.c.l.s4 1966171168
  %v1150 = vunpack.c.0.s8 %v1149
  %v1151 = vlaneseq
  %v1152 = vshrl.u32 %v1151, 7
  %v1153 = vsub.s32 %v1150, %v1152
  %v1154 = vrot.slane %v1126, %v1153
  %v1155 = vcombine.high %v1133, %v1133
  %v1156 = vcombine.high %v1140, %v1140
  %v1157 = vcombine.high %v1147, %v1147
  %v1158 = vcombine.high %v1154, %v1154
  %s1167 = scalar_lea.vmem %s3, 7
  %1168 = vst.msk [vmem:[%s1167] ss:$8 sm:$0x3] %vm579, %v1133
  %1169 = vst.msk [vmem:[%s1167] ss:$8 sm:$0x0] %vm579, %v1133
  %s1170 = scalar_lea.vmem %s3, 39
  %1171 = vst.msk [vmem:[%s1170] ss:$8 sm:$0x3] %vm579, %v1147
  %1172 = vst.msk [vmem:[%s1170] ss:$8 sm:$0x0] %vm579, %v1147
  %s1173 = scalar_lea.vmem %s3, 71
  %1174 = vst.msk [vmem:[%s1173] ss:$8 sm:$0x3] %vm579, %v1155
  %1175 = vst.msk [vmem:[%s1173] ss:$8 sm:$0x0] %vm579, %v1155
  %s1176 = scalar_lea.vmem %s3, 103
  %1177 = vst.msk [vmem:[%s1176] ss:$8 sm:$0x3] %vm579, %v1157
  %1178 = vst.msk [vmem:[%s1176] ss:$8 sm:$0x0] %vm579, %v1157
  %s1179 = scalar_lea.vmem %s3, 135
  %1180 = vst.msk [vmem:[%s1179] ss:$8 sm:$0x3] %vm579, %v1140
  %1181 = vst.msk [vmem:[%s1179] ss:$8 sm:$0x0] %vm579, %v1140
  %s1182 = scalar_lea.vmem %s3, 167
  %1183 = vst.msk [vmem:[%s1182] ss:$8 sm:$0x3] %vm579, %v1154
  %1184 = vst.msk [vmem:[%s1182] ss:$8 sm:$0x0] %vm579, %v1154
  %s1185 = scalar_lea.vmem %s3, 199
  %1186 = vst.msk [vmem:[%s1185] ss:$8 sm:$0x3] %vm579, %v1156
  %1187 = vst.msk [vmem:[%s1185] ss:$8 sm:$0x0] %vm579, %v1156
  %s1188 = scalar_lea.vmem %s3, 231
  %1189 = vst.msk [vmem:[%s1188] ss:$8 sm:$0x3] %vm579, %v1158
  %1190 = vst.msk [vmem:[%s1188] ss:$8 sm:$0x0] %vm579, %v1158
  %v1193 = vcombine.low %v500, %v501
  %v1194 = vcombine.high %v500, %v501
  %v1196 = vunpack.c.l.s4 1966171168
  %v1197 = vunpack.c.0.s8 %v1196
  %v1198 = vlaneseq
  %v1199 = vshrl.u32 %v1198, 7
  %v1200 = vsub.s32 %v1197, %v1199
  %v1201 = vrot.slane %v1193, %v1200
  %v1203 = vunpack.c.l.s4 1966171168
  %v1204 = vunpack.c.0.s8 %v1203
  %v1205 = vlaneseq
  %v1206 = vshrl.u32 %v1205, 7
  %v1207 = vsub.s32 %v1204, %v1206
  %v1208 = vrot.slane %v1194, %v1207
  %v1209 = vcombine.high %v1201, %v1201
  %v1210 = vcombine.high %v1208, %v1208
  %v1212 = vunpack.c.l.s4 1966171168
  %v1213 = vunpack.c.0.s8 %v1212
  %v1214 = vlaneseq
  %v1215 = vshrl.u32 %v1214, 7
  %v1216 = vsub.s32 %v1213, %v1215
  %v1217 = vrot.slane %v1201, %v1216
  %v1219 = vunpack.c.l.s4 1966171168
  %v1220 = vunpack.c.0.s8 %v1219
  %v1221 = vlaneseq
  %v1222 = vshrl.u32 %v1221, 7
  %v1223 = vsub.s32 %v1220, %v1222
  %v1224 = vrot.slane %v1208, %v1223
  %v1226 = vunpack.c.l.s4 1966171168
  %v1227 = vunpack.c.0.s8 %v1226
  %v1228 = vlaneseq
  %v1229 = vshrl.u32 %v1228, 7
  %v1230 = vsub.s32 %v1227, %v1229
  %v1231 = vrot.slane %v1209, %v1230
  %v1233 = vunpack.c.l.s4 1966171168
  %v1234 = vunpack.c.0.s8 %v1233
  %v1235 = vlaneseq
  %v1236 = vshrl.u32 %v1235, 7
  %v1237 = vsub.s32 %v1234, %v1236
  %v1238 = vrot.slane %v1210, %v1237
  %v1239 = vcombine.high %v1217, %v1217
  %v1240 = vcombine.high %v1224, %v1224
  %v1241 = vcombine.high %v1231, %v1231
  %v1242 = vcombine.high %v1238, %v1238
  %s1251 = scalar_lea.vmem %s3, 16
  %1252 = vst.msk [vmem:[%s1251] ss:$8 sm:$0x3] %vm579, %v1217
  %1253 = vst.msk [vmem:[%s1251] ss:$8 sm:$0x0] %vm579, %v1217
  %s1254 = scalar_lea.vmem %s3, 48
  %1255 = vst.msk [vmem:[%s1254] ss:$8 sm:$0x3] %vm579, %v1231
  %1256 = vst.msk [vmem:[%s1254] ss:$8 sm:$0x0] %vm579, %v1231
  %s1257 = scalar_lea.vmem %s3, 80
  %1258 = vst.msk [vmem:[%s1257] ss:$8 sm:$0x3] %vm579, %v1239
  %1259 = vst.msk [vmem:[%s1257] ss:$8 sm:$0x0] %vm579, %v1239
  %s1260 = scalar_lea.vmem %s3, 112
  %1261 = vst.msk [vmem:[%s1260] ss:$8 sm:$0x3] %vm579, %v1241
  %1262 = vst.msk [vmem:[%s1260] ss:$8 sm:$0x0] %vm579, %v1241
  %s1263 = scalar_lea.vmem %s3, 144
  %1264 = vst.msk [vmem:[%s1263] ss:$8 sm:$0x3] %vm579, %v1224
  %1265 = vst.msk [vmem:[%s1263] ss:$8 sm:$0x0] %vm579, %v1224
  %s1266 = scalar_lea.vmem %s3, 176
  %1267 = vst.msk [vmem:[%s1266] ss:$8 sm:$0x3] %vm579, %v1238
  %1268 = vst.msk [vmem:[%s1266] ss:$8 sm:$0x0] %vm579, %v1238
  %s1269 = scalar_lea.vmem %s3, 208
  %1270 = vst.msk [vmem:[%s1269] ss:$8 sm:$0x3] %vm579, %v1240
  %1271 = vst.msk [vmem:[%s1269] ss:$8 sm:$0x0] %vm579, %v1240
  %s1272 = scalar_lea.vmem %s3, 240
  %1273 = vst.msk [vmem:[%s1272] ss:$8 sm:$0x3] %vm579, %v1242
  %1274 = vst.msk [vmem:[%s1272] ss:$8 sm:$0x0] %vm579, %v1242
  %v1277 = vcombine.low %v502, %v503
  %v1278 = vcombine.high %v502, %v503
  %v1280 = vunpack.c.l.s4 1966171168
  %v1281 = vunpack.c.0.s8 %v1280
  %v1282 = vlaneseq
  %v1283 = vshrl.u32 %v1282, 7
  %v1284 = vsub.s32 %v1281, %v1283
  %v1285 = vrot.slane %v1277, %v1284
  %v1287 = vunpack.c.l.s4 1966171168
  %v1288 = vunpack.c.0.s8 %v1287
  %v1289 = vlaneseq
  %v1290 = vshrl.u32 %v1289, 7
  %v1291 = vsub.s32 %v1288, %v1290
  %v1292 = vrot.slane %v1278, %v1291
  %v1293 = vcombine.high %v1285, %v1285
  %v1294 = vcombine.high %v1292, %v1292
  %v1296 = vunpack.c.l.s4 1966171168
  %v1297 = vunpack.c.0.s8 %v1296
  %v1298 = vlaneseq
  %v1299 = vshrl.u32 %v1298, 7
  %v1300 = vsub.s32 %v1297, %v1299
  %v1301 = vrot.slane %v1285, %v1300
  %v1303 = vunpack.c.l.s4 1966171168
  %v1304 = vunpack.c.0.s8 %v1303
  %v1305 = vlaneseq
  %v1306 = vshrl.u32 %v1305, 7
  %v1307 = vsub.s32 %v1304, %v1306
  %v1308 = vrot.slane %v1292, %v1307
  %v1310 = vunpack.c.l.s4 1966171168
  %v1311 = vunpack.c.0.s8 %v1310
  %v1312 = vlaneseq
  %v1313 = vshrl.u32 %v1312, 7
  %v1314 = vsub.s32 %v1311, %v1313
  %v1315 = vrot.slane %v1293, %v1314
  %v1317 = vunpack.c.l.s4 1966171168
  %v1318 = vunpack.c.0.s8 %v1317
  %v1319 = vlaneseq
  %v1320 = vshrl.u32 %v1319, 7
  %v1321 = vsub.s32 %v1318, %v1320
  %v1322 = vrot.slane %v1294, %v1321
  %v1323 = vcombine.high %v1301, %v1301
  %v1324 = vcombine.high %v1308, %v1308
  %v1325 = vcombine.high %v1315, %v1315
  %v1326 = vcombine.high %v1322, %v1322
  %s1335 = scalar_lea.vmem %s3, 17
  %1336 = vst.msk [vmem:[%s1335] ss:$8 sm:$0x3] %vm579, %v1301
  %1337 = vst.msk [vmem:[%s1335] ss:$8 sm:$0x0] %vm579, %v1301
  %s1338 = scalar_lea.vmem %s3, 49
  %1339 = vst.msk [vmem:[%s1338] ss:$8 sm:$0x3] %vm579, %v1315
  %1340 = vst.msk [vmem:[%s1338] ss:$8 sm:$0x0] %vm579, %v1315
  %s1341 = scalar_lea.vmem %s3, 81
  %1342 = vst.msk [vmem:[%s1341] ss:$8 sm:$0x3] %vm579, %v1323
  %1343 = vst.msk [vmem:[%s1341] ss:$8 sm:$0x0] %vm579, %v1323
  %s1344 = scalar_lea.vmem %s3, 113
  %1345 = vst.msk [vmem:[%s1344] ss:$8 sm:$0x3] %vm579, %v1325
  %1346 = vst.msk [vmem:[%s1344] ss:$8 sm:$0x0] %vm579, %v1325
  %s1347 = scalar_lea.vmem %s3, 145
  %1348 = vst.msk [vmem:[%s1347] ss:$8 sm:$0x3] %vm579, %v1308
  %1349 = vst.msk [vmem:[%s1347] ss:$8 sm:$0x0] %vm579, %v1308
  %s1350 = scalar_lea.vmem %s3, 177
  %1351 = vst.msk [vmem:[%s1350] ss:$8 sm:$0x3] %vm579, %v1322
  %1352 = vst.msk [vmem:[%s1350] ss:$8 sm:$0x0] %vm579, %v1322
  %s1353 = scalar_lea.vmem %s3, 209
  %1354 = vst.msk [vmem:[%s1353] ss:$8 sm:$0x3] %vm579, %v1324
  %1355 = vst.msk [vmem:[%s1353] ss:$8 sm:$0x0] %vm579, %v1324
  %s1356 = scalar_lea.vmem %s3, 241
  %1357 = vst.msk [vmem:[%s1356] ss:$8 sm:$0x3] %vm579, %v1326
  %1358 = vst.msk [vmem:[%s1356] ss:$8 sm:$0x0] %vm579, %v1326
  %v1361 = vcombine.low %v504, %v505
  %v1362 = vcombine.high %v504, %v505
  %v1364 = vunpack.c.l.s4 1966171168
  %v1365 = vunpack.c.0.s8 %v1364
  %v1366 = vlaneseq
  %v1367 = vshrl.u32 %v1366, 7
  %v1368 = vsub.s32 %v1365, %v1367
  %v1369 = vrot.slane %v1361, %v1368
  %v1371 = vunpack.c.l.s4 1966171168
  %v1372 = vunpack.c.0.s8 %v1371
  %v1373 = vlaneseq
  %v1374 = vshrl.u32 %v1373, 7
  %v1375 = vsub.s32 %v1372, %v1374
  %v1376 = vrot.slane %v1362, %v1375
  %v1377 = vcombine.high %v1369, %v1369
  %v1378 = vcombine.high %v1376, %v1376
  %v1380 = vunpack.c.l.s4 1966171168
  %v1381 = vunpack.c.0.s8 %v1380
  %v1382 = vlaneseq
  %v1383 = vshrl.u32 %v1382, 7
  %v1384 = vsub.s32 %v1381, %v1383
  %v1385 = vrot.slane %v1369, %v1384
  %v1387 = vunpack.c.l.s4 1966171168
  %v1388 = vunpack.c.0.s8 %v1387
  %v1389 = vlaneseq
  %v1390 = vshrl.u32 %v1389, 7
  %v1391 = vsub.s32 %v1388, %v1390
  %v1392 = vrot.slane %v1376, %v1391
  %v1394 = vunpack.c.l.s4 1966171168
  %v1395 = vunpack.c.0.s8 %v1394
  %v1396 = vlaneseq
  %v1397 = vshrl.u32 %v1396, 7
  %v1398 = vsub.s32 %v1395, %v1397
  %v1399 = vrot.slane %v1377, %v1398
  %v1401 = vunpack.c.l.s4 1966171168
  %v1402 = vunpack.c.0.s8 %v1401
  %v1403 = vlaneseq
  %v1404 = vshrl.u32 %v1403, 7
  %v1405 = vsub.s32 %v1402, %v1404
  %v1406 = vrot.slane %v1378, %v1405
  %v1407 = vcombine.high %v1385, %v1385
  %v1408 = vcombine.high %v1392, %v1392
  %v1409 = vcombine.high %v1399, %v1399
  %v1410 = vcombine.high %v1406, %v1406
  %s1419 = scalar_lea.vmem %s3, 18
  %1420 = vst.msk [vmem:[%s1419] ss:$8 sm:$0x3] %vm579, %v1385
  %1421 = vst.msk [vmem:[%s1419] ss:$8 sm:$0x0] %vm579, %v1385
  %s1422 = scalar_lea.vmem %s3, 50
  %1423 = vst.msk [vmem:[%s1422] ss:$8 sm:$0x3] %vm579, %v1399
  %1424 = vst.msk [vmem:[%s1422] ss:$8 sm:$0x0] %vm579, %v1399
  %s1425 = scalar_lea.vmem %s3, 82
  %1426 = vst.msk [vmem:[%s1425] ss:$8 sm:$0x3] %vm579, %v1407
  %1427 = vst.msk [vmem:[%s1425] ss:$8 sm:$0x0] %vm579, %v1407
  %s1428 = scalar_lea.vmem %s3, 114
  %1429 = vst.msk [vmem:[%s1428] ss:$8 sm:$0x3] %vm579, %v1409
  %1430 = vst.msk [vmem:[%s1428] ss:$8 sm:$0x0] %vm579, %v1409
  %s1431 = scalar_lea.vmem %s3, 146
  %1432 = vst.msk [vmem:[%s1431] ss:$8 sm:$0x3] %vm579, %v1392
  %1433 = vst.msk [vmem:[%s1431] ss:$8 sm:$0x0] %vm579, %v1392
  %s1434 = scalar_lea.vmem %s3, 178
  %1435 = vst.msk [vmem:[%s1434] ss:$8 sm:$0x3] %vm579, %v1406
  %1436 = vst.msk [vmem:[%s1434] ss:$8 sm:$0x0] %vm579, %v1406
  %s1437 = scalar_lea.vmem %s3, 210
  %1438 = vst.msk [vmem:[%s1437] ss:$8 sm:$0x3] %vm579, %v1408
  %1439 = vst.msk [vmem:[%s1437] ss:$8 sm:$0x0] %vm579, %v1408
  %s1440 = scalar_lea.vmem %s3, 242
  %1441 = vst.msk [vmem:[%s1440] ss:$8 sm:$0x3] %vm579, %v1410
  %1442 = vst.msk [vmem:[%s1440] ss:$8 sm:$0x0] %vm579, %v1410
  %v1445 = vcombine.low %v506, %v507
  %v1446 = vcombine.high %v506, %v507
  %v1448 = vunpack.c.l.s4 1966171168
  %v1449 = vunpack.c.0.s8 %v1448
  %v1450 = vlaneseq
  %v1451 = vshrl.u32 %v1450, 7
  %v1452 = vsub.s32 %v1449, %v1451
  %v1453 = vrot.slane %v1445, %v1452
  %v1455 = vunpack.c.l.s4 1966171168
  %v1456 = vunpack.c.0.s8 %v1455
  %v1457 = vlaneseq
  %v1458 = vshrl.u32 %v1457, 7
  %v1459 = vsub.s32 %v1456, %v1458
  %v1460 = vrot.slane %v1446, %v1459
  %v1461 = vcombine.high %v1453, %v1453
  %v1462 = vcombine.high %v1460, %v1460
  %v1464 = vunpack.c.l.s4 1966171168
  %v1465 = vunpack.c.0.s8 %v1464
  %v1466 = vlaneseq
  %v1467 = vshrl.u32 %v1466, 7
  %v1468 = vsub.s32 %v1465, %v1467
  %v1469 = vrot.slane %v1453, %v1468
  %v1471 = vunpack.c.l.s4 1966171168
  %v1472 = vunpack.c.0.s8 %v1471
  %v1473 = vlaneseq
  %v1474 = vshrl.u32 %v1473, 7
  %v1475 = vsub.s32 %v1472, %v1474
  %v1476 = vrot.slane %v1460, %v1475
  %v1478 = vunpack.c.l.s4 1966171168
  %v1479 = vunpack.c.0.s8 %v1478
  %v1480 = vlaneseq
  %v1481 = vshrl.u32 %v1480, 7
  %v1482 = vsub.s32 %v1479, %v1481
  %v1483 = vrot.slane %v1461, %v1482
  %v1485 = vunpack.c.l.s4 1966171168
  %v1486 = vunpack.c.0.s8 %v1485
  %v1487 = vlaneseq
  %v1488 = vshrl.u32 %v1487, 7
  %v1489 = vsub.s32 %v1486, %v1488
  %v1490 = vrot.slane %v1462, %v1489
  %v1491 = vcombine.high %v1469, %v1469
  %v1492 = vcombine.high %v1476, %v1476
  %v1493 = vcombine.high %v1483, %v1483
  %v1494 = vcombine.high %v1490, %v1490
  %s1503 = scalar_lea.vmem %s3, 19
  %1504 = vst.msk [vmem:[%s1503] ss:$8 sm:$0x3] %vm579, %v1469
  %1505 = vst.msk [vmem:[%s1503] ss:$8 sm:$0x0] %vm579, %v1469
  %s1506 = scalar_lea.vmem %s3, 51
  %1507 = vst.msk [vmem:[%s1506] ss:$8 sm:$0x3] %vm579, %v1483
  %1508 = vst.msk [vmem:[%s1506] ss:$8 sm:$0x0] %vm579, %v1483
  %s1509 = scalar_lea.vmem %s3, 83
  %1510 = vst.msk [vmem:[%s1509] ss:$8 sm:$0x3] %vm579, %v1491
  %1511 = vst.msk [vmem:[%s1509] ss:$8 sm:$0x0] %vm579, %v1491
  %s1512 = scalar_lea.vmem %s3, 115
  %1513 = vst.msk [vmem:[%s1512] ss:$8 sm:$0x3] %vm579, %v1493
  %1514 = vst.msk [vmem:[%s1512] ss:$8 sm:$0x0] %vm579, %v1493
  %s1515 = scalar_lea.vmem %s3, 147
  %1516 = vst.msk [vmem:[%s1515] ss:$8 sm:$0x3] %vm579, %v1476
  %1517 = vst.msk [vmem:[%s1515] ss:$8 sm:$0x0] %vm579, %v1476
  %s1518 = scalar_lea.vmem %s3, 179
  %1519 = vst.msk [vmem:[%s1518] ss:$8 sm:$0x3] %vm579, %v1490
  %1520 = vst.msk [vmem:[%s1518] ss:$8 sm:$0x0] %vm579, %v1490
  %s1521 = scalar_lea.vmem %s3, 211
  %1522 = vst.msk [vmem:[%s1521] ss:$8 sm:$0x3] %vm579, %v1492
  %1523 = vst.msk [vmem:[%s1521] ss:$8 sm:$0x0] %vm579, %v1492
  %s1524 = scalar_lea.vmem %s3, 243
  %1525 = vst.msk [vmem:[%s1524] ss:$8 sm:$0x3] %vm579, %v1494
  %1526 = vst.msk [vmem:[%s1524] ss:$8 sm:$0x0] %vm579, %v1494
  %v1529 = vcombine.low %v508, %v509
  %v1530 = vcombine.high %v508, %v509
  %v1532 = vunpack.c.l.s4 1966171168
  %v1533 = vunpack.c.0.s8 %v1532
  %v1534 = vlaneseq
  %v1535 = vshrl.u32 %v1534, 7
  %v1536 = vsub.s32 %v1533, %v1535
  %v1537 = vrot.slane %v1529, %v1536
  %v1539 = vunpack.c.l.s4 1966171168
  %v1540 = vunpack.c.0.s8 %v1539
  %v1541 = vlaneseq
  %v1542 = vshrl.u32 %v1541, 7
  %v1543 = vsub.s32 %v1540, %v1542
  %v1544 = vrot.slane %v1530, %v1543
  %v1545 = vcombine.high %v1537, %v1537
  %v1546 = vcombine.high %v1544, %v1544
  %v1548 = vunpack.c.l.s4 1966171168
  %v1549 = vunpack.c.0.s8 %v1548
  %v1550 = vlaneseq
  %v1551 = vshrl.u32 %v1550, 7
  %v1552 = vsub.s32 %v1549, %v1551
  %v1553 = vrot.slane %v1537, %v1552
  %v1555 = vunpack.c.l.s4 1966171168
  %v1556 = vunpack.c.0.s8 %v1555
  %v1557 = vlaneseq
  %v1558 = vshrl.u32 %v1557, 7
  %v1559 = vsub.s32 %v1556, %v1558
  %v1560 = vrot.slane %v1544, %v1559
  %v1562 = vunpack.c.l.s4 1966171168
  %v1563 = vunpack.c.0.s8 %v1562
  %v1564 = vlaneseq
  %v1565 = vshrl.u32 %v1564, 7
  %v1566 = vsub.s32 %v1563, %v1565
  %v1567 = vrot.slane %v1545, %v1566
  %v1569 = vunpack.c.l.s4 1966171168
  %v1570 = vunpack.c.0.s8 %v1569
  %v1571 = vlaneseq
  %v1572 = vshrl.u32 %v1571, 7
  %v1573 = vsub.s32 %v1570, %v1572
  %v1574 = vrot.slane %v1546, %v1573
  %v1575 = vcombine.high %v1553, %v1553
  %v1576 = vcombine.high %v1560, %v1560
  %v1577 = vcombine.high %v1567, %v1567
  %v1578 = vcombine.high %v1574, %v1574
  %s1587 = scalar_lea.vmem %s3, 20
  %1588 = vst.msk [vmem:[%s1587] ss:$8 sm:$0x3] %vm579, %v1553
  %1589 = vst.msk [vmem:[%s1587] ss:$8 sm:$0x0] %vm579, %v1553
  %s1590 = scalar_lea.vmem %s3, 52
  %1591 = vst.msk [vmem:[%s1590] ss:$8 sm:$0x3] %vm579, %v1567
  %1592 = vst.msk [vmem:[%s1590] ss:$8 sm:$0x0] %vm579, %v1567
  %s1593 = scalar_lea.vmem %s3, 84
  %1594 = vst.msk [vmem:[%s1593] ss:$8 sm:$0x3] %vm579, %v1575
  %1595 = vst.msk [vmem:[%s1593] ss:$8 sm:$0x0] %vm579, %v1575
  %s1596 = scalar_lea.vmem %s3, 116
  %1597 = vst.msk [vmem:[%s1596] ss:$8 sm:$0x3] %vm579, %v1577
  %1598 = vst.msk [vmem:[%s1596] ss:$8 sm:$0x0] %vm579, %v1577
  %s1599 = scalar_lea.vmem %s3, 148
  %1600 = vst.msk [vmem:[%s1599] ss:$8 sm:$0x3] %vm579, %v1560
  %1601 = vst.msk [vmem:[%s1599] ss:$8 sm:$0x0] %vm579, %v1560
  %s1602 = scalar_lea.vmem %s3, 180
  %1603 = vst.msk [vmem:[%s1602] ss:$8 sm:$0x3] %vm579, %v1574
  %1604 = vst.msk [vmem:[%s1602] ss:$8 sm:$0x0] %vm579, %v1574
  %s1605 = scalar_lea.vmem %s3, 212
  %1606 = vst.msk [vmem:[%s1605] ss:$8 sm:$0x3] %vm579, %v1576
  %1607 = vst.msk [vmem:[%s1605] ss:$8 sm:$0x0] %vm579, %v1576
  %s1608 = scalar_lea.vmem %s3, 244
  %1609 = vst.msk [vmem:[%s1608] ss:$8 sm:$0x3] %vm579, %v1578
  %1610 = vst.msk [vmem:[%s1608] ss:$8 sm:$0x0] %vm579, %v1578
  %v1613 = vcombine.low %v510, %v511
  %v1614 = vcombine.high %v510, %v511
  %v1616 = vunpack.c.l.s4 1966171168
  %v1617 = vunpack.c.0.s8 %v1616
  %v1618 = vlaneseq
  %v1619 = vshrl.u32 %v1618, 7
  %v1620 = vsub.s32 %v1617, %v1619
  %v1621 = vrot.slane %v1613, %v1620
  %v1623 = vunpack.c.l.s4 1966171168
  %v1624 = vunpack.c.0.s8 %v1623
  %v1625 = vlaneseq
  %v1626 = vshrl.u32 %v1625, 7
  %v1627 = vsub.s32 %v1624, %v1626
  %v1628 = vrot.slane %v1614, %v1627
  %v1629 = vcombine.high %v1621, %v1621
  %v1630 = vcombine.high %v1628, %v1628
  %v1632 = vunpack.c.l.s4 1966171168
  %v1633 = vunpack.c.0.s8 %v1632
  %v1634 = vlaneseq
  %v1635 = vshrl.u32 %v1634, 7
  %v1636 = vsub.s32 %v1633, %v1635
  %v1637 = vrot.slane %v1621, %v1636
  %v1639 = vunpack.c.l.s4 1966171168
  %v1640 = vunpack.c.0.s8 %v1639
  %v1641 = vlaneseq
  %v1642 = vshrl.u32 %v1641, 7
  %v1643 = vsub.s32 %v1640, %v1642
  %v1644 = vrot.slane %v1628, %v1643
  %v1646 = vunpack.c.l.s4 1966171168
  %v1647 = vunpack.c.0.s8 %v1646
  %v1648 = vlaneseq
  %v1649 = vshrl.u32 %v1648, 7
  %v1650 = vsub.s32 %v1647, %v1649
  %v1651 = vrot.slane %v1629, %v1650
  %v1653 = vunpack.c.l.s4 1966171168
  %v1654 = vunpack.c.0.s8 %v1653
  %v1655 = vlaneseq
  %v1656 = vshrl.u32 %v1655, 7
  %v1657 = vsub.s32 %v1654, %v1656
  %v1658 = vrot.slane %v1630, %v1657
  %v1659 = vcombine.high %v1637, %v1637
  %v1660 = vcombine.high %v1644, %v1644
  %v1661 = vcombine.high %v1651, %v1651
  %v1662 = vcombine.high %v1658, %v1658
  %s1671 = scalar_lea.vmem %s3, 21
  %1672 = vst.msk [vmem:[%s1671] ss:$8 sm:$0x3] %vm579, %v1637
  %1673 = vst.msk [vmem:[%s1671] ss:$8 sm:$0x0] %vm579, %v1637
  %s1674 = scalar_lea.vmem %s3, 53
  %1675 = vst.msk [vmem:[%s1674] ss:$8 sm:$0x3] %vm579, %v1651
  %1676 = vst.msk [vmem:[%s1674] ss:$8 sm:$0x0] %vm579, %v1651
  %s1677 = scalar_lea.vmem %s3, 85
  %1678 = vst.msk [vmem:[%s1677] ss:$8 sm:$0x3] %vm579, %v1659
  %1679 = vst.msk [vmem:[%s1677] ss:$8 sm:$0x0] %vm579, %v1659
  %s1680 = scalar_lea.vmem %s3, 117
  %1681 = vst.msk [vmem:[%s1680] ss:$8 sm:$0x3] %vm579, %v1661
  %1682 = vst.msk [vmem:[%s1680] ss:$8 sm:$0x0] %vm579, %v1661
  %s1683 = scalar_lea.vmem %s3, 149
  %1684 = vst.msk [vmem:[%s1683] ss:$8 sm:$0x3] %vm579, %v1644
  %1685 = vst.msk [vmem:[%s1683] ss:$8 sm:$0x0] %vm579, %v1644
  %s1686 = scalar_lea.vmem %s3, 181
  %1687 = vst.msk [vmem:[%s1686] ss:$8 sm:$0x3] %vm579, %v1658
  %1688 = vst.msk [vmem:[%s1686] ss:$8 sm:$0x0] %vm579, %v1658
  %s1689 = scalar_lea.vmem %s3, 213
  %1690 = vst.msk [vmem:[%s1689] ss:$8 sm:$0x3] %vm579, %v1660
  %1691 = vst.msk [vmem:[%s1689] ss:$8 sm:$0x0] %vm579, %v1660
  %s1692 = scalar_lea.vmem %s3, 245
  %1693 = vst.msk [vmem:[%s1692] ss:$8 sm:$0x3] %vm579, %v1662
  %1694 = vst.msk [vmem:[%s1692] ss:$8 sm:$0x0] %vm579, %v1662
  %v1697 = vcombine.low %v512, %v513
  %v1698 = vcombine.high %v512, %v513
  %v1700 = vunpack.c.l.s4 1966171168
  %v1701 = vunpack.c.0.s8 %v1700
  %v1702 = vlaneseq
  %v1703 = vshrl.u32 %v1702, 7
  %v1704 = vsub.s32 %v1701, %v1703
  %v1705 = vrot.slane %v1697, %v1704
  %v1707 = vunpack.c.l.s4 1966171168
  %v1708 = vunpack.c.0.s8 %v1707
  %v1709 = vlaneseq
  %v1710 = vshrl.u32 %v1709, 7
  %v1711 = vsub.s32 %v1708, %v1710
  %v1712 = vrot.slane %v1698, %v1711
  %v1713 = vcombine.high %v1705, %v1705
  %v1714 = vcombine.high %v1712, %v1712
  %v1716 = vunpack.c.l.s4 1966171168
  %v1717 = vunpack.c.0.s8 %v1716
  %v1718 = vlaneseq
  %v1719 = vshrl.u32 %v1718, 7
  %v1720 = vsub.s32 %v1717, %v1719
  %v1721 = vrot.slane %v1705, %v1720
  %v1723 = vunpack.c.l.s4 1966171168
  %v1724 = vunpack.c.0.s8 %v1723
  %v1725 = vlaneseq
  %v1726 = vshrl.u32 %v1725, 7
  %v1727 = vsub.s32 %v1724, %v1726
  %v1728 = vrot.slane %v1712, %v1727
  %v1730 = vunpack.c.l.s4 1966171168
  %v1731 = vunpack.c.0.s8 %v1730
  %v1732 = vlaneseq
  %v1733 = vshrl.u32 %v1732, 7
  %v1734 = vsub.s32 %v1731, %v1733
  %v1735 = vrot.slane %v1713, %v1734
  %v1737 = vunpack.c.l.s4 1966171168
  %v1738 = vunpack.c.0.s8 %v1737
  %v1739 = vlaneseq
  %v1740 = vshrl.u32 %v1739, 7
  %v1741 = vsub.s32 %v1738, %v1740
  %v1742 = vrot.slane %v1714, %v1741
  %v1743 = vcombine.high %v1721, %v1721
  %v1744 = vcombine.high %v1728, %v1728
  %v1745 = vcombine.high %v1735, %v1735
  %v1746 = vcombine.high %v1742, %v1742
  %s1755 = scalar_lea.vmem %s3, 22
  %1756 = vst.msk [vmem:[%s1755] ss:$8 sm:$0x3] %vm579, %v1721
  %1757 = vst.msk [vmem:[%s1755] ss:$8 sm:$0x0] %vm579, %v1721
  %s1758 = scalar_lea.vmem %s3, 54
  %1759 = vst.msk [vmem:[%s1758] ss:$8 sm:$0x3] %vm579, %v1735
  %1760 = vst.msk [vmem:[%s1758] ss:$8 sm:$0x0] %vm579, %v1735
  %s1761 = scalar_lea.vmem %s3, 86
  %1762 = vst.msk [vmem:[%s1761] ss:$8 sm:$0x3] %vm579, %v1743
  %1763 = vst.msk [vmem:[%s1761] ss:$8 sm:$0x0] %vm579, %v1743
  %s1764 = scalar_lea.vmem %s3, 118
  %1765 = vst.msk [vmem:[%s1764] ss:$8 sm:$0x3] %vm579, %v1745
  %1766 = vst.msk [vmem:[%s1764] ss:$8 sm:$0x0] %vm579, %v1745
  %s1767 = scalar_lea.vmem %s3, 150
  %1768 = vst.msk [vmem:[%s1767] ss:$8 sm:$0x3] %vm579, %v1728
  %1769 = vst.msk [vmem:[%s1767] ss:$8 sm:$0x0] %vm579, %v1728
  %s1770 = scalar_lea.vmem %s3, 182
  %1771 = vst.msk [vmem:[%s1770] ss:$8 sm:$0x3] %vm579, %v1742
  %1772 = vst.msk [vmem:[%s1770] ss:$8 sm:$0x0] %vm579, %v1742
  %s1773 = scalar_lea.vmem %s3, 214
  %1774 = vst.msk [vmem:[%s1773] ss:$8 sm:$0x3] %vm579, %v1744
  %1775 = vst.msk [vmem:[%s1773] ss:$8 sm:$0x0] %vm579, %v1744
  %s1776 = scalar_lea.vmem %s3, 246
  %1777 = vst.msk [vmem:[%s1776] ss:$8 sm:$0x3] %vm579, %v1746
  %1778 = vst.msk [vmem:[%s1776] ss:$8 sm:$0x0] %vm579, %v1746
  %v1781 = vcombine.low %v514, %v515
  %v1782 = vcombine.high %v514, %v515
  %v1784 = vunpack.c.l.s4 1966171168
  %v1785 = vunpack.c.0.s8 %v1784
  %v1786 = vlaneseq
  %v1787 = vshrl.u32 %v1786, 7
  %v1788 = vsub.s32 %v1785, %v1787
  %v1789 = vrot.slane %v1781, %v1788
  %v1791 = vunpack.c.l.s4 1966171168
  %v1792 = vunpack.c.0.s8 %v1791
  %v1793 = vlaneseq
  %v1794 = vshrl.u32 %v1793, 7
  %v1795 = vsub.s32 %v1792, %v1794
  %v1796 = vrot.slane %v1782, %v1795
  %v1797 = vcombine.high %v1789, %v1789
  %v1798 = vcombine.high %v1796, %v1796
  %v1800 = vunpack.c.l.s4 1966171168
  %v1801 = vunpack.c.0.s8 %v1800
  %v1802 = vlaneseq
  %v1803 = vshrl.u32 %v1802, 7
  %v1804 = vsub.s32 %v1801, %v1803
  %v1805 = vrot.slane %v1789, %v1804
  %v1807 = vunpack.c.l.s4 1966171168
  %v1808 = vunpack.c.0.s8 %v1807
  %v1809 = vlaneseq
  %v1810 = vshrl.u32 %v1809, 7
  %v1811 = vsub.s32 %v1808, %v1810
  %v1812 = vrot.slane %v1796, %v1811
  %v1814 = vunpack.c.l.s4 1966171168
  %v1815 = vunpack.c.0.s8 %v1814
  %v1816 = vlaneseq
  %v1817 = vshrl.u32 %v1816, 7
  %v1818 = vsub.s32 %v1815, %v1817
  %v1819 = vrot.slane %v1797, %v1818
  %v1821 = vunpack.c.l.s4 1966171168
  %v1822 = vunpack.c.0.s8 %v1821
  %v1823 = vlaneseq
  %v1824 = vshrl.u32 %v1823, 7
  %v1825 = vsub.s32 %v1822, %v1824
  %v1826 = vrot.slane %v1798, %v1825
  %v1827 = vcombine.high %v1805, %v1805
  %v1828 = vcombine.high %v1812, %v1812
  %v1829 = vcombine.high %v1819, %v1819
  %v1830 = vcombine.high %v1826, %v1826
  %s1839 = scalar_lea.vmem %s3, 23
  %1840 = vst.msk [vmem:[%s1839] ss:$8 sm:$0x3] %vm579, %v1805
  %1841 = vst.msk [vmem:[%s1839] ss:$8 sm:$0x0] %vm579, %v1805
  %s1842 = scalar_lea.vmem %s3, 55
  %1843 = vst.msk [vmem:[%s1842] ss:$8 sm:$0x3] %vm579, %v1819
  %1844 = vst.msk [vmem:[%s1842] ss:$8 sm:$0x0] %vm579, %v1819
  %s1845 = scalar_lea.vmem %s3, 87
  %1846 = vst.msk [vmem:[%s1845] ss:$8 sm:$0x3] %vm579, %v1827
  %1847 = vst.msk [vmem:[%s1845] ss:$8 sm:$0x0] %vm579, %v1827
  %s1848 = scalar_lea.vmem %s3, 119
  %1849 = vst.msk [vmem:[%s1848] ss:$8 sm:$0x3] %vm579, %v1829
  %1850 = vst.msk [vmem:[%s1848] ss:$8 sm:$0x0] %vm579, %v1829
  %s1851 = scalar_lea.vmem %s3, 151
  %1852 = vst.msk [vmem:[%s1851] ss:$8 sm:$0x3] %vm579, %v1812
  %1853 = vst.msk [vmem:[%s1851] ss:$8 sm:$0x0] %vm579, %v1812
  %s1854 = scalar_lea.vmem %s3, 183
  %1855 = vst.msk [vmem:[%s1854] ss:$8 sm:$0x3] %vm579, %v1826
  %1856 = vst.msk [vmem:[%s1854] ss:$8 sm:$0x0] %vm579, %v1826
  %s1857 = scalar_lea.vmem %s3, 215
  %1858 = vst.msk [vmem:[%s1857] ss:$8 sm:$0x3] %vm579, %v1828
  %1859 = vst.msk [vmem:[%s1857] ss:$8 sm:$0x0] %vm579, %v1828
  %s1860 = scalar_lea.vmem %s3, 247
  %1861 = vst.msk [vmem:[%s1860] ss:$8 sm:$0x3] %vm579, %v1830
  %1862 = vst.msk [vmem:[%s1860] ss:$8 sm:$0x0] %vm579, %v1830
  // Predicated region
  $region14: #{lstm_model_forward.3} parent=0 // pred_check
    _
  $region15: #{lstm_model_forward.3} parent=0 // pred_check_branch
    %1864 = sbr.rel (0) target = $region17
  $region16: #{lstm_model_forward.3} parent=0 // pred_region
    _
  $region17: #{lstm_model_forward.3} parent=0 // pred_fallthru
    _
  // Predicated region
  $region18: #{lstm_model_forward.3} parent=0 // pred_check
    _
  $region19: #{lstm_model_forward.3} parent=0 // pred_check_branch
    %1866 = sbr.rel (0) target = $region21
  $region20: #{lstm_model_forward.3} parent=0 // pred_region
    _
  $region21: #{lstm_model_forward.3} parent=0 // pred_fallthru
    _

// kernel: lstm_model_forward.2
$region0: #{lstm_model_forward.2}
  #allocation0 [shape = 'u32[]', space=smem, size = 0x4, offset = 0x4, fixed_abs, tag = 'smem constant byte address 0x4 - core index']
  #allocation1 [shape = 'u32[144,128]{1,0:T(1,128)}', space=vmem, size = 0x12000, scoped, tag = 'internal scratch']
  #allocation2 [shape = 'f32[128,128]{1,0:T(8,128)}', space=vmem, size = 0x10000, scoped, tag = 'scratch operand']
  #allocation3 [shape = 'f32[128,512]{1,0:T(8,128)}', space=vmem, size = 0x40000, scoped, tag = 'scratch operand']
  #allocation4 [shape = 'f32[8,128]{1,0:T(8,128)}', space=vmem, size = 0x1000, scoped, tag = 'scratch operand']
  #allocation5 [shape = 'f32[8,128]{1,0:T(8,128)}', space=vmem, size = 0x1000, scoped, tag = 'scratch operand']
  #allocation6 [shape = 's32[1]{0}', space=sflag, size = 0x4, scoped, tag = 'scoped memory for lstm_model_forward.2']
  #allocation7 [shape = 's32[1]{0:T(128)S(6)}', space=smem, size = 0x200, scoped, tag = 'prefetched SMEM operand 0']
  %s0 = inlined_call_operand.<no memory space> [shape: s32[1], index: 0, kind: input, shape index: {}]
  %s1 = inlined_call_operand.vmem [shape: s32[8,1], index: 1, kind: input, shape index: {}]
  %s2 = inlined_call_operand.vmem [shape: f32[16,8,128], index: 2, kind: input, shape index: {}]
  %s3 = inlined_call_operand.vmem [shape: bf16[2,128,512], index: 3, kind: input, shape index: {}]
  %s4 = inlined_call_operand.vmem [shape: bf16[2,128,512], index: 4, kind: input, shape index: {}]
  %s5 = inlined_call_operand.vmem [shape: f32[2,1,512], index: 5, kind: input, shape index: {}]
  %s6 = inlined_call_operand.vmem [shape: f32[16,8,128], index: 6, kind: output, shape index: {}]
  %s7 = sld [smem:[#allocation0]]
  $region42: #{lstm_model_forward.2} parent=0
    _
  %s9 = ssub.s32 1, %s7
  %s10 = scalar_select 0, %s9, %s7
  %11 = sst [smem:[#allocation7]] %s0
  // Predicated region
  $region2: #{lstm_model_forward.2} parent=0 // pred_check
    _
  $region3: #{lstm_model_forward.2} parent=0 // pred_check_branch
    %13 = sbr.rel (0) target = $region5
  $region4: #{lstm_model_forward.2} parent=0 // pred_region
    _
  $region5: #{lstm_model_forward.2} parent=0 // pred_fallthru
    _
  // Predicated region
  $region6: #{lstm_model_forward.2} parent=0 // pred_check
    _
  $region7: #{lstm_model_forward.2} parent=0 // pred_check_branch
    %15 = sbr.rel (0) target = $region9
  $region8: #{lstm_model_forward.2} parent=0 // pred_region
    _
  $region9: #{lstm_model_forward.2} parent=0 // pred_fallthru
    _
  // Predicated region
  $region10: #{lstm_model_forward.2} parent=0 // pred_check
    _
  $region11: #{lstm_model_forward.2} parent=0 // pred_check_branch
    %17 = sbr.rel (0) target = $region13
  $region12: #{lstm_model_forward.2} parent=0 // pred_region
    _
  $region13: #{lstm_model_forward.2} parent=0 // pred_fallthru
    _
  // Predicated region
  $region14: #{lstm_model_forward.2} parent=0 // pred_check
    _
  $region15: #{lstm_model_forward.2} parent=0 // pred_check_branch
    %19 = sbr.rel (0) target = $region17
  $region16: #{lstm_model_forward.2} parent=0 // pred_region
    _
  $region17: #{lstm_model_forward.2} parent=0 // pred_fallthru
    _
  // Predicated region
  $region18: #{lstm_model_forward.2} parent=0 // pred_check
    _
  $region19: #{lstm_model_forward.2} parent=0 // pred_check_branch
    %21 = sbr.rel (0) target = $region21
  $region20: #{lstm_model_forward.2} parent=0 // pred_region
    _
  $region21: #{lstm_model_forward.2} parent=0 // pred_fallthru
    _
  %v24 = vld [vmem:[%s1] sm:$0xff]
  %s25 = sld [smem:[#allocation7]]
  %p26 = scmp.lt.s32.totalorder %s25, 16
  // Predicated region
  $region22: #{lstm_model_forward.2} parent=0 // pred_check
    %p27 = pneg %p26
  $region23: #{lstm_model_forward.2} parent=0 // pred_check_branch
    %29 = sbr.rel (%p27) target = $region25
  $region24: #{lstm_model_forward.2} parent=0 // pred_region
    %30 = vst [vmem:[%s6] sm:$0xff] 0.0
    %31 = vst [vmem:[%s6 + $0x8] sm:$0xff] 0.0
    %32 = vst [vmem:[%s6 + $0x10] sm:$0xff] 0.0
    %33 = vst [vmem:[%s6 + $0x18] sm:$0xff] 0.0
    %34 = vst [vmem:[%s6 + $0x20] sm:$0xff] 0.0
    %35 = vst [vmem:[%s6 + $0x28] sm:$0xff] 0.0
    %36 = vst [vmem:[%s6 + $0x30] sm:$0xff] 0.0
    %37 = vst [vmem:[%s6 + $0x38] sm:$0xff] 0.0
    %38 = vst [vmem:[%s6 + $0x40] sm:$0xff] 0.0
    %39 = vst [vmem:[%s6 + $0x48] sm:$0xff] 0.0
    %40 = vst [vmem:[%s6 + $0x50] sm:$0xff] 0.0
    %41 = vst [vmem:[%s6 + $0x58] sm:$0xff] 0.0
    %42 = vst [vmem:[%s6 + $0x60] sm:$0xff] 0.0
    %43 = vst [vmem:[%s6 + $0x68] sm:$0xff] 0.0
    %44 = vst [vmem:[%s6 + $0x70] sm:$0xff] 0.0
    %45 = vst [vmem:[%s6 + $0x78] sm:$0xff] 0.0
  $region25: #{lstm_model_forward.2} parent=0 // pred_fallthru
    _
  %v46 = vld [vmem:[%s3] sm:$0xff]
  %v47 = vld [vmem:[%s3 + $0x8] sm:$0xff]
  %v48 = vld [vmem:[%s3 + $0x10] sm:$0xff]
  %v49 = vld [vmem:[%s3 + $0x18] sm:$0xff]
  %v50 = vld [vmem:[%s3 + $0x20] sm:$0xff]
  %v51 = vld [vmem:[%s3 + $0x28] sm:$0xff]
  %v52 = vld [vmem:[%s3 + $0x30] sm:$0xff]
  %v53 = vld [vmem:[%s3 + $0x38] sm:$0xff]
  %v54 = vld [vmem:[%s3 + $0x40] sm:$0xff]
  %v55 = vld [vmem:[%s3 + $0x48] sm:$0xff]
  %v56 = vld [vmem:[%s3 + $0x50] sm:$0xff]
  %v57 = vld [vmem:[%s3 + $0x58] sm:$0xff]
  %v58 = vld [vmem:[%s3 + $0x60] sm:$0xff]
  %v59 = vld [vmem:[%s3 + $0x68] sm:$0xff]
  %v60 = vld [vmem:[%s3 + $0x70] sm:$0xff]
  %v61 = vld [vmem:[%s3 + $0x78] sm:$0xff]
  %v62 = vld [vmem:[%s3 + $0x80] sm:$0xff]
  %v63 = vld [vmem:[%s3 + $0x88] sm:$0xff]
  %v64 = vld [vmem:[%s3 + $0x90] sm:$0xff]
  %v65 = vld [vmem:[%s3 + $0x98] sm:$0xff]
  %v66 = vld [vmem:[%s3 + $0xa0] sm:$0xff]
  %v67 = vld [vmem:[%s3 + $0xa8] sm:$0xff]
  %v68 = vld [vmem:[%s3 + $0xb0] sm:$0xff]
  %v69 = vld [vmem:[%s3 + $0xb8] sm:$0xff]
  %v70 = vld [vmem:[%s3 + $0xc0] sm:$0xff]
  %v71 = vld [vmem:[%s3 + $0xc8] sm:$0xff]
  %v72 = vld [vmem:[%s3 + $0xd0] sm:$0xff]
  %v73 = vld [vmem:[%s3 + $0xd8] sm:$0xff]
  %v74 = vld [vmem:[%s3 + $0xe0] sm:$0xff]
  %v75 = vld [vmem:[%s3 + $0xe8] sm:$0xff]
  %v76 = vld [vmem:[%s3 + $0xf0] sm:$0xff]
  %v77 = vld [vmem:[%s3 + $0xf8] sm:$0xff]
  %v78 = vld [vmem:[%s4] sm:$0xff]
  %v79 = vld [vmem:[%s4 + $0x8] sm:$0xff]
  %v80 = vld [vmem:[%s4 + $0x10] sm:$0xff]
  %v81 = vld [vmem:[%s4 + $0x18] sm:$0xff]
  %v82 = vld [vmem:[%s4 + $0x20] sm:$0xff]
  %v83 = vld [vmem:[%s4 + $0x28] sm:$0xff]
  %v84 = vld [vmem:[%s4 + $0x30] sm:$0xff]
  %v85 = vld [vmem:[%s4 + $0x38] sm:$0xff]
  %v86 = vld [vmem:[%s4 + $0x40] sm:$0xff]
  %v87 = vld [vmem:[%s4 + $0x48] sm:$0xff]
  %v88 = vld [vmem:[%s4 + $0x50] sm:$0xff]
  %v89 = vld [vmem:[%s4 + $0x58] sm:$0xff]
  %v90 = vld [vmem:[%s4 + $0x60] sm:$0xff]
  %v91 = vld [vmem:[%s4 + $0x68] sm:$0xff]
  %v92 = vld [vmem:[%s4 + $0x70] sm:$0xff]
  %v93 = vld [vmem:[%s4 + $0x78] sm:$0xff]
  %v94 = vld [vmem:[%s4 + $0x80] sm:$0xff]
  %v95 = vld [vmem:[%s4 + $0x88] sm:$0xff]
  %v96 = vld [vmem:[%s4 + $0x90] sm:$0xff]
  %v97 = vld [vmem:[%s4 + $0x98] sm:$0xff]
  %v98 = vld [vmem:[%s4 + $0xa0] sm:$0xff]
  %v99 = vld [vmem:[%s4 + $0xa8] sm:$0xff]
  %v100 = vld [vmem:[%s4 + $0xb0] sm:$0xff]
  %v101 = vld [vmem:[%s4 + $0xb8] sm:$0xff]
  %v102 = vld [vmem:[%s4 + $0xc0] sm:$0xff]
  %v103 = vld [vmem:[%s4 + $0xc8] sm:$0xff]
  %v104 = vld [vmem:[%s4 + $0xd0] sm:$0xff]
  %v105 = vld [vmem:[%s4 + $0xd8] sm:$0xff]
  %v106 = vld [vmem:[%s4 + $0xe0] sm:$0xff]
  %v107 = vld [vmem:[%s4 + $0xe8] sm:$0xff]
  %v108 = vld [vmem:[%s4 + $0xf0] sm:$0xff]
  %v109 = vld [vmem:[%s4 + $0xf8] sm:$0xff]
  %v110 = vld [vmem:[%s5] sm:$0xf]
  %111 = vst [vmem:[#allocation4] sm:$0xff] 0.0
  %112 = vst [vmem:[#allocation5] sm:$0xff] 0.0
  %p113 = scmp.gt.s32.totalorder %s25, 0
  // Predicated region
  $region26: #{lstm_model_forward.2} parent=0 // pred_check
    %p114 = pneg %p113
  $region27: #{lstm_model_forward.2} parent=0 // pred_check_branch
    %116 = sbr.rel (%p114) target = $region29
  $region28: #{lstm_model_forward.2} parent=0 // pred_region
    %v117 = vld [vmem:[%s2] sm:$0xff]
    %v118 = vld [vmem:[%s2 + $0x8] sm:$0xff]
    %v119 = vld [vmem:[%s2 + $0x10] sm:$0xff]
    %v120 = vld [vmem:[%s2 + $0x18] sm:$0xff]
    %v121 = vld [vmem:[%s2 + $0x20] sm:$0xff]
    %v122 = vld [vmem:[%s2 + $0x28] sm:$0xff]
    %v123 = vld [vmem:[%s2 + $0x30] sm:$0xff]
    %v124 = vld [vmem:[%s2 + $0x38] sm:$0xff]
    %v125 = vld [vmem:[%s2 + $0x40] sm:$0xff]
    %v126 = vld [vmem:[%s2 + $0x48] sm:$0xff]
    %v127 = vld [vmem:[%s2 + $0x50] sm:$0xff]
    %v128 = vld [vmem:[%s2 + $0x58] sm:$0xff]
    %v129 = vld [vmem:[%s2 + $0x60] sm:$0xff]
    %v130 = vld [vmem:[%s2 + $0x68] sm:$0xff]
    %v131 = vld [vmem:[%s2 + $0x70] sm:$0xff]
    %v132 = vld [vmem:[%s2 + $0x78] sm:$0xff]
    %v133 = vpack.c.bf16 %v118, %v117
    %v134 = vpack.c.bf16 %v120, %v119
    %v135 = vpack.c.bf16 %v122, %v121
    %v136 = vpack.c.bf16 %v124, %v123
    %v137 = vpack.c.bf16 %v126, %v125
    %v138 = vpack.c.bf16 %v128, %v127
    %v139 = vpack.c.bf16 %v130, %v129
    %v140 = vpack.c.bf16 %v132, %v131
    %v142 = vlaneseq
    %v143 = vshrl.u32 %v142, 7
    %v144 = vsub.s32 0, %v143
    %v145 = vrot.slane %v110, %v144
    %v146 = vlaneseq
    %v147 = vshrl.u32 %v146, 7
    %v148 = vsub.s32 1, %v147
    %v149 = vrot.slane %v110, %v148
    %v150 = vlaneseq
    %v151 = vshrl.u32 %v150, 7
    %v152 = vsub.s32 2, %v151
    %v153 = vrot.slane %v110, %v152
    %v154 = vlaneseq
    %v155 = vshrl.u32 %v154, 7
    %v156 = vsub.s32 3, %v155
    %v157 = vrot.slane %v110, %v156
    %v194 = vunpack.c.l.b16 %v46
    %v195 = vunpack.c.h.b16 %v46
    %v196 = vunpack.c.l.b16 %v47
    %v197 = vunpack.c.h.b16 %v47
    %v198 = vunpack.c.l.b16 %v48
    %v199 = vunpack.c.h.b16 %v48
    %v200 = vunpack.c.l.b16 %v49
    %v201 = vunpack.c.h.b16 %v49
    %v202 = vunpack.c.l.b16 %v50
    %v203 = vunpack.c.h.b16 %v50
    %v204 = vunpack.c.l.b16 %v51
    %v205 = vunpack.c.h.b16 %v51
    %v206 = vunpack.c.l.b16 %v52
    %v207 = vunpack.c.h.b16 %v52
    %v208 = vunpack.c.l.b16 %v53
    %v209 = vunpack.c.h.b16 %v53
    %v210 = vunpack.c.l.b16 %v54
    %v211 = vunpack.c.h.b16 %v54
    %v212 = vunpack.c.l.b16 %v55
    %v213 = vunpack.c.h.b16 %v55
    %v214 = vunpack.c.l.b16 %v56
    %v215 = vunpack.c.h.b16 %v56
    %v216 = vunpack.c.l.b16 %v57
    %v217 = vunpack.c.h.b16 %v57
    %v218 = vunpack.c.l.b16 %v58
    %v219 = vunpack.c.h.b16 %v58
    %v220 = vunpack.c.l.b16 %v59
    %v221 = vunpack.c.h.b16 %v59
    %v222 = vunpack.c.l.b16 %v60
    %v223 = vunpack.c.h.b16 %v60
    %v224 = vunpack.c.l.b16 %v61
    %v225 = vunpack.c.h.b16 %v61
    %v226 = vunpack.c.l.b16 %v62
    %v227 = vunpack.c.h.b16 %v62
    %v228 = vunpack.c.l.b16 %v63
    %v229 = vunpack.c.h.b16 %v63
    %v230 = vunpack.c.l.b16 %v64
    %v231 = vunpack.c.h.b16 %v64
    %v232 = vunpack.c.l.b16 %v65
    %v233 = vunpack.c.h.b16 %v65
    %v234 = vunpack.c.l.b16 %v66
    %v235 = vunpack.c.h.b16 %v66
    %v236 = vunpack.c.l.b16 %v67
    %v237 = vunpack.c.h.b16 %v67
    %v238 = vunpack.c.l.b16 %v68
    %v239 = vunpack.c.h.b16 %v68
    %v240 = vunpack.c.l.b16 %v69
    %v241 = vunpack.c.h.b16 %v69
    %v242 = vunpack.c.l.b16 %v70
    %v243 = vunpack.c.h.b16 %v70
    %v244 = vunpack.c.l.b16 %v71
    %v245 = vunpack.c.h.b16 %v71
    %v246 = vunpack.c.l.b16 %v72
    %v247 = vunpack.c.h.b16 %v72
    %v248 = vunpack.c.l.b16 %v73
    %v249 = vunpack.c.h.b16 %v73
    %v250 = vunpack.c.l.b16 %v74
    %v251 = vunpack.c.h.b16 %v74
    %v252 = vunpack.c.l.b16 %v75
    %v253 = vunpack.c.h.b16 %v75
    %v254 = vunpack.c.l.b16 %v76
    %v255 = vunpack.c.h.b16 %v76
    %v256 = vunpack.c.l.b16 %v77
    %v257 = vunpack.c.h.b16 %v77
    %v258 = vpack.c.b16 %v198, %v194
    %v259 = vpack.c.b16 %v199, %v195
    %v260 = vpack.c.b16 %v200, %v196
    %v261 = vpack.c.b16 %v201, %v197
    %v262 = vpack.c.b16 %v206, %v202
    %v263 = vpack.c.b16 %v207, %v203
    %v264 = vpack.c.b16 %v208, %v204
    %v265 = vpack.c.b16 %v209, %v205
    %v266 = vpack.c.b16 %v214, %v210
    %v267 = vpack.c.b16 %v215, %v211
    %v268 = vpack.c.b16 %v216, %v212
    %v269 = vpack.c.b16 %v217, %v213
    %v270 = vpack.c.b16 %v222, %v218
    %v271 = vpack.c.b16 %v223, %v219
    %v272 = vpack.c.b16 %v224, %v220
    %v273 = vpack.c.b16 %v225, %v221
    %v274 = vpack.c.b16 %v230, %v226
    %v275 = vpack.c.b16 %v231, %v227
    %v276 = vpack.c.b16 %v232, %v228
    %v277 = vpack.c.b16 %v233, %v229
    %v278 = vpack.c.b16 %v238, %v234
    %v279 = vpack.c.b16 %v239, %v235
    %v280 = vpack.c.b16 %v240, %v236
    %v281 = vpack.c.b16 %v241, %v237
    %v282 = vpack.c.b16 %v246, %v242
    %v283 = vpack.c.b16 %v247, %v243
    %v284 = vpack.c.b16 %v248, %v244
    %v285 = vpack.c.b16 %v249, %v245
    %v286 = vpack.c.b16 %v254, %v250
    %v287 = vpack.c.b16 %v255, %v251
    %v288 = vpack.c.b16 %v256, %v252
    %v289 = vpack.c.b16 %v257, %v253
    %322 = vmatprep.subr.bf16.mxu0 %v287
    %323 = vmatpush1.bf16.msra.mxu0 %v286
    %324 = vmatprep.subr.bf16.mxu0 %v283
    %325 = vmatpush1.bf16.msra.mxu0 %v282
    %326 = vmatprep.subr.bf16.mxu0 %v279
    %327 = vmatpush1.bf16.msra.mxu0 %v278
    %328 = vmatprep.subr.bf16.mxu0 %v275
    %329 = vmatpush1.bf16.msra.mxu0 %v274
    %330 = vmatprep.subr.bf16.mxu0 %v271
    %331 = vmatpush1.bf16.msra.mxu0 %v270
    %332 = vmatprep.subr.bf16.mxu0 %v267
    %333 = vmatpush1.bf16.msra.mxu0 %v266
    %334 = vmatprep.subr.bf16.mxu0 %v263
    %335 = vmatpush1.bf16.msra.mxu0 %v262
    %336 = vmatprep.subr.bf16.mxu0 %v259
    %337 = vmatpush1.bf16.msra.mxu0 %v258
    %338 = vmatprep.subr.bf16.mxu0 0
    %339 = vmatpush2.bf16.msra.mxu0 0
    %340 = vmatprep.subr.bf16.mxu0 0
    %341 = vmatpush2.bf16.msra.mxu0 0
    %342 = vmatprep.subr.bf16.mxu0 0
    %343 = vmatpush2.bf16.msra.mxu0 0
    %344 = vmatprep.subr.bf16.mxu0 0
    %345 = vmatpush2.bf16.msra.mxu0 0
    %346 = vmatprep.subr.bf16.mxu0 0
    %347 = vmatpush2.bf16.msra.mxu0 0
    %348 = vmatprep.subr.bf16.mxu0 0
    %349 = vmatpush2.bf16.msra.mxu0 0
    %350 = vmatprep.subr.bf16.mxu0 0
    %351 = vmatpush2.bf16.msra.mxu0 0
    %352 = vmatprep.subr.bf16.mxu0 0
    %353 = vmatpush2.bf16.msra.mxu0 0
    %354 = vmatprep.mubr.bf16.mxu0 0
    %355 = vmatmul.mubr.bf16.gmra.mxu0 %v133
    %v356 = vpop.f32.mrf.mxu0
    %v357 = vadd.f32 %v145, %v356
    %v358 = vpop.f32.mrf.mxu0
    %v359 = vadd.f32 %v149, %v358
    %v360 = vpop.f32.mrf.mxu0
    %v361 = vadd.f32 %v145, %v360
    %v362 = vpop.f32.mrf.mxu0
    %v363 = vadd.f32 %v149, %v362
    %364 = vmatprep.mubr.bf16.mxu0 0
    %365 = vmatmul.mubr.bf16.gmra.mxu0 %v134
    %v366 = vpop.f32.mrf.mxu0
    %v367 = vadd.f32 %v145, %v366
    %v368 = vpop.f32.mrf.mxu0
    %v369 = vadd.f32 %v149, %v368
    %v370 = vpop.f32.mrf.mxu0
    %v371 = vadd.f32 %v145, %v370
    %v372 = vpop.f32.mrf.mxu0
    %v373 = vadd.f32 %v149, %v372
    %374 = vmatprep.mubr.bf16.mxu0 0
    %375 = vmatmul.mubr.bf16.gmra.mxu0 %v135
    %v376 = vpop.f32.mrf.mxu0
    %v377 = vadd.f32 %v145, %v376
    %v378 = vpop.f32.mrf.mxu0
    %v379 = vadd.f32 %v149, %v378
    %v380 = vpop.f32.mrf.mxu0
    %v381 = vadd.f32 %v145, %v380
    %v382 = vpop.f32.mrf.mxu0
    %v383 = vadd.f32 %v149, %v382
    %384 = vmatprep.mubr.bf16.mxu0 0
    %385 = vmatmul.mubr.bf16.gmra.mxu0 %v136
    %v386 = vpop.f32.mrf.mxu0
    %v387 = vadd.f32 %v145, %v386
    %v388 = vpop.f32.mrf.mxu0
    %v389 = vadd.f32 %v149, %v388
    %v390 = vpop.f32.mrf.mxu0
    %v391 = vadd.f32 %v145, %v390
    %v392 = vpop.f32.mrf.mxu0
    %v393 = vadd.f32 %v149, %v392
    %394 = vmatprep.mubr.bf16.mxu0 0
    %395 = vmatmul.mubr.bf16.gmra.mxu0 %v137
    %v396 = vpop.f32.mrf.mxu0
    %v397 = vadd.f32 %v145, %v396
    %v398 = vpop.f32.mrf.mxu0
    %v399 = vadd.f32 %v149, %v398
    %v400 = vpop.f32.mrf.mxu0
    %v401 = vadd.f32 %v145, %v400
    %v402 = vpop.f32.mrf.mxu0
    %v403 = vadd.f32 %v149, %v402
    %404 = vmatprep.mubr.bf16.mxu0 0
    %405 = vmatmul.mubr.bf16.gmra.mxu0 %v138
    %v406 = vpop.f32.mrf.mxu0
    %v407 = vadd.f32 %v145, %v406
    %v408 = vpop.f32.mrf.mxu0
    %v409 = vadd.f32 %v149, %v408
    %v410 = vpop.f32.mrf.mxu0
    %v411 = vadd.f32 %v145, %v410
    %v412 = vpop.f32.mrf.mxu0
    %v413 = vadd.f32 %v149, %v412
    %414 = vmatprep.mubr.bf16.mxu0 0
    %415 = vmatmul.mubr.bf16.gmra.mxu0 %v139
    %v416 = vpop.f32.mrf.mxu0
    %v417 = vadd.f32 %v145, %v416
    %v418 = vpop.f32.mrf.mxu0
    %v419 = vadd.f32 %v149, %v418
    %v420 = vpop.f32.mrf.mxu0
    %v421 = vadd.f32 %v145, %v420
    %v422 = vpop.f32.mrf.mxu0
    %v423 = vadd.f32 %v149, %v422
    %424 = vmatprep.mubr.bf16.mxu0 0
    %425 = vmatmul.mubr.bf16.gmra.mxu0 %v140
    %v426 = vpop.f32.mrf.mxu0
    %v427 = vadd.f32 %v145, %v426
    %v428 = vpop.f32.mrf.mxu0
    %v429 = vadd.f32 %v149, %v428
    %v430 = vpop.f32.mrf.mxu0
    %v431 = vadd.f32 %v145, %v430
    %v432 = vpop.f32.mrf.mxu0
    %v433 = vadd.f32 %v149, %v432
    %434 = vdwg.mxu0
    %435 = vmatprep.subr.bf16.mxu0 %v289
    %436 = vmatpush1.bf16.msra.mxu0 %v288
    %437 = vmatprep.subr.bf16.mxu0 %v285
    %438 = vmatpush1.bf16.msra.mxu0 %v284
    %439 = vmatprep.subr.bf16.mxu0 %v281
    %440 = vmatpush1.bf16.msra.mxu0 %v280
    %441 = vmatprep.subr.bf16.mxu0 %v277
    %442 = vmatpush1.bf16.msra.mxu0 %v276
    %443 = vmatprep.subr.bf16.mxu0 %v273
    %444 = vmatpush1.bf16.msra.mxu0 %v272
    %445 = vmatprep.subr.bf16.mxu0 %v269
    %446 = vmatpush1.bf16.msra.mxu0 %v268
    %447 = vmatprep.subr.bf16.mxu0 %v265
    %448 = vmatpush1.bf16.msra.mxu0 %v264
    %449 = vmatprep.subr.bf16.mxu0 %v261
    %450 = vmatpush1.bf16.msra.mxu0 %v260
    %451 = vmatprep.subr.bf16.mxu0 0
    %452 = vmatpush2.bf16.msra.mxu0 0
    %453 = vmatprep.subr.bf16.mxu0 0
    %454 = vmatpush2.bf16.msra.mxu0 0
    %455 = vmatprep.subr.bf16.mxu0 0
    %456 = vmatpush2.bf16.msra.mxu0 0
    %457 = vmatprep.subr.bf16.mxu0 0
    %458 = vmatpush2.bf16.msra.mxu0 0
    %459 = vmatprep.subr.bf16.mxu0 0
    %460 = vmatpush2.bf16.msra.mxu0 0
    %461 = vmatprep.subr.bf16.mxu0 0
    %462 = vmatpush2.bf16.msra.mxu0 0
    %463 = vmatprep.subr.bf16.mxu0 0
    %464 = vmatpush2.bf16.msra.mxu0 0
    %465 = vmatprep.subr.bf16.mxu0 0
    %466 = vmatpush2.bf16.msra.mxu0 0
    %467 = vmatprep.mubr.bf16.mxu0 0
    %468 = vmatmul.mubr.bf16.gmra.mxu0 %v133
    %v469 = vpop.f32.mrf.mxu0
    %v470 = vadd.f32 %v153, %v469
    %v471 = vpop.f32.mrf.mxu0
    %v472 = vadd.f32 %v157, %v471
    %v473 = vpop.f32.mrf.mxu0
    %v474 = vadd.f32 %v153, %v473
    %v475 = vpop.f32.mrf.mxu0
    %v476 = vadd.f32 %v157, %v475
    %477 = vmatprep.mubr.bf16.mxu0 0
    %478 = vmatmul.mubr.bf16.gmra.mxu0 %v134
    %v479 = vpop.f32.mrf.mxu0
    %v480 = vadd.f32 %v153, %v479
    %v481 = vpop.f32.mrf.mxu0
    %v482 = vadd.f32 %v157, %v481
    %v483 = vpop.f32.mrf.mxu0
    %v484 = vadd.f32 %v153, %v483
    %v485 = vpop.f32.mrf.mxu0
    %v486 = vadd.f32 %v157, %v485
    %487 = vmatprep.mubr.bf16.mxu0 0
    %488 = vmatmul.mubr.bf16.gmra.mxu0 %v135
    %v489 = vpop.f32.mrf.mxu0
    %v490 = vadd.f32 %v153, %v489
    %v491 = vpop.f32.mrf.mxu0
    %v492 = vadd.f32 %v157, %v491
    %v493 = vpop.f32.mrf.mxu0
    %v494 = vadd.f32 %v153, %v493
    %v495 = vpop.f32.mrf.mxu0
    %v496 = vadd.f32 %v157, %v495
    %497 = vmatprep.mubr.bf16.mxu0 0
    %498 = vmatmul.mubr.bf16.gmra.mxu0 %v136
    %v499 = vpop.f32.mrf.mxu0
    %v500 = vadd.f32 %v153, %v499
    %v501 = vpop.f32.mrf.mxu0
    %v502 = vadd.f32 %v157, %v501
    %v503 = vpop.f32.mrf.mxu0
    %v504 = vadd.f32 %v153, %v503
    %v505 = vpop.f32.mrf.mxu0
    %v506 = vadd.f32 %v157, %v505
    %507 = vmatprep.mubr.bf16.mxu0 0
    %508 = vmatmul.mubr.bf16.gmra.mxu0 %v137
    %v509 = vpop.f32.mrf.mxu0
    %v510 = vadd.f32 %v153, %v509
    %v511 = vpop.f32.mrf.mxu0
    %v512 = vadd.f32 %v157, %v511
    %v513 = vpop.f32.mrf.mxu0
    %v514 = vadd.f32 %v153, %v513
    %v515 = vpop.f32.mrf.mxu0
    %v516 = vadd.f32 %v157, %v515
    %517 = vmatprep.mubr.bf16.mxu0 0
    %518 = vmatmul.mubr.bf16.gmra.mxu0 %v138
    %v519 = vpop.f32.mrf.mxu0
    %v520 = vadd.f32 %v153, %v519
    %v521 = vpop.f32.mrf.mxu0
    %v522 = vadd.f32 %v157, %v521
    %v523 = vpop.f32.mrf.mxu0
    %v524 = vadd.f32 %v153, %v523
    %v525 = vpop.f32.mrf.mxu0
    %v526 = vadd.f32 %v157, %v525
    %527 = vmatprep.mubr.bf16.mxu0 0
    %528 = vmatmul.mubr.bf16.gmra.mxu0 %v139
    %v529 = vpop.f32.mrf.mxu0
    %v530 = vadd.f32 %v153, %v529
    %v531 = vpop.f32.mrf.mxu0
    %v532 = vadd.f32 %v157, %v531
    %v533 = vpop.f32.mrf.mxu0
    %v534 = vadd.f32 %v153, %v533
    %v535 = vpop.f32.mrf.mxu0
    %v536 = vadd.f32 %v157, %v535
    %537 = vmatprep.mubr.bf16.mxu0 0
    %538 = vmatmul.mubr.bf16.gmra.mxu0 %v140
    %v539 = vpop.f32.mrf.mxu0
    %v540 = vadd.f32 %v153, %v539
    %v541 = vpop.f32.mrf.mxu0
    %v542 = vadd.f32 %v157, %v541
    %v543 = vpop.f32.mrf.mxu0
    %v544 = vadd.f32 %v153, %v543
    %v545 = vpop.f32.mrf.mxu0
    %v546 = vadd.f32 %v157, %v545
    %547 = vdwg.mxu0
    %548 = vst [vmem:[#allocation3] sm:$0xff] %v357
    %549 = vst [vmem:[#allocation3 + $0x8] sm:$0xff] %v359
    %550 = vst [vmem:[#allocation3 + $0x10] sm:$0xff] %v470
    %551 = vst [vmem:[#allocation3 + $0x18] sm:$0xff] %v472
    %552 = vst [vmem:[#allocation3 + $0x20] sm:$0xff] %v361
    %553 = vst [vmem:[#allocation3 + $0x28] sm:$0xff] %v363
    %554 = vst [vmem:[#allocation3 + $0x30] sm:$0xff] %v474
    %555 = vst [vmem:[#allocation3 + $0x38] sm:$0xff] %v476
    %556 = vst [vmem:[#allocation3 + $0x40] sm:$0xff] %v367
    %557 = vst [vmem:[#allocation3 + $0x48] sm:$0xff] %v369
    %558 = vst [vmem:[#allocation3 + $0x50] sm:$0xff] %v480
    %559 = vst [vmem:[#allocation3 + $0x58] sm:$0xff] %v482
    %560 = vst [vmem:[#allocation3 + $0x60] sm:$0xff] %v371
    %561 = vst [vmem:[#allocation3 + $0x68] sm:$0xff] %v373
    %562 = vst [vmem:[#allocation3 + $0x70] sm:$0xff] %v484
    %563 = vst [vmem:[#allocation3 + $0x78] sm:$0xff] %v486
    %564 = vst [vmem:[#allocation3 + $0x80] sm:$0xff] %v377
    %565 = vst [vmem:[#allocation3 + $0x88] sm:$0xff] %v379
    %566 = vst [vmem:[#allocation3 + $0x90] sm:$0xff] %v490
    %567 = vst [vmem:[#allocation3 + $0x98] sm:$0xff] %v492
    %568 = vst [vmem:[#allocation3 + $0xa0] sm:$0xff] %v381
    %569 = vst [vmem:[#allocation3 + $0xa8] sm:$0xff] %v383
    %570 = vst [vmem:[#allocation3 + $0xb0] sm:$0xff] %v494
    %571 = vst [vmem:[#allocation3 + $0xb8] sm:$0xff] %v496
    %572 = vst [vmem:[#allocation3 + $0xc0] sm:$0xff] %v387
    %573 = vst [vmem:[#allocation3 + $0xc8] sm:$0xff] %v389
    %574 = vst [vmem:[#allocation3 + $0xd0] sm:$0xff] %v500
    %575 = vst [vmem:[#allocation3 + $0xd8] sm:$0xff] %v502
    %576 = vst [vmem:[#allocation3 + $0xe0] sm:$0xff] %v391
    %577 = vst [vmem:[#allocation3 + $0xe8] sm:$0xff] %v393
    %578 = vst [vmem:[#allocation3 + $0xf0] sm:$0xff] %v504
    %579 = vst [vmem:[#allocation3 + $0xf8] sm:$0xff] %v506
    %580 = vst [vmem:[#allocation3 + $0x100] sm:$0xff] %v397
    %581 = vst [vmem:[#allocation3 + $0x108] sm:$0xff] %v399
    %582 = vst [vmem:[#allocation3 + $0x110] sm:$0xff] %v510
    %583 = vst [vmem:[#allocation3 + $0x118] sm:$0xff] %v512
    %584 = vst [vmem:[#allocation3 + $0x120] sm:$0xff] %v401
    %585 = vst [vmem:[#allocation3 + $0x128] sm:$0xff] %v403
    %586 = vst [vmem:[#allocation3 + $0x130] sm:$0xff] %v514
    %587 = vst [vmem:[#allocation3 + $0x138] sm:$0xff] %v516
    %588 = vst [vmem:[#allocation3 + $0x140] sm:$0xff] %v407
    %589 = vst [vmem:[#allocation3 + $0x148] sm:$0xff] %v409
    %590 = vst [vmem:[#allocation3 + $0x150] sm:$0xff] %v520
    %591 = vst [vmem:[#allocation3 + $0x158] sm:$0xff] %v522
    %592 = vst [vmem:[#allocation3 + $0x160] sm:$0xff] %v411
    %593 = vst [vmem:[#allocation3 + $0x168] sm:$0xff] %v413
    %594 = vst [vmem:[#allocation3 + $0x170] sm:$0xff] %v524
    %595 = vst [vmem:[#allocation3 + $0x178] sm:$0xff] %v526
    %596 = vst [vmem:[#allocation3 + $0x180] sm:$0xff] %v417
    %597 = vst [vmem:[#allocation3 + $0x188] sm:$0xff] %v419
    %598 = vst [vmem:[#allocation3 + $0x190] sm:$0xff] %v530
    %599 = vst [vmem:[#allocation3 + $0x198] sm:$0xff] %v532
    %600 = vst [vmem:[#allocation3 + $0x1a0] sm:$0xff] %v421
    %601 = vst [vmem:[#allocation3 + $0x1a8] sm:$0xff] %v423
    %602 = vst [vmem:[#allocation3 + $0x1b0] sm:$0xff] %v534
    %603 = vst [vmem:[#allocation3 + $0x1b8] sm:$0xff] %v536
    %604 = vst [vmem:[#allocation3 + $0x1c0] sm:$0xff] %v427
    %605 = vst [vmem:[#allocation3 + $0x1c8] sm:$0xff] %v429
    %606 = vst [vmem:[#allocation3 + $0x1d0] sm:$0xff] %v540
    %607 = vst [vmem:[#allocation3 + $0x1d8] sm:$0xff] %v542
    %608 = vst [vmem:[#allocation3 + $0x1e0] sm:$0xff] %v431
    %609 = vst [vmem:[#allocation3 + $0x1e8] sm:$0xff] %v433
    %610 = vst [vmem:[#allocation3 + $0x1f0] sm:$0xff] %v544
    %611 = vst [vmem:[#allocation3 + $0x1f8] sm:$0xff] %v546
    %v612 = vld [vmem:[#allocation4] sm:$0xff]
    %v613 = vld [vmem:[#allocation5] sm:$0xff]
    %s614 = smul.u32 0, 4
    %s615 = smul.addr %s614, 8
    %s616 = scalar_lea.vmem [#allocation3], %s615
    %v617 = vld [vmem:[%s616] sm:$0xff]
    %v618 = vld [vmem:[%s616 + $0x8] sm:$0xff]
    %v619 = vld [vmem:[%s616 + $0x10] sm:$0xff]
    %v620 = vld [vmem:[%s616 + $0x18] sm:$0xff]
    %v621 = vpack.c.bf16 %v612, %v612
    %v654 = vunpack.c.l.b16 %v78
    %v655 = vunpack.c.h.b16 %v78
    %v656 = vunpack.c.l.b16 %v79
    %v657 = vunpack.c.h.b16 %v79
    %v658 = vunpack.c.l.b16 %v80
    %v659 = vunpack.c.h.b16 %v80
    %v660 = vunpack.c.l.b16 %v81
    %v661 = vunpack.c.h.b16 %v81
    %v662 = vunpack.c.l.b16 %v82
    %v663 = vunpack.c.h.b16 %v82
    %v664 = vunpack.c.l.b16 %v83
    %v665 = vunpack.c.h.b16 %v83
    %v666 = vunpack.c.l.b16 %v84
    %v667 = vunpack.c.h.b16 %v84
    %v668 = vunpack.c.l.b16 %v85
    %v669 = vunpack.c.h.b16 %v85
    %v670 = vunpack.c.l.b16 %v86
    %v671 = vunpack.c.h.b16 %v86
    %v672 = vunpack.c.l.b16 %v87
    %v673 = vunpack.c.h.b16 %v87
    %v674 = vunpack.c.l.b16 %v88
    %v675 = vunpack.c.h.b16 %v88
    %v676 = vunpack.c.l.b16 %v89
    %v677 = vunpack.c.h.b16 %v89
    %v678 = vunpack.c.l.b16 %v90
    %v679 = vunpack.c.h.b16 %v90
    %v680 = vunpack.c.l.b16 %v91
    %v681 = vunpack.c.h.b16 %v91
    %v682 = vunpack.c.l.b16 %v92
    %v683 = vunpack.c.h.b16 %v92
    %v684 = vunpack.c.l.b16 %v93
    %v685 = vunpack.c.h.b16 %v93
    %v686 = vunpack.c.l.b16 %v94
    %v687 = vunpack.c.h.b16 %v94
    %v688 = vunpack.c.l.b16 %v95
    %v689 = vunpack.c.h.b16 %v95
    %v690 = vunpack.c.l.b16 %v96
    %v691 = vunpack.c.h.b16 %v96
    %v692 = vunpack.c.l.b16 %v97
    %v693 = vunpack.c.h.b16 %v97
    %v694 = vunpack.c.l.b16 %v98
    %v695 = vunpack.c.h.b16 %v98
    %v696 = vunpack.c.l.b16 %v99
    %v697 = vunpack.c.h.b16 %v99
    %v698 = vunpack.c.l.b16 %v100
    %v699 = vunpack.c.h.b16 %v100
    %v700 = vunpack.c.l.b16 %v101
    %v701 = vunpack.c.h.b16 %v101
    %v702 = vunpack.c.l.b16 %v102
    %v703 = vunpack.c.h.b16 %v102
    %v704 = vunpack.c.l.b16 %v103
    %v705 = vunpack.c.h.b16 %v103
    %v706 = vunpack.c.l.b16 %v104
    %v707 = vunpack.c.h.b16 %v104
    %v708 = vunpack.c.l.b16 %v105
    %v709 = vunpack.c.h.b16 %v105
    %v710 = vunpack.c.l.b16 %v106
    %v711 = vunpack.c.h.b16 %v106
    %v712 = vunpack.c.l.b16 %v107
    %v713 = vunpack.c.h.b16 %v107
    %v714 = vunpack.c.l.b16 %v108
    %v715 = vunpack.c.h.b16 %v108
    %v716 = vunpack.c.l.b16 %v109
    %v717 = vunpack.c.h.b16 %v109
    %v718 = vpack.c.b16 %v658, %v654
    %v719 = vpack.c.b16 %v659, %v655
    %v720 = vpack.c.b16 %v660, %v656
    %v721 = vpack.c.b16 %v661, %v657
    %v722 = vpack.c.b16 %v666, %v662
    %v723 = vpack.c.b16 %v667, %v663
    %v724 = vpack.c.b16 %v668, %v664
    %v725 = vpack.c.b16 %v669, %v665
    %v726 = vpack.c.b16 %v674, %v670
    %v727 = vpack.c.b16 %v675, %v671
    %v728 = vpack.c.b16 %v676, %v672
    %v729 = vpack.c.b16 %v677, %v673
    %v730 = vpack.c.b16 %v682, %v678
    %v731 = vpack.c.b16 %v683, %v679
    %v732 = vpack.c.b16 %v684, %v680
    %v733 = vpack.c.b16 %v685, %v681
    %v734 = vpack.c.b16 %v690, %v686
    %v735 = vpack.c.b16 %v691, %v687
    %v736 = vpack.c.b16 %v692, %v688
    %v737 = vpack.c.b16 %v693, %v689
    %v738 = vpack.c.b16 %v698, %v694
    %v739 = vpack.c.b16 %v699, %v695
    %v740 = vpack.c.b16 %v700, %v696
    %v741 = vpack.c.b16 %v701, %v697
    %v742 = vpack.c.b16 %v706, %v702
    %v743 = vpack.c.b16 %v707, %v703
    %v744 = vpack.c.b16 %v708, %v704
    %v745 = vpack.c.b16 %v709, %v705
    %v746 = vpack.c.b16 %v714, %v710
    %v747 = vpack.c.b16 %v715, %v711
    %v748 = vpack.c.b16 %v716, %v712
    %v749 = vpack.c.b16 %v717, %v713
    %782 = vmatprep.subr.bf16.mxu0 %v747
    %783 = vmatpush1.bf16.msra.mxu0 %v746
    %784 = vmatprep.subr.bf16.mxu0 %v743
    %785 = vmatpush1.bf16.msra.mxu0 %v742
    %786 = vmatprep.subr.bf16.mxu0 %v739
    %787 = vmatpush1.bf16.msra.mxu0 %v738
    %788 = vmatprep.subr.bf16.mxu0 %v735
    %789 = vmatpush1.bf16.msra.mxu0 %v734
    %790 = vmatprep.subr.bf16.mxu0 %v731
    %791 = vmatpush1.bf16.msra.mxu0 %v730
    %792 = vmatprep.subr.bf16.mxu0 %v727
    %793 = vmatpush1.bf16.msra.mxu0 %v726
    %794 = vmatprep.subr.bf16.mxu0 %v723
    %795 = vmatpush1.bf16.msra.mxu0 %v722
    %796 = vmatprep.subr.bf16.mxu0 %v719
    %797 = vmatpush1.bf16.msra.mxu0 %v718
    %798 = vmatprep.subr.bf16.mxu0 0
    %799 = vmatpush2.bf16.msra.mxu0 0
    %800 = vmatprep.subr.bf16.mxu0 0
    %801 = vmatpush2.bf16.msra.mxu0 0
    %802 = vmatprep.subr.bf16.mxu0 0
    %803 = vmatpush2.bf16.msra.mxu0 0
    %804 = vmatprep.subr.bf16.mxu0 0
    %805 = vmatpush2.bf16.msra.mxu0 0
    %806 = vmatprep.subr.bf16.mxu0 0
    %807 = vmatpush2.bf16.msra.mxu0 0
    %808 = vmatprep.subr.bf16.mxu0 0
    %809 = vmatpush2.bf16.msra.mxu0 0
    %810 = vmatprep.subr.bf16.mxu0 0
    %811 = vmatpush2.bf16.msra.mxu0 0
    %812 = vmatprep.subr.bf16.mxu0 0
    %813 = vmatpush2.bf16.msra.mxu0 0
    %814 = vmatprep.mubr.bf16.mxu0 0
    %815 = vmatmul.mubr.bf16.gmra.mxu0 %v621
    %v816 = vpop.f32.mrf.mxu0
    %v817 = vadd.f32 0.0, %v816
    %v818 = vpop.f32.mrf.mxu0
    %v819 = vadd.f32 0.0, %v818
    %v820 = vpop.f32.mrf.mxu0
    %v821 = vpop.f32.mrf.mxu0
    %822 = vdwg.mxu0
    %823 = vmatprep.subr.bf16.mxu0 %v749
    %824 = vmatpush1.bf16.msra.mxu0 %v748
    %825 = vmatprep.subr.bf16.mxu0 %v745
    %826 = vmatpush1.bf16.msra.mxu0 %v744
    %827 = vmatprep.subr.bf16.mxu0 %v741
    %828 = vmatpush1.bf16.msra.mxu0 %v740
    %829 = vmatprep.subr.bf16.mxu0 %v737
    %830 = vmatpush1.bf16.msra.mxu0 %v736
    %831 = vmatprep.subr.bf16.mxu0 %v733
    %832 = vmatpush1.bf16.msra.mxu0 %v732
    %833 = vmatprep.subr.bf16.mxu0 %v729
    %834 = vmatpush1.bf16.msra.mxu0 %v728
    %835 = vmatprep.subr.bf16.mxu0 %v725
    %836 = vmatpush1.bf16.msra.mxu0 %v724
    %837 = vmatprep.subr.bf16.mxu0 %v721
    %838 = vmatpush1.bf16.msra.mxu0 %v720
    %839 = vmatprep.subr.bf16.mxu0 0
    %840 = vmatpush2.bf16.msra.mxu0 0
    %841 = vmatprep.subr.bf16.mxu0 0
    %842 = vmatpush2.bf16.msra.mxu0 0
    %843 = vmatprep.subr.bf16.mxu0 0
    %844 = vmatpush2.bf16.msra.mxu0 0
    %845 = vmatprep.subr.bf16.mxu0 0
    %846 = vmatpush2.bf16.msra.mxu0 0
    %847 = vmatprep.subr.bf16.mxu0 0
    %848 = vmatpush2.bf16.msra.mxu0 0
    %849 = vmatprep.subr.bf16.mxu0 0
    %850 = vmatpush2.bf16.msra.mxu0 0
    %851 = vmatprep.subr.bf16.mxu0 0
    %852 = vmatpush2.bf16.msra.mxu0 0
    %853 = vmatprep.subr.bf16.mxu0 0
    %854 = vmatpush2.bf16.msra.mxu0 0
    %855 = vmatprep.mubr.bf16.mxu0 0
    %856 = vmatmul.mubr.bf16.gmra.mxu0 %v621
    %v857 = vpop.f32.mrf.mxu0
    %v858 = vadd.f32 0.0, %v857
    %v859 = vpop.f32.mrf.mxu0
    %v860 = vadd.f32 0.0, %v859
    %v861 = vpop.f32.mrf.mxu0
    %v862 = vpop.f32.mrf.mxu0
    %863 = vdwg.mxu0
    %v864 = vadd.f32 %v617, %v817
    %v865 = vadd.f32 %v618, %v819
    %v866 = vadd.f32 %v619, %v858
    %v867 = vadd.f32 %v620, %v860
    %v868 = vpack.c.bf16 %v864, %v864
    %v869 = vpack.c.bf16 %v865, %v865
    %v870 = vpack.c.bf16 %v866, %v866
    %v871 = vpack.c.bf16 %v867, %v867
    %v872 = vxor.u32 %v868, 2147516416
    %v874 = vmul.bf16 %v872, 1069105081
    %v875 = vpow.bf16.pop %v874
    %v876 = vadd.bf16 %v875, 1065369472
    %v877 = vrcp.bf16.pop %v876
    %v878 = vmul.bf16 1065369472, %v877
    %v879 = vunpack.c.l.bf16 %v878
    %v880 = vxor.u32 %v869, 2147516416
    %v882 = vmul.bf16 %v880, 1069105081
    %v883 = vpow.bf16.pop %v882
    %v884 = vadd.bf16 %v883, 1065369472
    %v885 = vrcp.bf16.pop %v884
    %v886 = vmul.bf16 1065369472, %v885
    %v887 = vunpack.c.l.bf16 %v886
    %v888 = vtanh.bf16.pop %v870
    %v889 = vunpack.c.l.bf16 %v888
    %v890 = vxor.u32 %v871, 2147516416
    %v892 = vmul.bf16 %v890, 1069105081
    %v893 = vpow.bf16.pop %v892
    %v894 = vadd.bf16 %v893, 1065369472
    %v895 = vrcp.bf16.pop %v894
    %v896 = vmul.bf16 1065369472, %v895
    %v897 = vunpack.c.l.bf16 %v896
    %v898 = vmul.f32 %v887, %v613
    %v899 = vmul.f32 %v879, %v889
    %v900 = vadd.f32 %v898, %v899
    %v901 = vtanh.pop %v900
    %v902 = vmul.f32 %v897, %v901
    %vm903 = vcmp.gt.s32.totalorder %v24, 0
    %v904 = vsel %vm903, 1, 0
    %905 = vset.pattern.permute.xlu0 0
    %906 = vperm.xlu0 %905, %v904
    %v907 = vpop.permute.xlu0 %906
    %vm908 = vcmp.eq.s32.totalorder %v907, 1
    %v909 = vsel %vm908, %v902, %v612
    %v910 = vsel %vm908, %v900, %v613
    %v911 = vsel %vm908, %v902, 0.0
    %912 = vst [vmem:[#allocation2] sm:$0xff] %v911
    %s913 = smul.u32 1, 4
    %s914 = smul.addr %s913, 8
    %s915 = scalar_lea.vmem [#allocation3], %s914
    %v916 = vld [vmem:[%s915] sm:$0xff]
    %v917 = vld [vmem:[%s915 + $0x8] sm:$0xff]
    %v918 = vld [vmem:[%s915 + $0x10] sm:$0xff]
    %v919 = vld [vmem:[%s915 + $0x18] sm:$0xff]
    %v920 = vpack.c.bf16 %v909, %v909
    %921 = vmatprep.subr.bf16.mxu0 %v747
    %922 = vmatpush1.bf16.msra.mxu0 %v746
    %923 = vmatprep.subr.bf16.mxu0 %v743
    %924 = vmatpush1.bf16.msra.mxu0 %v742
    %925 = vmatprep.subr.bf16.mxu0 %v739
    %926 = vmatpush1.bf16.msra.mxu0 %v738
    %927 = vmatprep.subr.bf16.mxu0 %v735
    %928 = vmatpush1.bf16.msra.mxu0 %v734
    %929 = vmatprep.subr.bf16.mxu0 %v731
    %930 = vmatpush1.bf16.msra.mxu0 %v730
    %931 = vmatprep.subr.bf16.mxu0 %v727
    %932 = vmatpush1.bf16.msra.mxu0 %v726
    %933 = vmatprep.subr.bf16.mxu0 %v723
    %934 = vmatpush1.bf16.msra.mxu0 %v722
    %935 = vmatprep.subr.bf16.mxu0 %v719
    %936 = vmatpush1.bf16.msra.mxu0 %v718
    %937 = vmatprep.subr.bf16.mxu0 0
    %938 = vmatpush2.bf16.msra.mxu0 0
    %939 = vmatprep.subr.bf16.mxu0 0
    %940 = vmatpush2.bf16.msra.mxu0 0
    %941 = vmatprep.subr.bf16.mxu0 0
    %942 = vmatpush2.bf16.msra.mxu0 0
    %943 = vmatprep.subr.bf16.mxu0 0
    %944 = vmatpush2.bf16.msra.mxu0 0
    %945 = vmatprep.subr.bf16.mxu0 0
    %946 = vmatpush2.bf16.msra.mxu0 0
    %947 = vmatprep.subr.bf16.mxu0 0
    %948 = vmatpush2.bf16.msra.mxu0 0
    %949 = vmatprep.subr.bf16.mxu0 0
    %950 = vmatpush2.bf16.msra.mxu0 0
    %951 = vmatprep.subr.bf16.mxu0 0
    %952 = vmatpush2.bf16.msra.mxu0 0
    %953 = vmatprep.mubr.bf16.mxu0 0
    %954 = vmatmul.mubr.bf16.gmra.mxu0 %v920
    %v955 = vpop.f32.mrf.mxu0
    %v956 = vadd.f32 0.0, %v955
    %v957 = vpop.f32.mrf.mxu0
    %v958 = vadd.f32 0.0, %v957
    %v959 = vpop.f32.mrf.mxu0
    %v960 = vpop.f32.mrf.mxu0
    %961 = vdwg.mxu0
    %962 = vmatprep.subr.bf16.mxu0 %v749
    %963 = vmatpush1.bf16.msra.mxu0 %v748
    %964 = vmatprep.subr.bf16.mxu0 %v745
    %965 = vmatpush1.bf16.msra.mxu0 %v744
    %966 = vmatprep.subr.bf16.mxu0 %v741
    %967 = vmatpush1.bf16.msra.mxu0 %v740
    %968 = vmatprep.subr.bf16.mxu0 %v737
    %969 = vmatpush1.bf16.msra.mxu0 %v736
    %970 = vmatprep.subr.bf16.mxu0 %v733
    %971 = vmatpush1.bf16.msra.mxu0 %v732
    %972 = vmatprep.subr.bf16.mxu0 %v729
    %973 = vmatpush1.bf16.msra.mxu0 %v728
    %974 = vmatprep.subr.bf16.mxu0 %v725
    %975 = vmatpush1.bf16.msra.mxu0 %v724
    %976 = vmatprep.subr.bf16.mxu0 %v721
    %977 = vmatpush1.bf16.msra.mxu0 %v720
    %978 = vmatprep.subr.bf16.mxu0 0
    %979 = vmatpush2.bf16.msra.mxu0 0
    %980 = vmatprep.subr.bf16.mxu0 0
    %981 = vmatpush2.bf16.msra.mxu0 0
    %982 = vmatprep.subr.bf16.mxu0 0
    %983 = vmatpush2.bf16.msra.mxu0 0
    %984 = vmatprep.subr.bf16.mxu0 0
    %985 = vmatpush2.bf16.msra.mxu0 0
    %986 = vmatprep.subr.bf16.mxu0 0
    %987 = vmatpush2.bf16.msra.mxu0 0
    %988 = vmatprep.subr.bf16.mxu0 0
    %989 = vmatpush2.bf16.msra.mxu0 0
    %990 = vmatprep.subr.bf16.mxu0 0
    %991 = vmatpush2.bf16.msra.mxu0 0
    %992 = vmatprep.subr.bf16.mxu0 0
    %993 = vmatpush2.bf16.msra.mxu0 0
    %994 = vmatprep.mubr.bf16.mxu0 0
    %995 = vmatmul.mubr.bf16.gmra.mxu0 %v920
    %v996 = vpop.f32.mrf.mxu0
    %v997 = vadd.f32 0.0, %v996
    %v998 = vpop.f32.mrf.mxu0
    %v999 = vadd.f32 0.0, %v998
    %v1000 = vpop.f32.mrf.mxu0
    %v1001 = vpop.f32.mrf.mxu0
    %1002 = vdwg.mxu0
    %v1003 = vadd.f32 %v916, %v956
    %v1004 = vadd.f32 %v917, %v958
    %v1005 = vadd.f32 %v918, %v997
    %v1006 = vadd.f32 %v919, %v999
    %v1007 = vpack.c.bf16 %v1003, %v1003
    %v1008 = vpack.c.bf16 %v1004, %v1004
    %v1009 = vpack.c.bf16 %v1005, %v1005
    %v1010 = vpack.c.bf16 %v1006, %v1006
    %v1011 = vxor.u32 %v1007, 2147516416
    %v1013 = vmul.bf16 %v1011, 1069105081
    %v1014 = vpow.bf16.pop %v1013
    %v1015 = vadd.bf16 %v1014, 1065369472
    %v1016 = vrcp.bf16.pop %v1015
    %v1017 = vmul.bf16 1065369472, %v1016
    %v1018 = vunpack.c.l.bf16 %v1017
    %v1019 = vxor.u32 %v1008, 2147516416
    %v1021 = vmul.bf16 %v1019, 1069105081
    %v1022 = vpow.bf16.pop %v1021
    %v1023 = vadd.bf16 %v1022, 1065369472
    %v1024 = vrcp.bf16.pop %v1023
    %v1025 = vmul.bf16 1065369472, %v1024
    %v1026 = vunpack.c.l.bf16 %v1025
    %v1027 = vtanh.bf16.pop %v1009
    %v1028 = vunpack.c.l.bf16 %v1027
    %v1029 = vxor.u32 %v1010, 2147516416
    %v1031 = vmul.bf16 %v1029, 1069105081
    %v1032 = vpow.bf16.pop %v1031
    %v1033 = vadd.bf16 %v1032, 1065369472
    %v1034 = vrcp.bf16.pop %v1033
    %v1035 = vmul.bf16 1065369472, %v1034
    %v1036 = vunpack.c.l.bf16 %v1035
    %v1037 = vmul.f32 %v1026, %v910
    %v1038 = vmul.f32 %v1018, %v1028
    %v1039 = vadd.f32 %v1037, %v1038
    %v1040 = vtanh.pop %v1039
    %v1041 = vmul.f32 %v1036, %v1040
    %vm1042 = vcmp.gt.s32.totalorder %v24, 1
    %v1043 = vsel %vm1042, 1, 0
    %1044 = vset.pattern.permute.xlu0 0
    %1045 = vperm.xlu0 %1044, %v1043
    %v1046 = vpop.permute.xlu0 %1045
    %vm1047 = vcmp.eq.s32.totalorder %v1046, 1
    %v1048 = vsel %vm1047, %v1041, %v909
    %v1049 = vsel %vm1047, %v1039, %v910
    %v1050 = vsel %vm1047, %v1041, 0.0
    %s1051 = scalar_lea.vmem [#allocation2], 8
    %1052 = vst [vmem:[%s1051] sm:$0xff] %v1050
    %s1053 = smul.u32 2, 4
    %s1054 = smul.addr %s1053, 8
    %s1055 = scalar_lea.vmem [#allocation3], %s1054
    %v1056 = vld [vmem:[%s1055] sm:$0xff]
    %v1057 = vld [vmem:[%s1055 + $0x8] sm:$0xff]
    %v1058 = vld [vmem:[%s1055 + $0x10] sm:$0xff]
    %v1059 = vld [vmem:[%s1055 + $0x18] sm:$0xff]
    %v1060 = vpack.c.bf16 %v1048, %v1048
    %1061 = vmatprep.subr.bf16.mxu0 %v747
    %1062 = vmatpush1.bf16.msra.mxu0 %v746
    %1063 = vmatprep.subr.bf16.mxu0 %v743
    %1064 = vmatpush1.bf16.msra.mxu0 %v742
    %1065 = vmatprep.subr.bf16.mxu0 %v739
    %1066 = vmatpush1.bf16.msra.mxu0 %v738
    %1067 = vmatprep.subr.bf16.mxu0 %v735
    %1068 = vmatpush1.bf16.msra.mxu0 %v734
    %1069 = vmatprep.subr.bf16.mxu0 %v731
    %1070 = vmatpush1.bf16.msra.mxu0 %v730
    %1071 = vmatprep.subr.bf16.mxu0 %v727
    %1072 = vmatpush1.bf16.msra.mxu0 %v726
    %1073 = vmatprep.subr.bf16.mxu0 %v723
    %1074 = vmatpush1.bf16.msra.mxu0 %v722
    %1075 = vmatprep.subr.bf16.mxu0 %v719
    %1076 = vmatpush1.bf16.msra.mxu0 %v718
    %1077 = vmatprep.subr.bf16.mxu0 0
    %1078 = vmatpush2.bf16.msra.mxu0 0
    %1079 = vmatprep.subr.bf16.mxu0 0
    %1080 = vmatpush2.bf16.msra.mxu0 0
    %1081 = vmatprep.subr.bf16.mxu0 0
    %1082 = vmatpush2.bf16.msra.mxu0 0
    %1083 = vmatprep.subr.bf16.mxu0 0
    %1084 = vmatpush2.bf16.msra.mxu0 0
    %1085 = vmatprep.subr.bf16.mxu0 0
    %1086 = vmatpush2.bf16.msra.mxu0 0
    %1087 = vmatprep.subr.bf16.mxu0 0
    %1088 = vmatpush2.bf16.msra.mxu0 0
    %1089 = vmatprep.subr.bf16.mxu0 0
    %1090 = vmatpush2.bf16.msra.mxu0 0
    %1091 = vmatprep.subr.bf16.mxu0 0
    %1092 = vmatpush2.bf16.msra.mxu0 0
    %1093 = vmatprep.mubr.bf16.mxu0 0
    %1094 = vmatmul.mubr.bf16.gmra.mxu0 %v1060
    %v1095 = vpop.f32.mrf.mxu0
    %v1096 = vadd.f32 0.0, %v1095
    %v1097 = vpop.f32.mrf.mxu0
    %v1098 = vadd.f32 0.0, %v1097
    %v1099 = vpop.f32.mrf.mxu0
    %v1100 = vpop.f32.mrf.mxu0
    %1101 = vdwg.mxu0
    %1102 = vmatprep.subr.bf16.mxu0 %v749
    %1103 = vmatpush1.bf16.msra.mxu0 %v748
    %1104 = vmatprep.subr.bf16.mxu0 %v745
    %1105 = vmatpush1.bf16.msra.mxu0 %v744
    %1106 = vmatprep.subr.bf16.mxu0 %v741
    %1107 = vmatpush1.bf16.msra.mxu0 %v740
    %1108 = vmatprep.subr.bf16.mxu0 %v737
    %1109 = vmatpush1.bf16.msra.mxu0 %v736
    %1110 = vmatprep.subr.bf16.mxu0 %v733
    %1111 = vmatpush1.bf16.msra.mxu0 %v732
    %1112 = vmatprep.subr.bf16.mxu0 %v729
    %1113 = vmatpush1.bf16.msra.mxu0 %v728
    %1114 = vmatprep.subr.bf16.mxu0 %v725
    %1115 = vmatpush1.bf16.msra.mxu0 %v724
    %1116 = vmatprep.subr.bf16.mxu0 %v721
    %1117 = vmatpush1.bf16.msra.mxu0 %v720
    %1118 = vmatprep.subr.bf16.mxu0 0
    %1119 = vmatpush2.bf16.msra.mxu0 0
    %1120 = vmatprep.subr.bf16.mxu0 0
    %1121 = vmatpush2.bf16.msra.mxu0 0
    %1122 = vmatprep.subr.bf16.mxu0 0
    %1123 = vmatpush2.bf16.msra.mxu0 0
    %1124 = vmatprep.subr.bf16.mxu0 0
    %1125 = vmatpush2.bf16.msra.mxu0 0
    %1126 = vmatprep.subr.bf16.mxu0 0
    %1127 = vmatpush2.bf16.msra.mxu0 0
    %1128 = vmatprep.subr.bf16.mxu0 0
    %1129 = vmatpush2.bf16.msra.mxu0 0
    %1130 = vmatprep.subr.bf16.mxu0 0
    %1131 = vmatpush2.bf16.msra.mxu0 0
    %1132 = vmatprep.subr.bf16.mxu0 0
    %1133 = vmatpush2.bf16.msra.mxu0 0
    %1134 = vmatprep.mubr.bf16.mxu0 0
    %1135 = vmatmul.mubr.bf16.gmra.mxu0 %v1060
    %v1136 = vpop.f32.mrf.mxu0
    %v1137 = vadd.f32 0.0, %v1136
    %v1138 = vpop.f32.mrf.mxu0
    %v1139 = vadd.f32 0.0, %v1138
    %v1140 = vpop.f32.mrf.mxu0
    %v1141 = vpop.f32.mrf.mxu0
    %1142 = vdwg.mxu0
    %v1143 = vadd.f32 %v1056, %v1096
    %v1144 = vadd.f32 %v1057, %v1098
    %v1145 = vadd.f32 %v1058, %v1137
    %v1146 = vadd.f32 %v1059, %v1139
    %v1147 = vpack.c.bf16 %v1143, %v1143
    %v1148 = vpack.c.bf16 %v1144, %v1144
    %v1149 = vpack.c.bf16 %v1145, %v1145
    %v1150 = vpack.c.bf16 %v1146, %v1146
    %v1151 = vxor.u32 %v1147, 2147516416
    %v1153 = vmul.bf16 %v1151, 1069105081
    %v1154 = vpow.bf16.pop %v1153
    %v1155 = vadd.bf16 %v1154, 1065369472
    %v1156 = vrcp.bf16.pop %v1155
    %v1157 = vmul.bf16 1065369472, %v1156
    %v1158 = vunpack.c.l.bf16 %v1157
    %v1159 = vxor.u32 %v1148, 2147516416
    %v1161 = vmul.bf16 %v1159, 1069105081
    %v1162 = vpow.bf16.pop %v1161
    %v1163 = vadd.bf16 %v1162, 1065369472
    %v1164 = vrcp.bf16.pop %v1163
    %v1165 = vmul.bf16 1065369472, %v1164
    %v1166 = vunpack.c.l.bf16 %v1165
    %v1167 = vtanh.bf16.pop %v1149
    %v1168 = vunpack.c.l.bf16 %v1167
    %v1169 = vxor.u32 %v1150, 2147516416
    %v1171 = vmul.bf16 %v1169, 1069105081
    %v1172 = vpow.bf16.pop %v1171
    %v1173 = vadd.bf16 %v1172, 1065369472
    %v1174 = vrcp.bf16.pop %v1173
    %v1175 = vmul.bf16 1065369472, %v1174
    %v1176 = vunpack.c.l.bf16 %v1175
    %v1177 = vmul.f32 %v1166, %v1049
    %v1178 = vmul.f32 %v1158, %v1168
    %v1179 = vadd.f32 %v1177, %v1178
    %v1180 = vtanh.pop %v1179
    %v1181 = vmul.f32 %v1176, %v1180
    %vm1182 = vcmp.gt.s32.totalorder %v24, 2
    %v1183 = vsel %vm1182, 1, 0
    %1184 = vset.pattern.permute.xlu0 0
    %1185 = vperm.xlu0 %1184, %v1183
    %v1186 = vpop.permute.xlu0 %1185
    %vm1187 = vcmp.eq.s32.totalorder %v1186, 1
    %v1188 = vsel %vm1187, %v1181, %v1048
    %v1189 = vsel %vm1187, %v1179, %v1049
    %v1190 = vsel %vm1187, %v1181, 0.0
    %s1191 = scalar_lea.vmem [#allocation2], 16
    %1192 = vst [vmem:[%s1191] sm:$0xff] %v1190
    %s1193 = smul.u32 3, 4
    %s1194 = smul.addr %s1193, 8
    %s1195 = scalar_lea.vmem [#allocation3], %s1194
    %v1196 = vld [vmem:[%s1195] sm:$0xff]
    %v1197 = vld [vmem:[%s1195 + $0x8] sm:$0xff]
    %v1198 = vld [vmem:[%s1195 + $0x10] sm:$0xff]
    %v1199 = vld [vmem:[%s1195 + $0x18] sm:$0xff]
    %v1200 = vpack.c.bf16 %v1188, %v1188
    %1201 = vmatprep.subr.bf16.mxu0 %v747
    %1202 = vmatpush1.bf16.msra.mxu0 %v746
    %1203 = vmatprep.subr.bf16.mxu0 %v743
    %1204 = vmatpush1.bf16.msra.mxu0 %v742
    %1205 = vmatprep.subr.bf16.mxu0 %v739
    %1206 = vmatpush1.bf16.msra.mxu0 %v738
    %1207 = vmatprep.subr.bf16.mxu0 %v735
    %1208 = vmatpush1.bf16.msra.mxu0 %v734
    %1209 = vmatprep.subr.bf16.mxu0 %v731
    %1210 = vmatpush1.bf16.msra.mxu0 %v730
    %1211 = vmatprep.subr.bf16.mxu0 %v727
    %1212 = vmatpush1.bf16.msra.mxu0 %v726
    %1213 = vmatprep.subr.bf16.mxu0 %v723
    %1214 = vmatpush1.bf16.msra.mxu0 %v722
    %1215 = vmatprep.subr.bf16.mxu0 %v719
    %1216 = vmatpush1.bf16.msra.mxu0 %v718
    %1217 = vmatprep.subr.bf16.mxu0 0
    %1218 = vmatpush2.bf16.msra.mxu0 0
    %1219 = vmatprep.subr.bf16.mxu0 0
    %1220 = vmatpush2.bf16.msra.mxu0 0
    %1221 = vmatprep.subr.bf16.mxu0 0
    %1222 = vmatpush2.bf16.msra.mxu0 0
    %1223 = vmatprep.subr.bf16.mxu0 0
    %1224 = vmatpush2.bf16.msra.mxu0 0
    %1225 = vmatprep.subr.bf16.mxu0 0
    %1226 = vmatpush2.bf16.msra.mxu0 0
    %1227 = vmatprep.subr.bf16.mxu0 0
    %1228 = vmatpush2.bf16.msra.mxu0 0
    %1229 = vmatprep.subr.bf16.mxu0 0
    %1230 = vmatpush2.bf16.msra.mxu0 0
    %1231 = vmatprep.subr.bf16.mxu0 0
    %1232 = vmatpush2.bf16.msra.mxu0 0
    %1233 = vmatprep.mubr.bf16.mxu0 0
    %1234 = vmatmul.mubr.bf16.gmra.mxu0 %v1200
    %v1235 = vpop.f32.mrf.mxu0
    %v1236 = vadd.f32 0.0, %v1235
    %v1237 = vpop.f32.mrf.mxu0
    %v1238 = vadd.f32 0.0, %v1237
    %v1239 = vpop.f32.mrf.mxu0
    %v1240 = vpop.f32.mrf.mxu0
    %1241 = vdwg.mxu0
    %1242 = vmatprep.subr.bf16.mxu0 %v749
    %1243 = vmatpush1.bf16.msra.mxu0 %v748
    %1244 = vmatprep.subr.bf16.mxu0 %v745
    %1245 = vmatpush1.bf16.msra.mxu0 %v744
    %1246 = vmatprep.subr.bf16.mxu0 %v741
    %1247 = vmatpush1.bf16.msra.mxu0 %v740
    %1248 = vmatprep.subr.bf16.mxu0 %v737
    %1249 = vmatpush1.bf16.msra.mxu0 %v736
    %1250 = vmatprep.subr.bf16.mxu0 %v733
    %1251 = vmatpush1.bf16.msra.mxu0 %v732
    %1252 = vmatprep.subr.bf16.mxu0 %v729
    %1253 = vmatpush1.bf16.msra.mxu0 %v728
    %1254 = vmatprep.subr.bf16.mxu0 %v725
    %1255 = vmatpush1.bf16.msra.mxu0 %v724
    %1256 = vmatprep.subr.bf16.mxu0 %v721
    %1257 = vmatpush1.bf16.msra.mxu0 %v720
    %1258 = vmatprep.subr.bf16.mxu0 0
    %1259 = vmatpush2.bf16.msra.mxu0 0
    %1260 = vmatprep.subr.bf16.mxu0 0
    %1261 = vmatpush2.bf16.msra.mxu0 0
    %1262 = vmatprep.subr.bf16.mxu0 0
    %1263 = vmatpush2.bf16.msra.mxu0 0
    %1264 = vmatprep.subr.bf16.mxu0 0
    %1265 = vmatpush2.bf16.msra.mxu0 0
    %1266 = vmatprep.subr.bf16.mxu0 0
    %1267 = vmatpush2.bf16.msra.mxu0 0
    %1268 = vmatprep.subr.bf16.mxu0 0
    %1269 = vmatpush2.bf16.msra.mxu0 0
    %1270 = vmatprep.subr.bf16.mxu0 0
    %1271 = vmatpush2.bf16.msra.mxu0 0
    %1272 = vmatprep.subr.bf16.mxu0 0
    %1273 = vmatpush2.bf16.msra.mxu0 0
    %1274 = vmatprep.mubr.bf16.mxu0 0
    %1275 = vmatmul.mubr.bf16.gmra.mxu0 %v1200
    %v1276 = vpop.f32.mrf.mxu0
    %v1277 = vadd.f32 0.0, %v1276
    %v1278 = vpop.f32.mrf.mxu0
    %v1279 = vadd.f32 0.0, %v1278
    %v1280 = vpop.f32.mrf.mxu0
    %v1281 = vpop.f32.mrf.mxu0
    %1282 = vdwg.mxu0
    %v1283 = vadd.f32 %v1196, %v1236
    %v1284 = vadd.f32 %v1197, %v1238
    %v1285 = vadd.f32 %v1198, %v1277
    %v1286 = vadd.f32 %v1199, %v1279
    %v1287 = vpack.c.bf16 %v1283, %v1283
    %v1288 = vpack.c.bf16 %v1284, %v1284
    %v1289 = vpack.c.bf16 %v1285, %v1285
    %v1290 = vpack.c.bf16 %v1286, %v1286
    %v1291 = vxor.u32 %v1287, 2147516416
    %v1293 = vmul.bf16 %v1291, 1069105081
    %v1294 = vpow.bf16.pop %v1293
    %v1295 = vadd.bf16 %v1294, 1065369472
    %v1296 = vrcp.bf16.pop %v1295
    %v1297 = vmul.bf16 1065369472, %v1296
    %v1298 = vunpack.c.l.bf16 %v1297
    %v1299 = vxor.u32 %v1288, 2147516416
    %v1301 = vmul.bf16 %v1299, 1069105081
    %v1302 = vpow.bf16.pop %v1301
    %v1303 = vadd.bf16 %v1302, 1065369472
    %v1304 = vrcp.bf16.pop %v1303
    %v1305 = vmul.bf16 1065369472, %v1304
    %v1306 = vunpack.c.l.bf16 %v1305
    %v1307 = vtanh.bf16.pop %v1289
    %v1308 = vunpack.c.l.bf16 %v1307
    %v1309 = vxor.u32 %v1290, 2147516416
    %v1311 = vmul.bf16 %v1309, 1069105081
    %v1312 = vpow.bf16.pop %v1311
    %v1313 = vadd.bf16 %v1312, 1065369472
    %v1314 = vrcp.bf16.pop %v1313
    %v1315 = vmul.bf16 1065369472, %v1314
    %v1316 = vunpack.c.l.bf16 %v1315
    %v1317 = vmul.f32 %v1306, %v1189
    %v1318 = vmul.f32 %v1298, %v1308
    %v1319 = vadd.f32 %v1317, %v1318
    %v1320 = vtanh.pop %v1319
    %v1321 = vmul.f32 %v1316, %v1320
    %vm1322 = vcmp.gt.s32.totalorder %v24, 3
    %v1323 = vsel %vm1322, 1, 0
    %1324 = vset.pattern.permute.xlu0 0
    %1325 = vperm.xlu0 %1324, %v1323
    %v1326 = vpop.permute.xlu0 %1325
    %vm1327 = vcmp.eq.s32.totalorder %v1326, 1
    %v1328 = vsel %vm1327, %v1321, %v1188
    %v1329 = vsel %vm1327, %v1319, %v1189
    %v1330 = vsel %vm1327, %v1321, 0.0
    %s1331 = scalar_lea.vmem [#allocation2], 24
    %1332 = vst [vmem:[%s1331] sm:$0xff] %v1330
    %s1333 = smul.u32 4, 4
    %s1334 = smul.addr %s1333, 8
    %s1335 = scalar_lea.vmem [#allocation3], %s1334
    %v1336 = vld [vmem:[%s1335] sm:$0xff]
    %v1337 = vld [vmem:[%s1335 + $0x8] sm:$0xff]
    %v1338 = vld [vmem:[%s1335 + $0x10] sm:$0xff]
    %v1339 = vld [vmem:[%s1335 + $0x18] sm:$0xff]
    %v1340 = vpack.c.bf16 %v1328, %v1328
    %1341 = vmatprep.subr.bf16.mxu0 %v747
    %1342 = vmatpush1.bf16.msra.mxu0 %v746
    %1343 = vmatprep.subr.bf16.mxu0 %v743
    %1344 = vmatpush1.bf16.msra.mxu0 %v742
    %1345 = vmatprep.subr.bf16.mxu0 %v739
    %1346 = vmatpush1.bf16.msra.mxu0 %v738
    %1347 = vmatprep.subr.bf16.mxu0 %v735
    %1348 = vmatpush1.bf16.msra.mxu0 %v734
    %1349 = vmatprep.subr.bf16.mxu0 %v731
    %1350 = vmatpush1.bf16.msra.mxu0 %v730
    %1351 = vmatprep.subr.bf16.mxu0 %v727
    %1352 = vmatpush1.bf16.msra.mxu0 %v726
    %1353 = vmatprep.subr.bf16.mxu0 %v723
    %1354 = vmatpush1.bf16.msra.mxu0 %v722
    %1355 = vmatprep.subr.bf16.mxu0 %v719
    %1356 = vmatpush1.bf16.msra.mxu0 %v718
    %1357 = vmatprep.subr.bf16.mxu0 0
    %1358 = vmatpush2.bf16.msra.mxu0 0
    %1359 = vmatprep.subr.bf16.mxu0 0
    %1360 = vmatpush2.bf16.msra.mxu0 0
    %1361 = vmatprep.subr.bf16.mxu0 0
    %1362 = vmatpush2.bf16.msra.mxu0 0
    %1363 = vmatprep.subr.bf16.mxu0 0
    %1364 = vmatpush2.bf16.msra.mxu0 0
    %1365 = vmatprep.subr.bf16.mxu0 0
    %1366 = vmatpush2.bf16.msra.mxu0 0
    %1367 = vmatprep.subr.bf16.mxu0 0
    %1368 = vmatpush2.bf16.msra.mxu0 0
    %1369 = vmatprep.subr.bf16.mxu0 0
    %1370 = vmatpush2.bf16.msra.mxu0 0
    %1371 = vmatprep.subr.bf16.mxu0 0
    %1372 = vmatpush2.bf16.msra.mxu0 0
    %1373 = vmatprep.mubr.bf16.mxu0 0
    %1374 = vmatmul.mubr.bf16.gmra.mxu0 %v1340
    %v1375 = vpop.f32.mrf.mxu0
    %v1376 = vadd.f32 0.0, %v1375
    %v1377 = vpop.f32.mrf.mxu0
    %v1378 = vadd.f32 0.0, %v1377
    %v1379 = vpop.f32.mrf.mxu0
    %v1380 = vpop.f32.mrf.mxu0
    %1381 = vdwg.mxu0
    %1382 = vmatprep.subr.bf16.mxu0 %v749
    %1383 = vmatpush1.bf16.msra.mxu0 %v748
    %1384 = vmatprep.subr.bf16.mxu0 %v745
    %1385 = vmatpush1.bf16.msra.mxu0 %v744
    %1386 = vmatprep.subr.bf16.mxu0 %v741
    %1387 = vmatpush1.bf16.msra.mxu0 %v740
    %1388 = vmatprep.subr.bf16.mxu0 %v737
    %1389 = vmatpush1.bf16.msra.mxu0 %v736
    %1390 = vmatprep.subr.bf16.mxu0 %v733
    %1391 = vmatpush1.bf16.msra.mxu0 %v732
    %1392 = vmatprep.subr.bf16.mxu0 %v729
    %1393 = vmatpush1.bf16.msra.mxu0 %v728
    %1394 = vmatprep.subr.bf16.mxu0 %v725
    %1395 = vmatpush1.bf16.msra.mxu0 %v724
    %1396 = vmatprep.subr.bf16.mxu0 %v721
    %1397 = vmatpush1.bf16.msra.mxu0 %v720
    %1398 = vmatprep.subr.bf16.mxu0 0
    %1399 = vmatpush2.bf16.msra.mxu0 0
    %1400 = vmatprep.subr.bf16.mxu0 0
    %1401 = vmatpush2.bf16.msra.mxu0 0
    %1402 = vmatprep.subr.bf16.mxu0 0
    %1403 = vmatpush2.bf16.msra.mxu0 0
    %1404 = vmatprep.subr.bf16.mxu0 0
    %1405 = vmatpush2.bf16.msra.mxu0 0
    %1406 = vmatprep.subr.bf16.mxu0 0
    %1407 = vmatpush2.bf16.msra.mxu0 0
    %1408 = vmatprep.subr.bf16.mxu0 0
    %1409 = vmatpush2.bf16.msra.mxu0 0
    %1410 = vmatprep.subr.bf16.mxu0 0
    %1411 = vmatpush2.bf16.msra.mxu0 0
    %1412 = vmatprep.subr.bf16.mxu0 0
    %1413 = vmatpush2.bf16.msra.mxu0 0
    %1414 = vmatprep.mubr.bf16.mxu0 0
    %1415 = vmatmul.mubr.bf16.gmra.mxu0 %v1340
    %v1416 = vpop.f32.mrf.mxu0
    %v1417 = vadd.f32 0.0, %v1416
    %v1418 = vpop.f32.mrf.mxu0
    %v1419 = vadd.f32 0.0, %v1418
    %v1420 = vpop.f32.mrf.mxu0
    %v1421 = vpop.f32.mrf.mxu0
    %1422 = vdwg.mxu0
    %v1423 = vadd.f32 %v1336, %v1376
    %v1424 = vadd.f32 %v1337, %v1378
    %v1425 = vadd.f32 %v1338, %v1417
    %v1426 = vadd.f32 %v1339, %v1419
    %v1427 = vpack.c.bf16 %v1423, %v1423
    %v1428 = vpack.c.bf16 %v1424, %v1424
    %v1429 = vpack.c.bf16 %v1425, %v1425
    %v1430 = vpack.c.bf16 %v1426, %v1426
    %v1431 = vxor.u32 %v1427, 2147516416
    %v1433 = vmul.bf16 %v1431, 1069105081
    %v1434 = vpow.bf16.pop %v1433
    %v1435 = vadd.bf16 %v1434, 1065369472
    %v1436 = vrcp.bf16.pop %v1435
    %v1437 = vmul.bf16 1065369472, %v1436
    %v1438 = vunpack.c.l.bf16 %v1437
    %v1439 = vxor.u32 %v1428, 2147516416
    %v1441 = vmul.bf16 %v1439, 1069105081
    %v1442 = vpow.bf16.pop %v1441
    %v1443 = vadd.bf16 %v1442, 1065369472
    %v1444 = vrcp.bf16.pop %v1443
    %v1445 = vmul.bf16 1065369472, %v1444
    %v1446 = vunpack.c.l.bf16 %v1445
    %v1447 = vtanh.bf16.pop %v1429
    %v1448 = vunpack.c.l.bf16 %v1447
    %v1449 = vxor.u32 %v1430, 2147516416
    %v1451 = vmul.bf16 %v1449, 1069105081
    %v1452 = vpow.bf16.pop %v1451
    %v1453 = vadd.bf16 %v1452, 1065369472
    %v1454 = vrcp.bf16.pop %v1453
    %v1455 = vmul.bf16 1065369472, %v1454
    %v1456 = vunpack.c.l.bf16 %v1455
    %v1457 = vmul.f32 %v1446, %v1329
    %v1458 = vmul.f32 %v1438, %v1448
    %v1459 = vadd.f32 %v1457, %v1458
    %v1460 = vtanh.pop %v1459
    %v1461 = vmul.f32 %v1456, %v1460
    %vm1462 = vcmp.gt.s32.totalorder %v24, 4
    %v1463 = vsel %vm1462, 1, 0
    %1464 = vset.pattern.permute.xlu0 0
    %1465 = vperm.xlu0 %1464, %v1463
    %v1466 = vpop.permute.xlu0 %1465
    %vm1467 = vcmp.eq.s32.totalorder %v1466, 1
    %v1468 = vsel %vm1467, %v1461, %v1328
    %v1469 = vsel %vm1467, %v1459, %v1329
    %v1470 = vsel %vm1467, %v1461, 0.0
    %s1471 = scalar_lea.vmem [#allocation2], 32
    %1472 = vst [vmem:[%s1471] sm:$0xff] %v1470
    %s1473 = smul.u32 5, 4
    %s1474 = smul.addr %s1473, 8
    %s1475 = scalar_lea.vmem [#allocation3], %s1474
    %v1476 = vld [vmem:[%s1475] sm:$0xff]
    %v1477 = vld [vmem:[%s1475 + $0x8] sm:$0xff]
    %v1478 = vld [vmem:[%s1475 + $0x10] sm:$0xff]
    %v1479 = vld [vmem:[%s1475 + $0x18] sm:$0xff]
    %v1480 = vpack.c.bf16 %v1468, %v1468
    %1481 = vmatprep.subr.bf16.mxu0 %v747
    %1482 = vmatpush1.bf16.msra.mxu0 %v746
    %1483 = vmatprep.subr.bf16.mxu0 %v743
    %1484 = vmatpush1.bf16.msra.mxu0 %v742
    %1485 = vmatprep.subr.bf16.mxu0 %v739
    %1486 = vmatpush1.bf16.msra.mxu0 %v738
    %1487 = vmatprep.subr.bf16.mxu0 %v735
    %1488 = vmatpush1.bf16.msra.mxu0 %v734
    %1489 = vmatprep.subr.bf16.mxu0 %v731
    %1490 = vmatpush1.bf16.msra.mxu0 %v730
    %1491 = vmatprep.subr.bf16.mxu0 %v727
    %1492 = vmatpush1.bf16.msra.mxu0 %v726
    %1493 = vmatprep.subr.bf16.mxu0 %v723
    %1494 = vmatpush1.bf16.msra.mxu0 %v722
    %1495 = vmatprep.subr.bf16.mxu0 %v719
    %1496 = vmatpush1.bf16.msra.mxu0 %v718
    %1497 = vmatprep.subr.bf16.mxu0 0
    %1498 = vmatpush2.bf16.msra.mxu0 0
    %1499 = vmatprep.subr.bf16.mxu0 0
    %1500 = vmatpush2.bf16.msra.mxu0 0
    %1501 = vmatprep.subr.bf16.mxu0 0
    %1502 = vmatpush2.bf16.msra.mxu0 0
    %1503 = vmatprep.subr.bf16.mxu0 0
    %1504 = vmatpush2.bf16.msra.mxu0 0
    %1505 = vmatprep.subr.bf16.mxu0 0
    %1506 = vmatpush2.bf16.msra.mxu0 0
    %1507 = vmatprep.subr.bf16.mxu0 0
    %1508 = vmatpush2.bf16.msra.mxu0 0
    %1509 = vmatprep.subr.bf16.mxu0 0
    %1510 = vmatpush2.bf16.msra.mxu0 0
    %1511 = vmatprep.subr.bf16.mxu0 0
    %1512 = vmatpush2.bf16.msra.mxu0 0
    %1513 = vmatprep.mubr.bf16.mxu0 0
    %1514 = vmatmul.mubr.bf16.gmra.mxu0 %v1480
    %v1515 = vpop.f32.mrf.mxu0
    %v1516 = vadd.f32 0.0, %v1515
    %v1517 = vpop.f32.mrf.mxu0
    %v1518 = vadd.f32 0.0, %v1517
    %v1519 = vpop.f32.mrf.mxu0
    %v1520 = vpop.f32.mrf.mxu0
    %1521 = vdwg.mxu0
    %1522 = vmatprep.subr.bf16.mxu0 %v749
    %1523 = vmatpush1.bf16.msra.mxu0 %v748
    %1524 = vmatprep.subr.bf16.mxu0 %v745
    %1525 = vmatpush1.bf16.msra.mxu0 %v744
    %1526 = vmatprep.subr.bf16.mxu0 %v741
    %1527 = vmatpush1.bf16.msra.mxu0 %v740
    %1528 = vmatprep.subr.bf16.mxu0 %v737
    %1529 = vmatpush1.bf16.msra.mxu0 %v736
    %1530 = vmatprep.subr.bf16.mxu0 %v733
    %1531 = vmatpush1.bf16.msra.mxu0 %v732
    %1532 = vmatprep.subr.bf16.mxu0 %v729
    %1533 = vmatpush1.bf16.msra.mxu0 %v728
    %1534 = vmatprep.subr.bf16.mxu0 %v725
    %1535 = vmatpush1.bf16.msra.mxu0 %v724
    %1536 = vmatprep.subr.bf16.mxu0 %v721
    %1537 = vmatpush1.bf16.msra.mxu0 %v720
    %1538 = vmatprep.subr.bf16.mxu0 0
    %1539 = vmatpush2.bf16.msra.mxu0 0
    %1540 = vmatprep.subr.bf16.mxu0 0
    %1541 = vmatpush2.bf16.msra.mxu0 0
    %1542 = vmatprep.subr.bf16.mxu0 0
    %1543 = vmatpush2.bf16.msra.mxu0 0
    %1544 = vmatprep.subr.bf16.mxu0 0
    %1545 = vmatpush2.bf16.msra.mxu0 0
    %1546 = vmatprep.subr.bf16.mxu0 0
    %1547 = vmatpush2.bf16.msra.mxu0 0
    %1548 = vmatprep.subr.bf16.mxu0 0
    %1549 = vmatpush2.bf16.msra.mxu0 0
    %1550 = vmatprep.subr.bf16.mxu0 0
    %1551 = vmatpush2.bf16.msra.mxu0 0
    %1552 = vmatprep.subr.bf16.mxu0 0
    %1553 = vmatpush2.bf16.msra.mxu0 0
    %1554 = vmatprep.mubr.bf16.mxu0 0
    %1555 = vmatmul.mubr.bf16.gmra.mxu0 %v1480
    %v1556 = vpop.f32.mrf.mxu0
    %v1557 = vadd.f32 0.0, %v1556
    %v1558 = vpop.f32.mrf.mxu0
    %v1559 = vadd.f32 0.0, %v1558
    %v1560 = vpop.f32.mrf.mxu0
    %v1561 = vpop.f32.mrf.mxu0
    %1562 = vdwg.mxu0
    %v1563 = vadd.f32 %v1476, %v1516
    %v1564 = vadd.f32 %v1477, %v1518
    %v1565 = vadd.f32 %v1478, %v1557
    %v1566 = vadd.f32 %v1479, %v1559
    %v1567 = vpack.c.bf16 %v1563, %v1563
    %v1568 = vpack.c.bf16 %v1564, %v1564
    %v1569 = vpack.c.bf16 %v1565, %v1565
    %v1570 = vpack.c.bf16 %v1566, %v1566
    %v1571 = vxor.u32 %v1567, 2147516416
    %v1573 = vmul.bf16 %v1571, 1069105081
    %v1574 = vpow.bf16.pop %v1573
    %v1575 = vadd.bf16 %v1574, 1065369472
    %v1576 = vrcp.bf16.pop %v1575
    %v1577 = vmul.bf16 1065369472, %v1576
    %v1578 = vunpack.c.l.bf16 %v1577
    %v1579 = vxor.u32 %v1568, 2147516416
    %v1581 = vmul.bf16 %v1579, 1069105081
    %v1582 = vpow.bf16.pop %v1581
    %v1583 = vadd.bf16 %v1582, 1065369472
    %v1584 = vrcp.bf16.pop %v1583
    %v1585 = vmul.bf16 1065369472, %v1584
    %v1586 = vunpack.c.l.bf16 %v1585
    %v1587 = vtanh.bf16.pop %v1569
    %v1588 = vunpack.c.l.bf16 %v1587
    %v1589 = vxor.u32 %v1570, 2147516416
    %v1591 = vmul.bf16 %v1589, 1069105081
    %v1592 = vpow.bf16.pop %v1591
    %v1593 = vadd.bf16 %v1592, 1065369472
    %v1594 = vrcp.bf16.pop %v1593
    %v1595 = vmul.bf16 1065369472, %v1594
    %v1596 = vunpack.c.l.bf16 %v1595
    %v1597 = vmul.f32 %v1586, %v1469
    %v1598 = vmul.f32 %v1578, %v1588
    %v1599 = vadd.f32 %v1597, %v1598
    %v1600 = vtanh.pop %v1599
    %v1601 = vmul.f32 %v1596, %v1600
    %vm1602 = vcmp.gt.s32.totalorder %v24, 5
    %v1603 = vsel %vm1602, 1, 0
    %1604 = vset.pattern.permute.xlu0 0
    %1605 = vperm.xlu0 %1604, %v1603
    %v1606 = vpop.permute.xlu0 %1605
    %vm1607 = vcmp.eq.s32.totalorder %v1606, 1
    %v1608 = vsel %vm1607, %v1601, %v1468
    %v1609 = vsel %vm1607, %v1599, %v1469
    %v1610 = vsel %vm1607, %v1601, 0.0
    %s1611 = scalar_lea.vmem [#allocation2], 40
    %1612 = vst [vmem:[%s1611] sm:$0xff] %v1610
    %s1613 = smul.u32 6, 4
    %s1614 = smul.addr %s1613, 8
    %s1615 = scalar_lea.vmem [#allocation3], %s1614
    %v1616 = vld [vmem:[%s1615] sm:$0xff]
    %v1617 = vld [vmem:[%s1615 + $0x8] sm:$0xff]
    %v1618 = vld [vmem:[%s1615 + $0x10] sm:$0xff]
    %v1619 = vld [vmem:[%s1615 + $0x18] sm:$0xff]
    %v1620 = vpack.c.bf16 %v1608, %v1608
    %1621 = vmatprep.subr.bf16.mxu0 %v747
    %1622 = vmatpush1.bf16.msra.mxu0 %v746
    %1623 = vmatprep.subr.bf16.mxu0 %v743
    %1624 = vmatpush1.bf16.msra.mxu0 %v742
    %1625 = vmatprep.subr.bf16.mxu0 %v739
    %1626 = vmatpush1.bf16.msra.mxu0 %v738
    %1627 = vmatprep.subr.bf16.mxu0 %v735
    %1628 = vmatpush1.bf16.msra.mxu0 %v734
    %1629 = vmatprep.subr.bf16.mxu0 %v731
    %1630 = vmatpush1.bf16.msra.mxu0 %v730
    %1631 = vmatprep.subr.bf16.mxu0 %v727
    %1632 = vmatpush1.bf16.msra.mxu0 %v726
    %1633 = vmatprep.subr.bf16.mxu0 %v723
    %1634 = vmatpush1.bf16.msra.mxu0 %v722
    %1635 = vmatprep.subr.bf16.mxu0 %v719
    %1636 = vmatpush1.bf16.msra.mxu0 %v718
    %1637 = vmatprep.subr.bf16.mxu0 0
    %1638 = vmatpush2.bf16.msra.mxu0 0
    %1639 = vmatprep.subr.bf16.mxu0 0
    %1640 = vmatpush2.bf16.msra.mxu0 0
    %1641 = vmatprep.subr.bf16.mxu0 0
    %1642 = vmatpush2.bf16.msra.mxu0 0
    %1643 = vmatprep.subr.bf16.mxu0 0
    %1644 = vmatpush2.bf16.msra.mxu0 0
    %1645 = vmatprep.subr.bf16.mxu0 0
    %1646 = vmatpush2.bf16.msra.mxu0 0
    %1647 = vmatprep.subr.bf16.mxu0 0
    %1648 = vmatpush2.bf16.msra.mxu0 0
    %1649 = vmatprep.subr.bf16.mxu0 0
    %1650 = vmatpush2.bf16.msra.mxu0 0
    %1651 = vmatprep.subr.bf16.mxu0 0
    %1652 = vmatpush2.bf16.msra.mxu0 0
    %1653 = vmatprep.mubr.bf16.mxu0 0
    %1654 = vmatmul.mubr.bf16.gmra.mxu0 %v1620
    %v1655 = vpop.f32.mrf.mxu0
    %v1656 = vadd.f32 0.0, %v1655
    %v1657 = vpop.f32.mrf.mxu0
    %v1658 = vadd.f32 0.0, %v1657
    %v1659 = vpop.f32.mrf.mxu0
    %v1660 = vpop.f32.mrf.mxu0
    %1661 = vdwg.mxu0
    %1662 = vmatprep.subr.bf16.mxu0 %v749
    %1663 = vmatpush1.bf16.msra.mxu0 %v748
    %1664 = vmatprep.subr.bf16.mxu0 %v745
    %1665 = vmatpush1.bf16.msra.mxu0 %v744
    %1666 = vmatprep.subr.bf16.mxu0 %v741
    %1667 = vmatpush1.bf16.msra.mxu0 %v740
    %1668 = vmatprep.subr.bf16.mxu0 %v737
    %1669 = vmatpush1.bf16.msra.mxu0 %v736
    %1670 = vmatprep.subr.bf16.mxu0 %v733
    %1671 = vmatpush1.bf16.msra.mxu0 %v732
    %1672 = vmatprep.subr.bf16.mxu0 %v729
    %1673 = vmatpush1.bf16.msra.mxu0 %v728
    %1674 = vmatprep.subr.bf16.mxu0 %v725
    %1675 = vmatpush1.bf16.msra.mxu0 %v724
    %1676 = vmatprep.subr.bf16.mxu0 %v721
    %1677 = vmatpush1.bf16.msra.mxu0 %v720
    %1678 = vmatprep.subr.bf16.mxu0 0
    %1679 = vmatpush2.bf16.msra.mxu0 0
    %1680 = vmatprep.subr.bf16.mxu0 0
    %1681 = vmatpush2.bf16.msra.mxu0 0
    %1682 = vmatprep.subr.bf16.mxu0 0
    %1683 = vmatpush2.bf16.msra.mxu0 0
    %1684 = vmatprep.subr.bf16.mxu0 0
    %1685 = vmatpush2.bf16.msra.mxu0 0
    %1686 = vmatprep.subr.bf16.mxu0 0
    %1687 = vmatpush2.bf16.msra.mxu0 0
    %1688 = vmatprep.subr.bf16.mxu0 0
    %1689 = vmatpush2.bf16.msra.mxu0 0
    %1690 = vmatprep.subr.bf16.mxu0 0
    %1691 = vmatpush2.bf16.msra.mxu0 0
    %1692 = vmatprep.subr.bf16.mxu0 0
    %1693 = vmatpush2.bf16.msra.mxu0 0
    %1694 = vmatprep.mubr.bf16.mxu0 0
    %1695 = vmatmul.mubr.bf16.gmra.mxu0 %v1620
    %v1696 = vpop.f32.mrf.mxu0
    %v1697 = vadd.f32 0.0, %v1696
    %v1698 = vpop.f32.mrf.mxu0
    %v1699 = vadd.f32 0.0, %v1698
    %v1700 = vpop.f32.mrf.mxu0
    %v1701 = vpop.f32.mrf.mxu0
    %1702 = vdwg.mxu0
    %v1703 = vadd.f32 %v1616, %v1656
    %v1704 = vadd.f32 %v1617, %v1658
    %v1705 = vadd.f32 %v1618, %v1697
    %v1706 = vadd.f32 %v1619, %v1699
    %v1707 = vpack.c.bf16 %v1703, %v1703
    %v1708 = vpack.c.bf16 %v1704, %v1704
    %v1709 = vpack.c.bf16 %v1705, %v1705
    %v1710 = vpack.c.bf16 %v1706, %v1706
    %v1711 = vxor.u32 %v1707, 2147516416
    %v1713 = vmul.bf16 %v1711, 1069105081
    %v1714 = vpow.bf16.pop %v1713
    %v1715 = vadd.bf16 %v1714, 1065369472
    %v1716 = vrcp.bf16.pop %v1715
    %v1717 = vmul.bf16 1065369472, %v1716
    %v1718 = vunpack.c.l.bf16 %v1717
    %v1719 = vxor.u32 %v1708, 2147516416
    %v1721 = vmul.bf16 %v1719, 1069105081
    %v1722 = vpow.bf16.pop %v1721
    %v1723 = vadd.bf16 %v1722, 1065369472
    %v1724 = vrcp.bf16.pop %v1723
    %v1725 = vmul.bf16 1065369472, %v1724
    %v1726 = vunpack.c.l.bf16 %v1725
    %v1727 = vtanh.bf16.pop %v1709
    %v1728 = vunpack.c.l.bf16 %v1727
    %v1729 = vxor.u32 %v1710, 2147516416
    %v1731 = vmul.bf16 %v1729, 1069105081
    %v1732 = vpow.bf16.pop %v1731
    %v1733 = vadd.bf16 %v1732, 1065369472
    %v1734 = vrcp.bf16.pop %v1733
    %v1735 = vmul.bf16 1065369472, %v1734
    %v1736 = vunpack.c.l.bf16 %v1735
    %v1737 = vmul.f32 %v1726, %v1609
    %v1738 = vmul.f32 %v1718, %v1728
    %v1739 = vadd.f32 %v1737, %v1738
    %v1740 = vtanh.pop %v1739
    %v1741 = vmul.f32 %v1736, %v1740
    %vm1742 = vcmp.gt.s32.totalorder %v24, 6
    %v1743 = vsel %vm1742, 1, 0
    %1744 = vset.pattern.permute.xlu0 0
    %1745 = vperm.xlu0 %1744, %v1743
    %v1746 = vpop.permute.xlu0 %1745
    %vm1747 = vcmp.eq.s32.totalorder %v1746, 1
    %v1748 = vsel %vm1747, %v1741, %v1608
    %v1749 = vsel %vm1747, %v1739, %v1609
    %v1750 = vsel %vm1747, %v1741, 0.0
    %s1751 = scalar_lea.vmem [#allocation2], 48
    %1752 = vst [vmem:[%s1751] sm:$0xff] %v1750
    %s1753 = smul.u32 7, 4
    %s1754 = smul.addr %s1753, 8
    %s1755 = scalar_lea.vmem [#allocation3], %s1754
    %v1756 = vld [vmem:[%s1755] sm:$0xff]
    %v1757 = vld [vmem:[%s1755 + $0x8] sm:$0xff]
    %v1758 = vld [vmem:[%s1755 + $0x10] sm:$0xff]
    %v1759 = vld [vmem:[%s1755 + $0x18] sm:$0xff]
    %v1760 = vpack.c.bf16 %v1748, %v1748
    %1761 = vmatprep.subr.bf16.mxu0 %v747
    %1762 = vmatpush1.bf16.msra.mxu0 %v746
    %1763 = vmatprep.subr.bf16.mxu0 %v743
    %1764 = vmatpush1.bf16.msra.mxu0 %v742
    %1765 = vmatprep.subr.bf16.mxu0 %v739
    %1766 = vmatpush1.bf16.msra.mxu0 %v738
    %1767 = vmatprep.subr.bf16.mxu0 %v735
    %1768 = vmatpush1.bf16.msra.mxu0 %v734
    %1769 = vmatprep.subr.bf16.mxu0 %v731
    %1770 = vmatpush1.bf16.msra.mxu0 %v730
    %1771 = vmatprep.subr.bf16.mxu0 %v727
    %1772 = vmatpush1.bf16.msra.mxu0 %v726
    %1773 = vmatprep.subr.bf16.mxu0 %v723
    %1774 = vmatpush1.bf16.msra.mxu0 %v722
    %1775 = vmatprep.subr.bf16.mxu0 %v719
    %1776 = vmatpush1.bf16.msra.mxu0 %v718
    %1777 = vmatprep.subr.bf16.mxu0 0
    %1778 = vmatpush2.bf16.msra.mxu0 0
    %1779 = vmatprep.subr.bf16.mxu0 0
    %1780 = vmatpush2.bf16.msra.mxu0 0
    %1781 = vmatprep.subr.bf16.mxu0 0
    %1782 = vmatpush2.bf16.msra.mxu0 0
    %1783 = vmatprep.subr.bf16.mxu0 0
    %1784 = vmatpush2.bf16.msra.mxu0 0
    %1785 = vmatprep.subr.bf16.mxu0 0
    %1786 = vmatpush2.bf16.msra.mxu0 0
    %1787 = vmatprep.subr.bf16.mxu0 0
    %1788 = vmatpush2.bf16.msra.mxu0 0
    %1789 = vmatprep.subr.bf16.mxu0 0
    %1790 = vmatpush2.bf16.msra.mxu0 0
    %1791 = vmatprep.subr.bf16.mxu0 0
    %1792 = vmatpush2.bf16.msra.mxu0 0
    %1793 = vmatprep.mubr.bf16.mxu0 0
    %1794 = vmatmul.mubr.bf16.gmra.mxu0 %v1760
    %v1795 = vpop.f32.mrf.mxu0
    %v1796 = vadd.f32 0.0, %v1795
    %v1797 = vpop.f32.mrf.mxu0
    %v1798 = vadd.f32 0.0, %v1797
    %v1799 = vpop.f32.mrf.mxu0
    %v1800 = vpop.f32.mrf.mxu0
    %1801 = vdwg.mxu0
    %1802 = vmatprep.subr.bf16.mxu0 %v749
    %1803 = vmatpush1.bf16.msra.mxu0 %v748
    %1804 = vmatprep.subr.bf16.mxu0 %v745
    %1805 = vmatpush1.bf16.msra.mxu0 %v744
    %1806 = vmatprep.subr.bf16.mxu0 %v741
    %1807 = vmatpush1.bf16.msra.mxu0 %v740
    %1808 = vmatprep.subr.bf16.mxu0 %v737
    %1809 = vmatpush1.bf16.msra.mxu0 %v736
    %1810 = vmatprep.subr.bf16.mxu0 %v733
    %1811 = vmatpush1.bf16.msra.mxu0 %v732
    %1812 = vmatprep.subr.bf16.mxu0 %v729
    %1813 = vmatpush1.bf16.msra.mxu0 %v728
    %1814 = vmatprep.subr.bf16.mxu0 %v725
    %1815 = vmatpush1.bf16.msra.mxu0 %v724
    %1816 = vmatprep.subr.bf16.mxu0 %v721
    %1817 = vmatpush1.bf16.msra.mxu0 %v720
    %1818 = vmatprep.subr.bf16.mxu0 0
    %1819 = vmatpush2.bf16.msra.mxu0 0
    %1820 = vmatprep.subr.bf16.mxu0 0
    %1821 = vmatpush2.bf16.msra.mxu0 0
    %1822 = vmatprep.subr.bf16.mxu0 0
    %1823 = vmatpush2.bf16.msra.mxu0 0
    %1824 = vmatprep.subr.bf16.mxu0 0
    %1825 = vmatpush2.bf16.msra.mxu0 0
    %1826 = vmatprep.subr.bf16.mxu0 0
    %1827 = vmatpush2.bf16.msra.mxu0 0
    %1828 = vmatprep.subr.bf16.mxu0 0
    %1829 = vmatpush2.bf16.msra.mxu0 0
    %1830 = vmatprep.subr.bf16.mxu0 0
    %1831 = vmatpush2.bf16.msra.mxu0 0
    %1832 = vmatprep.subr.bf16.mxu0 0
    %1833 = vmatpush2.bf16.msra.mxu0 0
    %1834 = vmatprep.mubr.bf16.mxu0 0
    %1835 = vmatmul.mubr.bf16.gmra.mxu0 %v1760
    %v1836 = vpop.f32.mrf.mxu0
    %v1837 = vadd.f32 0.0, %v1836
    %v1838 = vpop.f32.mrf.mxu0
    %v1839 = vadd.f32 0.0, %v1838
    %v1840 = vpop.f32.mrf.mxu0
    %v1841 = vpop.f32.mrf.mxu0
    %1842 = vdwg.mxu0
    %v1843 = vadd.f32 %v1756, %v1796
    %v1844 = vadd.f32 %v1757, %v1798
    %v1845 = vadd.f32 %v1758, %v1837
    %v1846 = vadd.f32 %v1759, %v1839
    %v1847 = vpack.c.bf16 %v1843, %v1843
    %v1848 = vpack.c.bf16 %v1844, %v1844
    %v1849 = vpack.c.bf16 %v1845, %v1845
    %v1850 = vpack.c.bf16 %v1846, %v1846
    %v1851 = vxor.u32 %v1847, 2147516416
    %v1853 = vmul.bf16 %v1851, 1069105081
    %v1854 = vpow.bf16.pop %v1853
    %v1855 = vadd.bf16 %v1854, 1065369472
    %v1856 = vrcp.bf16.pop %v1855
    %v1857 = vmul.bf16 1065369472, %v1856
    %v1858 = vunpack.c.l.bf16 %v1857
    %v1859 = vxor.u32 %v1848, 2147516416
    %v1861 = vmul.bf16 %v1859, 1069105081
    %v1862 = vpow.bf16.pop %v1861
    %v1863 = vadd.bf16 %v1862, 1065369472
    %v1864 = vrcp.bf16.pop %v1863
    %v1865 = vmul.bf16 1065369472, %v1864
    %v1866 = vunpack.c.l.bf16 %v1865
    %v1867 = vtanh.bf16.pop %v1849
    %v1868 = vunpack.c.l.bf16 %v1867
    %v1869 = vxor.u32 %v1850, 2147516416
    %v1871 = vmul.bf16 %v1869, 1069105081
    %v1872 = vpow.bf16.pop %v1871
    %v1873 = vadd.bf16 %v1872, 1065369472
    %v1874 = vrcp.bf16.pop %v1873
    %v1875 = vmul.bf16 1065369472, %v1874
    %v1876 = vunpack.c.l.bf16 %v1875
    %v1877 = vmul.f32 %v1866, %v1749
    %v1878 = vmul.f32 %v1858, %v1868
    %v1879 = vadd.f32 %v1877, %v1878
    %v1880 = vtanh.pop %v1879
    %v1881 = vmul.f32 %v1876, %v1880
    %vm1882 = vcmp.gt.s32.totalorder %v24, 7
    %v1883 = vsel %vm1882, 1, 0
    %1884 = vset.pattern.permute.xlu0 0
    %1885 = vperm.xlu0 %1884, %v1883
    %v1886 = vpop.permute.xlu0 %1885
    %vm1887 = vcmp.eq.s32.totalorder %v1886, 1
    %v1888 = vsel %vm1887, %v1881, %v1748
    %v1889 = vsel %vm1887, %v1879, %v1749
    %v1890 = vsel %vm1887, %v1881, 0.0
    %s1891 = scalar_lea.vmem [#allocation2], 56
    %1892 = vst [vmem:[%s1891] sm:$0xff] %v1890
    %s1893 = smul.u32 8, 4
    %s1894 = smul.addr %s1893, 8
    %s1895 = scalar_lea.vmem [#allocation3], %s1894
    %v1896 = vld [vmem:[%s1895] sm:$0xff]
    %v1897 = vld [vmem:[%s1895 + $0x8] sm:$0xff]
    %v1898 = vld [vmem:[%s1895 + $0x10] sm:$0xff]
    %v1899 = vld [vmem:[%s1895 + $0x18] sm:$0xff]
    %v1900 = vpack.c.bf16 %v1888, %v1888
    %1901 = vmatprep.subr.bf16.mxu0 %v747
    %1902 = vmatpush1.bf16.msra.mxu0 %v746
    %1903 = vmatprep.subr.bf16.mxu0 %v743
    %1904 = vmatpush1.bf16.msra.mxu0 %v742
    %1905 = vmatprep.subr.bf16.mxu0 %v739
    %1906 = vmatpush1.bf16.msra.mxu0 %v738
    %1907 = vmatprep.subr.bf16.mxu0 %v735
    %1908 = vmatpush1.bf16.msra.mxu0 %v734
    %1909 = vmatprep.subr.bf16.mxu0 %v731
    %1910 = vmatpush1.bf16.msra.mxu0 %v730
    %1911 = vmatprep.subr.bf16.mxu0 %v727
    %1912 = vmatpush1.bf16.msra.mxu0 %v726
    %1913 = vmatprep.subr.bf16.mxu0 %v723
    %1914 = vmatpush1.bf16.msra.mxu0 %v722
    %1915 = vmatprep.subr.bf16.mxu0 %v719
    %1916 = vmatpush1.bf16.msra.mxu0 %v718
    %1917 = vmatprep.subr.bf16.mxu0 0
    %1918 = vmatpush2.bf16.msra.mxu0 0
    %1919 = vmatprep.subr.bf16.mxu0 0
    %1920 = vmatpush2.bf16.msra.mxu0 0
    %1921 = vmatprep.subr.bf16.mxu0 0
    %1922 = vmatpush2.bf16.msra.mxu0 0
    %1923 = vmatprep.subr.bf16.mxu0 0
    %1924 = vmatpush2.bf16.msra.mxu0 0
    %1925 = vmatprep.subr.bf16.mxu0 0
    %1926 = vmatpush2.bf16.msra.mxu0 0
    %1927 = vmatprep.subr.bf16.mxu0 0
    %1928 = vmatpush2.bf16.msra.mxu0 0
    %1929 = vmatprep.subr.bf16.mxu0 0
    %1930 = vmatpush2.bf16.msra.mxu0 0
    %1931 = vmatprep.subr.bf16.mxu0 0
    %1932 = vmatpush2.bf16.msra.mxu0 0
    %1933 = vmatprep.mubr.bf16.mxu0 0
    %1934 = vmatmul.mubr.bf16.gmra.mxu0 %v1900
    %v1935 = vpop.f32.mrf.mxu0
    %v1936 = vadd.f32 0.0, %v1935
    %v1937 = vpop.f32.mrf.mxu0
    %v1938 = vadd.f32 0.0, %v1937
    %v1939 = vpop.f32.mrf.mxu0
    %v1940 = vpop.f32.mrf.mxu0
    %1941 = vdwg.mxu0
    %1942 = vmatprep.subr.bf16.mxu0 %v749
    %1943 = vmatpush1.bf16.msra.mxu0 %v748
    %1944 = vmatprep.subr.bf16.mxu0 %v745
    %1945 = vmatpush1.bf16.msra.mxu0 %v744
    %1946 = vmatprep.subr.bf16.mxu0 %v741
    %1947 = vmatpush1.bf16.msra.mxu0 %v740
    %1948 = vmatprep.subr.bf16.mxu0 %v737
    %1949 = vmatpush1.bf16.msra.mxu0 %v736
    %1950 = vmatprep.subr.bf16.mxu0 %v733
    %1951 = vmatpush1.bf16.msra.mxu0 %v732
    %1952 = vmatprep.subr.bf16.mxu0 %v729
    %1953 = vmatpush1.bf16.msra.mxu0 %v728
    %1954 = vmatprep.subr.bf16.mxu0 %v725
    %1955 = vmatpush1.bf16.msra.mxu0 %v724
    %1956 = vmatprep.subr.bf16.mxu0 %v721
    %1957 = vmatpush1.bf16.msra.mxu0 %v720
    %1958 = vmatprep.subr.bf16.mxu0 0
    %1959 = vmatpush2.bf16.msra.mxu0 0
    %1960 = vmatprep.subr.bf16.mxu0 0
    %1961 = vmatpush2.bf16.msra.mxu0 0
    %1962 = vmatprep.subr.bf16.mxu0 0
    %1963 = vmatpush2.bf16.msra.mxu0 0
    %1964 = vmatprep.subr.bf16.mxu0 0
    %1965 = vmatpush2.bf16.msra.mxu0 0
    %1966 = vmatprep.subr.bf16.mxu0 0
    %1967 = vmatpush2.bf16.msra.mxu0 0
    %1968 = vmatprep.subr.bf16.mxu0 0
    %1969 = vmatpush2.bf16.msra.mxu0 0
    %1970 = vmatprep.subr.bf16.mxu0 0
    %1971 = vmatpush2.bf16.msra.mxu0 0
    %1972 = vmatprep.subr.bf16.mxu0 0
    %1973 = vmatpush2.bf16.msra.mxu0 0
    %1974 = vmatprep.mubr.bf16.mxu0 0
    %1975 = vmatmul.mubr.bf16.gmra.mxu0 %v1900
    %v1976 = vpop.f32.mrf.mxu0
    %v1977 = vadd.f32 0.0, %v1976
    %v1978 = vpop.f32.mrf.mxu0
    %v1979 = vadd.f32 0.0, %v1978
    %v1980 = vpop.f32.mrf.mxu0
    %v1981 = vpop.f32.mrf.mxu0
    %1982 = vdwg.mxu0
    %v1983 = vadd.f32 %v1896, %v1936
    %v1984 = vadd.f32 %v1897, %v1938
    %v1985 = vadd.f32 %v1898, %v1977
    %v1986 = vadd.f32 %v1899, %v1979
    %v1987 = vpack.c.bf16 %v1983, %v1983
    %v1988 = vpack.c.bf16 %v1984, %v1984
    %v1989 = vpack.c.bf16 %v1985, %v1985
    %v1990 = vpack.c.bf16 %v1986, %v1986
    %v1991 = vxor.u32 %v1987, 2147516416
    %v1993 = vmul.bf16 %v1991, 1069105081
    %v1994 = vpow.bf16.pop %v1993
    %v1995 = vadd.bf16 %v1994, 1065369472
    %v1996 = vrcp.bf16.pop %v1995
    %v1997 = vmul.bf16 1065369472, %v1996
    %v1998 = vunpack.c.l.bf16 %v1997
    %v1999 = vxor.u32 %v1988, 2147516416
    %v2001 = vmul.bf16 %v1999, 1069105081
    %v2002 = vpow.bf16.pop %v2001
    %v2003 = vadd.bf16 %v2002, 1065369472
    %v2004 = vrcp.bf16.pop %v2003
    %v2005 = vmul.bf16 1065369472, %v2004
    %v2006 = vunpack.c.l.bf16 %v2005
    %v2007 = vtanh.bf16.pop %v1989
    %v2008 = vunpack.c.l.bf16 %v2007
    %v2009 = vxor.u32 %v1990, 2147516416
    %v2011 = vmul.bf16 %v2009, 1069105081
    %v2012 = vpow.bf16.pop %v2011
    %v2013 = vadd.bf16 %v2012, 1065369472
    %v2014 = vrcp.bf16.pop %v2013
    %v2015 = vmul.bf16 1065369472, %v2014
    %v2016 = vunpack.c.l.bf16 %v2015
    %v2017 = vmul.f32 %v2006, %v1889
    %v2018 = vmul.f32 %v1998, %v2008
    %v2019 = vadd.f32 %v2017, %v2018
    %v2020 = vtanh.pop %v2019
    %v2021 = vmul.f32 %v2016, %v2020
    %vm2022 = vcmp.gt.s32.totalorder %v24, 8
    %v2023 = vsel %vm2022, 1, 0
    %2024 = vset.pattern.permute.xlu0 0
    %2025 = vperm.xlu0 %2024, %v2023
    %v2026 = vpop.permute.xlu0 %2025
    %vm2027 = vcmp.eq.s32.totalorder %v2026, 1
    %v2028 = vsel %vm2027, %v2021, %v1888
    %v2029 = vsel %vm2027, %v2019, %v1889
    %v2030 = vsel %vm2027, %v2021, 0.0
    %s2031 = scalar_lea.vmem [#allocation2], 64
    %2032 = vst [vmem:[%s2031] sm:$0xff] %v2030
    %s2033 = smul.u32 9, 4
    %s2034 = smul.addr %s2033, 8
    %s2035 = scalar_lea.vmem [#allocation3], %s2034
    %v2036 = vld [vmem:[%s2035] sm:$0xff]
    %v2037 = vld [vmem:[%s2035 + $0x8] sm:$0xff]
    %v2038 = vld [vmem:[%s2035 + $0x10] sm:$0xff]
    %v2039 = vld [vmem:[%s2035 + $0x18] sm:$0xff]
    %v2040 = vpack.c.bf16 %v2028, %v2028
    %2041 = vmatprep.subr.bf16.mxu0 %v747
    %2042 = vmatpush1.bf16.msra.mxu0 %v746
    %2043 = vmatprep.subr.bf16.mxu0 %v743
    %2044 = vmatpush1.bf16.msra.mxu0 %v742
    %2045 = vmatprep.subr.bf16.mxu0 %v739
    %2046 = vmatpush1.bf16.msra.mxu0 %v738
    %2047 = vmatprep.subr.bf16.mxu0 %v735
    %2048 = vmatpush1.bf16.msra.mxu0 %v734
    %2049 = vmatprep.subr.bf16.mxu0 %v731
    %2050 = vmatpush1.bf16.msra.mxu0 %v730
    %2051 = vmatprep.subr.bf16.mxu0 %v727
    %2052 = vmatpush1.bf16.msra.mxu0 %v726
    %2053 = vmatprep.subr.bf16.mxu0 %v723
    %2054 = vmatpush1.bf16.msra.mxu0 %v722
    %2055 = vmatprep.subr.bf16.mxu0 %v719
    %2056 = vmatpush1.bf16.msra.mxu0 %v718
    %2057 = vmatprep.subr.bf16.mxu0 0
    %2058 = vmatpush2.bf16.msra.mxu0 0
    %2059 = vmatprep.subr.bf16.mxu0 0
    %2060 = vmatpush2.bf16.msra.mxu0 0
    %2061 = vmatprep.subr.bf16.mxu0 0
    %2062 = vmatpush2.bf16.msra.mxu0 0
    %2063 = vmatprep.subr.bf16.mxu0 0
    %2064 = vmatpush2.bf16.msra.mxu0 0
    %2065 = vmatprep.subr.bf16.mxu0 0
    %2066 = vmatpush2.bf16.msra.mxu0 0
    %2067 = vmatprep.subr.bf16.mxu0 0
    %2068 = vmatpush2.bf16.msra.mxu0 0
    %2069 = vmatprep.subr.bf16.mxu0 0
    %2070 = vmatpush2.bf16.msra.mxu0 0
    %2071 = vmatprep.subr.bf16.mxu0 0
    %2072 = vmatpush2.bf16.msra.mxu0 0
    %2073 = vmatprep.mubr.bf16.mxu0 0
    %2074 = vmatmul.mubr.bf16.gmra.mxu0 %v2040
    %v2075 = vpop.f32.mrf.mxu0
    %v2076 = vadd.f32 0.0, %v2075
    %v2077 = vpop.f32.mrf.mxu0
    %v2078 = vadd.f32 0.0, %v2077
    %v2079 = vpop.f32.mrf.mxu0
    %v2080 = vpop.f32.mrf.mxu0
    %2081 = vdwg.mxu0
    %2082 = vmatprep.subr.bf16.mxu0 %v749
    %2083 = vmatpush1.bf16.msra.mxu0 %v748
    %2084 = vmatprep.subr.bf16.mxu0 %v745
    %2085 = vmatpush1.bf16.msra.mxu0 %v744
    %2086 = vmatprep.subr.bf16.mxu0 %v741
    %2087 = vmatpush1.bf16.msra.mxu0 %v740
    %2088 = vmatprep.subr.bf16.mxu0 %v737
    %2089 = vmatpush1.bf16.msra.mxu0 %v736
    %2090 = vmatprep.subr.bf16.mxu0 %v733
    %2091 = vmatpush1.bf16.msra.mxu0 %v732
    %2092 = vmatprep.subr.bf16.mxu0 %v729
    %2093 = vmatpush1.bf16.msra.mxu0 %v728
    %2094 = vmatprep.subr.bf16.mxu0 %v725
    %2095 = vmatpush1.bf16.msra.mxu0 %v724
    %2096 = vmatprep.subr.bf16.mxu0 %v721
    %2097 = vmatpush1.bf16.msra.mxu0 %v720
    %2098 = vmatprep.subr.bf16.mxu0 0
    %2099 = vmatpush2.bf16.msra.mxu0 0
    %2100 = vmatprep.subr.bf16.mxu0 0
    %2101 = vmatpush2.bf16.msra.mxu0 0
    %2102 = vmatprep.subr.bf16.mxu0 0
    %2103 = vmatpush2.bf16.msra.mxu0 0
    %2104 = vmatprep.subr.bf16.mxu0 0
    %2105 = vmatpush2.bf16.msra.mxu0 0
    %2106 = vmatprep.subr.bf16.mxu0 0
    %2107 = vmatpush2.bf16.msra.mxu0 0
    %2108 = vmatprep.subr.bf16.mxu0 0
    %2109 = vmatpush2.bf16.msra.mxu0 0
    %2110 = vmatprep.subr.bf16.mxu0 0
    %2111 = vmatpush2.bf16.msra.mxu0 0
    %2112 = vmatprep.subr.bf16.mxu0 0
    %2113 = vmatpush2.bf16.msra.mxu0 0
    %2114 = vmatprep.mubr.bf16.mxu0 0
    %2115 = vmatmul.mubr.bf16.gmra.mxu0 %v2040
    %v2116 = vpop.f32.mrf.mxu0
    %v2117 = vadd.f32 0.0, %v2116
    %v2118 = vpop.f32.mrf.mxu0
    %v2119 = vadd.f32 0.0, %v2118
    %v2120 = vpop.f32.mrf.mxu0
    %v2121 = vpop.f32.mrf.mxu0
    %2122 = vdwg.mxu0
    %v2123 = vadd.f32 %v2036, %v2076
    %v2124 = vadd.f32 %v2037, %v2078
    %v2125 = vadd.f32 %v2038, %v2117
    %v2126 = vadd.f32 %v2039, %v2119
    %v2127 = vpack.c.bf16 %v2123, %v2123
    %v2128 = vpack.c.bf16 %v2124, %v2124
    %v2129 = vpack.c.bf16 %v2125, %v2125
    %v2130 = vpack.c.bf16 %v2126, %v2126
    %v2131 = vxor.u32 %v2127, 2147516416
    %v2133 = vmul.bf16 %v2131, 1069105081
    %v2134 = vpow.bf16.pop %v2133
    %v2135 = vadd.bf16 %v2134, 1065369472
    %v2136 = vrcp.bf16.pop %v2135
    %v2137 = vmul.bf16 1065369472, %v2136
    %v2138 = vunpack.c.l.bf16 %v2137
    %v2139 = vxor.u32 %v2128, 2147516416
    %v2141 = vmul.bf16 %v2139, 1069105081
    %v2142 = vpow.bf16.pop %v2141
    %v2143 = vadd.bf16 %v2142, 1065369472
    %v2144 = vrcp.bf16.pop %v2143
    %v2145 = vmul.bf16 1065369472, %v2144
    %v2146 = vunpack.c.l.bf16 %v2145
    %v2147 = vtanh.bf16.pop %v2129
    %v2148 = vunpack.c.l.bf16 %v2147
    %v2149 = vxor.u32 %v2130, 2147516416
    %v2151 = vmul.bf16 %v2149, 1069105081
    %v2152 = vpow.bf16.pop %v2151
    %v2153 = vadd.bf16 %v2152, 1065369472
    %v2154 = vrcp.bf16.pop %v2153
    %v2155 = vmul.bf16 1065369472, %v2154
    %v2156 = vunpack.c.l.bf16 %v2155
    %v2157 = vmul.f32 %v2146, %v2029
    %v2158 = vmul.f32 %v2138, %v2148
    %v2159 = vadd.f32 %v2157, %v2158
    %v2160 = vtanh.pop %v2159
    %v2161 = vmul.f32 %v2156, %v2160
    %vm2162 = vcmp.gt.s32.totalorder %v24, 9
    %v2163 = vsel %vm2162, 1, 0
    %2164 = vset.pattern.permute.xlu0 0
    %2165 = vperm.xlu0 %2164, %v2163
    %v2166 = vpop.permute.xlu0 %2165
    %vm2167 = vcmp.eq.s32.totalorder %v2166, 1
    %v2168 = vsel %vm2167, %v2161, %v2028
    %v2169 = vsel %vm2167, %v2159, %v2029
    %v2170 = vsel %vm2167, %v2161, 0.0
    %s2171 = scalar_lea.vmem [#allocation2], 72
    %2172 = vst [vmem:[%s2171] sm:$0xff] %v2170
    %s2173 = smul.u32 10, 4
    %s2174 = smul.addr %s2173, 8
    %s2175 = scalar_lea.vmem [#allocation3], %s2174
    %v2176 = vld [vmem:[%s2175] sm:$0xff]
    %v2177 = vld [vmem:[%s2175 + $0x8] sm:$0xff]
    %v2178 = vld [vmem:[%s2175 + $0x10] sm:$0xff]
    %v2179 = vld [vmem:[%s2175 + $0x18] sm:$0xff]
    %v2180 = vpack.c.bf16 %v2168, %v2168
    %2181 = vmatprep.subr.bf16.mxu0 %v747
    %2182 = vmatpush1.bf16.msra.mxu0 %v746
    %2183 = vmatprep.subr.bf16.mxu0 %v743
    %2184 = vmatpush1.bf16.msra.mxu0 %v742
    %2185 = vmatprep.subr.bf16.mxu0 %v739
    %2186 = vmatpush1.bf16.msra.mxu0 %v738
    %2187 = vmatprep.subr.bf16.mxu0 %v735
    %2188 = vmatpush1.bf16.msra.mxu0 %v734
    %2189 = vmatprep.subr.bf16.mxu0 %v731
    %2190 = vmatpush1.bf16.msra.mxu0 %v730
    %2191 = vmatprep.subr.bf16.mxu0 %v727
    %2192 = vmatpush1.bf16.msra.mxu0 %v726
    %2193 = vmatprep.subr.bf16.mxu0 %v723
    %2194 = vmatpush1.bf16.msra.mxu0 %v722
    %2195 = vmatprep.subr.bf16.mxu0 %v719
    %2196 = vmatpush1.bf16.msra.mxu0 %v718
    %2197 = vmatprep.subr.bf16.mxu0 0
    %2198 = vmatpush2.bf16.msra.mxu0 0
    %2199 = vmatprep.subr.bf16.mxu0 0
    %2200 = vmatpush2.bf16.msra.mxu0 0
    %2201 = vmatprep.subr.bf16.mxu0 0
    %2202 = vmatpush2.bf16.msra.mxu0 0
    %2203 = vmatprep.subr.bf16.mxu0 0
    %2204 = vmatpush2.bf16.msra.mxu0 0
    %2205 = vmatprep.subr.bf16.mxu0 0
    %2206 = vmatpush2.bf16.msra.mxu0 0
    %2207 = vmatprep.subr.bf16.mxu0 0
    %2208 = vmatpush2.bf16.msra.mxu0 0
    %2209 = vmatprep.subr.bf16.mxu0 0
    %2210 = vmatpush2.bf16.msra.mxu0 0
    %2211 = vmatprep.subr.bf16.mxu0 0
    %2212 = vmatpush2.bf16.msra.mxu0 0
    %2213 = vmatprep.mubr.bf16.mxu0 0
    %2214 = vmatmul.mubr.bf16.gmra.mxu0 %v2180
    %v2215 = vpop.f32.mrf.mxu0
    %v2216 = vadd.f32 0.0, %v2215
    %v2217 = vpop.f32.mrf.mxu0
    %v2218 = vadd.f32 0.0, %v2217
    %v2219 = vpop.f32.mrf.mxu0
    %v2220 = vpop.f32.mrf.mxu0
    %2221 = vdwg.mxu0
    %2222 = vmatprep.subr.bf16.mxu0 %v749
    %2223 = vmatpush1.bf16.msra.mxu0 %v748
    %2224 = vmatprep.subr.bf16.mxu0 %v745
    %2225 = vmatpush1.bf16.msra.mxu0 %v744
    %2226 = vmatprep.subr.bf16.mxu0 %v741
    %2227 = vmatpush1.bf16.msra.mxu0 %v740
    %2228 = vmatprep.subr.bf16.mxu0 %v737
    %2229 = vmatpush1.bf16.msra.mxu0 %v736
    %2230 = vmatprep.subr.bf16.mxu0 %v733
    %2231 = vmatpush1.bf16.msra.mxu0 %v732
    %2232 = vmatprep.subr.bf16.mxu0 %v729
    %2233 = vmatpush1.bf16.msra.mxu0 %v728
    %2234 = vmatprep.subr.bf16.mxu0 %v725
    %2235 = vmatpush1.bf16.msra.mxu0 %v724
    %2236 = vmatprep.subr.bf16.mxu0 %v721
    %2237 = vmatpush1.bf16.msra.mxu0 %v720
    %2238 = vmatprep.subr.bf16.mxu0 0
    %2239 = vmatpush2.bf16.msra.mxu0 0
    %2240 = vmatprep.subr.bf16.mxu0 0
    %2241 = vmatpush2.bf16.msra.mxu0 0
    %2242 = vmatprep.subr.bf16.mxu0 0
    %2243 = vmatpush2.bf16.msra.mxu0 0
    %2244 = vmatprep.subr.bf16.mxu0 0
    %2245 = vmatpush2.bf16.msra.mxu0 0
    %2246 = vmatprep.subr.bf16.mxu0 0
    %2247 = vmatpush2.bf16.msra.mxu0 0
    %2248 = vmatprep.subr.bf16.mxu0 0
    %2249 = vmatpush2.bf16.msra.mxu0 0
    %2250 = vmatprep.subr.bf16.mxu0 0
    %2251 = vmatpush2.bf16.msra.mxu0 0
    %2252 = vmatprep.subr.bf16.mxu0 0
    %2253 = vmatpush2.bf16.msra.mxu0 0
    %2254 = vmatprep.mubr.bf16.mxu0 0
    %2255 = vmatmul.mubr.bf16.gmra.mxu0 %v2180
    %v2256 = vpop.f32.mrf.mxu0
    %v2257 = vadd.f32 0.0, %v2256
    %v2258 = vpop.f32.mrf.mxu0
    %v2259 = vadd.f32 0.0, %v2258
    %v2260 = vpop.f32.mrf.mxu0
    %v2261 = vpop.f32.mrf.mxu0
    %2262 = vdwg.mxu0
    %v2263 = vadd.f32 %v2176, %v2216
    %v2264 = vadd.f32 %v2177, %v2218
    %v2265 = vadd.f32 %v2178, %v2257
    %v2266 = vadd.f32 %v2179, %v2259
    %v2267 = vpack.c.bf16 %v2263, %v2263
    %v2268 = vpack.c.bf16 %v2264, %v2264
    %v2269 = vpack.c.bf16 %v2265, %v2265
    %v2270 = vpack.c.bf16 %v2266, %v2266
    %v2271 = vxor.u32 %v2267, 2147516416
    %v2273 = vmul.bf16 %v2271, 1069105081
    %v2274 = vpow.bf16.pop %v2273
    %v2275 = vadd.bf16 %v2274, 1065369472
    %v2276 = vrcp.bf16.pop %v2275
    %v2277 = vmul.bf16 1065369472, %v2276
    %v2278 = vunpack.c.l.bf16 %v2277
    %v2279 = vxor.u32 %v2268, 2147516416
    %v2281 = vmul.bf16 %v2279, 1069105081
    %v2282 = vpow.bf16.pop %v2281
    %v2283 = vadd.bf16 %v2282, 1065369472
    %v2284 = vrcp.bf16.pop %v2283
    %v2285 = vmul.bf16 1065369472, %v2284
    %v2286 = vunpack.c.l.bf16 %v2285
    %v2287 = vtanh.bf16.pop %v2269
    %v2288 = vunpack.c.l.bf16 %v2287
    %v2289 = vxor.u32 %v2270, 2147516416
    %v2291 = vmul.bf16 %v2289, 1069105081
    %v2292 = vpow.bf16.pop %v2291
    %v2293 = vadd.bf16 %v2292, 1065369472
    %v2294 = vrcp.bf16.pop %v2293
    %v2295 = vmul.bf16 1065369472, %v2294
    %v2296 = vunpack.c.l.bf16 %v2295
    %v2297 = vmul.f32 %v2286, %v2169
    %v2298 = vmul.f32 %v2278, %v2288
    %v2299 = vadd.f32 %v2297, %v2298
    %v2300 = vtanh.pop %v2299
    %v2301 = vmul.f32 %v2296, %v2300
    %vm2302 = vcmp.gt.s32.totalorder %v24, 10
    %v2303 = vsel %vm2302, 1, 0
    %2304 = vset.pattern.permute.xlu0 0
    %2305 = vperm.xlu0 %2304, %v2303
    %v2306 = vpop.permute.xlu0 %2305
    %vm2307 = vcmp.eq.s32.totalorder %v2306, 1
    %v2308 = vsel %vm2307, %v2301, %v2168
    %v2309 = vsel %vm2307, %v2299, %v2169
    %v2310 = vsel %vm2307, %v2301, 0.0
    %s2311 = scalar_lea.vmem [#allocation2], 80
    %2312 = vst [vmem:[%s2311] sm:$0xff] %v2310
    %s2313 = smul.u32 11, 4
    %s2314 = smul.addr %s2313, 8
    %s2315 = scalar_lea.vmem [#allocation3], %s2314
    %v2316 = vld [vmem:[%s2315] sm:$0xff]
    %v2317 = vld [vmem:[%s2315 + $0x8] sm:$0xff]
    %v2318 = vld [vmem:[%s2315 + $0x10] sm:$0xff]
    %v2319 = vld [vmem:[%s2315 + $0x18] sm:$0xff]
    %v2320 = vpack.c.bf16 %v2308, %v2308
    %2321 = vmatprep.subr.bf16.mxu0 %v747
    %2322 = vmatpush1.bf16.msra.mxu0 %v746
    %2323 = vmatprep.subr.bf16.mxu0 %v743
    %2324 = vmatpush1.bf16.msra.mxu0 %v742
    %2325 = vmatprep.subr.bf16.mxu0 %v739
    %2326 = vmatpush1.bf16.msra.mxu0 %v738
    %2327 = vmatprep.subr.bf16.mxu0 %v735
    %2328 = vmatpush1.bf16.msra.mxu0 %v734
    %2329 = vmatprep.subr.bf16.mxu0 %v731
    %2330 = vmatpush1.bf16.msra.mxu0 %v730
    %2331 = vmatprep.subr.bf16.mxu0 %v727
    %2332 = vmatpush1.bf16.msra.mxu0 %v726
    %2333 = vmatprep.subr.bf16.mxu0 %v723
    %2334 = vmatpush1.bf16.msra.mxu0 %v722
    %2335 = vmatprep.subr.bf16.mxu0 %v719
    %2336 = vmatpush1.bf16.msra.mxu0 %v718
    %2337 = vmatprep.subr.bf16.mxu0 0
    %2338 = vmatpush2.bf16.msra.mxu0 0
    %2339 = vmatprep.subr.bf16.mxu0 0
    %2340 = vmatpush2.bf16.msra.mxu0 0
    %2341 = vmatprep.subr.bf16.mxu0 0
    %2342 = vmatpush2.bf16.msra.mxu0 0
    %2343 = vmatprep.subr.bf16.mxu0 0
    %2344 = vmatpush2.bf16.msra.mxu0 0
    %2345 = vmatprep.subr.bf16.mxu0 0
    %2346 = vmatpush2.bf16.msra.mxu0 0
    %2347 = vmatprep.subr.bf16.mxu0 0
    %2348 = vmatpush2.bf16.msra.mxu0 0
    %2349 = vmatprep.subr.bf16.mxu0 0
    %2350 = vmatpush2.bf16.msra.mxu0 0
    %2351 = vmatprep.subr.bf16.mxu0 0
    %2352 = vmatpush2.bf16.msra.mxu0 0
    %2353 = vmatprep.mubr.bf16.mxu0 0
    %2354 = vmatmul.mubr.bf16.gmra.mxu0 %v2320
    %v2355 = vpop.f32.mrf.mxu0
    %v2356 = vadd.f32 0.0, %v2355
    %v2357 = vpop.f32.mrf.mxu0
    %v2358 = vadd.f32 0.0, %v2357
    %v2359 = vpop.f32.mrf.mxu0
    %v2360 = vpop.f32.mrf.mxu0
    %2361 = vdwg.mxu0
    %2362 = vmatprep.subr.bf16.mxu0 %v749
    %2363 = vmatpush1.bf16.msra.mxu0 %v748
    %2364 = vmatprep.subr.bf16.mxu0 %v745
    %2365 = vmatpush1.bf16.msra.mxu0 %v744
    %2366 = vmatprep.subr.bf16.mxu0 %v741
    %2367 = vmatpush1.bf16.msra.mxu0 %v740
    %2368 = vmatprep.subr.bf16.mxu0 %v737
    %2369 = vmatpush1.bf16.msra.mxu0 %v736
    %2370 = vmatprep.subr.bf16.mxu0 %v733
    %2371 = vmatpush1.bf16.msra.mxu0 %v732
    %2372 = vmatprep.subr.bf16.mxu0 %v729
    %2373 = vmatpush1.bf16.msra.mxu0 %v728
    %2374 = vmatprep.subr.bf16.mxu0 %v725
    %2375 = vmatpush1.bf16.msra.mxu0 %v724
    %2376 = vmatprep.subr.bf16.mxu0 %v721
    %2377 = vmatpush1.bf16.msra.mxu0 %v720
    %2378 = vmatprep.subr.bf16.mxu0 0
    %2379 = vmatpush2.bf16.msra.mxu0 0
    %2380 = vmatprep.subr.bf16.mxu0 0
    %2381 = vmatpush2.bf16.msra.mxu0 0
    %2382 = vmatprep.subr.bf16.mxu0 0
    %2383 = vmatpush2.bf16.msra.mxu0 0
    %2384 = vmatprep.subr.bf16.mxu0 0
    %2385 = vmatpush2.bf16.msra.mxu0 0
    %2386 = vmatprep.subr.bf16.mxu0 0
    %2387 = vmatpush2.bf16.msra.mxu0 0
    %2388 = vmatprep.subr.bf16.mxu0 0
    %2389 = vmatpush2.bf16.msra.mxu0 0
    %2390 = vmatprep.subr.bf16.mxu0 0
    %2391 = vmatpush2.bf16.msra.mxu0 0
    %2392 = vmatprep.subr.bf16.mxu0 0
    %2393 = vmatpush2.bf16.msra.mxu0 0
    %2394 = vmatprep.mubr.bf16.mxu0 0
    %2395 = vmatmul.mubr.bf16.gmra.mxu0 %v2320
    %v2396 = vpop.f32.mrf.mxu0
    %v2397 = vadd.f32 0.0, %v2396
    %v2398 = vpop.f32.mrf.mxu0
    %v2399 = vadd.f32 0.0, %v2398
    %v2400 = vpop.f32.mrf.mxu0
    %v2401 = vpop.f32.mrf.mxu0
    %2402 = vdwg.mxu0
    %v2403 = vadd.f32 %v2316, %v2356
    %v2404 = vadd.f32 %v2317, %v2358
    %v2405 = vadd.f32 %v2318, %v2397
    %v2406 = vadd.f32 %v2319, %v2399
    %v2407 = vpack.c.bf16 %v2403, %v2403
    %v2408 = vpack.c.bf16 %v2404, %v2404
    %v2409 = vpack.c.bf16 %v2405, %v2405
    %v2410 = vpack.c.bf16 %v2406, %v2406
    %v2411 = vxor.u32 %v2407, 2147516416
    %v2413 = vmul.bf16 %v2411, 1069105081
    %v2414 = vpow.bf16.pop %v2413
    %v2415 = vadd.bf16 %v2414, 1065369472
    %v2416 = vrcp.bf16.pop %v2415
    %v2417 = vmul.bf16 1065369472, %v2416
    %v2418 = vunpack.c.l.bf16 %v2417
    %v2419 = vxor.u32 %v2408, 2147516416
    %v2421 = vmul.bf16 %v2419, 1069105081
    %v2422 = vpow.bf16.pop %v2421
    %v2423 = vadd.bf16 %v2422, 1065369472
    %v2424 = vrcp.bf16.pop %v2423
    %v2425 = vmul.bf16 1065369472, %v2424
    %v2426 = vunpack.c.l.bf16 %v2425
    %v2427 = vtanh.bf16.pop %v2409
    %v2428 = vunpack.c.l.bf16 %v2427
    %v2429 = vxor.u32 %v2410, 2147516416
    %v2431 = vmul.bf16 %v2429, 1069105081
    %v2432 = vpow.bf16.pop %v2431
    %v2433 = vadd.bf16 %v2432, 1065369472
    %v2434 = vrcp.bf16.pop %v2433
    %v2435 = vmul.bf16 1065369472, %v2434
    %v2436 = vunpack.c.l.bf16 %v2435
    %v2437 = vmul.f32 %v2426, %v2309
    %v2438 = vmul.f32 %v2418, %v2428
    %v2439 = vadd.f32 %v2437, %v2438
    %v2440 = vtanh.pop %v2439
    %v2441 = vmul.f32 %v2436, %v2440
    %vm2442 = vcmp.gt.s32.totalorder %v24, 11
    %v2443 = vsel %vm2442, 1, 0
    %2444 = vset.pattern.permute.xlu0 0
    %2445 = vperm.xlu0 %2444, %v2443
    %v2446 = vpop.permute.xlu0 %2445
    %vm2447 = vcmp.eq.s32.totalorder %v2446, 1
    %v2448 = vsel %vm2447, %v2441, %v2308
    %v2449 = vsel %vm2447, %v2439, %v2309
    %v2450 = vsel %vm2447, %v2441, 0.0
    %s2451 = scalar_lea.vmem [#allocation2], 88
    %2452 = vst [vmem:[%s2451] sm:$0xff] %v2450
    %s2453 = smul.u32 12, 4
    %s2454 = smul.addr %s2453, 8
    %s2455 = scalar_lea.vmem [#allocation3], %s2454
    %v2456 = vld [vmem:[%s2455] sm:$0xff]
    %v2457 = vld [vmem:[%s2455 + $0x8] sm:$0xff]
    %v2458 = vld [vmem:[%s2455 + $0x10] sm:$0xff]
    %v2459 = vld [vmem:[%s2455 + $0x18] sm:$0xff]
    %v2460 = vpack.c.bf16 %v2448, %v2448
    %2461 = vmatprep.subr.bf16.mxu0 %v747
    %2462 = vmatpush1.bf16.msra.mxu0 %v746
    %2463 = vmatprep.subr.bf16.mxu0 %v743
    %2464 = vmatpush1.bf16.msra.mxu0 %v742
    %2465 = vmatprep.subr.bf16.mxu0 %v739
    %2466 = vmatpush1.bf16.msra.mxu0 %v738
    %2467 = vmatprep.subr.bf16.mxu0 %v735
    %2468 = vmatpush1.bf16.msra.mxu0 %v734
    %2469 = vmatprep.subr.bf16.mxu0 %v731
    %2470 = vmatpush1.bf16.msra.mxu0 %v730
    %2471 = vmatprep.subr.bf16.mxu0 %v727
    %2472 = vmatpush1.bf16.msra.mxu0 %v726
    %2473 = vmatprep.subr.bf16.mxu0 %v723
    %2474 = vmatpush1.bf16.msra.mxu0 %v722
    %2475 = vmatprep.subr.bf16.mxu0 %v719
    %2476 = vmatpush1.bf16.msra.mxu0 %v718
    %2477 = vmatprep.subr.bf16.mxu0 0
    %2478 = vmatpush2.bf16.msra.mxu0 0
    %2479 = vmatprep.subr.bf16.mxu0 0
    %2480 = vmatpush2.bf16.msra.mxu0 0
    %2481 = vmatprep.subr.bf16.mxu0 0
    %2482 = vmatpush2.bf16.msra.mxu0 0
    %2483 = vmatprep.subr.bf16.mxu0 0
    %2484 = vmatpush2.bf16.msra.mxu0 0
    %2485 = vmatprep.subr.bf16.mxu0 0
    %2486 = vmatpush2.bf16.msra.mxu0 0
    %2487 = vmatprep.subr.bf16.mxu0 0
    %2488 = vmatpush2.bf16.msra.mxu0 0
    %2489 = vmatprep.subr.bf16.mxu0 0
    %2490 = vmatpush2.bf16.msra.mxu0 0
    %2491 = vmatprep.subr.bf16.mxu0 0
    %2492 = vmatpush2.bf16.msra.mxu0 0
    %2493 = vmatprep.mubr.bf16.mxu0 0
    %2494 = vmatmul.mubr.bf16.gmra.mxu0 %v2460
    %v2495 = vpop.f32.mrf.mxu0
    %v2496 = vadd.f32 0.0, %v2495
    %v2497 = vpop.f32.mrf.mxu0
    %v2498 = vadd.f32 0.0, %v2497
    %v2499 = vpop.f32.mrf.mxu0
    %v2500 = vpop.f32.mrf.mxu0
    %2501 = vdwg.mxu0
    %2502 = vmatprep.subr.bf16.mxu0 %v749
    %2503 = vmatpush1.bf16.msra.mxu0 %v748
    %2504 = vmatprep.subr.bf16.mxu0 %v745
    %2505 = vmatpush1.bf16.msra.mxu0 %v744
    %2506 = vmatprep.subr.bf16.mxu0 %v741
    %2507 = vmatpush1.bf16.msra.mxu0 %v740
    %2508 = vmatprep.subr.bf16.mxu0 %v737
    %2509 = vmatpush1.bf16.msra.mxu0 %v736
    %2510 = vmatprep.subr.bf16.mxu0 %v733
    %2511 = vmatpush1.bf16.msra.mxu0 %v732
    %2512 = vmatprep.subr.bf16.mxu0 %v729
    %2513 = vmatpush1.bf16.msra.mxu0 %v728
    %2514 = vmatprep.subr.bf16.mxu0 %v725
    %2515 = vmatpush1.bf16.msra.mxu0 %v724
    %2516 = vmatprep.subr.bf16.mxu0 %v721
    %2517 = vmatpush1.bf16.msra.mxu0 %v720
    %2518 = vmatprep.subr.bf16.mxu0 0
    %2519 = vmatpush2.bf16.msra.mxu0 0
    %2520 = vmatprep.subr.bf16.mxu0 0
    %2521 = vmatpush2.bf16.msra.mxu0 0
    %2522 = vmatprep.subr.bf16.mxu0 0
    %2523 = vmatpush2.bf16.msra.mxu0 0
    %2524 = vmatprep.subr.bf16.mxu0 0
    %2525 = vmatpush2.bf16.msra.mxu0 0
    %2526 = vmatprep.subr.bf16.mxu0 0
    %2527 = vmatpush2.bf16.msra.mxu0 0
    %2528 = vmatprep.subr.bf16.mxu0 0
    %2529 = vmatpush2.bf16.msra.mxu0 0
    %2530 = vmatprep.subr.bf16.mxu0 0
    %2531 = vmatpush2.bf16.msra.mxu0 0
    %2532 = vmatprep.subr.bf16.mxu0 0
    %2533 = vmatpush2.bf16.msra.mxu0 0
    %2534 = vmatprep.mubr.bf16.mxu0 0
    %2535 = vmatmul.mubr.bf16.gmra.mxu0 %v2460
    %v2536 = vpop.f32.mrf.mxu0
    %v2537 = vadd.f32 0.0, %v2536
    %v2538 = vpop.f32.mrf.mxu0
    %v2539 = vadd.f32 0.0, %v2538
    %v2540 = vpop.f32.mrf.mxu0
    %v2541 = vpop.f32.mrf.mxu0
    %2542 = vdwg.mxu0
    %v2543 = vadd.f32 %v2456, %v2496
    %v2544 = vadd.f32 %v2457, %v2498
    %v2545 = vadd.f32 %v2458, %v2537
    %v2546 = vadd.f32 %v2459, %v2539
    %v2547 = vpack.c.bf16 %v2543, %v2543
    %v2548 = vpack.c.bf16 %v2544, %v2544
    %v2549 = vpack.c.bf16 %v2545, %v2545
    %v2550 = vpack.c.bf16 %v2546, %v2546
    %v2551 = vxor.u32 %v2547, 2147516416
    %v2553 = vmul.bf16 %v2551, 1069105081
    %v2554 = vpow.bf16.pop %v2553
    %v2555 = vadd.bf16 %v2554, 1065369472
    %v2556 = vrcp.bf16.pop %v2555
    %v2557 = vmul.bf16 1065369472, %v2556
    %v2558 = vunpack.c.l.bf16 %v2557
    %v2559 = vxor.u32 %v2548, 2147516416
    %v2561 = vmul.bf16 %v2559, 1069105081
    %v2562 = vpow.bf16.pop %v2561
    %v2563 = vadd.bf16 %v2562, 1065369472
    %v2564 = vrcp.bf16.pop %v2563
    %v2565 = vmul.bf16 1065369472, %v2564
    %v2566 = vunpack.c.l.bf16 %v2565
    %v2567 = vtanh.bf16.pop %v2549
    %v2568 = vunpack.c.l.bf16 %v2567
    %v2569 = vxor.u32 %v2550, 2147516416
    %v2571 = vmul.bf16 %v2569, 1069105081
    %v2572 = vpow.bf16.pop %v2571
    %v2573 = vadd.bf16 %v2572, 1065369472
    %v2574 = vrcp.bf16.pop %v2573
    %v2575 = vmul.bf16 1065369472, %v2574
    %v2576 = vunpack.c.l.bf16 %v2575
    %v2577 = vmul.f32 %v2566, %v2449
    %v2578 = vmul.f32 %v2558, %v2568
    %v2579 = vadd.f32 %v2577, %v2578
    %v2580 = vtanh.pop %v2579
    %v2581 = vmul.f32 %v2576, %v2580
    %vm2582 = vcmp.gt.s32.totalorder %v24, 12
    %v2583 = vsel %vm2582, 1, 0
    %2584 = vset.pattern.permute.xlu0 0
    %2585 = vperm.xlu0 %2584, %v2583
    %v2586 = vpop.permute.xlu0 %2585
    %vm2587 = vcmp.eq.s32.totalorder %v2586, 1
    %v2588 = vsel %vm2587, %v2581, %v2448
    %v2589 = vsel %vm2587, %v2579, %v2449
    %v2590 = vsel %vm2587, %v2581, 0.0
    %s2591 = scalar_lea.vmem [#allocation2], 96
    %2592 = vst [vmem:[%s2591] sm:$0xff] %v2590
    %s2593 = smul.u32 13, 4
    %s2594 = smul.addr %s2593, 8
    %s2595 = scalar_lea.vmem [#allocation3], %s2594
    %v2596 = vld [vmem:[%s2595] sm:$0xff]
    %v2597 = vld [vmem:[%s2595 + $0x8] sm:$0xff]
    %v2598 = vld [vmem:[%s2595 + $0x10] sm:$0xff]
    %v2599 = vld [vmem:[%s2595 + $0x18] sm:$0xff]
    %v2600 = vpack.c.bf16 %v2588, %v2588
    %2601 = vmatprep.subr.bf16.mxu0 %v747
    %2602 = vmatpush1.bf16.msra.mxu0 %v746
    %2603 = vmatprep.subr.bf16.mxu0 %v743
    %2604 = vmatpush1.bf16.msra.mxu0 %v742
    %2605 = vmatprep.subr.bf16.mxu0 %v739
    %2606 = vmatpush1.bf16.msra.mxu0 %v738
    %2607 = vmatprep.subr.bf16.mxu0 %v735
    %2608 = vmatpush1.bf16.msra.mxu0 %v734
    %2609 = vmatprep.subr.bf16.mxu0 %v731
    %2610 = vmatpush1.bf16.msra.mxu0 %v730
    %2611 = vmatprep.subr.bf16.mxu0 %v727
    %2612 = vmatpush1.bf16.msra.mxu0 %v726
    %2613 = vmatprep.subr.bf16.mxu0 %v723
    %2614 = vmatpush1.bf16.msra.mxu0 %v722
    %2615 = vmatprep.subr.bf16.mxu0 %v719
    %2616 = vmatpush1.bf16.msra.mxu0 %v718
    %2617 = vmatprep.subr.bf16.mxu0 0
    %2618 = vmatpush2.bf16.msra.mxu0 0
    %2619 = vmatprep.subr.bf16.mxu0 0
    %2620 = vmatpush2.bf16.msra.mxu0 0
    %2621 = vmatprep.subr.bf16.mxu0 0
    %2622 = vmatpush2.bf16.msra.mxu0 0
    %2623 = vmatprep.subr.bf16.mxu0 0
    %2624 = vmatpush2.bf16.msra.mxu0 0
    %2625 = vmatprep.subr.bf16.mxu0 0
    %2626 = vmatpush2.bf16.msra.mxu0 0
    %2627 = vmatprep.subr.bf16.mxu0 0
    %2628 = vmatpush2.bf16.msra.mxu0 0
    %2629 = vmatprep.subr.bf16.mxu0 0
    %2630 = vmatpush2.bf16.msra.mxu0 0
    %2631 = vmatprep.subr.bf16.mxu0 0
    %2632 = vmatpush2.bf16.msra.mxu0 0
    %2633 = vmatprep.mubr.bf16.mxu0 0
    %2634 = vmatmul.mubr.bf16.gmra.mxu0 %v2600
    %v2635 = vpop.f32.mrf.mxu0
    %v2636 = vadd.f32 0.0, %v2635
    %v2637 = vpop.f32.mrf.mxu0
    %v2638 = vadd.f32 0.0, %v2637
    %v2639 = vpop.f32.mrf.mxu0
    %v2640 = vpop.f32.mrf.mxu0
    %2641 = vdwg.mxu0
    %2642 = vmatprep.subr.bf16.mxu0 %v749
    %2643 = vmatpush1.bf16.msra.mxu0 %v748
    %2644 = vmatprep.subr.bf16.mxu0 %v745
    %2645 = vmatpush1.bf16.msra.mxu0 %v744
    %2646 = vmatprep.subr.bf16.mxu0 %v741
    %2647 = vmatpush1.bf16.msra.mxu0 %v740
    %2648 = vmatprep.subr.bf16.mxu0 %v737
    %2649 = vmatpush1.bf16.msra.mxu0 %v736
    %2650 = vmatprep.subr.bf16.mxu0 %v733
    %2651 = vmatpush1.bf16.msra.mxu0 %v732
    %2652 = vmatprep.subr.bf16.mxu0 %v729
    %2653 = vmatpush1.bf16.msra.mxu0 %v728
    %2654 = vmatprep.subr.bf16.mxu0 %v725
    %2655 = vmatpush1.bf16.msra.mxu0 %v724
    %2656 = vmatprep.subr.bf16.mxu0 %v721
    %2657 = vmatpush1.bf16.msra.mxu0 %v720
    %2658 = vmatprep.subr.bf16.mxu0 0
    %2659 = vmatpush2.bf16.msra.mxu0 0
    %2660 = vmatprep.subr.bf16.mxu0 0
    %2661 = vmatpush2.bf16.msra.mxu0 0
    %2662 = vmatprep.subr.bf16.mxu0 0
    %2663 = vmatpush2.bf16.msra.mxu0 0
    %2664 = vmatprep.subr.bf16.mxu0 0
    %2665 = vmatpush2.bf16.msra.mxu0 0
    %2666 = vmatprep.subr.bf16.mxu0 0
    %2667 = vmatpush2.bf16.msra.mxu0 0
    %2668 = vmatprep.subr.bf16.mxu0 0
    %2669 = vmatpush2.bf16.msra.mxu0 0
    %2670 = vmatprep.subr.bf16.mxu0 0
    %2671 = vmatpush2.bf16.msra.mxu0 0
    %2672 = vmatprep.subr.bf16.mxu0 0
    %2673 = vmatpush2.bf16.msra.mxu0 0
    %2674 = vmatprep.mubr.bf16.mxu0 0
    %2675 = vmatmul.mubr.bf16.gmra.mxu0 %v2600
    %v2676 = vpop.f32.mrf.mxu0
    %v2677 = vadd.f32 0.0, %v2676
    %v2678 = vpop.f32.mrf.mxu0
    %v2679 = vadd.f32 0.0, %v2678
    %v2680 = vpop.f32.mrf.mxu0
    %v2681 = vpop.f32.mrf.mxu0
    %2682 = vdwg.mxu0
    %v2683 = vadd.f32 %v2596, %v2636
    %v2684 = vadd.f32 %v2597, %v2638
    %v2685 = vadd.f32 %v2598, %v2677
    %v2686 = vadd.f32 %v2599, %v2679
    %v2687 = vpack.c.bf16 %v2683, %v2683
    %v2688 = vpack.c.bf16 %v2684, %v2684
    %v2689 = vpack.c.bf16 %v2685, %v2685
    %v2690 = vpack.c.bf16 %v2686, %v2686
    %v2691 = vxor.u32 %v2687, 2147516416
    %v2693 = vmul.bf16 %v2691, 1069105081
    %v2694 = vpow.bf16.pop %v2693
    %v2695 = vadd.bf16 %v2694, 1065369472
    %v2696 = vrcp.bf16.pop %v2695
    %v2697 = vmul.bf16 1065369472, %v2696
    %v2698 = vunpack.c.l.bf16 %v2697
    %v2699 = vxor.u32 %v2688, 2147516416
    %v2701 = vmul.bf16 %v2699, 1069105081
    %v2702 = vpow.bf16.pop %v2701
    %v2703 = vadd.bf16 %v2702, 1065369472
    %v2704 = vrcp.bf16.pop %v2703
    %v2705 = vmul.bf16 1065369472, %v2704
    %v2706 = vunpack.c.l.bf16 %v2705
    %v2707 = vtanh.bf16.pop %v2689
    %v2708 = vunpack.c.l.bf16 %v2707
    %v2709 = vxor.u32 %v2690, 2147516416
    %v2711 = vmul.bf16 %v2709, 1069105081
    %v2712 = vpow.bf16.pop %v2711
    %v2713 = vadd.bf16 %v2712, 1065369472
    %v2714 = vrcp.bf16.pop %v2713
    %v2715 = vmul.bf16 1065369472, %v2714
    %v2716 = vunpack.c.l.bf16 %v2715
    %v2717 = vmul.f32 %v2706, %v2589
    %v2718 = vmul.f32 %v2698, %v2708
    %v2719 = vadd.f32 %v2717, %v2718
    %v2720 = vtanh.pop %v2719
    %v2721 = vmul.f32 %v2716, %v2720
    %vm2722 = vcmp.gt.s32.totalorder %v24, 13
    %v2723 = vsel %vm2722, 1, 0
    %2724 = vset.pattern.permute.xlu0 0
    %2725 = vperm.xlu0 %2724, %v2723
    %v2726 = vpop.permute.xlu0 %2725
    %vm2727 = vcmp.eq.s32.totalorder %v2726, 1
    %v2728 = vsel %vm2727, %v2721, %v2588
    %v2729 = vsel %vm2727, %v2719, %v2589
    %v2730 = vsel %vm2727, %v2721, 0.0
    %s2731 = scalar_lea.vmem [#allocation2], 104
    %2732 = vst [vmem:[%s2731] sm:$0xff] %v2730
    %s2733 = smul.u32 14, 4
    %s2734 = smul.addr %s2733, 8
    %s2735 = scalar_lea.vmem [#allocation3], %s2734
    %v2736 = vld [vmem:[%s2735] sm:$0xff]
    %v2737 = vld [vmem:[%s2735 + $0x8] sm:$0xff]
    %v2738 = vld [vmem:[%s2735 + $0x10] sm:$0xff]
    %v2739 = vld [vmem:[%s2735 + $0x18] sm:$0xff]
    %v2740 = vpack.c.bf16 %v2728, %v2728
    %2741 = vmatprep.subr.bf16.mxu0 %v747
    %2742 = vmatpush1.bf16.msra.mxu0 %v746
    %2743 = vmatprep.subr.bf16.mxu0 %v743
    %2744 = vmatpush1.bf16.msra.mxu0 %v742
    %2745 = vmatprep.subr.bf16.mxu0 %v739
    %2746 = vmatpush1.bf16.msra.mxu0 %v738
    %2747 = vmatprep.subr.bf16.mxu0 %v735
    %2748 = vmatpush1.bf16.msra.mxu0 %v734
    %2749 = vmatprep.subr.bf16.mxu0 %v731
    %2750 = vmatpush1.bf16.msra.mxu0 %v730
    %2751 = vmatprep.subr.bf16.mxu0 %v727
    %2752 = vmatpush1.bf16.msra.mxu0 %v726
    %2753 = vmatprep.subr.bf16.mxu0 %v723
    %2754 = vmatpush1.bf16.msra.mxu0 %v722
    %2755 = vmatprep.subr.bf16.mxu0 %v719
    %2756 = vmatpush1.bf16.msra.mxu0 %v718
    %2757 = vmatprep.subr.bf16.mxu0 0
    %2758 = vmatpush2.bf16.msra.mxu0 0
    %2759 = vmatprep.subr.bf16.mxu0 0
    %2760 = vmatpush2.bf16.msra.mxu0 0
    %2761 = vmatprep.subr.bf16.mxu0 0
    %2762 = vmatpush2.bf16.msra.mxu0 0
    %2763 = vmatprep.subr.bf16.mxu0 0
    %2764 = vmatpush2.bf16.msra.mxu0 0
    %2765 = vmatprep.subr.bf16.mxu0 0
    %2766 = vmatpush2.bf16.msra.mxu0 0
    %2767 = vmatprep.subr.bf16.mxu0 0
    %2768 = vmatpush2.bf16.msra.mxu0 0
    %2769 = vmatprep.subr.bf16.mxu0 0
    %2770 = vmatpush2.bf16.msra.mxu0 0
    %2771 = vmatprep.subr.bf16.mxu0 0
    %2772 = vmatpush2.bf16.msra.mxu0 0
    %2773 = vmatprep.mubr.bf16.mxu0 0
    %2774 = vmatmul.mubr.bf16.gmra.mxu0 %v2740
    %v2775 = vpop.f32.mrf.mxu0
    %v2776 = vadd.f32 0.0, %v2775
    %v2777 = vpop.f32.mrf.mxu0
    %v2778 = vadd.f32 0.0, %v2777
    %v2779 = vpop.f32.mrf.mxu0
    %v2780 = vpop.f32.mrf.mxu0
    %2781 = vdwg.mxu0
    %2782 = vmatprep.subr.bf16.mxu0 %v749
    %2783 = vmatpush1.bf16.msra.mxu0 %v748
    %2784 = vmatprep.subr.bf16.mxu0 %v745
    %2785 = vmatpush1.bf16.msra.mxu0 %v744
    %2786 = vmatprep.subr.bf16.mxu0 %v741
    %2787 = vmatpush1.bf16.msra.mxu0 %v740
    %2788 = vmatprep.subr.bf16.mxu0 %v737
    %2789 = vmatpush1.bf16.msra.mxu0 %v736
    %2790 = vmatprep.subr.bf16.mxu0 %v733
    %2791 = vmatpush1.bf16.msra.mxu0 %v732
    %2792 = vmatprep.subr.bf16.mxu0 %v729
    %2793 = vmatpush1.bf16.msra.mxu0 %v728
    %2794 = vmatprep.subr.bf16.mxu0 %v725
    %2795 = vmatpush1.bf16.msra.mxu0 %v724
    %2796 = vmatprep.subr.bf16.mxu0 %v721
    %2797 = vmatpush1.bf16.msra.mxu0 %v720
    %2798 = vmatprep.subr.bf16.mxu0 0
    %2799 = vmatpush2.bf16.msra.mxu0 0
    %2800 = vmatprep.subr.bf16.mxu0 0
    %2801 = vmatpush2.bf16.msra.mxu0 0
    %2802 = vmatprep.subr.bf16.mxu0 0
    %2803 = vmatpush2.bf16.msra.mxu0 0
    %2804 = vmatprep.subr.bf16.mxu0 0
    %2805 = vmatpush2.bf16.msra.mxu0 0
    %2806 = vmatprep.subr.bf16.mxu0 0
    %2807 = vmatpush2.bf16.msra.mxu0 0
    %2808 = vmatprep.subr.bf16.mxu0 0
    %2809 = vmatpush2.bf16.msra.mxu0 0
    %2810 = vmatprep.subr.bf16.mxu0 0
    %2811 = vmatpush2.bf16.msra.mxu0 0
    %2812 = vmatprep.subr.bf16.mxu0 0
    %2813 = vmatpush2.bf16.msra.mxu0 0
    %2814 = vmatprep.mubr.bf16.mxu0 0
    %2815 = vmatmul.mubr.bf16.gmra.mxu0 %v2740
    %v2816 = vpop.f32.mrf.mxu0
    %v2817 = vadd.f32 0.0, %v2816
    %v2818 = vpop.f32.mrf.mxu0
    %v2819 = vadd.f32 0.0, %v2818
    %v2820 = vpop.f32.mrf.mxu0
    %v2821 = vpop.f32.mrf.mxu0
    %2822 = vdwg.mxu0
    %v2823 = vadd.f32 %v2736, %v2776
    %v2824 = vadd.f32 %v2737, %v2778
    %v2825 = vadd.f32 %v2738, %v2817
    %v2826 = vadd.f32 %v2739, %v2819
    %v2827 = vpack.c.bf16 %v2823, %v2823
    %v2828 = vpack.c.bf16 %v2824, %v2824
    %v2829 = vpack.c.bf16 %v2825, %v2825
    %v2830 = vpack.c.bf16 %v2826, %v2826
    %v2831 = vxor.u32 %v2827, 2147516416
    %v2833 = vmul.bf16 %v2831, 1069105081
    %v2834 = vpow.bf16.pop %v2833
    %v2835 = vadd.bf16 %v2834, 1065369472
    %v2836 = vrcp.bf16.pop %v2835
    %v2837 = vmul.bf16 1065369472, %v2836
    %v2838 = vunpack.c.l.bf16 %v2837
    %v2839 = vxor.u32 %v2828, 2147516416
    %v2841 = vmul.bf16 %v2839, 1069105081
    %v2842 = vpow.bf16.pop %v2841
    %v2843 = vadd.bf16 %v2842, 1065369472
    %v2844 = vrcp.bf16.pop %v2843
    %v2845 = vmul.bf16 1065369472, %v2844
    %v2846 = vunpack.c.l.bf16 %v2845
    %v2847 = vtanh.bf16.pop %v2829
    %v2848 = vunpack.c.l.bf16 %v2847
    %v2849 = vxor.u32 %v2830, 2147516416
    %v2851 = vmul.bf16 %v2849, 1069105081
    %v2852 = vpow.bf16.pop %v2851
    %v2853 = vadd.bf16 %v2852, 1065369472
    %v2854 = vrcp.bf16.pop %v2853
    %v2855 = vmul.bf16 1065369472, %v2854
    %v2856 = vunpack.c.l.bf16 %v2855
    %v2857 = vmul.f32 %v2846, %v2729
    %v2858 = vmul.f32 %v2838, %v2848
    %v2859 = vadd.f32 %v2857, %v2858
    %v2860 = vtanh.pop %v2859
    %v2861 = vmul.f32 %v2856, %v2860
    %vm2862 = vcmp.gt.s32.totalorder %v24, 14
    %v2863 = vsel %vm2862, 1, 0
    %2864 = vset.pattern.permute.xlu0 0
    %2865 = vperm.xlu0 %2864, %v2863
    %v2866 = vpop.permute.xlu0 %2865
    %vm2867 = vcmp.eq.s32.totalorder %v2866, 1
    %v2868 = vsel %vm2867, %v2861, %v2728
    %v2869 = vsel %vm2867, %v2859, %v2729
    %v2870 = vsel %vm2867, %v2861, 0.0
    %s2871 = scalar_lea.vmem [#allocation2], 112
    %2872 = vst [vmem:[%s2871] sm:$0xff] %v2870
    %s2873 = smul.u32 15, 4
    %s2874 = smul.addr %s2873, 8
    %s2875 = scalar_lea.vmem [#allocation3], %s2874
    %v2876 = vld [vmem:[%s2875] sm:$0xff]
    %v2877 = vld [vmem:[%s2875 + $0x8] sm:$0xff]
    %v2878 = vld [vmem:[%s2875 + $0x10] sm:$0xff]
    %v2879 = vld [vmem:[%s2875 + $0x18] sm:$0xff]
    %v2880 = vpack.c.bf16 %v2868, %v2868
    %2881 = vmatprep.subr.bf16.mxu0 %v747
    %2882 = vmatpush1.bf16.msra.mxu0 %v746
    %2883 = vmatprep.subr.bf16.mxu0 %v743
    %2884 = vmatpush1.bf16.msra.mxu0 %v742
    %2885 = vmatprep.subr.bf16.mxu0 %v739
    %2886 = vmatpush1.bf16.msra.mxu0 %v738
    %2887 = vmatprep.subr.bf16.mxu0 %v735
    %2888 = vmatpush1.bf16.msra.mxu0 %v734
    %2889 = vmatprep.subr.bf16.mxu0 %v731
    %2890 = vmatpush1.bf16.msra.mxu0 %v730
    %2891 = vmatprep.subr.bf16.mxu0 %v727
    %2892 = vmatpush1.bf16.msra.mxu0 %v726
    %2893 = vmatprep.subr.bf16.mxu0 %v723
    %2894 = vmatpush1.bf16.msra.mxu0 %v722
    %2895 = vmatprep.subr.bf16.mxu0 %v719
    %2896 = vmatpush1.bf16.msra.mxu0 %v718
    %2897 = vmatprep.subr.bf16.mxu0 0
    %2898 = vmatpush2.bf16.msra.mxu0 0
    %2899 = vmatprep.subr.bf16.mxu0 0
    %2900 = vmatpush2.bf16.msra.mxu0 0
    %2901 = vmatprep.subr.bf16.mxu0 0
    %2902 = vmatpush2.bf16.msra.mxu0 0
    %2903 = vmatprep.subr.bf16.mxu0 0
    %2904 = vmatpush2.bf16.msra.mxu0 0
    %2905 = vmatprep.subr.bf16.mxu0 0
    %2906 = vmatpush2.bf16.msra.mxu0 0
    %2907 = vmatprep.subr.bf16.mxu0 0
    %2908 = vmatpush2.bf16.msra.mxu0 0
    %2909 = vmatprep.subr.bf16.mxu0 0
    %2910 = vmatpush2.bf16.msra.mxu0 0
    %2911 = vmatprep.subr.bf16.mxu0 0
    %2912 = vmatpush2.bf16.msra.mxu0 0
    %2913 = vmatprep.mubr.bf16.mxu0 0
    %2914 = vmatmul.mubr.bf16.gmra.mxu0 %v2880
    %v2915 = vpop.f32.mrf.mxu0
    %v2916 = vadd.f32 0.0, %v2915
    %v2917 = vpop.f32.mrf.mxu0
    %v2918 = vadd.f32 0.0, %v2917
    %v2919 = vpop.f32.mrf.mxu0
    %v2920 = vpop.f32.mrf.mxu0
    %2921 = vdwg.mxu0
    %2922 = vmatprep.subr.bf16.mxu0 %v749
    %2923 = vmatpush1.bf16.msra.mxu0 %v748
    %2924 = vmatprep.subr.bf16.mxu0 %v745
    %2925 = vmatpush1.bf16.msra.mxu0 %v744
    %2926 = vmatprep.subr.bf16.mxu0 %v741
    %2927 = vmatpush1.bf16.msra.mxu0 %v740
    %2928 = vmatprep.subr.bf16.mxu0 %v737
    %2929 = vmatpush1.bf16.msra.mxu0 %v736
    %2930 = vmatprep.subr.bf16.mxu0 %v733
    %2931 = vmatpush1.bf16.msra.mxu0 %v732
    %2932 = vmatprep.subr.bf16.mxu0 %v729
    %2933 = vmatpush1.bf16.msra.mxu0 %v728
    %2934 = vmatprep.subr.bf16.mxu0 %v725
    %2935 = vmatpush1.bf16.msra.mxu0 %v724
    %2936 = vmatprep.subr.bf16.mxu0 %v721
    %2937 = vmatpush1.bf16.msra.mxu0 %v720
    %2938 = vmatprep.subr.bf16.mxu0 0
    %2939 = vmatpush2.bf16.msra.mxu0 0
    %2940 = vmatprep.subr.bf16.mxu0 0
    %2941 = vmatpush2.bf16.msra.mxu0 0
    %2942 = vmatprep.subr.bf16.mxu0 0
    %2943 = vmatpush2.bf16.msra.mxu0 0
    %2944 = vmatprep.subr.bf16.mxu0 0
    %2945 = vmatpush2.bf16.msra.mxu0 0
    %2946 = vmatprep.subr.bf16.mxu0 0
    %2947 = vmatpush2.bf16.msra.mxu0 0
    %2948 = vmatprep.subr.bf16.mxu0 0
    %2949 = vmatpush2.bf16.msra.mxu0 0
    %2950 = vmatprep.subr.bf16.mxu0 0
    %2951 = vmatpush2.bf16.msra.mxu0 0
    %2952 = vmatprep.subr.bf16.mxu0 0
    %2953 = vmatpush2.bf16.msra.mxu0 0
    %2954 = vmatprep.mubr.bf16.mxu0 0
    %2955 = vmatmul.mubr.bf16.gmra.mxu0 %v2880
    %v2956 = vpop.f32.mrf.mxu0
    %v2957 = vadd.f32 0.0, %v2956
    %v2958 = vpop.f32.mrf.mxu0
    %v2959 = vadd.f32 0.0, %v2958
    %v2960 = vpop.f32.mrf.mxu0
    %v2961 = vpop.f32.mrf.mxu0
    %2962 = vdwg.mxu0
    %v2963 = vadd.f32 %v2876, %v2916
    %v2964 = vadd.f32 %v2877, %v2918
    %v2965 = vadd.f32 %v2878, %v2957
    %v2966 = vadd.f32 %v2879, %v2959
    %v2967 = vpack.c.bf16 %v2963, %v2963
    %v2968 = vpack.c.bf16 %v2964, %v2964
    %v2969 = vpack.c.bf16 %v2965, %v2965
    %v2970 = vpack.c.bf16 %v2966, %v2966
    %v2971 = vxor.u32 %v2967, 2147516416
    %v2973 = vmul.bf16 %v2971, 1069105081
    %v2974 = vpow.bf16.pop %v2973
    %v2975 = vadd.bf16 %v2974, 1065369472
    %v2976 = vrcp.bf16.pop %v2975
    %v2977 = vmul.bf16 1065369472, %v2976
    %v2978 = vunpack.c.l.bf16 %v2977
    %v2979 = vxor.u32 %v2968, 2147516416
    %v2981 = vmul.bf16 %v2979, 1069105081
    %v2982 = vpow.bf16.pop %v2981
    %v2983 = vadd.bf16 %v2982, 1065369472
    %v2984 = vrcp.bf16.pop %v2983
    %v2985 = vmul.bf16 1065369472, %v2984
    %v2986 = vunpack.c.l.bf16 %v2985
    %v2987 = vtanh.bf16.pop %v2969
    %v2988 = vunpack.c.l.bf16 %v2987
    %v2989 = vxor.u32 %v2970, 2147516416
    %v2991 = vmul.bf16 %v2989, 1069105081
    %v2992 = vpow.bf16.pop %v2991
    %v2993 = vadd.bf16 %v2992, 1065369472
    %v2994 = vrcp.bf16.pop %v2993
    %v2995 = vmul.bf16 1065369472, %v2994
    %v2996 = vunpack.c.l.bf16 %v2995
    %v2997 = vmul.f32 %v2986, %v2869
    %v2998 = vmul.f32 %v2978, %v2988
    %v2999 = vadd.f32 %v2997, %v2998
    %v3000 = vtanh.pop %v2999
    %v3001 = vmul.f32 %v2996, %v3000
    %vm3002 = vcmp.gt.s32.totalorder %v24, 15
    %v3003 = vsel %vm3002, 1, 0
    %3004 = vset.pattern.permute.xlu0 0
    %3005 = vperm.xlu0 %3004, %v3003
    %v3006 = vpop.permute.xlu0 %3005
    %vm3007 = vcmp.eq.s32.totalorder %v3006, 1
    %v3008 = vsel %vm3007, %v3001, %v2868
    %v3009 = vsel %vm3007, %v2999, %v2869
    %v3010 = vsel %vm3007, %v3001, 0.0
    %s3011 = scalar_lea.vmem [#allocation2], 120
    %3012 = vst [vmem:[%s3011] sm:$0xff] %v3010
    %3013 = vst [vmem:[#allocation4] sm:$0xff] %v3008
    %3014 = vst [vmem:[#allocation5] sm:$0xff] %v3009
  $region29: #{lstm_model_forward.2} parent=0 // pred_fallthru
    _
  %s3015 = scalar_lea.vmem %s3, 256
  %v3016 = vld [vmem:[%s3015] sm:$0xff]
  %v3017 = vld [vmem:[%s3015 + $0x8] sm:$0xff]
  %v3018 = vld [vmem:[%s3015 + $0x10] sm:$0xff]
  %v3019 = vld [vmem:[%s3015 + $0x18] sm:$0xff]
  %v3020 = vld [vmem:[%s3015 + $0x20] sm:$0xff]
  %v3021 = vld [vmem:[%s3015 + $0x28] sm:$0xff]
  %v3022 = vld [vmem:[%s3015 + $0x30] sm:$0xff]
  %v3023 = vld [vmem:[%s3015 + $0x38] sm:$0xff]
  %v3024 = vld [vmem:[%s3015 + $0x40] sm:$0xff]
  %v3025 = vld [vmem:[%s3015 + $0x48] sm:$0xff]
  %v3026 = vld [vmem:[%s3015 + $0x50] sm:$0xff]
  %v3027 = vld [vmem:[%s3015 + $0x58] sm:$0xff]
  %v3028 = vld [vmem:[%s3015 + $0x60] sm:$0xff]
  %v3029 = vld [vmem:[%s3015 + $0x68] sm:$0xff]
  %v3030 = vld [vmem:[%s3015 + $0x70] sm:$0xff]
  %v3031 = vld [vmem:[%s3015 + $0x78] sm:$0xff]
  %v3032 = vld [vmem:[%s3015 + $0x80] sm:$0xff]
  %v3033 = vld [vmem:[%s3015 + $0x88] sm:$0xff]
  %v3034 = vld [vmem:[%s3015 + $0x90] sm:$0xff]
  %v3035 = vld [vmem:[%s3015 + $0x98] sm:$0xff]
  %v3036 = vld [vmem:[%s3015 + $0xa0] sm:$0xff]
  %v3037 = vld [vmem:[%s3015 + $0xa8] sm:$0xff]
  %v3038 = vld [vmem:[%s3015 + $0xb0] sm:$0xff]
  %v3039 = vld [vmem:[%s3015 + $0xb8] sm:$0xff]
  %v3040 = vld [vmem:[%s3015 + $0xc0] sm:$0xff]
  %v3041 = vld [vmem:[%s3015 + $0xc8] sm:$0xff]
  %v3042 = vld [vmem:[%s3015 + $0xd0] sm:$0xff]
  %v3043 = vld [vmem:[%s3015 + $0xd8] sm:$0xff]
  %v3044 = vld [vmem:[%s3015 + $0xe0] sm:$0xff]
  %v3045 = vld [vmem:[%s3015 + $0xe8] sm:$0xff]
  %v3046 = vld [vmem:[%s3015 + $0xf0] sm:$0xff]
  %v3047 = vld [vmem:[%s3015 + $0xf8] sm:$0xff]
  %s3048 = scalar_lea.vmem %s4, 256
  %v3049 = vld [vmem:[%s3048] sm:$0xff]
  %v3050 = vld [vmem:[%s3048 + $0x8] sm:$0xff]
  %v3051 = vld [vmem:[%s3048 + $0x10] sm:$0xff]
  %v3052 = vld [vmem:[%s3048 + $0x18] sm:$0xff]
  %v3053 = vld [vmem:[%s3048 + $0x20] sm:$0xff]
  %v3054 = vld [vmem:[%s3048 + $0x28] sm:$0xff]
  %v3055 = vld [vmem:[%s3048 + $0x30] sm:$0xff]
  %v3056 = vld [vmem:[%s3048 + $0x38] sm:$0xff]
  %v3057 = vld [vmem:[%s3048 + $0x40] sm:$0xff]
  %v3058 = vld [vmem:[%s3048 + $0x48] sm:$0xff]
  %v3059 = vld [vmem:[%s3048 + $0x50] sm:$0xff]
  %v3060 = vld [vmem:[%s3048 + $0x58] sm:$0xff]
  %v3061 = vld [vmem:[%s3048 + $0x60] sm:$0xff]
  %v3062 = vld [vmem:[%s3048 + $0x68] sm:$0xff]
  %v3063 = vld [vmem:[%s3048 + $0x70] sm:$0xff]
  %v3064 = vld [vmem:[%s3048 + $0x78] sm:$0xff]
  %v3065 = vld [vmem:[%s3048 + $0x80] sm:$0xff]
  %v3066 = vld [vmem:[%s3048 + $0x88] sm:$0xff]
  %v3067 = vld [vmem:[%s3048 + $0x90] sm:$0xff]
  %v3068 = vld [vmem:[%s3048 + $0x98] sm:$0xff]
  %v3069 = vld [vmem:[%s3048 + $0xa0] sm:$0xff]
  %v3070 = vld [vmem:[%s3048 + $0xa8] sm:$0xff]
  %v3071 = vld [vmem:[%s3048 + $0xb0] sm:$0xff]
  %v3072 = vld [vmem:[%s3048 + $0xb8] sm:$0xff]
  %v3073 = vld [vmem:[%s3048 + $0xc0] sm:$0xff]
  %v3074 = vld [vmem:[%s3048 + $0xc8] sm:$0xff]
  %v3075 = vld [vmem:[%s3048 + $0xd0] sm:$0xff]
  %v3076 = vld [vmem:[%s3048 + $0xd8] sm:$0xff]
  %v3077 = vld [vmem:[%s3048 + $0xe0] sm:$0xff]
  %v3078 = vld [vmem:[%s3048 + $0xe8] sm:$0xff]
  %v3079 = vld [vmem:[%s3048 + $0xf0] sm:$0xff]
  %v3080 = vld [vmem:[%s3048 + $0xf8] sm:$0xff]
  %s3081 = scalar_lea.vmem %s5, 4
  %v3082 = vld [vmem:[%s3081] sm:$0xf]
  %3083 = vst [vmem:[#allocation4] sm:$0xff] 0.0
  %3084 = vst [vmem:[#allocation5] sm:$0xff] 0.0
  // Predicated region
  $region30: #{lstm_model_forward.2} parent=0 // pred_check
    %p3085 = pneg %p113
  $region31: #{lstm_model_forward.2} parent=0 // pred_check_branch
    %3087 = sbr.rel (%p3085) target = $region33
  $region32: #{lstm_model_forward.2} parent=0 // pred_region
    %v3088 = vld [vmem:[#allocation2] sm:$0xff]
    %v3089 = vld [vmem:[#allocation2 + $0x8] sm:$0xff]
    %v3090 = vld [vmem:[#allocation2 + $0x10] sm:$0xff]
    %v3091 = vld [vmem:[#allocation2 + $0x18] sm:$0xff]
    %v3092 = vld [vmem:[#allocation2 + $0x20] sm:$0xff]
    %v3093 = vld [vmem:[#allocation2 + $0x28] sm:$0xff]
    %v3094 = vld [vmem:[#allocation2 + $0x30] sm:$0xff]
    %v3095 = vld [vmem:[#allocation2 + $0x38] sm:$0xff]
    %v3096 = vld [vmem:[#allocation2 + $0x40] sm:$0xff]
    %v3097 = vld [vmem:[#allocation2 + $0x48] sm:$0xff]
    %v3098 = vld [vmem:[#allocation2 + $0x50] sm:$0xff]
    %v3099 = vld [vmem:[#allocation2 + $0x58] sm:$0xff]
    %v3100 = vld [vmem:[#allocation2 + $0x60] sm:$0xff]
    %v3101 = vld [vmem:[#allocation2 + $0x68] sm:$0xff]
    %v3102 = vld [vmem:[#allocation2 + $0x70] sm:$0xff]
    %v3103 = vld [vmem:[#allocation2 + $0x78] sm:$0xff]
    %v3104 = vpack.c.bf16 %v3089, %v3088
    %v3105 = vpack.c.bf16 %v3091, %v3090
    %v3106 = vpack.c.bf16 %v3093, %v3092
    %v3107 = vpack.c.bf16 %v3095, %v3094
    %v3108 = vpack.c.bf16 %v3097, %v3096
    %v3109 = vpack.c.bf16 %v3099, %v3098
    %v3110 = vpack.c.bf16 %v3101, %v3100
    %v3111 = vpack.c.bf16 %v3103, %v3102
    %v3113 = vlaneseq
    %v3114 = vshrl.u32 %v3113, 7
    %v3115 = vsub.s32 0, %v3114
    %v3116 = vrot.slane %v3082, %v3115
    %v3117 = vlaneseq
    %v3118 = vshrl.u32 %v3117, 7
    %v3119 = vsub.s32 1, %v3118
    %v3120 = vrot.slane %v3082, %v3119
    %v3121 = vlaneseq
    %v3122 = vshrl.u32 %v3121, 7
    %v3123 = vsub.s32 2, %v3122
    %v3124 = vrot.slane %v3082, %v3123
    %v3125 = vlaneseq
    %v3126 = vshrl.u32 %v3125, 7
    %v3127 = vsub.s32 3, %v3126
    %v3128 = vrot.slane %v3082, %v3127
    %v3165 = vunpack.c.l.b16 %v3016
    %v3166 = vunpack.c.h.b16 %v3016
    %v3167 = vunpack.c.l.b16 %v3017
    %v3168 = vunpack.c.h.b16 %v3017
    %v3169 = vunpack.c.l.b16 %v3018
    %v3170 = vunpack.c.h.b16 %v3018
    %v3171 = vunpack.c.l.b16 %v3019
    %v3172 = vunpack.c.h.b16 %v3019
    %v3173 = vunpack.c.l.b16 %v3020
    %v3174 = vunpack.c.h.b16 %v3020
    %v3175 = vunpack.c.l.b16 %v3021
    %v3176 = vunpack.c.h.b16 %v3021
    %v3177 = vunpack.c.l.b16 %v3022
    %v3178 = vunpack.c.h.b16 %v3022
    %v3179 = vunpack.c.l.b16 %v3023
    %v3180 = vunpack.c.h.b16 %v3023
    %v3181 = vunpack.c.l.b16 %v3024
    %v3182 = vunpack.c.h.b16 %v3024
    %v3183 = vunpack.c.l.b16 %v3025
    %v3184 = vunpack.c.h.b16 %v3025
    %v3185 = vunpack.c.l.b16 %v3026
    %v3186 = vunpack.c.h.b16 %v3026
    %v3187 = vunpack.c.l.b16 %v3027
    %v3188 = vunpack.c.h.b16 %v3027
    %v3189 = vunpack.c.l.b16 %v3028
    %v3190 = vunpack.c.h.b16 %v3028
    %v3191 = vunpack.c.l.b16 %v3029
    %v3192 = vunpack.c.h.b16 %v3029
    %v3193 = vunpack.c.l.b16 %v3030
    %v3194 = vunpack.c.h.b16 %v3030
    %v3195 = vunpack.c.l.b16 %v3031
    %v3196 = vunpack.c.h.b16 %v3031
    %v3197 = vunpack.c.l.b16 %v3032
    %v3198 = vunpack.c.h.b16 %v3032
    %v3199 = vunpack.c.l.b16 %v3033
    %v3200 = vunpack.c.h.b16 %v3033
    %v3201 = vunpack.c.l.b16 %v3034
    %v3202 = vunpack.c.h.b16 %v3034
    %v3203 = vunpack.c.l.b16 %v3035
    %v3204 = vunpack.c.h.b16 %v3035
    %v3205 = vunpack.c.l.b16 %v3036
    %v3206 = vunpack.c.h.b16 %v3036
    %v3207 = vunpack.c.l.b16 %v3037
    %v3208 = vunpack.c.h.b16 %v3037
    %v3209 = vunpack.c.l.b16 %v3038
    %v3210 = vunpack.c.h.b16 %v3038
    %v3211 = vunpack.c.l.b16 %v3039
    %v3212 = vunpack.c.h.b16 %v3039
    %v3213 = vunpack.c.l.b16 %v3040
    %v3214 = vunpack.c.h.b16 %v3040
    %v3215 = vunpack.c.l.b16 %v3041
    %v3216 = vunpack.c.h.b16 %v3041
    %v3217 = vunpack.c.l.b16 %v3042
    %v3218 = vunpack.c.h.b16 %v3042
    %v3219 = vunpack.c.l.b16 %v3043
    %v3220 = vunpack.c.h.b16 %v3043
    %v3221 = vunpack.c.l.b16 %v3044
    %v3222 = vunpack.c.h.b16 %v3044
    %v3223 = vunpack.c.l.b16 %v3045
    %v3224 = vunpack.c.h.b16 %v3045
    %v3225 = vunpack.c.l.b16 %v3046
    %v3226 = vunpack.c.h.b16 %v3046
    %v3227 = vunpack.c.l.b16 %v3047
    %v3228 = vunpack.c.h.b16 %v3047
    %v3229 = vpack.c.b16 %v3169, %v3165
    %v3230 = vpack.c.b16 %v3170, %v3166
    %v3231 = vpack.c.b16 %v3171, %v3167
    %v3232 = vpack.c.b16 %v3172, %v3168
    %v3233 = vpack.c.b16 %v3177, %v3173
    %v3234 = vpack.c.b16 %v3178, %v3174
    %v3235 = vpack.c.b16 %v3179, %v3175
    %v3236 = vpack.c.b16 %v3180, %v3176
    %v3237 = vpack.c.b16 %v3185, %v3181
    %v3238 = vpack.c.b16 %v3186, %v3182
    %v3239 = vpack.c.b16 %v3187, %v3183
    %v3240 = vpack.c.b16 %v3188, %v3184
    %v3241 = vpack.c.b16 %v3193, %v3189
    %v3242 = vpack.c.b16 %v3194, %v3190
    %v3243 = vpack.c.b16 %v3195, %v3191
    %v3244 = vpack.c.b16 %v3196, %v3192
    %v3245 = vpack.c.b16 %v3201, %v3197
    %v3246 = vpack.c.b16 %v3202, %v3198
    %v3247 = vpack.c.b16 %v3203, %v3199
    %v3248 = vpack.c.b16 %v3204, %v3200
    %v3249 = vpack.c.b16 %v3209, %v3205
    %v3250 = vpack.c.b16 %v3210, %v3206
    %v3251 = vpack.c.b16 %v3211, %v3207
    %v3252 = vpack.c.b16 %v3212, %v3208
    %v3253 = vpack.c.b16 %v3217, %v3213
    %v3254 = vpack.c.b16 %v3218, %v3214
    %v3255 = vpack.c.b16 %v3219, %v3215
    %v3256 = vpack.c.b16 %v3220, %v3216
    %v3257 = vpack.c.b16 %v3225, %v3221
    %v3258 = vpack.c.b16 %v3226, %v3222
    %v3259 = vpack.c.b16 %v3227, %v3223
    %v3260 = vpack.c.b16 %v3228, %v3224
    %3293 = vmatprep.subr.bf16.mxu0 %v3258
    %3294 = vmatpush1.bf16.msra.mxu0 %v3257
    %3295 = vmatprep.subr.bf16.mxu0 %v3254
    %3296 = vmatpush1.bf16.msra.mxu0 %v3253
    %3297 = vmatprep.subr.bf16.mxu0 %v3250
    %3298 = vmatpush1.bf16.msra.mxu0 %v3249
    %3299 = vmatprep.subr.bf16.mxu0 %v3246
    %3300 = vmatpush1.bf16.msra.mxu0 %v3245
    %3301 = vmatprep.subr.bf16.mxu0 %v3242
    %3302 = vmatpush1.bf16.msra.mxu0 %v3241
    %3303 = vmatprep.subr.bf16.mxu0 %v3238
    %3304 = vmatpush1.bf16.msra.mxu0 %v3237
    %3305 = vmatprep.subr.bf16.mxu0 %v3234
    %3306 = vmatpush1.bf16.msra.mxu0 %v3233
    %3307 = vmatprep.subr.bf16.mxu0 %v3230
    %3308 = vmatpush1.bf16.msra.mxu0 %v3229
    %3309 = vmatprep.subr.bf16.mxu0 0
    %3310 = vmatpush2.bf16.msra.mxu0 0
    %3311 = vmatprep.subr.bf16.mxu0 0
    %3312 = vmatpush2.bf16.msra.mxu0 0
    %3313 = vmatprep.subr.bf16.mxu0 0
    %3314 = vmatpush2.bf16.msra.mxu0 0
    %3315 = vmatprep.subr.bf16.mxu0 0
    %3316 = vmatpush2.bf16.msra.mxu0 0
    %3317 = vmatprep.subr.bf16.mxu0 0
    %3318 = vmatpush2.bf16.msra.mxu0 0
    %3319 = vmatprep.subr.bf16.mxu0 0
    %3320 = vmatpush2.bf16.msra.mxu0 0
    %3321 = vmatprep.subr.bf16.mxu0 0
    %3322 = vmatpush2.bf16.msra.mxu0 0
    %3323 = vmatprep.subr.bf16.mxu0 0
    %3324 = vmatpush2.bf16.msra.mxu0 0
    %3325 = vmatprep.mubr.bf16.mxu0 0
    %3326 = vmatmul.mubr.bf16.gmra.mxu0 %v3104
    %v3327 = vpop.f32.mrf.mxu0
    %v3328 = vadd.f32 %v3116, %v3327
    %v3329 = vpop.f32.mrf.mxu0
    %v3330 = vadd.f32 %v3120, %v3329
    %v3331 = vpop.f32.mrf.mxu0
    %v3332 = vadd.f32 %v3116, %v3331
    %v3333 = vpop.f32.mrf.mxu0
    %v3334 = vadd.f32 %v3120, %v3333
    %3335 = vmatprep.mubr.bf16.mxu0 0
    %3336 = vmatmul.mubr.bf16.gmra.mxu0 %v3105
    %v3337 = vpop.f32.mrf.mxu0
    %v3338 = vadd.f32 %v3116, %v3337
    %v3339 = vpop.f32.mrf.mxu0
    %v3340 = vadd.f32 %v3120, %v3339
    %v3341 = vpop.f32.mrf.mxu0
    %v3342 = vadd.f32 %v3116, %v3341
    %v3343 = vpop.f32.mrf.mxu0
    %v3344 = vadd.f32 %v3120, %v3343
    %3345 = vmatprep.mubr.bf16.mxu0 0
    %3346 = vmatmul.mubr.bf16.gmra.mxu0 %v3106
    %v3347 = vpop.f32.mrf.mxu0
    %v3348 = vadd.f32 %v3116, %v3347
    %v3349 = vpop.f32.mrf.mxu0
    %v3350 = vadd.f32 %v3120, %v3349
    %v3351 = vpop.f32.mrf.mxu0
    %v3352 = vadd.f32 %v3116, %v3351
    %v3353 = vpop.f32.mrf.mxu0
    %v3354 = vadd.f32 %v3120, %v3353
    %3355 = vmatprep.mubr.bf16.mxu0 0
    %3356 = vmatmul.mubr.bf16.gmra.mxu0 %v3107
    %v3357 = vpop.f32.mrf.mxu0
    %v3358 = vadd.f32 %v3116, %v3357
    %v3359 = vpop.f32.mrf.mxu0
    %v3360 = vadd.f32 %v3120, %v3359
    %v3361 = vpop.f32.mrf.mxu0
    %v3362 = vadd.f32 %v3116, %v3361
    %v3363 = vpop.f32.mrf.mxu0
    %v3364 = vadd.f32 %v3120, %v3363
    %3365 = vmatprep.mubr.bf16.mxu0 0
    %3366 = vmatmul.mubr.bf16.gmra.mxu0 %v3108
    %v3367 = vpop.f32.mrf.mxu0
    %v3368 = vadd.f32 %v3116, %v3367
    %v3369 = vpop.f32.mrf.mxu0
    %v3370 = vadd.f32 %v3120, %v3369
    %v3371 = vpop.f32.mrf.mxu0
    %v3372 = vadd.f32 %v3116, %v3371
    %v3373 = vpop.f32.mrf.mxu0
    %v3374 = vadd.f32 %v3120, %v3373
    %3375 = vmatprep.mubr.bf16.mxu0 0
    %3376 = vmatmul.mubr.bf16.gmra.mxu0 %v3109
    %v3377 = vpop.f32.mrf.mxu0
    %v3378 = vadd.f32 %v3116, %v3377
    %v3379 = vpop.f32.mrf.mxu0
    %v3380 = vadd.f32 %v3120, %v3379
    %v3381 = vpop.f32.mrf.mxu0
    %v3382 = vadd.f32 %v3116, %v3381
    %v3383 = vpop.f32.mrf.mxu0
    %v3384 = vadd.f32 %v3120, %v3383
    %3385 = vmatprep.mubr.bf16.mxu0 0
    %3386 = vmatmul.mubr.bf16.gmra.mxu0 %v3110
    %v3387 = vpop.f32.mrf.mxu0
    %v3388 = vadd.f32 %v3116, %v3387
    %v3389 = vpop.f32.mrf.mxu0
    %v3390 = vadd.f32 %v3120, %v3389
    %v3391 = vpop.f32.mrf.mxu0
    %v3392 = vadd.f32 %v3116, %v3391
    %v3393 = vpop.f32.mrf.mxu0
    %v3394 = vadd.f32 %v3120, %v3393
    %3395 = vmatprep.mubr.bf16.mxu0 0
    %3396 = vmatmul.mubr.bf16.gmra.mxu0 %v3111
    %v3397 = vpop.f32.mrf.mxu0
    %v3398 = vadd.f32 %v3116, %v3397
    %v3399 = vpop.f32.mrf.mxu0
    %v3400 = vadd.f32 %v3120, %v3399
    %v3401 = vpop.f32.mrf.mxu0
    %v3402 = vadd.f32 %v3116, %v3401
    %v3403 = vpop.f32.mrf.mxu0
    %v3404 = vadd.f32 %v3120, %v3403
    %3405 = vdwg.mxu0
    %3406 = vmatprep.subr.bf16.mxu0 %v3260
    %3407 = vmatpush1.bf16.msra.mxu0 %v3259
    %3408 = vmatprep.subr.bf16.mxu0 %v3256
    %3409 = vmatpush1.bf16.msra.mxu0 %v3255
    %3410 = vmatprep.subr.bf16.mxu0 %v3252
    %3411 = vmatpush1.bf16.msra.mxu0 %v3251
    %3412 = vmatprep.subr.bf16.mxu0 %v3248
    %3413 = vmatpush1.bf16.msra.mxu0 %v3247
    %3414 = vmatprep.subr.bf16.mxu0 %v3244
    %3415 = vmatpush1.bf16.msra.mxu0 %v3243
    %3416 = vmatprep.subr.bf16.mxu0 %v3240
    %3417 = vmatpush1.bf16.msra.mxu0 %v3239
    %3418 = vmatprep.subr.bf16.mxu0 %v3236
    %3419 = vmatpush1.bf16.msra.mxu0 %v3235
    %3420 = vmatprep.subr.bf16.mxu0 %v3232
    %3421 = vmatpush1.bf16.msra.mxu0 %v3231
    %3422 = vmatprep.subr.bf16.mxu0 0
    %3423 = vmatpush2.bf16.msra.mxu0 0
    %3424 = vmatprep.subr.bf16.mxu0 0
    %3425 = vmatpush2.bf16.msra.mxu0 0
    %3426 = vmatprep.subr.bf16.mxu0 0
    %3427 = vmatpush2.bf16.msra.mxu0 0
    %3428 = vmatprep.subr.bf16.mxu0 0
    %3429 = vmatpush2.bf16.msra.mxu0 0
    %3430 = vmatprep.subr.bf16.mxu0 0
    %3431 = vmatpush2.bf16.msra.mxu0 0
    %3432 = vmatprep.subr.bf16.mxu0 0
    %3433 = vmatpush2.bf16.msra.mxu0 0
    %3434 = vmatprep.subr.bf16.mxu0 0
    %3435 = vmatpush2.bf16.msra.mxu0 0
    %3436 = vmatprep.subr.bf16.mxu0 0
    %3437 = vmatpush2.bf16.msra.mxu0 0
    %3438 = vmatprep.mubr.bf16.mxu0 0
    %3439 = vmatmul.mubr.bf16.gmra.mxu0 %v3104
    %v3440 = vpop.f32.mrf.mxu0
    %v3441 = vadd.f32 %v3124, %v3440
    %v3442 = vpop.f32.mrf.mxu0
    %v3443 = vadd.f32 %v3128, %v3442
    %v3444 = vpop.f32.mrf.mxu0
    %v3445 = vadd.f32 %v3124, %v3444
    %v3446 = vpop.f32.mrf.mxu0
    %v3447 = vadd.f32 %v3128, %v3446
    %3448 = vmatprep.mubr.bf16.mxu0 0
    %3449 = vmatmul.mubr.bf16.gmra.mxu0 %v3105
    %v3450 = vpop.f32.mrf.mxu0
    %v3451 = vadd.f32 %v3124, %v3450
    %v3452 = vpop.f32.mrf.mxu0
    %v3453 = vadd.f32 %v3128, %v3452
    %v3454 = vpop.f32.mrf.mxu0
    %v3455 = vadd.f32 %v3124, %v3454
    %v3456 = vpop.f32.mrf.mxu0
    %v3457 = vadd.f32 %v3128, %v3456
    %3458 = vmatprep.mubr.bf16.mxu0 0
    %3459 = vmatmul.mubr.bf16.gmra.mxu0 %v3106
    %v3460 = vpop.f32.mrf.mxu0
    %v3461 = vadd.f32 %v3124, %v3460
    %v3462 = vpop.f32.mrf.mxu0
    %v3463 = vadd.f32 %v3128, %v3462
    %v3464 = vpop.f32.mrf.mxu0
    %v3465 = vadd.f32 %v3124, %v3464
    %v3466 = vpop.f32.mrf.mxu0
    %v3467 = vadd.f32 %v3128, %v3466
    %3468 = vmatprep.mubr.bf16.mxu0 0
    %3469 = vmatmul.mubr.bf16.gmra.mxu0 %v3107
    %v3470 = vpop.f32.mrf.mxu0
    %v3471 = vadd.f32 %v3124, %v3470
    %v3472 = vpop.f32.mrf.mxu0
    %v3473 = vadd.f32 %v3128, %v3472
    %v3474 = vpop.f32.mrf.mxu0
    %v3475 = vadd.f32 %v3124, %v3474
    %v3476 = vpop.f32.mrf.mxu0
    %v3477 = vadd.f32 %v3128, %v3476
    %3478 = vmatprep.mubr.bf16.mxu0 0
    %3479 = vmatmul.mubr.bf16.gmra.mxu0 %v3108
    %v3480 = vpop.f32.mrf.mxu0
    %v3481 = vadd.f32 %v3124, %v3480
    %v3482 = vpop.f32.mrf.mxu0
    %v3483 = vadd.f32 %v3128, %v3482
    %v3484 = vpop.f32.mrf.mxu0
    %v3485 = vadd.f32 %v3124, %v3484
    %v3486 = vpop.f32.mrf.mxu0
    %v3487 = vadd.f32 %v3128, %v3486
    %3488 = vmatprep.mubr.bf16.mxu0 0
    %3489 = vmatmul.mubr.bf16.gmra.mxu0 %v3109
    %v3490 = vpop.f32.mrf.mxu0
    %v3491 = vadd.f32 %v3124, %v3490
    %v3492 = vpop.f32.mrf.mxu0
    %v3493 = vadd.f32 %v3128, %v3492
    %v3494 = vpop.f32.mrf.mxu0
    %v3495 = vadd.f32 %v3124, %v3494
    %v3496 = vpop.f32.mrf.mxu0
    %v3497 = vadd.f32 %v3128, %v3496
    %3498 = vmatprep.mubr.bf16.mxu0 0
    %3499 = vmatmul.mubr.bf16.gmra.mxu0 %v3110
    %v3500 = vpop.f32.mrf.mxu0
    %v3501 = vadd.f32 %v3124, %v3500
    %v3502 = vpop.f32.mrf.mxu0
    %v3503 = vadd.f32 %v3128, %v3502
    %v3504 = vpop.f32.mrf.mxu0
    %v3505 = vadd.f32 %v3124, %v3504
    %v3506 = vpop.f32.mrf.mxu0
    %v3507 = vadd.f32 %v3128, %v3506
    %3508 = vmatprep.mubr.bf16.mxu0 0
    %3509 = vmatmul.mubr.bf16.gmra.mxu0 %v3111
    %v3510 = vpop.f32.mrf.mxu0
    %v3511 = vadd.f32 %v3124, %v3510
    %v3512 = vpop.f32.mrf.mxu0
    %v3513 = vadd.f32 %v3128, %v3512
    %v3514 = vpop.f32.mrf.mxu0
    %v3515 = vadd.f32 %v3124, %v3514
    %v3516 = vpop.f32.mrf.mxu0
    %v3517 = vadd.f32 %v3128, %v3516
    %3518 = vdwg.mxu0
    %3519 = vst [vmem:[#allocation3] sm:$0xff] %v3328
    %3520 = vst [vmem:[#allocation3 + $0x8] sm:$0xff] %v3330
    %3521 = vst [vmem:[#allocation3 + $0x10] sm:$0xff] %v3441
    %3522 = vst [vmem:[#allocation3 + $0x18] sm:$0xff] %v3443
    %3523 = vst [vmem:[#allocation3 + $0x20] sm:$0xff] %v3332
    %3524 = vst [vmem:[#allocation3 + $0x28] sm:$0xff] %v3334
    %3525 = vst [vmem:[#allocation3 + $0x30] sm:$0xff] %v3445
    %3526 = vst [vmem:[#allocation3 + $0x38] sm:$0xff] %v3447
    %3527 = vst [vmem:[#allocation3 + $0x40] sm:$0xff] %v3338
    %3528 = vst [vmem:[#allocation3 + $0x48] sm:$0xff] %v3340
    %3529 = vst [vmem:[#allocation3 + $0x50] sm:$0xff] %v3451
    %3530 = vst [vmem:[#allocation3 + $0x58] sm:$0xff] %v3453
    %3531 = vst [vmem:[#allocation3 + $0x60] sm:$0xff] %v3342
    %3532 = vst [vmem:[#allocation3 + $0x68] sm:$0xff] %v3344
    %3533 = vst [vmem:[#allocation3 + $0x70] sm:$0xff] %v3455
    %3534 = vst [vmem:[#allocation3 + $0x78] sm:$0xff] %v3457
    %3535 = vst [vmem:[#allocation3 + $0x80] sm:$0xff] %v3348
    %3536 = vst [vmem:[#allocation3 + $0x88] sm:$0xff] %v3350
    %3537 = vst [vmem:[#allocation3 + $0x90] sm:$0xff] %v3461
    %3538 = vst [vmem:[#allocation3 + $0x98] sm:$0xff] %v3463
    %3539 = vst [vmem:[#allocation3 + $0xa0] sm:$0xff] %v3352
    %3540 = vst [vmem:[#allocation3 + $0xa8] sm:$0xff] %v3354
    %3541 = vst [vmem:[#allocation3 + $0xb0] sm:$0xff] %v3465
    %3542 = vst [vmem:[#allocation3 + $0xb8] sm:$0xff] %v3467
    %3543 = vst [vmem:[#allocation3 + $0xc0] sm:$0xff] %v3358
    %3544 = vst [vmem:[#allocation3 + $0xc8] sm:$0xff] %v3360
    %3545 = vst [vmem:[#allocation3 + $0xd0] sm:$0xff] %v3471
    %3546 = vst [vmem:[#allocation3 + $0xd8] sm:$0xff] %v3473
    %3547 = vst [vmem:[#allocation3 + $0xe0] sm:$0xff] %v3362
    %3548 = vst [vmem:[#allocation3 + $0xe8] sm:$0xff] %v3364
    %3549 = vst [vmem:[#allocation3 + $0xf0] sm:$0xff] %v3475
    %3550 = vst [vmem:[#allocation3 + $0xf8] sm:$0xff] %v3477
    %3551 = vst [vmem:[#allocation3 + $0x100] sm:$0xff] %v3368
    %3552 = vst [vmem:[#allocation3 + $0x108] sm:$0xff] %v3370
    %3553 = vst [vmem:[#allocation3 + $0x110] sm:$0xff] %v3481
    %3554 = vst [vmem:[#allocation3 + $0x118] sm:$0xff] %v3483
    %3555 = vst [vmem:[#allocation3 + $0x120] sm:$0xff] %v3372
    %3556 = vst [vmem:[#allocation3 + $0x128] sm:$0xff] %v3374
    %3557 = vst [vmem:[#allocation3 + $0x130] sm:$0xff] %v3485
    %3558 = vst [vmem:[#allocation3 + $0x138] sm:$0xff] %v3487
    %3559 = vst [vmem:[#allocation3 + $0x140] sm:$0xff] %v3378
    %3560 = vst [vmem:[#allocation3 + $0x148] sm:$0xff] %v3380
    %3561 = vst [vmem:[#allocation3 + $0x150] sm:$0xff] %v3491
    %3562 = vst [vmem:[#allocation3 + $0x158] sm:$0xff] %v3493
    %3563 = vst [vmem:[#allocation3 + $0x160] sm:$0xff] %v3382
    %3564 = vst [vmem:[#allocation3 + $0x168] sm:$0xff] %v3384
    %3565 = vst [vmem:[#allocation3 + $0x170] sm:$0xff] %v3495
    %3566 = vst [vmem:[#allocation3 + $0x178] sm:$0xff] %v3497
    %3567 = vst [vmem:[#allocation3 + $0x180] sm:$0xff] %v3388
    %3568 = vst [vmem:[#allocation3 + $0x188] sm:$0xff] %v3390
    %3569 = vst [vmem:[#allocation3 + $0x190] sm:$0xff] %v3501
    %3570 = vst [vmem:[#allocation3 + $0x198] sm:$0xff] %v3503
    %3571 = vst [vmem:[#allocation3 + $0x1a0] sm:$0xff] %v3392
    %3572 = vst [vmem:[#allocation3 + $0x1a8] sm:$0xff] %v3394
    %3573 = vst [vmem:[#allocation3 + $0x1b0] sm:$0xff] %v3505
    %3574 = vst [vmem:[#allocation3 + $0x1b8] sm:$0xff] %v3507
    %3575 = vst [vmem:[#allocation3 + $0x1c0] sm:$0xff] %v3398
    %3576 = vst [vmem:[#allocation3 + $0x1c8] sm:$0xff] %v3400
    %3577 = vst [vmem:[#allocation3 + $0x1d0] sm:$0xff] %v3511
    %3578 = vst [vmem:[#allocation3 + $0x1d8] sm:$0xff] %v3513
    %3579 = vst [vmem:[#allocation3 + $0x1e0] sm:$0xff] %v3402
    %3580 = vst [vmem:[#allocation3 + $0x1e8] sm:$0xff] %v3404
    %3581 = vst [vmem:[#allocation3 + $0x1f0] sm:$0xff] %v3515
    %3582 = vst [vmem:[#allocation3 + $0x1f8] sm:$0xff] %v3517
    %v3583 = vld [vmem:[#allocation4] sm:$0xff]
    %v3584 = vld [vmem:[#allocation5] sm:$0xff]
    %s3585 = smul.u32 0, 4
    %s3586 = smul.addr %s3585, 8
    %s3587 = scalar_lea.vmem [#allocation3], %s3586
    %v3588 = vld [vmem:[%s3587] sm:$0xff]
    %v3589 = vld [vmem:[%s3587 + $0x8] sm:$0xff]
    %v3590 = vld [vmem:[%s3587 + $0x10] sm:$0xff]
    %v3591 = vld [vmem:[%s3587 + $0x18] sm:$0xff]
    %v3592 = vpack.c.bf16 %v3583, %v3583
    %v3625 = vunpack.c.l.b16 %v3049
    %v3626 = vunpack.c.h.b16 %v3049
    %v3627 = vunpack.c.l.b16 %v3050
    %v3628 = vunpack.c.h.b16 %v3050
    %v3629 = vunpack.c.l.b16 %v3051
    %v3630 = vunpack.c.h.b16 %v3051
    %v3631 = vunpack.c.l.b16 %v3052
    %v3632 = vunpack.c.h.b16 %v3052
    %v3633 = vunpack.c.l.b16 %v3053
    %v3634 = vunpack.c.h.b16 %v3053
    %v3635 = vunpack.c.l.b16 %v3054
    %v3636 = vunpack.c.h.b16 %v3054
    %v3637 = vunpack.c.l.b16 %v3055
    %v3638 = vunpack.c.h.b16 %v3055
    %v3639 = vunpack.c.l.b16 %v3056
    %v3640 = vunpack.c.h.b16 %v3056
    %v3641 = vunpack.c.l.b16 %v3057
    %v3642 = vunpack.c.h.b16 %v3057
    %v3643 = vunpack.c.l.b16 %v3058
    %v3644 = vunpack.c.h.b16 %v3058
    %v3645 = vunpack.c.l.b16 %v3059
    %v3646 = vunpack.c.h.b16 %v3059
    %v3647 = vunpack.c.l.b16 %v3060
    %v3648 = vunpack.c.h.b16 %v3060
    %v3649 = vunpack.c.l.b16 %v3061
    %v3650 = vunpack.c.h.b16 %v3061
    %v3651 = vunpack.c.l.b16 %v3062
    %v3652 = vunpack.c.h.b16 %v3062
    %v3653 = vunpack.c.l.b16 %v3063
    %v3654 = vunpack.c.h.b16 %v3063
    %v3655 = vunpack.c.l.b16 %v3064
    %v3656 = vunpack.c.h.b16 %v3064
    %v3657 = vunpack.c.l.b16 %v3065
    %v3658 = vunpack.c.h.b16 %v3065
    %v3659 = vunpack.c.l.b16 %v3066
    %v3660 = vunpack.c.h.b16 %v3066
    %v3661 = vunpack.c.l.b16 %v3067
    %v3662 = vunpack.c.h.b16 %v3067
    %v3663 = vunpack.c.l.b16 %v3068
    %v3664 = vunpack.c.h.b16 %v3068
    %v3665 = vunpack.c.l.b16 %v3069
    %v3666 = vunpack.c.h.b16 %v3069
    %v3667 = vunpack.c.l.b16 %v3070
    %v3668 = vunpack.c.h.b16 %v3070
    %v3669 = vunpack.c.l.b16 %v3071
    %v3670 = vunpack.c.h.b16 %v3071
    %v3671 = vunpack.c.l.b16 %v3072
    %v3672 = vunpack.c.h.b16 %v3072
    %v3673 = vunpack.c.l.b16 %v3073
    %v3674 = vunpack.c.h.b16 %v3073
    %v3675 = vunpack.c.l.b16 %v3074
    %v3676 = vunpack.c.h.b16 %v3074
    %v3677 = vunpack.c.l.b16 %v3075
    %v3678 = vunpack.c.h.b16 %v3075
    %v3679 = vunpack.c.l.b16 %v3076
    %v3680 = vunpack.c.h.b16 %v3076
    %v3681 = vunpack.c.l.b16 %v3077
    %v3682 = vunpack.c.h.b16 %v3077
    %v3683 = vunpack.c.l.b16 %v3078
    %v3684 = vunpack.c.h.b16 %v3078
    %v3685 = vunpack.c.l.b16 %v3079
    %v3686 = vunpack.c.h.b16 %v3079
    %v3687 = vunpack.c.l.b16 %v3080
    %v3688 = vunpack.c.h.b16 %v3080
    %v3689 = vpack.c.b16 %v3629, %v3625
    %v3690 = vpack.c.b16 %v3630, %v3626
    %v3691 = vpack.c.b16 %v3631, %v3627
    %v3692 = vpack.c.b16 %v3632, %v3628
    %v3693 = vpack.c.b16 %v3637, %v3633
    %v3694 = vpack.c.b16 %v3638, %v3634
    %v3695 = vpack.c.b16 %v3639, %v3635
    %v3696 = vpack.c.b16 %v3640, %v3636
    %v3697 = vpack.c.b16 %v3645, %v3641
    %v3698 = vpack.c.b16 %v3646, %v3642
    %v3699 = vpack.c.b16 %v3647, %v3643
    %v3700 = vpack.c.b16 %v3648, %v3644
    %v3701 = vpack.c.b16 %v3653, %v3649
    %v3702 = vpack.c.b16 %v3654, %v3650
    %v3703 = vpack.c.b16 %v3655, %v3651
    %v3704 = vpack.c.b16 %v3656, %v3652
    %v3705 = vpack.c.b16 %v3661, %v3657
    %v3706 = vpack.c.b16 %v3662, %v3658
    %v3707 = vpack.c.b16 %v3663, %v3659
    %v3708 = vpack.c.b16 %v3664, %v3660
    %v3709 = vpack.c.b16 %v3669, %v3665
    %v3710 = vpack.c.b16 %v3670, %v3666
    %v3711 = vpack.c.b16 %v3671, %v3667
    %v3712 = vpack.c.b16 %v3672, %v3668
    %v3713 = vpack.c.b16 %v3677, %v3673
    %v3714 = vpack.c.b16 %v3678, %v3674
    %v3715 = vpack.c.b16 %v3679, %v3675
    %v3716 = vpack.c.b16 %v3680, %v3676
    %v3717 = vpack.c.b16 %v3685, %v3681
    %v3718 = vpack.c.b16 %v3686, %v3682
    %v3719 = vpack.c.b16 %v3687, %v3683
    %v3720 = vpack.c.b16 %v3688, %v3684
    %3753 = vmatprep.subr.bf16.mxu0 %v3718
    %3754 = vmatpush1.bf16.msra.mxu0 %v3717
    %3755 = vmatprep.subr.bf16.mxu0 %v3714
    %3756 = vmatpush1.bf16.msra.mxu0 %v3713
    %3757 = vmatprep.subr.bf16.mxu0 %v3710
    %3758 = vmatpush1.bf16.msra.mxu0 %v3709
    %3759 = vmatprep.subr.bf16.mxu0 %v3706
    %3760 = vmatpush1.bf16.msra.mxu0 %v3705
    %3761 = vmatprep.subr.bf16.mxu0 %v3702
    %3762 = vmatpush1.bf16.msra.mxu0 %v3701
    %3763 = vmatprep.subr.bf16.mxu0 %v3698
    %3764 = vmatpush1.bf16.msra.mxu0 %v3697
    %3765 = vmatprep.subr.bf16.mxu0 %v3694
    %3766 = vmatpush1.bf16.msra.mxu0 %v3693
    %3767 = vmatprep.subr.bf16.mxu0 %v3690
    %3768 = vmatpush1.bf16.msra.mxu0 %v3689
    %3769 = vmatprep.subr.bf16.mxu0 0
    %3770 = vmatpush2.bf16.msra.mxu0 0
    %3771 = vmatprep.subr.bf16.mxu0 0
    %3772 = vmatpush2.bf16.msra.mxu0 0
    %3773 = vmatprep.subr.bf16.mxu0 0
    %3774 = vmatpush2.bf16.msra.mxu0 0
    %3775 = vmatprep.subr.bf16.mxu0 0
    %3776 = vmatpush2.bf16.msra.mxu0 0
    %3777 = vmatprep.subr.bf16.mxu0 0
    %3778 = vmatpush2.bf16.msra.mxu0 0
    %3779 = vmatprep.subr.bf16.mxu0 0
    %3780 = vmatpush2.bf16.msra.mxu0 0
    %3781 = vmatprep.subr.bf16.mxu0 0
    %3782 = vmatpush2.bf16.msra.mxu0 0
    %3783 = vmatprep.subr.bf16.mxu0 0
    %3784 = vmatpush2.bf16.msra.mxu0 0
    %3785 = vmatprep.mubr.bf16.mxu0 0
    %3786 = vmatmul.mubr.bf16.gmra.mxu0 %v3592
    %v3787 = vpop.f32.mrf.mxu0
    %v3788 = vadd.f32 0.0, %v3787
    %v3789 = vpop.f32.mrf.mxu0
    %v3790 = vadd.f32 0.0, %v3789
    %v3791 = vpop.f32.mrf.mxu0
    %v3792 = vpop.f32.mrf.mxu0
    %3793 = vdwg.mxu0
    %3794 = vmatprep.subr.bf16.mxu0 %v3720
    %3795 = vmatpush1.bf16.msra.mxu0 %v3719
    %3796 = vmatprep.subr.bf16.mxu0 %v3716
    %3797 = vmatpush1.bf16.msra.mxu0 %v3715
    %3798 = vmatprep.subr.bf16.mxu0 %v3712
    %3799 = vmatpush1.bf16.msra.mxu0 %v3711
    %3800 = vmatprep.subr.bf16.mxu0 %v3708
    %3801 = vmatpush1.bf16.msra.mxu0 %v3707
    %3802 = vmatprep.subr.bf16.mxu0 %v3704
    %3803 = vmatpush1.bf16.msra.mxu0 %v3703
    %3804 = vmatprep.subr.bf16.mxu0 %v3700
    %3805 = vmatpush1.bf16.msra.mxu0 %v3699
    %3806 = vmatprep.subr.bf16.mxu0 %v3696
    %3807 = vmatpush1.bf16.msra.mxu0 %v3695
    %3808 = vmatprep.subr.bf16.mxu0 %v3692
    %3809 = vmatpush1.bf16.msra.mxu0 %v3691
    %3810 = vmatprep.subr.bf16.mxu0 0
    %3811 = vmatpush2.bf16.msra.mxu0 0
    %3812 = vmatprep.subr.bf16.mxu0 0
    %3813 = vmatpush2.bf16.msra.mxu0 0
    %3814 = vmatprep.subr.bf16.mxu0 0
    %3815 = vmatpush2.bf16.msra.mxu0 0
    %3816 = vmatprep.subr.bf16.mxu0 0
    %3817 = vmatpush2.bf16.msra.mxu0 0
    %3818 = vmatprep.subr.bf16.mxu0 0
    %3819 = vmatpush2.bf16.msra.mxu0 0
    %3820 = vmatprep.subr.bf16.mxu0 0
    %3821 = vmatpush2.bf16.msra.mxu0 0
    %3822 = vmatprep.subr.bf16.mxu0 0
    %3823 = vmatpush2.bf16.msra.mxu0 0
    %3824 = vmatprep.subr.bf16.mxu0 0
    %3825 = vmatpush2.bf16.msra.mxu0 0
    %3826 = vmatprep.mubr.bf16.mxu0 0
    %3827 = vmatmul.mubr.bf16.gmra.mxu0 %v3592
    %v3828 = vpop.f32.mrf.mxu0
    %v3829 = vadd.f32 0.0, %v3828
    %v3830 = vpop.f32.mrf.mxu0
    %v3831 = vadd.f32 0.0, %v3830
    %v3832 = vpop.f32.mrf.mxu0
    %v3833 = vpop.f32.mrf.mxu0
    %3834 = vdwg.mxu0
    %v3835 = vadd.f32 %v3588, %v3788
    %v3836 = vadd.f32 %v3589, %v3790
    %v3837 = vadd.f32 %v3590, %v3829
    %v3838 = vadd.f32 %v3591, %v3831
    %v3839 = vpack.c.bf16 %v3835, %v3835
    %v3840 = vpack.c.bf16 %v3836, %v3836
    %v3841 = vpack.c.bf16 %v3837, %v3837
    %v3842 = vpack.c.bf16 %v3838, %v3838
    %v3843 = vxor.u32 %v3839, 2147516416
    %v3845 = vmul.bf16 %v3843, 1069105081
    %v3846 = vpow.bf16.pop %v3845
    %v3847 = vadd.bf16 %v3846, 1065369472
    %v3848 = vrcp.bf16.pop %v3847
    %v3849 = vmul.bf16 1065369472, %v3848
    %v3850 = vunpack.c.l.bf16 %v3849
    %v3851 = vxor.u32 %v3840, 2147516416
    %v3853 = vmul.bf16 %v3851, 1069105081
    %v3854 = vpow.bf16.pop %v3853
    %v3855 = vadd.bf16 %v3854, 1065369472
    %v3856 = vrcp.bf16.pop %v3855
    %v3857 = vmul.bf16 1065369472, %v3856
    %v3858 = vunpack.c.l.bf16 %v3857
    %v3859 = vtanh.bf16.pop %v3841
    %v3860 = vunpack.c.l.bf16 %v3859
    %v3861 = vxor.u32 %v3842, 2147516416
    %v3863 = vmul.bf16 %v3861, 1069105081
    %v3864 = vpow.bf16.pop %v3863
    %v3865 = vadd.bf16 %v3864, 1065369472
    %v3866 = vrcp.bf16.pop %v3865
    %v3867 = vmul.bf16 1065369472, %v3866
    %v3868 = vunpack.c.l.bf16 %v3867
    %v3869 = vmul.f32 %v3858, %v3584
    %v3870 = vmul.f32 %v3850, %v3860
    %v3871 = vadd.f32 %v3869, %v3870
    %v3872 = vtanh.pop %v3871
    %v3873 = vmul.f32 %v3868, %v3872
    %vm3874 = vcmp.gt.s32.totalorder %v24, 0
    %v3875 = vsel %vm3874, 1, 0
    %3876 = vset.pattern.permute.xlu0 0
    %3877 = vperm.xlu0 %3876, %v3875
    %v3878 = vpop.permute.xlu0 %3877
    %vm3879 = vcmp.eq.s32.totalorder %v3878, 1
    %v3880 = vsel %vm3879, %v3873, %v3583
    %v3881 = vsel %vm3879, %v3871, %v3584
    %v3882 = vsel %vm3879, %v3873, 0.0
    %3883 = vst [vmem:[%s6] sm:$0xff] %v3882
    %s3884 = smul.u32 1, 4
    %s3885 = smul.addr %s3884, 8
    %s3886 = scalar_lea.vmem [#allocation3], %s3885
    %v3887 = vld [vmem:[%s3886] sm:$0xff]
    %v3888 = vld [vmem:[%s3886 + $0x8] sm:$0xff]
    %v3889 = vld [vmem:[%s3886 + $0x10] sm:$0xff]
    %v3890 = vld [vmem:[%s3886 + $0x18] sm:$0xff]
    %v3891 = vpack.c.bf16 %v3880, %v3880
    %3892 = vmatprep.subr.bf16.mxu0 %v3718
    %3893 = vmatpush1.bf16.msra.mxu0 %v3717
    %3894 = vmatprep.subr.bf16.mxu0 %v3714
    %3895 = vmatpush1.bf16.msra.mxu0 %v3713
    %3896 = vmatprep.subr.bf16.mxu0 %v3710
    %3897 = vmatpush1.bf16.msra.mxu0 %v3709
    %3898 = vmatprep.subr.bf16.mxu0 %v3706
    %3899 = vmatpush1.bf16.msra.mxu0 %v3705
    %3900 = vmatprep.subr.bf16.mxu0 %v3702
    %3901 = vmatpush1.bf16.msra.mxu0 %v3701
    %3902 = vmatprep.subr.bf16.mxu0 %v3698
    %3903 = vmatpush1.bf16.msra.mxu0 %v3697
    %3904 = vmatprep.subr.bf16.mxu0 %v3694
    %3905 = vmatpush1.bf16.msra.mxu0 %v3693
    %3906 = vmatprep.subr.bf16.mxu0 %v3690
    %3907 = vmatpush1.bf16.msra.mxu0 %v3689
    %3908 = vmatprep.subr.bf16.mxu0 0
    %3909 = vmatpush2.bf16.msra.mxu0 0
    %3910 = vmatprep.subr.bf16.mxu0 0
    %3911 = vmatpush2.bf16.msra.mxu0 0
    %3912 = vmatprep.subr.bf16.mxu0 0
    %3913 = vmatpush2.bf16.msra.mxu0 0
    %3914 = vmatprep.subr.bf16.mxu0 0
    %3915 = vmatpush2.bf16.msra.mxu0 0
    %3916 = vmatprep.subr.bf16.mxu0 0
    %3917 = vmatpush2.bf16.msra.mxu0 0
    %3918 = vmatprep.subr.bf16.mxu0 0
    %3919 = vmatpush2.bf16.msra.mxu0 0
    %3920 = vmatprep.subr.bf16.mxu0 0
    %3921 = vmatpush2.bf16.msra.mxu0 0
    %3922 = vmatprep.subr.bf16.mxu0 0
    %3923 = vmatpush2.bf16.msra.mxu0 0
    %3924 = vmatprep.mubr.bf16.mxu0 0
    %3925 = vmatmul.mubr.bf16.gmra.mxu0 %v3891
    %v3926 = vpop.f32.mrf.mxu0
    %v3927 = vadd.f32 0.0, %v3926
    %v3928 = vpop.f32.mrf.mxu0
    %v3929 = vadd.f32 0.0, %v3928
    %v3930 = vpop.f32.mrf.mxu0
    %v3931 = vpop.f32.mrf.mxu0
    %3932 = vdwg.mxu0
    %3933 = vmatprep.subr.bf16.mxu0 %v3720
    %3934 = vmatpush1.bf16.msra.mxu0 %v3719
    %3935 = vmatprep.subr.bf16.mxu0 %v3716
    %3936 = vmatpush1.bf16.msra.mxu0 %v3715
    %3937 = vmatprep.subr.bf16.mxu0 %v3712
    %3938 = vmatpush1.bf16.msra.mxu0 %v3711
    %3939 = vmatprep.subr.bf16.mxu0 %v3708
    %3940 = vmatpush1.bf16.msra.mxu0 %v3707
    %3941 = vmatprep.subr.bf16.mxu0 %v3704
    %3942 = vmatpush1.bf16.msra.mxu0 %v3703
    %3943 = vmatprep.subr.bf16.mxu0 %v3700
    %3944 = vmatpush1.bf16.msra.mxu0 %v3699
    %3945 = vmatprep.subr.bf16.mxu0 %v3696
    %3946 = vmatpush1.bf16.msra.mxu0 %v3695
    %3947 = vmatprep.subr.bf16.mxu0 %v3692
    %3948 = vmatpush1.bf16.msra.mxu0 %v3691
    %3949 = vmatprep.subr.bf16.mxu0 0
    %3950 = vmatpush2.bf16.msra.mxu0 0
    %3951 = vmatprep.subr.bf16.mxu0 0
    %3952 = vmatpush2.bf16.msra.mxu0 0
    %3953 = vmatprep.subr.bf16.mxu0 0
    %3954 = vmatpush2.bf16.msra.mxu0 0
    %3955 = vmatprep.subr.bf16.mxu0 0
    %3956 = vmatpush2.bf16.msra.mxu0 0
    %3957 = vmatprep.subr.bf16.mxu0 0
    %3958 = vmatpush2.bf16.msra.mxu0 0
    %3959 = vmatprep.subr.bf16.mxu0 0
    %3960 = vmatpush2.bf16.msra.mxu0 0
    %3961 = vmatprep.subr.bf16.mxu0 0
    %3962 = vmatpush2.bf16.msra.mxu0 0
    %3963 = vmatprep.subr.bf16.mxu0 0
    %3964 = vmatpush2.bf16.msra.mxu0 0
    %3965 = vmatprep.mubr.bf16.mxu0 0
    %3966 = vmatmul.mubr.bf16.gmra.mxu0 %v3891
    %v3967 = vpop.f32.mrf.mxu0
    %v3968 = vadd.f32 0.0, %v3967
    %v3969 = vpop.f32.mrf.mxu0
    %v3970 = vadd.f32 0.0, %v3969
    %v3971 = vpop.f32.mrf.mxu0
    %v3972 = vpop.f32.mrf.mxu0
    %3973 = vdwg.mxu0
    %v3974 = vadd.f32 %v3887, %v3927
    %v3975 = vadd.f32 %v3888, %v3929
    %v3976 = vadd.f32 %v3889, %v3968
    %v3977 = vadd.f32 %v3890, %v3970
    %v3978 = vpack.c.bf16 %v3974, %v3974
    %v3979 = vpack.c.bf16 %v3975, %v3975
    %v3980 = vpack.c.bf16 %v3976, %v3976
    %v3981 = vpack.c.bf16 %v3977, %v3977
    %v3982 = vxor.u32 %v3978, 2147516416
    %v3984 = vmul.bf16 %v3982, 1069105081
    %v3985 = vpow.bf16.pop %v3984
    %v3986 = vadd.bf16 %v3985, 1065369472
    %v3987 = vrcp.bf16.pop %v3986
    %v3988 = vmul.bf16 1065369472, %v3987
    %v3989 = vunpack.c.l.bf16 %v3988
    %v3990 = vxor.u32 %v3979, 2147516416
    %v3992 = vmul.bf16 %v3990, 1069105081
    %v3993 = vpow.bf16.pop %v3992
    %v3994 = vadd.bf16 %v3993, 1065369472
    %v3995 = vrcp.bf16.pop %v3994
    %v3996 = vmul.bf16 1065369472, %v3995
    %v3997 = vunpack.c.l.bf16 %v3996
    %v3998 = vtanh.bf16.pop %v3980
    %v3999 = vunpack.c.l.bf16 %v3998
    %v4000 = vxor.u32 %v3981, 2147516416
    %v4002 = vmul.bf16 %v4000, 1069105081
    %v4003 = vpow.bf16.pop %v4002
    %v4004 = vadd.bf16 %v4003, 1065369472
    %v4005 = vrcp.bf16.pop %v4004
    %v4006 = vmul.bf16 1065369472, %v4005
    %v4007 = vunpack.c.l.bf16 %v4006
    %v4008 = vmul.f32 %v3997, %v3881
    %v4009 = vmul.f32 %v3989, %v3999
    %v4010 = vadd.f32 %v4008, %v4009
    %v4011 = vtanh.pop %v4010
    %v4012 = vmul.f32 %v4007, %v4011
    %vm4013 = vcmp.gt.s32.totalorder %v24, 1
    %v4014 = vsel %vm4013, 1, 0
    %4015 = vset.pattern.permute.xlu0 0
    %4016 = vperm.xlu0 %4015, %v4014
    %v4017 = vpop.permute.xlu0 %4016
    %vm4018 = vcmp.eq.s32.totalorder %v4017, 1
    %v4019 = vsel %vm4018, %v4012, %v3880
    %v4020 = vsel %vm4018, %v4010, %v3881
    %v4021 = vsel %vm4018, %v4012, 0.0
    %s4022 = scalar_lea.vmem %s6, 8
    %4023 = vst [vmem:[%s4022] sm:$0xff] %v4021
    %s4024 = smul.u32 2, 4
    %s4025 = smul.addr %s4024, 8
    %s4026 = scalar_lea.vmem [#allocation3], %s4025
    %v4027 = vld [vmem:[%s4026] sm:$0xff]
    %v4028 = vld [vmem:[%s4026 + $0x8] sm:$0xff]
    %v4029 = vld [vmem:[%s4026 + $0x10] sm:$0xff]
    %v4030 = vld [vmem:[%s4026 + $0x18] sm:$0xff]
    %v4031 = vpack.c.bf16 %v4019, %v4019
    %4032 = vmatprep.subr.bf16.mxu0 %v3718
    %4033 = vmatpush1.bf16.msra.mxu0 %v3717
    %4034 = vmatprep.subr.bf16.mxu0 %v3714
    %4035 = vmatpush1.bf16.msra.mxu0 %v3713
    %4036 = vmatprep.subr.bf16.mxu0 %v3710
    %4037 = vmatpush1.bf16.msra.mxu0 %v3709
    %4038 = vmatprep.subr.bf16.mxu0 %v3706
    %4039 = vmatpush1.bf16.msra.mxu0 %v3705
    %4040 = vmatprep.subr.bf16.mxu0 %v3702
    %4041 = vmatpush1.bf16.msra.mxu0 %v3701
    %4042 = vmatprep.subr.bf16.mxu0 %v3698
    %4043 = vmatpush1.bf16.msra.mxu0 %v3697
    %4044 = vmatprep.subr.bf16.mxu0 %v3694
    %4045 = vmatpush1.bf16.msra.mxu0 %v3693
    %4046 = vmatprep.subr.bf16.mxu0 %v3690
    %4047 = vmatpush1.bf16.msra.mxu0 %v3689
    %4048 = vmatprep.subr.bf16.mxu0 0
    %4049 = vmatpush2.bf16.msra.mxu0 0
    %4050 = vmatprep.subr.bf16.mxu0 0
    %4051 = vmatpush2.bf16.msra.mxu0 0
    %4052 = vmatprep.subr.bf16.mxu0 0
    %4053 = vmatpush2.bf16.msra.mxu0 0
    %4054 = vmatprep.subr.bf16.mxu0 0
    %4055 = vmatpush2.bf16.msra.mxu0 0
    %4056 = vmatprep.subr.bf16.mxu0 0
    %4057 = vmatpush2.bf16.msra.mxu0 0
    %4058 = vmatprep.subr.bf16.mxu0 0
    %4059 = vmatpush2.bf16.msra.mxu0 0
    %4060 = vmatprep.subr.bf16.mxu0 0
    %4061 = vmatpush2.bf16.msra.mxu0 0
    %4062 = vmatprep.subr.bf16.mxu0 0
    %4063 = vmatpush2.bf16.msra.mxu0 0
    %4064 = vmatprep.mubr.bf16.mxu0 0
    %4065 = vmatmul.mubr.bf16.gmra.mxu0 %v4031
    %v4066 = vpop.f32.mrf.mxu0
    %v4067 = vadd.f32 0.0, %v4066
    %v4068 = vpop.f32.mrf.mxu0
    %v4069 = vadd.f32 0.0, %v4068
    %v4070 = vpop.f32.mrf.mxu0
    %v4071 = vpop.f32.mrf.mxu0
    %4072 = vdwg.mxu0
    %4073 = vmatprep.subr.bf16.mxu0 %v3720
    %4074 = vmatpush1.bf16.msra.mxu0 %v3719
    %4075 = vmatprep.subr.bf16.mxu0 %v3716
    %4076 = vmatpush1.bf16.msra.mxu0 %v3715
    %4077 = vmatprep.subr.bf16.mxu0 %v3712
    %4078 = vmatpush1.bf16.msra.mxu0 %v3711
    %4079 = vmatprep.subr.bf16.mxu0 %v3708
    %4080 = vmatpush1.bf16.msra.mxu0 %v3707
    %4081 = vmatprep.subr.bf16.mxu0 %v3704
    %4082 = vmatpush1.bf16.msra.mxu0 %v3703
    %4083 = vmatprep.subr.bf16.mxu0 %v3700
    %4084 = vmatpush1.bf16.msra.mxu0 %v3699
    %4085 = vmatprep.subr.bf16.mxu0 %v3696
    %4086 = vmatpush1.bf16.msra.mxu0 %v3695
    %4087 = vmatprep.subr.bf16.mxu0 %v3692
    %4088 = vmatpush1.bf16.msra.mxu0 %v3691
    %4089 = vmatprep.subr.bf16.mxu0 0
    %4090 = vmatpush2.bf16.msra.mxu0 0
    %4091 = vmatprep.subr.bf16.mxu0 0
    %4092 = vmatpush2.bf16.msra.mxu0 0
    %4093 = vmatprep.subr.bf16.mxu0 0
    %4094 = vmatpush2.bf16.msra.mxu0 0
    %4095 = vmatprep.subr.bf16.mxu0 0
    %4096 = vmatpush2.bf16.msra.mxu0 0
    %4097 = vmatprep.subr.bf16.mxu0 0
    %4098 = vmatpush2.bf16.msra.mxu0 0
    %4099 = vmatprep.subr.bf16.mxu0 0
    %4100 = vmatpush2.bf16.msra.mxu0 0
    %4101 = vmatprep.subr.bf16.mxu0 0
    %4102 = vmatpush2.bf16.msra.mxu0 0
    %4103 = vmatprep.subr.bf16.mxu0 0
    %4104 = vmatpush2.bf16.msra.mxu0 0
    %4105 = vmatprep.mubr.bf16.mxu0 0
    %4106 = vmatmul.mubr.bf16.gmra.mxu0 %v4031
    %v4107 = vpop.f32.mrf.mxu0
    %v4108 = vadd.f32 0.0, %v4107
    %v4109 = vpop.f32.mrf.mxu0
    %v4110 = vadd.f32 0.0, %v4109
    %v4111 = vpop.f32.mrf.mxu0
    %v4112 = vpop.f32.mrf.mxu0
    %4113 = vdwg.mxu0
    %v4114 = vadd.f32 %v4027, %v4067
    %v4115 = vadd.f32 %v4028, %v4069
    %v4116 = vadd.f32 %v4029, %v4108
    %v4117 = vadd.f32 %v4030, %v4110
    %v4118 = vpack.c.bf16 %v4114, %v4114
    %v4119 = vpack.c.bf16 %v4115, %v4115
    %v4120 = vpack.c.bf16 %v4116, %v4116
    %v4121 = vpack.c.bf16 %v4117, %v4117
    %v4122 = vxor.u32 %v4118, 2147516416
    %v4124 = vmul.bf16 %v4122, 1069105081
    %v4125 = vpow.bf16.pop %v4124
    %v4126 = vadd.bf16 %v4125, 1065369472
    %v4127 = vrcp.bf16.pop %v4126
    %v4128 = vmul.bf16 1065369472, %v4127
    %v4129 = vunpack.c.l.bf16 %v4128
    %v4130 = vxor.u32 %v4119, 2147516416
    %v4132 = vmul.bf16 %v4130, 1069105081
    %v4133 = vpow.bf16.pop %v4132
    %v4134 = vadd.bf16 %v4133, 1065369472
    %v4135 = vrcp.bf16.pop %v4134
    %v4136 = vmul.bf16 1065369472, %v4135
    %v4137 = vunpack.c.l.bf16 %v4136
    %v4138 = vtanh.bf16.pop %v4120
    %v4139 = vunpack.c.l.bf16 %v4138
    %v4140 = vxor.u32 %v4121, 2147516416
    %v4142 = vmul.bf16 %v4140, 1069105081
    %v4143 = vpow.bf16.pop %v4142
    %v4144 = vadd.bf16 %v4143, 1065369472
    %v4145 = vrcp.bf16.pop %v4144
    %v4146 = vmul.bf16 1065369472, %v4145
    %v4147 = vunpack.c.l.bf16 %v4146
    %v4148 = vmul.f32 %v4137, %v4020
    %v4149 = vmul.f32 %v4129, %v4139
    %v4150 = vadd.f32 %v4148, %v4149
    %v4151 = vtanh.pop %v4150
    %v4152 = vmul.f32 %v4147, %v4151
    %vm4153 = vcmp.gt.s32.totalorder %v24, 2
    %v4154 = vsel %vm4153, 1, 0
    %4155 = vset.pattern.permute.xlu0 0
    %4156 = vperm.xlu0 %4155, %v4154
    %v4157 = vpop.permute.xlu0 %4156
    %vm4158 = vcmp.eq.s32.totalorder %v4157, 1
    %v4159 = vsel %vm4158, %v4152, %v4019
    %v4160 = vsel %vm4158, %v4150, %v4020
    %v4161 = vsel %vm4158, %v4152, 0.0
    %s4162 = scalar_lea.vmem %s6, 16
    %4163 = vst [vmem:[%s4162] sm:$0xff] %v4161
    %s4164 = smul.u32 3, 4
    %s4165 = smul.addr %s4164, 8
    %s4166 = scalar_lea.vmem [#allocation3], %s4165
    %v4167 = vld [vmem:[%s4166] sm:$0xff]
    %v4168 = vld [vmem:[%s4166 + $0x8] sm:$0xff]
    %v4169 = vld [vmem:[%s4166 + $0x10] sm:$0xff]
    %v4170 = vld [vmem:[%s4166 + $0x18] sm:$0xff]
    %v4171 = vpack.c.bf16 %v4159, %v4159
    %4172 = vmatprep.subr.bf16.mxu0 %v3718
    %4173 = vmatpush1.bf16.msra.mxu0 %v3717
    %4174 = vmatprep.subr.bf16.mxu0 %v3714
    %4175 = vmatpush1.bf16.msra.mxu0 %v3713
    %4176 = vmatprep.subr.bf16.mxu0 %v3710
    %4177 = vmatpush1.bf16.msra.mxu0 %v3709
    %4178 = vmatprep.subr.bf16.mxu0 %v3706
    %4179 = vmatpush1.bf16.msra.mxu0 %v3705
    %4180 = vmatprep.subr.bf16.mxu0 %v3702
    %4181 = vmatpush1.bf16.msra.mxu0 %v3701
    %4182 = vmatprep.subr.bf16.mxu0 %v3698
    %4183 = vmatpush1.bf16.msra.mxu0 %v3697
    %4184 = vmatprep.subr.bf16.mxu0 %v3694
    %4185 = vmatpush1.bf16.msra.mxu0 %v3693
    %4186 = vmatprep.subr.bf16.mxu0 %v3690
    %4187 = vmatpush1.bf16.msra.mxu0 %v3689
    %4188 = vmatprep.subr.bf16.mxu0 0
    %4189 = vmatpush2.bf16.msra.mxu0 0
    %4190 = vmatprep.subr.bf16.mxu0 0
    %4191 = vmatpush2.bf16.msra.mxu0 0
    %4192 = vmatprep.subr.bf16.mxu0 0
    %4193 = vmatpush2.bf16.msra.mxu0 0
    %4194 = vmatprep.subr.bf16.mxu0 0
    %4195 = vmatpush2.bf16.msra.mxu0 0
    %4196 = vmatprep.subr.bf16.mxu0 0
    %4197 = vmatpush2.bf16.msra.mxu0 0
    %4198 = vmatprep.subr.bf16.mxu0 0
    %4199 = vmatpush2.bf16.msra.mxu0 0
    %4200 = vmatprep.subr.bf16.mxu0 0
    %4201 = vmatpush2.bf16.msra.mxu0 0
    %4202 = vmatprep.subr.bf16.mxu0 0
    %4203 = vmatpush2.bf16.msra.mxu0 0
    %4204 = vmatprep.mubr.bf16.mxu0 0
    %4205 = vmatmul.mubr.bf16.gmra.mxu0 %v4171
    %v4206 = vpop.f32.mrf.mxu0
    %v4207 = vadd.f32 0.0, %v4206
    %v4208 = vpop.f32.mrf.mxu0
    %v4209 = vadd.f32 0.0, %v4208
    %v4210 = vpop.f32.mrf.mxu0
    %v4211 = vpop.f32.mrf.mxu0
    %4212 = vdwg.mxu0
    %4213 = vmatprep.subr.bf16.mxu0 %v3720
    %4214 = vmatpush1.bf16.msra.mxu0 %v3719
    %4215 = vmatprep.subr.bf16.mxu0 %v3716
    %4216 = vmatpush1.bf16.msra.mxu0 %v3715
    %4217 = vmatprep.subr.bf16.mxu0 %v3712
    %4218 = vmatpush1.bf16.msra.mxu0 %v3711
    %4219 = vmatprep.subr.bf16.mxu0 %v3708
    %4220 = vmatpush1.bf16.msra.mxu0 %v3707
    %4221 = vmatprep.subr.bf16.mxu0 %v3704
    %4222 = vmatpush1.bf16.msra.mxu0 %v3703
    %4223 = vmatprep.subr.bf16.mxu0 %v3700
    %4224 = vmatpush1.bf16.msra.mxu0 %v3699
    %4225 = vmatprep.subr.bf16.mxu0 %v3696
    %4226 = vmatpush1.bf16.msra.mxu0 %v3695
    %4227 = vmatprep.subr.bf16.mxu0 %v3692
    %4228 = vmatpush1.bf16.msra.mxu0 %v3691
    %4229 = vmatprep.subr.bf16.mxu0 0
    %4230 = vmatpush2.bf16.msra.mxu0 0
    %4231 = vmatprep.subr.bf16.mxu0 0
    %4232 = vmatpush2.bf16.msra.mxu0 0
    %4233 = vmatprep.subr.bf16.mxu0 0
    %4234 = vmatpush2.bf16.msra.mxu0 0
    %4235 = vmatprep.subr.bf16.mxu0 0
    %4236 = vmatpush2.bf16.msra.mxu0 0
    %4237 = vmatprep.subr.bf16.mxu0 0
    %4238 = vmatpush2.bf16.msra.mxu0 0
    %4239 = vmatprep.subr.bf16.mxu0 0
    %4240 = vmatpush2.bf16.msra.mxu0 0
    %4241 = vmatprep.subr.bf16.mxu0 0
    %4242 = vmatpush2.bf16.msra.mxu0 0
    %4243 = vmatprep.subr.bf16.mxu0 0
    %4244 = vmatpush2.bf16.msra.mxu0 0
    %4245 = vmatprep.mubr.bf16.mxu0 0
    %4246 = vmatmul.mubr.bf16.gmra.mxu0 %v4171
    %v4247 = vpop.f32.mrf.mxu0
    %v4248 = vadd.f32 0.0, %v4247
    %v4249 = vpop.f32.mrf.mxu0
    %v4250 = vadd.f32 0.0, %v4249
    %v4251 = vpop.f32.mrf.mxu0
    %v4252 = vpop.f32.mrf.mxu0
    %4253 = vdwg.mxu0
    %v4254 = vadd.f32 %v4167, %v4207
    %v4255 = vadd.f32 %v4168, %v4209
    %v4256 = vadd.f32 %v4169, %v4248
    %v4257 = vadd.f32 %v4170, %v4250
    %v4258 = vpack.c.bf16 %v4254, %v4254
    %v4259 = vpack.c.bf16 %v4255, %v4255
    %v4260 = vpack.c.bf16 %v4256, %v4256
    %v4261 = vpack.c.bf16 %v4257, %v4257
    %v4262 = vxor.u32 %v4258, 2147516416
    %v4264 = vmul.bf16 %v4262, 1069105081
    %v4265 = vpow.bf16.pop %v4264
    %v4266 = vadd.bf16 %v4265, 1065369472
    %v4267 = vrcp.bf16.pop %v4266
    %v4268 = vmul.bf16 1065369472, %v4267
    %v4269 = vunpack.c.l.bf16 %v4268
    %v4270 = vxor.u32 %v4259, 2147516416
    %v4272 = vmul.bf16 %v4270, 1069105081
    %v4273 = vpow.bf16.pop %v4272
    %v4274 = vadd.bf16 %v4273, 1065369472
    %v4275 = vrcp.bf16.pop %v4274
    %v4276 = vmul.bf16 1065369472, %v4275
    %v4277 = vunpack.c.l.bf16 %v4276
    %v4278 = vtanh.bf16.pop %v4260
    %v4279 = vunpack.c.l.bf16 %v4278
    %v4280 = vxor.u32 %v4261, 2147516416
    %v4282 = vmul.bf16 %v4280, 1069105081
    %v4283 = vpow.bf16.pop %v4282
    %v4284 = vadd.bf16 %v4283, 1065369472
    %v4285 = vrcp.bf16.pop %v4284
    %v4286 = vmul.bf16 1065369472, %v4285
    %v4287 = vunpack.c.l.bf16 %v4286
    %v4288 = vmul.f32 %v4277, %v4160
    %v4289 = vmul.f32 %v4269, %v4279
    %v4290 = vadd.f32 %v4288, %v4289
    %v4291 = vtanh.pop %v4290
    %v4292 = vmul.f32 %v4287, %v4291
    %vm4293 = vcmp.gt.s32.totalorder %v24, 3
    %v4294 = vsel %vm4293, 1, 0
    %4295 = vset.pattern.permute.xlu0 0
    %4296 = vperm.xlu0 %4295, %v4294
    %v4297 = vpop.permute.xlu0 %4296
    %vm4298 = vcmp.eq.s32.totalorder %v4297, 1
    %v4299 = vsel %vm4298, %v4292, %v4159
    %v4300 = vsel %vm4298, %v4290, %v4160
    %v4301 = vsel %vm4298, %v4292, 0.0
    %s4302 = scalar_lea.vmem %s6, 24
    %4303 = vst [vmem:[%s4302] sm:$0xff] %v4301
    %s4304 = smul.u32 4, 4
    %s4305 = smul.addr %s4304, 8
    %s4306 = scalar_lea.vmem [#allocation3], %s4305
    %v4307 = vld [vmem:[%s4306] sm:$0xff]
    %v4308 = vld [vmem:[%s4306 + $0x8] sm:$0xff]
    %v4309 = vld [vmem:[%s4306 + $0x10] sm:$0xff]
    %v4310 = vld [vmem:[%s4306 + $0x18] sm:$0xff]
    %v4311 = vpack.c.bf16 %v4299, %v4299
    %4312 = vmatprep.subr.bf16.mxu0 %v3718
    %4313 = vmatpush1.bf16.msra.mxu0 %v3717
    %4314 = vmatprep.subr.bf16.mxu0 %v3714
    %4315 = vmatpush1.bf16.msra.mxu0 %v3713
    %4316 = vmatprep.subr.bf16.mxu0 %v3710
    %4317 = vmatpush1.bf16.msra.mxu0 %v3709
    %4318 = vmatprep.subr.bf16.mxu0 %v3706
    %4319 = vmatpush1.bf16.msra.mxu0 %v3705
    %4320 = vmatprep.subr.bf16.mxu0 %v3702
    %4321 = vmatpush1.bf16.msra.mxu0 %v3701
    %4322 = vmatprep.subr.bf16.mxu0 %v3698
    %4323 = vmatpush1.bf16.msra.mxu0 %v3697
    %4324 = vmatprep.subr.bf16.mxu0 %v3694
    %4325 = vmatpush1.bf16.msra.mxu0 %v3693
    %4326 = vmatprep.subr.bf16.mxu0 %v3690
    %4327 = vmatpush1.bf16.msra.mxu0 %v3689
    %4328 = vmatprep.subr.bf16.mxu0 0
    %4329 = vmatpush2.bf16.msra.mxu0 0
    %4330 = vmatprep.subr.bf16.mxu0 0
    %4331 = vmatpush2.bf16.msra.mxu0 0
    %4332 = vmatprep.subr.bf16.mxu0 0
    %4333 = vmatpush2.bf16.msra.mxu0 0
    %4334 = vmatprep.subr.bf16.mxu0 0
    %4335 = vmatpush2.bf16.msra.mxu0 0
    %4336 = vmatprep.subr.bf16.mxu0 0
    %4337 = vmatpush2.bf16.msra.mxu0 0
    %4338 = vmatprep.subr.bf16.mxu0 0
    %4339 = vmatpush2.bf16.msra.mxu0 0
    %4340 = vmatprep.subr.bf16.mxu0 0
    %4341 = vmatpush2.bf16.msra.mxu0 0
    %4342 = vmatprep.subr.bf16.mxu0 0
    %4343 = vmatpush2.bf16.msra.mxu0 0
    %4344 = vmatprep.mubr.bf16.mxu0 0
    %4345 = vmatmul.mubr.bf16.gmra.mxu0 %v4311
    %v4346 = vpop.f32.mrf.mxu0
    %v4347 = vadd.f32 0.0, %v4346
    %v4348 = vpop.f32.mrf.mxu0
    %v4349 = vadd.f32 0.0, %v4348
    %v4350 = vpop.f32.mrf.mxu0
    %v4351 = vpop.f32.mrf.mxu0
    %4352 = vdwg.mxu0
    %4353 = vmatprep.subr.bf16.mxu0 %v3720
    %4354 = vmatpush1.bf16.msra.mxu0 %v3719
    %4355 = vmatprep.subr.bf16.mxu0 %v3716
    %4356 = vmatpush1.bf16.msra.mxu0 %v3715
    %4357 = vmatprep.subr.bf16.mxu0 %v3712
    %4358 = vmatpush1.bf16.msra.mxu0 %v3711
    %4359 = vmatprep.subr.bf16.mxu0 %v3708
    %4360 = vmatpush1.bf16.msra.mxu0 %v3707
    %4361 = vmatprep.subr.bf16.mxu0 %v3704
    %4362 = vmatpush1.bf16.msra.mxu0 %v3703
    %4363 = vmatprep.subr.bf16.mxu0 %v3700
    %4364 = vmatpush1.bf16.msra.mxu0 %v3699
    %4365 = vmatprep.subr.bf16.mxu0 %v3696
    %4366 = vmatpush1.bf16.msra.mxu0 %v3695
    %4367 = vmatprep.subr.bf16.mxu0 %v3692
    %4368 = vmatpush1.bf16.msra.mxu0 %v3691
    %4369 = vmatprep.subr.bf16.mxu0 0
    %4370 = vmatpush2.bf16.msra.mxu0 0
    %4371 = vmatprep.subr.bf16.mxu0 0
    %4372 = vmatpush2.bf16.msra.mxu0 0
    %4373 = vmatprep.subr.bf16.mxu0 0
    %4374 = vmatpush2.bf16.msra.mxu0 0
    %4375 = vmatprep.subr.bf16.mxu0 0
    %4376 = vmatpush2.bf16.msra.mxu0 0
    %4377 = vmatprep.subr.bf16.mxu0 0
    %4378 = vmatpush2.bf16.msra.mxu0 0
    %4379 = vmatprep.subr.bf16.mxu0 0
    %4380 = vmatpush2.bf16.msra.mxu0 0
    %4381 = vmatprep.subr.bf16.mxu0 0
    %4382 = vmatpush2.bf16.msra.mxu0 0
    %4383 = vmatprep.subr.bf16.mxu0 0
    %4384 = vmatpush2.bf16.msra.mxu0 0
    %4385 = vmatprep.mubr.bf16.mxu0 0
    %4386 = vmatmul.mubr.bf16.gmra.mxu0 %v4311
    %v4387 = vpop.f32.mrf.mxu0
    %v4388 = vadd.f32 0.0, %v4387
    %v4389 = vpop.f32.mrf.mxu0
    %v4390 = vadd.f32 0.0, %v4389
    %v4391 = vpop.f32.mrf.mxu0
    %v4392 = vpop.f32.mrf.mxu0
    %4393 = vdwg.mxu0
    %v4394 = vadd.f32 %v4307, %v4347
    %v4395 = vadd.f32 %v4308, %v4349
    %v4396 = vadd.f32 %v4309, %v4388
    %v4397 = vadd.f32 %v4310, %v4390
    %v4398 = vpack.c.bf16 %v4394, %v4394
    %v4399 = vpack.c.bf16 %v4395, %v4395
    %v4400 = vpack.c.bf16 %v4396, %v4396
    %v4401 = vpack.c.bf16 %v4397, %v4397
    %v4402 = vxor.u32 %v4398, 2147516416
    %v4404 = vmul.bf16 %v4402, 1069105081
    %v4405 = vpow.bf16.pop %v4404
    %v4406 = vadd.bf16 %v4405, 1065369472
    %v4407 = vrcp.bf16.pop %v4406
    %v4408 = vmul.bf16 1065369472, %v4407
    %v4409 = vunpack.c.l.bf16 %v4408
    %v4410 = vxor.u32 %v4399, 2147516416
    %v4412 = vmul.bf16 %v4410, 1069105081
    %v4413 = vpow.bf16.pop %v4412
    %v4414 = vadd.bf16 %v4413, 1065369472
    %v4415 = vrcp.bf16.pop %v4414
    %v4416 = vmul.bf16 1065369472, %v4415
    %v4417 = vunpack.c.l.bf16 %v4416
    %v4418 = vtanh.bf16.pop %v4400
    %v4419 = vunpack.c.l.bf16 %v4418
    %v4420 = vxor.u32 %v4401, 2147516416
    %v4422 = vmul.bf16 %v4420, 1069105081
    %v4423 = vpow.bf16.pop %v4422
    %v4424 = vadd.bf16 %v4423, 1065369472
    %v4425 = vrcp.bf16.pop %v4424
    %v4426 = vmul.bf16 1065369472, %v4425
    %v4427 = vunpack.c.l.bf16 %v4426
    %v4428 = vmul.f32 %v4417, %v4300
    %v4429 = vmul.f32 %v4409, %v4419
    %v4430 = vadd.f32 %v4428, %v4429
    %v4431 = vtanh.pop %v4430
    %v4432 = vmul.f32 %v4427, %v4431
    %vm4433 = vcmp.gt.s32.totalorder %v24, 4
    %v4434 = vsel %vm4433, 1, 0
    %4435 = vset.pattern.permute.xlu0 0
    %4436 = vperm.xlu0 %4435, %v4434
    %v4437 = vpop.permute.xlu0 %4436
    %vm4438 = vcmp.eq.s32.totalorder %v4437, 1
    %v4439 = vsel %vm4438, %v4432, %v4299
    %v4440 = vsel %vm4438, %v4430, %v4300
    %v4441 = vsel %vm4438, %v4432, 0.0
    %s4442 = scalar_lea.vmem %s6, 32
    %4443 = vst [vmem:[%s4442] sm:$0xff] %v4441
    %s4444 = smul.u32 5, 4
    %s4445 = smul.addr %s4444, 8
    %s4446 = scalar_lea.vmem [#allocation3], %s4445
    %v4447 = vld [vmem:[%s4446] sm:$0xff]
    %v4448 = vld [vmem:[%s4446 + $0x8] sm:$0xff]
    %v4449 = vld [vmem:[%s4446 + $0x10] sm:$0xff]
    %v4450 = vld [vmem:[%s4446 + $0x18] sm:$0xff]
    %v4451 = vpack.c.bf16 %v4439, %v4439
    %4452 = vmatprep.subr.bf16.mxu0 %v3718
    %4453 = vmatpush1.bf16.msra.mxu0 %v3717
    %4454 = vmatprep.subr.bf16.mxu0 %v3714
    %4455 = vmatpush1.bf16.msra.mxu0 %v3713
    %4456 = vmatprep.subr.bf16.mxu0 %v3710
    %4457 = vmatpush1.bf16.msra.mxu0 %v3709
    %4458 = vmatprep.subr.bf16.mxu0 %v3706
    %4459 = vmatpush1.bf16.msra.mxu0 %v3705
    %4460 = vmatprep.subr.bf16.mxu0 %v3702
    %4461 = vmatpush1.bf16.msra.mxu0 %v3701
    %4462 = vmatprep.subr.bf16.mxu0 %v3698
    %4463 = vmatpush1.bf16.msra.mxu0 %v3697
    %4464 = vmatprep.subr.bf16.mxu0 %v3694
    %4465 = vmatpush1.bf16.msra.mxu0 %v3693
    %4466 = vmatprep.subr.bf16.mxu0 %v3690
    %4467 = vmatpush1.bf16.msra.mxu0 %v3689
    %4468 = vmatprep.subr.bf16.mxu0 0
    %4469 = vmatpush2.bf16.msra.mxu0 0
    %4470 = vmatprep.subr.bf16.mxu0 0
    %4471 = vmatpush2.bf16.msra.mxu0 0
    %4472 = vmatprep.subr.bf16.mxu0 0
    %4473 = vmatpush2.bf16.msra.mxu0 0
    %4474 = vmatprep.subr.bf16.mxu0 0
    %4475 = vmatpush2.bf16.msra.mxu0 0
    %4476 = vmatprep.subr.bf16.mxu0 0
    %4477 = vmatpush2.bf16.msra.mxu0 0
    %4478 = vmatprep.subr.bf16.mxu0 0
    %4479 = vmatpush2.bf16.msra.mxu0 0
    %4480 = vmatprep.subr.bf16.mxu0 0
    %4481 = vmatpush2.bf16.msra.mxu0 0
    %4482 = vmatprep.subr.bf16.mxu0 0
    %4483 = vmatpush2.bf16.msra.mxu0 0
    %4484 = vmatprep.mubr.bf16.mxu0 0
    %4485 = vmatmul.mubr.bf16.gmra.mxu0 %v4451
    %v4486 = vpop.f32.mrf.mxu0
    %v4487 = vadd.f32 0.0, %v4486
    %v4488 = vpop.f32.mrf.mxu0
    %v4489 = vadd.f32 0.0, %v4488
    %v4490 = vpop.f32.mrf.mxu0
    %v4491 = vpop.f32.mrf.mxu0
    %4492 = vdwg.mxu0
    %4493 = vmatprep.subr.bf16.mxu0 %v3720
    %4494 = vmatpush1.bf16.msra.mxu0 %v3719
    %4495 = vmatprep.subr.bf16.mxu0 %v3716
    %4496 = vmatpush1.bf16.msra.mxu0 %v3715
    %4497 = vmatprep.subr.bf16.mxu0 %v3712
    %4498 = vmatpush1.bf16.msra.mxu0 %v3711
    %4499 = vmatprep.subr.bf16.mxu0 %v3708
    %4500 = vmatpush1.bf16.msra.mxu0 %v3707
    %4501 = vmatprep.subr.bf16.mxu0 %v3704
    %4502 = vmatpush1.bf16.msra.mxu0 %v3703
    %4503 = vmatprep.subr.bf16.mxu0 %v3700
    %4504 = vmatpush1.bf16.msra.mxu0 %v3699
    %4505 = vmatprep.subr.bf16.mxu0 %v3696
    %4506 = vmatpush1.bf16.msra.mxu0 %v3695
    %4507 = vmatprep.subr.bf16.mxu0 %v3692
    %4508 = vmatpush1.bf16.msra.mxu0 %v3691
    %4509 = vmatprep.subr.bf16.mxu0 0
    %4510 = vmatpush2.bf16.msra.mxu0 0
    %4511 = vmatprep.subr.bf16.mxu0 0
    %4512 = vmatpush2.bf16.msra.mxu0 0
    %4513 = vmatprep.subr.bf16.mxu0 0
    %4514 = vmatpush2.bf16.msra.mxu0 0
    %4515 = vmatprep.subr.bf16.mxu0 0
    %4516 = vmatpush2.bf16.msra.mxu0 0
    %4517 = vmatprep.subr.bf16.mxu0 0
    %4518 = vmatpush2.bf16.msra.mxu0 0
    %4519 = vmatprep.subr.bf16.mxu0 0
    %4520 = vmatpush2.bf16.msra.mxu0 0
    %4521 = vmatprep.subr.bf16.mxu0 0
    %4522 = vmatpush2.bf16.msra.mxu0 0
    %4523 = vmatprep.subr.bf16.mxu0 0
    %4524 = vmatpush2.bf16.msra.mxu0 0
    %4525 = vmatprep.mubr.bf16.mxu0 0
    %4526 = vmatmul.mubr.bf16.gmra.mxu0 %v4451
    %v4527 = vpop.f32.mrf.mxu0
    %v4528 = vadd.f32 0.0, %v4527
    %v4529 = vpop.f32.mrf.mxu0
    %v4530 = vadd.f32 0.0, %v4529
    %v4531 = vpop.f32.mrf.mxu0
    %v4532 = vpop.f32.mrf.mxu0
    %4533 = vdwg.mxu0
    %v4534 = vadd.f32 %v4447, %v4487
    %v4535 = vadd.f32 %v4448, %v4489
    %v4536 = vadd.f32 %v4449, %v4528
    %v4537 = vadd.f32 %v4450, %v4530
    %v4538 = vpack.c.bf16 %v4534, %v4534
    %v4539 = vpack.c.bf16 %v4535, %v4535
    %v4540 = vpack.c.bf16 %v4536, %v4536
    %v4541 = vpack.c.bf16 %v4537, %v4537
    %v4542 = vxor.u32 %v4538, 2147516416
    %v4544 = vmul.bf16 %v4542, 1069105081
    %v4545 = vpow.bf16.pop %v4544
    %v4546 = vadd.bf16 %v4545, 1065369472
    %v4547 = vrcp.bf16.pop %v4546
    %v4548 = vmul.bf16 1065369472, %v4547
    %v4549 = vunpack.c.l.bf16 %v4548
    %v4550 = vxor.u32 %v4539, 2147516416
    %v4552 = vmul.bf16 %v4550, 1069105081
    %v4553 = vpow.bf16.pop %v4552
    %v4554 = vadd.bf16 %v4553, 1065369472
    %v4555 = vrcp.bf16.pop %v4554
    %v4556 = vmul.bf16 1065369472, %v4555
    %v4557 = vunpack.c.l.bf16 %v4556
    %v4558 = vtanh.bf16.pop %v4540
    %v4559 = vunpack.c.l.bf16 %v4558
    %v4560 = vxor.u32 %v4541, 2147516416
    %v4562 = vmul.bf16 %v4560, 1069105081
    %v4563 = vpow.bf16.pop %v4562
    %v4564 = vadd.bf16 %v4563, 1065369472
    %v4565 = vrcp.bf16.pop %v4564
    %v4566 = vmul.bf16 1065369472, %v4565
    %v4567 = vunpack.c.l.bf16 %v4566
    %v4568 = vmul.f32 %v4557, %v4440
    %v4569 = vmul.f32 %v4549, %v4559
    %v4570 = vadd.f32 %v4568, %v4569
    %v4571 = vtanh.pop %v4570
    %v4572 = vmul.f32 %v4567, %v4571
    %vm4573 = vcmp.gt.s32.totalorder %v24, 5
    %v4574 = vsel %vm4573, 1, 0
    %4575 = vset.pattern.permute.xlu0 0
    %4576 = vperm.xlu0 %4575, %v4574
    %v4577 = vpop.permute.xlu0 %4576
    %vm4578 = vcmp.eq.s32.totalorder %v4577, 1
    %v4579 = vsel %vm4578, %v4572, %v4439
    %v4580 = vsel %vm4578, %v4570, %v4440
    %v4581 = vsel %vm4578, %v4572, 0.0
    %s4582 = scalar_lea.vmem %s6, 40
    %4583 = vst [vmem:[%s4582] sm:$0xff] %v4581
    %s4584 = smul.u32 6, 4
    %s4585 = smul.addr %s4584, 8
    %s4586 = scalar_lea.vmem [#allocation3], %s4585
    %v4587 = vld [vmem:[%s4586] sm:$0xff]
    %v4588 = vld [vmem:[%s4586 + $0x8] sm:$0xff]
    %v4589 = vld [vmem:[%s4586 + $0x10] sm:$0xff]
    %v4590 = vld [vmem:[%s4586 + $0x18] sm:$0xff]
    %v4591 = vpack.c.bf16 %v4579, %v4579
    %4592 = vmatprep.subr.bf16.mxu0 %v3718
    %4593 = vmatpush1.bf16.msra.mxu0 %v3717
    %4594 = vmatprep.subr.bf16.mxu0 %v3714
    %4595 = vmatpush1.bf16.msra.mxu0 %v3713
    %4596 = vmatprep.subr.bf16.mxu0 %v3710
    %4597 = vmatpush1.bf16.msra.mxu0 %v3709
    %4598 = vmatprep.subr.bf16.mxu0 %v3706
    %4599 = vmatpush1.bf16.msra.mxu0 %v3705
    %4600 = vmatprep.subr.bf16.mxu0 %v3702
    %4601 = vmatpush1.bf16.msra.mxu0 %v3701
    %4602 = vmatprep.subr.bf16.mxu0 %v3698
    %4603 = vmatpush1.bf16.msra.mxu0 %v3697
    %4604 = vmatprep.subr.bf16.mxu0 %v3694
    %4605 = vmatpush1.bf16.msra.mxu0 %v3693
    %4606 = vmatprep.subr.bf16.mxu0 %v3690
    %4607 = vmatpush1.bf16.msra.mxu0 %v3689
    %4608 = vmatprep.subr.bf16.mxu0 0
    %4609 = vmatpush2.bf16.msra.mxu0 0
    %4610 = vmatprep.subr.bf16.mxu0 0
    %4611 = vmatpush2.bf16.msra.mxu0 0
    %4612 = vmatprep.subr.bf16.mxu0 0
    %4613 = vmatpush2.bf16.msra.mxu0 0
    %4614 = vmatprep.subr.bf16.mxu0 0
    %4615 = vmatpush2.bf16.msra.mxu0 0
    %4616 = vmatprep.subr.bf16.mxu0 0
    %4617 = vmatpush2.bf16.msra.mxu0 0
    %4618 = vmatprep.subr.bf16.mxu0 0
    %4619 = vmatpush2.bf16.msra.mxu0 0
    %4620 = vmatprep.subr.bf16.mxu0 0
    %4621 = vmatpush2.bf16.msra.mxu0 0
    %4622 = vmatprep.subr.bf16.mxu0 0
    %4623 = vmatpush2.bf16.msra.mxu0 0
    %4624 = vmatprep.mubr.bf16.mxu0 0
    %4625 = vmatmul.mubr.bf16.gmra.mxu0 %v4591
    %v4626 = vpop.f32.mrf.mxu0
    %v4627 = vadd.f32 0.0, %v4626
    %v4628 = vpop.f32.mrf.mxu0
    %v4629 = vadd.f32 0.0, %v4628
    %v4630 = vpop.f32.mrf.mxu0
    %v4631 = vpop.f32.mrf.mxu0
    %4632 = vdwg.mxu0
    %4633 = vmatprep.subr.bf16.mxu0 %v3720
    %4634 = vmatpush1.bf16.msra.mxu0 %v3719
    %4635 = vmatprep.subr.bf16.mxu0 %v3716
    %4636 = vmatpush1.bf16.msra.mxu0 %v3715
    %4637 = vmatprep.subr.bf16.mxu0 %v3712
    %4638 = vmatpush1.bf16.msra.mxu0 %v3711
    %4639 = vmatprep.subr.bf16.mxu0 %v3708
    %4640 = vmatpush1.bf16.msra.mxu0 %v3707
    %4641 = vmatprep.subr.bf16.mxu0 %v3704
    %4642 = vmatpush1.bf16.msra.mxu0 %v3703
    %4643 = vmatprep.subr.bf16.mxu0 %v3700
    %4644 = vmatpush1.bf16.msra.mxu0 %v3699
    %4645 = vmatprep.subr.bf16.mxu0 %v3696
    %4646 = vmatpush1.bf16.msra.mxu0 %v3695
    %4647 = vmatprep.subr.bf16.mxu0 %v3692
    %4648 = vmatpush1.bf16.msra.mxu0 %v3691
    %4649 = vmatprep.subr.bf16.mxu0 0
    %4650 = vmatpush2.bf16.msra.mxu0 0
    %4651 = vmatprep.subr.bf16.mxu0 0
    %4652 = vmatpush2.bf16.msra.mxu0 0
    %4653 = vmatprep.subr.bf16.mxu0 0
    %4654 = vmatpush2.bf16.msra.mxu0 0
    %4655 = vmatprep.subr.bf16.mxu0 0
    %4656 = vmatpush2.bf16.msra.mxu0 0
    %4657 = vmatprep.subr.bf16.mxu0 0
    %4658 = vmatpush2.bf16.msra.mxu0 0
    %4659 = vmatprep.subr.bf16.mxu0 0
    %4660 = vmatpush2.bf16.msra.mxu0 0
    %4661 = vmatprep.subr.bf16.mxu0 0
    %4662 = vmatpush2.bf16.msra.mxu0 0
    %4663 = vmatprep.subr.bf16.mxu0 0
    %4664 = vmatpush2.bf16.msra.mxu0 0
    %4665 = vmatprep.mubr.bf16.mxu0 0
    %4666 = vmatmul.mubr.bf16.gmra.mxu0 %v4591
    %v4667 = vpop.f32.mrf.mxu0
    %v4668 = vadd.f32 0.0, %v4667
    %v4669 = vpop.f32.mrf.mxu0
    %v4670 = vadd.f32 0.0, %v4669
    %v4671 = vpop.f32.mrf.mxu0
    %v4672 = vpop.f32.mrf.mxu0
    %4673 = vdwg.mxu0
    %v4674 = vadd.f32 %v4587, %v4627
    %v4675 = vadd.f32 %v4588, %v4629
    %v4676 = vadd.f32 %v4589, %v4668
    %v4677 = vadd.f32 %v4590, %v4670
    %v4678 = vpack.c.bf16 %v4674, %v4674
    %v4679 = vpack.c.bf16 %v4675, %v4675
    %v4680 = vpack.c.bf16 %v4676, %v4676
    %v4681 = vpack.c.bf16 %v4677, %v4677
    %v4682 = vxor.u32 %v4678, 2147516416
    %v4684 = vmul.bf16 %v4682, 1069105081
    %v4685 = vpow.bf16.pop %v4684
    %v4686 = vadd.bf16 %v4685, 1065369472
    %v4687 = vrcp.bf16.pop %v4686
    %v4688 = vmul.bf16 1065369472, %v4687
    %v4689 = vunpack.c.l.bf16 %v4688
    %v4690 = vxor.u32 %v4679, 2147516416
    %v4692 = vmul.bf16 %v4690, 1069105081
    %v4693 = vpow.bf16.pop %v4692
    %v4694 = vadd.bf16 %v4693, 1065369472
    %v4695 = vrcp.bf16.pop %v4694
    %v4696 = vmul.bf16 1065369472, %v4695
    %v4697 = vunpack.c.l.bf16 %v4696
    %v4698 = vtanh.bf16.pop %v4680
    %v4699 = vunpack.c.l.bf16 %v4698
    %v4700 = vxor.u32 %v4681, 2147516416
    %v4702 = vmul.bf16 %v4700, 1069105081
    %v4703 = vpow.bf16.pop %v4702
    %v4704 = vadd.bf16 %v4703, 1065369472
    %v4705 = vrcp.bf16.pop %v4704
    %v4706 = vmul.bf16 1065369472, %v4705
    %v4707 = vunpack.c.l.bf16 %v4706
    %v4708 = vmul.f32 %v4697, %v4580
    %v4709 = vmul.f32 %v4689, %v4699
    %v4710 = vadd.f32 %v4708, %v4709
    %v4711 = vtanh.pop %v4710
    %v4712 = vmul.f32 %v4707, %v4711
    %vm4713 = vcmp.gt.s32.totalorder %v24, 6
    %v4714 = vsel %vm4713, 1, 0
    %4715 = vset.pattern.permute.xlu0 0
    %4716 = vperm.xlu0 %4715, %v4714
    %v4717 = vpop.permute.xlu0 %4716
    %vm4718 = vcmp.eq.s32.totalorder %v4717, 1
    %v4719 = vsel %vm4718, %v4712, %v4579
    %v4720 = vsel %vm4718, %v4710, %v4580
    %v4721 = vsel %vm4718, %v4712, 0.0
    %s4722 = scalar_lea.vmem %s6, 48
    %4723 = vst [vmem:[%s4722] sm:$0xff] %v4721
    %s4724 = smul.u32 7, 4
    %s4725 = smul.addr %s4724, 8
    %s4726 = scalar_lea.vmem [#allocation3], %s4725
    %v4727 = vld [vmem:[%s4726] sm:$0xff]
    %v4728 = vld [vmem:[%s4726 + $0x8] sm:$0xff]
    %v4729 = vld [vmem:[%s4726 + $0x10] sm:$0xff]
    %v4730 = vld [vmem:[%s4726 + $0x18] sm:$0xff]
    %v4731 = vpack.c.bf16 %v4719, %v4719
    %4732 = vmatprep.subr.bf16.mxu0 %v3718
    %4733 = vmatpush1.bf16.msra.mxu0 %v3717
    %4734 = vmatprep.subr.bf16.mxu0 %v3714
    %4735 = vmatpush1.bf16.msra.mxu0 %v3713
    %4736 = vmatprep.subr.bf16.mxu0 %v3710
    %4737 = vmatpush1.bf16.msra.mxu0 %v3709
    %4738 = vmatprep.subr.bf16.mxu0 %v3706
    %4739 = vmatpush1.bf16.msra.mxu0 %v3705
    %4740 = vmatprep.subr.bf16.mxu0 %v3702
    %4741 = vmatpush1.bf16.msra.mxu0 %v3701
    %4742 = vmatprep.subr.bf16.mxu0 %v3698
    %4743 = vmatpush1.bf16.msra.mxu0 %v3697
    %4744 = vmatprep.subr.bf16.mxu0 %v3694
    %4745 = vmatpush1.bf16.msra.mxu0 %v3693
    %4746 = vmatprep.subr.bf16.mxu0 %v3690
    %4747 = vmatpush1.bf16.msra.mxu0 %v3689
    %4748 = vmatprep.subr.bf16.mxu0 0
    %4749 = vmatpush2.bf16.msra.mxu0 0
    %4750 = vmatprep.subr.bf16.mxu0 0
    %4751 = vmatpush2.bf16.msra.mxu0 0
    %4752 = vmatprep.subr.bf16.mxu0 0
    %4753 = vmatpush2.bf16.msra.mxu0 0
    %4754 = vmatprep.subr.bf16.mxu0 0
    %4755 = vmatpush2.bf16.msra.mxu0 0
    %4756 = vmatprep.subr.bf16.mxu0 0
    %4757 = vmatpush2.bf16.msra.mxu0 0
    %4758 = vmatprep.subr.bf16.mxu0 0
    %4759 = vmatpush2.bf16.msra.mxu0 0
    %4760 = vmatprep.subr.bf16.mxu0 0
    %4761 = vmatpush2.bf16.msra.mxu0 0
    %4762 = vmatprep.subr.bf16.mxu0 0
    %4763 = vmatpush2.bf16.msra.mxu0 0
    %4764 = vmatprep.mubr.bf16.mxu0 0
    %4765 = vmatmul.mubr.bf16.gmra.mxu0 %v4731
    %v4766 = vpop.f32.mrf.mxu0
    %v4767 = vadd.f32 0.0, %v4766
    %v4768 = vpop.f32.mrf.mxu0
    %v4769 = vadd.f32 0.0, %v4768
    %v4770 = vpop.f32.mrf.mxu0
    %v4771 = vpop.f32.mrf.mxu0
    %4772 = vdwg.mxu0
    %4773 = vmatprep.subr.bf16.mxu0 %v3720
    %4774 = vmatpush1.bf16.msra.mxu0 %v3719
    %4775 = vmatprep.subr.bf16.mxu0 %v3716
    %4776 = vmatpush1.bf16.msra.mxu0 %v3715
    %4777 = vmatprep.subr.bf16.mxu0 %v3712
    %4778 = vmatpush1.bf16.msra.mxu0 %v3711
    %4779 = vmatprep.subr.bf16.mxu0 %v3708
    %4780 = vmatpush1.bf16.msra.mxu0 %v3707
    %4781 = vmatprep.subr.bf16.mxu0 %v3704
    %4782 = vmatpush1.bf16.msra.mxu0 %v3703
    %4783 = vmatprep.subr.bf16.mxu0 %v3700
    %4784 = vmatpush1.bf16.msra.mxu0 %v3699
    %4785 = vmatprep.subr.bf16.mxu0 %v3696
    %4786 = vmatpush1.bf16.msra.mxu0 %v3695
    %4787 = vmatprep.subr.bf16.mxu0 %v3692
    %4788 = vmatpush1.bf16.msra.mxu0 %v3691
    %4789 = vmatprep.subr.bf16.mxu0 0
    %4790 = vmatpush2.bf16.msra.mxu0 0
    %4791 = vmatprep.subr.bf16.mxu0 0
    %4792 = vmatpush2.bf16.msra.mxu0 0
    %4793 = vmatprep.subr.bf16.mxu0 0
    %4794 = vmatpush2.bf16.msra.mxu0 0
    %4795 = vmatprep.subr.bf16.mxu0 0
    %4796 = vmatpush2.bf16.msra.mxu0 0
    %4797 = vmatprep.subr.bf16.mxu0 0
    %4798 = vmatpush2.bf16.msra.mxu0 0
    %4799 = vmatprep.subr.bf16.mxu0 0
    %4800 = vmatpush2.bf16.msra.mxu0 0
    %4801 = vmatprep.subr.bf16.mxu0 0
    %4802 = vmatpush2.bf16.msra.mxu0 0
    %4803 = vmatprep.subr.bf16.mxu0 0
    %4804 = vmatpush2.bf16.msra.mxu0 0
    %4805 = vmatprep.mubr.bf16.mxu0 0
    %4806 = vmatmul.mubr.bf16.gmra.mxu0 %v4731
    %v4807 = vpop.f32.mrf.mxu0
    %v4808 = vadd.f32 0.0, %v4807
    %v4809 = vpop.f32.mrf.mxu0
    %v4810 = vadd.f32 0.0, %v4809
    %v4811 = vpop.f32.mrf.mxu0
    %v4812 = vpop.f32.mrf.mxu0
    %4813 = vdwg.mxu0
    %v4814 = vadd.f32 %v4727, %v4767
    %v4815 = vadd.f32 %v4728, %v4769
    %v4816 = vadd.f32 %v4729, %v4808
    %v4817 = vadd.f32 %v4730, %v4810
    %v4818 = vpack.c.bf16 %v4814, %v4814
    %v4819 = vpack.c.bf16 %v4815, %v4815
    %v4820 = vpack.c.bf16 %v4816, %v4816
    %v4821 = vpack.c.bf16 %v4817, %v4817
    %v4822 = vxor.u32 %v4818, 2147516416
    %v4824 = vmul.bf16 %v4822, 1069105081
    %v4825 = vpow.bf16.pop %v4824
    %v4826 = vadd.bf16 %v4825, 1065369472
    %v4827 = vrcp.bf16.pop %v4826
    %v4828 = vmul.bf16 1065369472, %v4827
    %v4829 = vunpack.c.l.bf16 %v4828
    %v4830 = vxor.u32 %v4819, 2147516416
    %v4832 = vmul.bf16 %v4830, 1069105081
    %v4833 = vpow.bf16.pop %v4832
    %v4834 = vadd.bf16 %v4833, 1065369472
    %v4835 = vrcp.bf16.pop %v4834
    %v4836 = vmul.bf16 1065369472, %v4835
    %v4837 = vunpack.c.l.bf16 %v4836
    %v4838 = vtanh.bf16.pop %v4820
    %v4839 = vunpack.c.l.bf16 %v4838
    %v4840 = vxor.u32 %v4821, 2147516416
    %v4842 = vmul.bf16 %v4840, 1069105081
    %v4843 = vpow.bf16.pop %v4842
    %v4844 = vadd.bf16 %v4843, 1065369472
    %v4845 = vrcp.bf16.pop %v4844
    %v4846 = vmul.bf16 1065369472, %v4845
    %v4847 = vunpack.c.l.bf16 %v4846
    %v4848 = vmul.f32 %v4837, %v4720
    %v4849 = vmul.f32 %v4829, %v4839
    %v4850 = vadd.f32 %v4848, %v4849
    %v4851 = vtanh.pop %v4850
    %v4852 = vmul.f32 %v4847, %v4851
    %vm4853 = vcmp.gt.s32.totalorder %v24, 7
    %v4854 = vsel %vm4853, 1, 0
    %4855 = vset.pattern.permute.xlu0 0
    %4856 = vperm.xlu0 %4855, %v4854
    %v4857 = vpop.permute.xlu0 %4856
    %vm4858 = vcmp.eq.s32.totalorder %v4857, 1
    %v4859 = vsel %vm4858, %v4852, %v4719
    %v4860 = vsel %vm4858, %v4850, %v4720
    %v4861 = vsel %vm4858, %v4852, 0.0
    %s4862 = scalar_lea.vmem %s6, 56
    %4863 = vst [vmem:[%s4862] sm:$0xff] %v4861
    %s4864 = smul.u32 8, 4
    %s4865 = smul.addr %s4864, 8
    %s4866 = scalar_lea.vmem [#allocation3], %s4865
    %v4867 = vld [vmem:[%s4866] sm:$0xff]
    %v4868 = vld [vmem:[%s4866 + $0x8] sm:$0xff]
    %v4869 = vld [vmem:[%s4866 + $0x10] sm:$0xff]
    %v4870 = vld [vmem:[%s4866 + $0x18] sm:$0xff]
    %v4871 = vpack.c.bf16 %v4859, %v4859
    %4872 = vmatprep.subr.bf16.mxu0 %v3718
    %4873 = vmatpush1.bf16.msra.mxu0 %v3717
    %4874 = vmatprep.subr.bf16.mxu0 %v3714
    %4875 = vmatpush1.bf16.msra.mxu0 %v3713
    %4876 = vmatprep.subr.bf16.mxu0 %v3710
    %4877 = vmatpush1.bf16.msra.mxu0 %v3709
    %4878 = vmatprep.subr.bf16.mxu0 %v3706
    %4879 = vmatpush1.bf16.msra.mxu0 %v3705
    %4880 = vmatprep.subr.bf16.mxu0 %v3702
    %4881 = vmatpush1.bf16.msra.mxu0 %v3701
    %4882 = vmatprep.subr.bf16.mxu0 %v3698
    %4883 = vmatpush1.bf16.msra.mxu0 %v3697
    %4884 = vmatprep.subr.bf16.mxu0 %v3694
    %4885 = vmatpush1.bf16.msra.mxu0 %v3693
    %4886 = vmatprep.subr.bf16.mxu0 %v3690
    %4887 = vmatpush1.bf16.msra.mxu0 %v3689
    %4888 = vmatprep.subr.bf16.mxu0 0
    %4889 = vmatpush2.bf16.msra.mxu0 0
    %4890 = vmatprep.subr.bf16.mxu0 0
    %4891 = vmatpush2.bf16.msra.mxu0 0
    %4892 = vmatprep.subr.bf16.mxu0 0
    %4893 = vmatpush2.bf16.msra.mxu0 0
    %4894 = vmatprep.subr.bf16.mxu0 0
    %4895 = vmatpush2.bf16.msra.mxu0 0
    %4896 = vmatprep.subr.bf16.mxu0 0
    %4897 = vmatpush2.bf16.msra.mxu0 0
    %4898 = vmatprep.subr.bf16.mxu0 0
    %4899 = vmatpush2.bf16.msra.mxu0 0
    %4900 = vmatprep.subr.bf16.mxu0 0
    %4901 = vmatpush2.bf16.msra.mxu0 0
    %4902 = vmatprep.subr.bf16.mxu0 0
    %4903 = vmatpush2.bf16.msra.mxu0 0
    %4904 = vmatprep.mubr.bf16.mxu0 0
    %4905 = vmatmul.mubr.bf16.gmra.mxu0 %v4871
    %v4906 = vpop.f32.mrf.mxu0
    %v4907 = vadd.f32 0.0, %v4906
    %v4908 = vpop.f32.mrf.mxu0
    %v4909 = vadd.f32 0.0, %v4908
    %v4910 = vpop.f32.mrf.mxu0
    %v4911 = vpop.f32.mrf.mxu0
    %4912 = vdwg.mxu0
    %4913 = vmatprep.subr.bf16.mxu0 %v3720
    %4914 = vmatpush1.bf16.msra.mxu0 %v3719
    %4915 = vmatprep.subr.bf16.mxu0 %v3716
    %4916 = vmatpush1.bf16.msra.mxu0 %v3715
    %4917 = vmatprep.subr.bf16.mxu0 %v3712
    %4918 = vmatpush1.bf16.msra.mxu0 %v3711
    %4919 = vmatprep.subr.bf16.mxu0 %v3708
    %4920 = vmatpush1.bf16.msra.mxu0 %v3707
    %4921 = vmatprep.subr.bf16.mxu0 %v3704
    %4922 = vmatpush1.bf16.msra.mxu0 %v3703
    %4923 = vmatprep.subr.bf16.mxu0 %v3700
    %4924 = vmatpush1.bf16.msra.mxu0 %v3699
    %4925 = vmatprep.subr.bf16.mxu0 %v3696
    %4926 = vmatpush1.bf16.msra.mxu0 %v3695
    %4927 = vmatprep.subr.bf16.mxu0 %v3692
    %4928 = vmatpush1.bf16.msra.mxu0 %v3691
    %4929 = vmatprep.subr.bf16.mxu0 0
    %4930 = vmatpush2.bf16.msra.mxu0 0
    %4931 = vmatprep.subr.bf16.mxu0 0
    %4932 = vmatpush2.bf16.msra.mxu0 0
    %4933 = vmatprep.subr.bf16.mxu0 0
    %4934 = vmatpush2.bf16.msra.mxu0 0
    %4935 = vmatprep.subr.bf16.mxu0 0
    %4936 = vmatpush2.bf16.msra.mxu0 0
    %4937 = vmatprep.subr.bf16.mxu0 0
    %4938 = vmatpush2.bf16.msra.mxu0 0
    %4939 = vmatprep.subr.bf16.mxu0 0
    %4940 = vmatpush2.bf16.msra.mxu0 0
    %4941 = vmatprep.subr.bf16.mxu0 0
    %4942 = vmatpush2.bf16.msra.mxu0 0
    %4943 = vmatprep.subr.bf16.mxu0 0
    %4944 = vmatpush2.bf16.msra.mxu0 0
    %4945 = vmatprep.mubr.bf16.mxu0 0
    %4946 = vmatmul.mubr.bf16.gmra.mxu0 %v4871
    %v4947 = vpop.f32.mrf.mxu0
    %v4948 = vadd.f32 0.0, %v4947
    %v4949 = vpop.f32.mrf.mxu0
    %v4950 = vadd.f32 0.0, %v4949
    %v4951 = vpop.f32.mrf.mxu0
    %v4952 = vpop.f32.mrf.mxu0
    %4953 = vdwg.mxu0
    %v4954 = vadd.f32 %v4867, %v4907
    %v4955 = vadd.f32 %v4868, %v4909
    %v4956 = vadd.f32 %v4869, %v4948
    %v4957 = vadd.f32 %v4870, %v4950
    %v4958 = vpack.c.bf16 %v4954, %v4954
    %v4959 = vpack.c.bf16 %v4955, %v4955
    %v4960 = vpack.c.bf16 %v4956, %v4956
    %v4961 = vpack.c.bf16 %v4957, %v4957
    %v4962 = vxor.u32 %v4958, 2147516416
    %v4964 = vmul.bf16 %v4962, 1069105081
    %v4965 = vpow.bf16.pop %v4964
    %v4966 = vadd.bf16 %v4965, 1065369472
    %v4967 = vrcp.bf16.pop %v4966
    %v4968 = vmul.bf16 1065369472, %v4967
    %v4969 = vunpack.c.l.bf16 %v4968
    %v4970 = vxor.u32 %v4959, 2147516416
    %v4972 = vmul.bf16 %v4970, 1069105081
    %v4973 = vpow.bf16.pop %v4972
    %v4974 = vadd.bf16 %v4973, 1065369472
    %v4975 = vrcp.bf16.pop %v4974
    %v4976 = vmul.bf16 1065369472, %v4975
    %v4977 = vunpack.c.l.bf16 %v4976
    %v4978 = vtanh.bf16.pop %v4960
    %v4979 = vunpack.c.l.bf16 %v4978
    %v4980 = vxor.u32 %v4961, 2147516416
    %v4982 = vmul.bf16 %v4980, 1069105081
    %v4983 = vpow.bf16.pop %v4982
    %v4984 = vadd.bf16 %v4983, 1065369472
    %v4985 = vrcp.bf16.pop %v4984
    %v4986 = vmul.bf16 1065369472, %v4985
    %v4987 = vunpack.c.l.bf16 %v4986
    %v4988 = vmul.f32 %v4977, %v4860
    %v4989 = vmul.f32 %v4969, %v4979
    %v4990 = vadd.f32 %v4988, %v4989
    %v4991 = vtanh.pop %v4990
    %v4992 = vmul.f32 %v4987, %v4991
    %vm4993 = vcmp.gt.s32.totalorder %v24, 8
    %v4994 = vsel %vm4993, 1, 0
    %4995 = vset.pattern.permute.xlu0 0
    %4996 = vperm.xlu0 %4995, %v4994
    %v4997 = vpop.permute.xlu0 %4996
    %vm4998 = vcmp.eq.s32.totalorder %v4997, 1
    %v4999 = vsel %vm4998, %v4992, %v4859
    %v5000 = vsel %vm4998, %v4990, %v4860
    %v5001 = vsel %vm4998, %v4992, 0.0
    %s5002 = scalar_lea.vmem %s6, 64
    %5003 = vst [vmem:[%s5002] sm:$0xff] %v5001
    %s5004 = smul.u32 9, 4
    %s5005 = smul.addr %s5004, 8
    %s5006 = scalar_lea.vmem [#allocation3], %s5005
    %v5007 = vld [vmem:[%s5006] sm:$0xff]
    %v5008 = vld [vmem:[%s5006 + $0x8] sm:$0xff]
    %v5009 = vld [vmem:[%s5006 + $0x10] sm:$0xff]
    %v5010 = vld [vmem:[%s5006 + $0x18] sm:$0xff]
    %v5011 = vpack.c.bf16 %v4999, %v4999
    %5012 = vmatprep.subr.bf16.mxu0 %v3718
    %5013 = vmatpush1.bf16.msra.mxu0 %v3717
    %5014 = vmatprep.subr.bf16.mxu0 %v3714
    %5015 = vmatpush1.bf16.msra.mxu0 %v3713
    %5016 = vmatprep.subr.bf16.mxu0 %v3710
    %5017 = vmatpush1.bf16.msra.mxu0 %v3709
    %5018 = vmatprep.subr.bf16.mxu0 %v3706
    %5019 = vmatpush1.bf16.msra.mxu0 %v3705
    %5020 = vmatprep.subr.bf16.mxu0 %v3702
    %5021 = vmatpush1.bf16.msra.mxu0 %v3701
    %5022 = vmatprep.subr.bf16.mxu0 %v3698
    %5023 = vmatpush1.bf16.msra.mxu0 %v3697
    %5024 = vmatprep.subr.bf16.mxu0 %v3694
    %5025 = vmatpush1.bf16.msra.mxu0 %v3693
    %5026 = vmatprep.subr.bf16.mxu0 %v3690
    %5027 = vmatpush1.bf16.msra.mxu0 %v3689
    %5028 = vmatprep.subr.bf16.mxu0 0
    %5029 = vmatpush2.bf16.msra.mxu0 0
    %5030 = vmatprep.subr.bf16.mxu0 0
    %5031 = vmatpush2.bf16.msra.mxu0 0
    %5032 = vmatprep.subr.bf16.mxu0 0
    %5033 = vmatpush2.bf16.msra.mxu0 0
    %5034 = vmatprep.subr.bf16.mxu0 0
    %5035 = vmatpush2.bf16.msra.mxu0 0
    %5036 = vmatprep.subr.bf16.mxu0 0
    %5037 = vmatpush2.bf16.msra.mxu0 0
    %5038 = vmatprep.subr.bf16.mxu0 0
    %5039 = vmatpush2.bf16.msra.mxu0 0
    %5040 = vmatprep.subr.bf16.mxu0 0
    %5041 = vmatpush2.bf16.msra.mxu0 0
    %5042 = vmatprep.subr.bf16.mxu0 0
    %5043 = vmatpush2.bf16.msra.mxu0 0
    %5044 = vmatprep.mubr.bf16.mxu0 0
    %5045 = vmatmul.mubr.bf16.gmra.mxu0 %v5011
    %v5046 = vpop.f32.mrf.mxu0
    %v5047 = vadd.f32 0.0, %v5046
    %v5048 = vpop.f32.mrf.mxu0
    %v5049 = vadd.f32 0.0, %v5048
    %v5050 = vpop.f32.mrf.mxu0
    %v5051 = vpop.f32.mrf.mxu0
    %5052 = vdwg.mxu0
    %5053 = vmatprep.subr.bf16.mxu0 %v3720
    %5054 = vmatpush1.bf16.msra.mxu0 %v3719
    %5055 = vmatprep.subr.bf16.mxu0 %v3716
    %5056 = vmatpush1.bf16.msra.mxu0 %v3715
    %5057 = vmatprep.subr.bf16.mxu0 %v3712
    %5058 = vmatpush1.bf16.msra.mxu0 %v3711
    %5059 = vmatprep.subr.bf16.mxu0 %v3708
    %5060 = vmatpush1.bf16.msra.mxu0 %v3707
    %5061 = vmatprep.subr.bf16.mxu0 %v3704
    %5062 = vmatpush1.bf16.msra.mxu0 %v3703
    %5063 = vmatprep.subr.bf16.mxu0 %v3700
    %5064 = vmatpush1.bf16.msra.mxu0 %v3699
    %5065 = vmatprep.subr.bf16.mxu0 %v3696
    %5066 = vmatpush1.bf16.msra.mxu0 %v3695
    %5067 = vmatprep.subr.bf16.mxu0 %v3692
    %5068 = vmatpush1.bf16.msra.mxu0 %v3691
    %5069 = vmatprep.subr.bf16.mxu0 0
    %5070 = vmatpush2.bf16.msra.mxu0 0
    %5071 = vmatprep.subr.bf16.mxu0 0
    %5072 = vmatpush2.bf16.msra.mxu0 0
    %5073 = vmatprep.subr.bf16.mxu0 0
    %5074 = vmatpush2.bf16.msra.mxu0 0
    %5075 = vmatprep.subr.bf16.mxu0 0
    %5076 = vmatpush2.bf16.msra.mxu0 0
    %5077 = vmatprep.subr.bf16.mxu0 0
    %5078 = vmatpush2.bf16.msra.mxu0 0
    %5079 = vmatprep.subr.bf16.mxu0 0
    %5080 = vmatpush2.bf16.msra.mxu0 0
    %5081 = vmatprep.subr.bf16.mxu0 0
    %5082 = vmatpush2.bf16.msra.mxu0 0
    %5083 = vmatprep.subr.bf16.mxu0 0
    %5084 = vmatpush2.bf16.msra.mxu0 0
    %5085 = vmatprep.mubr.bf16.mxu0 0
    %5086 = vmatmul.mubr.bf16.gmra.mxu0 %v5011
    %v5087 = vpop.f32.mrf.mxu0
    %v5088 = vadd.f32 0.0, %v5087
    %v5089 = vpop.f32.mrf.mxu0
    %v5090 = vadd.f32 0.0, %v5089
    %v5091 = vpop.f32.mrf.mxu0
    %v5092 = vpop.f32.mrf.mxu0
    %5093 = vdwg.mxu0
    %v5094 = vadd.f32 %v5007, %v5047
    %v5095 = vadd.f32 %v5008, %v5049
    %v5096 = vadd.f32 %v5009, %v5088
    %v5097 = vadd.f32 %v5010, %v5090
    %v5098 = vpack.c.bf16 %v5094, %v5094
    %v5099 = vpack.c.bf16 %v5095, %v5095
    %v5100 = vpack.c.bf16 %v5096, %v5096
    %v5101 = vpack.c.bf16 %v5097, %v5097
    %v5102 = vxor.u32 %v5098, 2147516416
    %v5104 = vmul.bf16 %v5102, 1069105081
    %v5105 = vpow.bf16.pop %v5104
    %v5106 = vadd.bf16 %v5105, 1065369472
    %v5107 = vrcp.bf16.pop %v5106
    %v5108 = vmul.bf16 1065369472, %v5107
    %v5109 = vunpack.c.l.bf16 %v5108
    %v5110 = vxor.u32 %v5099, 2147516416
    %v5112 = vmul.bf16 %v5110, 1069105081
    %v5113 = vpow.bf16.pop %v5112
    %v5114 = vadd.bf16 %v5113, 1065369472
    %v5115 = vrcp.bf16.pop %v5114
    %v5116 = vmul.bf16 1065369472, %v5115
    %v5117 = vunpack.c.l.bf16 %v5116
    %v5118 = vtanh.bf16.pop %v5100
    %v5119 = vunpack.c.l.bf16 %v5118
    %v5120 = vxor.u32 %v5101, 2147516416
    %v5122 = vmul.bf16 %v5120, 1069105081
    %v5123 = vpow.bf16.pop %v5122
    %v5124 = vadd.bf16 %v5123, 1065369472
    %v5125 = vrcp.bf16.pop %v5124
    %v5126 = vmul.bf16 1065369472, %v5125
    %v5127 = vunpack.c.l.bf16 %v5126
    %v5128 = vmul.f32 %v5117, %v5000
    %v5129 = vmul.f32 %v5109, %v5119
    %v5130 = vadd.f32 %v5128, %v5129
    %v5131 = vtanh.pop %v5130
    %v5132 = vmul.f32 %v5127, %v5131
    %vm5133 = vcmp.gt.s32.totalorder %v24, 9
    %v5134 = vsel %vm5133, 1, 0
    %5135 = vset.pattern.permute.xlu0 0
    %5136 = vperm.xlu0 %5135, %v5134
    %v5137 = vpop.permute.xlu0 %5136
    %vm5138 = vcmp.eq.s32.totalorder %v5137, 1
    %v5139 = vsel %vm5138, %v5132, %v4999
    %v5140 = vsel %vm5138, %v5130, %v5000
    %v5141 = vsel %vm5138, %v5132, 0.0
    %s5142 = scalar_lea.vmem %s6, 72
    %5143 = vst [vmem:[%s5142] sm:$0xff] %v5141
    %s5144 = smul.u32 10, 4
    %s5145 = smul.addr %s5144, 8
    %s5146 = scalar_lea.vmem [#allocation3], %s5145
    %v5147 = vld [vmem:[%s5146] sm:$0xff]
    %v5148 = vld [vmem:[%s5146 + $0x8] sm:$0xff]
    %v5149 = vld [vmem:[%s5146 + $0x10] sm:$0xff]
    %v5150 = vld [vmem:[%s5146 + $0x18] sm:$0xff]
    %v5151 = vpack.c.bf16 %v5139, %v5139
    %5152 = vmatprep.subr.bf16.mxu0 %v3718
    %5153 = vmatpush1.bf16.msra.mxu0 %v3717
    %5154 = vmatprep.subr.bf16.mxu0 %v3714
    %5155 = vmatpush1.bf16.msra.mxu0 %v3713
    %5156 = vmatprep.subr.bf16.mxu0 %v3710
    %5157 = vmatpush1.bf16.msra.mxu0 %v3709
    %5158 = vmatprep.subr.bf16.mxu0 %v3706
    %5159 = vmatpush1.bf16.msra.mxu0 %v3705
    %5160 = vmatprep.subr.bf16.mxu0 %v3702
    %5161 = vmatpush1.bf16.msra.mxu0 %v3701
    %5162 = vmatprep.subr.bf16.mxu0 %v3698
    %5163 = vmatpush1.bf16.msra.mxu0 %v3697
    %5164 = vmatprep.subr.bf16.mxu0 %v3694
    %5165 = vmatpush1.bf16.msra.mxu0 %v3693
    %5166 = vmatprep.subr.bf16.mxu0 %v3690
    %5167 = vmatpush1.bf16.msra.mxu0 %v3689
    %5168 = vmatprep.subr.bf16.mxu0 0
    %5169 = vmatpush2.bf16.msra.mxu0 0
    %5170 = vmatprep.subr.bf16.mxu0 0
    %5171 = vmatpush2.bf16.msra.mxu0 0
    %5172 = vmatprep.subr.bf16.mxu0 0
    %5173 = vmatpush2.bf16.msra.mxu0 0
    %5174 = vmatprep.subr.bf16.mxu0 0
    %5175 = vmatpush2.bf16.msra.mxu0 0
    %5176 = vmatprep.subr.bf16.mxu0 0
    %5177 = vmatpush2.bf16.msra.mxu0 0
    %5178 = vmatprep.subr.bf16.mxu0 0
    %5179 = vmatpush2.bf16.msra.mxu0 0
    %5180 = vmatprep.subr.bf16.mxu0 0
    %5181 = vmatpush2.bf16.msra.mxu0 0
    %5182 = vmatprep.subr.bf16.mxu0 0
    %5183 = vmatpush2.bf16.msra.mxu0 0
    %5184 = vmatprep.mubr.bf16.mxu0 0
    %5185 = vmatmul.mubr.bf16.gmra.mxu0 %v5151
    %v5186 = vpop.f32.mrf.mxu0
    %v5187 = vadd.f32 0.0, %v5186
    %v5188 = vpop.f32.mrf.mxu0
    %v5189 = vadd.f32 0.0, %v5188
    %v5190 = vpop.f32.mrf.mxu0
    %v5191 = vpop.f32.mrf.mxu0
    %5192 = vdwg.mxu0
    %5193 = vmatprep.subr.bf16.mxu0 %v3720
    %5194 = vmatpush1.bf16.msra.mxu0 %v3719
    %5195 = vmatprep.subr.bf16.mxu0 %v3716
    %5196 = vmatpush1.bf16.msra.mxu0 %v3715
    %5197 = vmatprep.subr.bf16.mxu0 %v3712
    %5198 = vmatpush1.bf16.msra.mxu0 %v3711
    %5199 = vmatprep.subr.bf16.mxu0 %v3708
    %5200 = vmatpush1.bf16.msra.mxu0 %v3707
    %5201 = vmatprep.subr.bf16.mxu0 %v3704
    %5202 = vmatpush1.bf16.msra.mxu0 %v3703
    %5203 = vmatprep.subr.bf16.mxu0 %v3700
    %5204 = vmatpush1.bf16.msra.mxu0 %v3699
    %5205 = vmatprep.subr.bf16.mxu0 %v3696
    %5206 = vmatpush1.bf16.msra.mxu0 %v3695
    %5207 = vmatprep.subr.bf16.mxu0 %v3692
    %5208 = vmatpush1.bf16.msra.mxu0 %v3691
    %5209 = vmatprep.subr.bf16.mxu0 0
    %5210 = vmatpush2.bf16.msra.mxu0 0
    %5211 = vmatprep.subr.bf16.mxu0 0
    %5212 = vmatpush2.bf16.msra.mxu0 0
    %5213 = vmatprep.subr.bf16.mxu0 0
    %5214 = vmatpush2.bf16.msra.mxu0 0
    %5215 = vmatprep.subr.bf16.mxu0 0
    %5216 = vmatpush2.bf16.msra.mxu0 0
    %5217 = vmatprep.subr.bf16.mxu0 0
    %5218 = vmatpush2.bf16.msra.mxu0 0
    %5219 = vmatprep.subr.bf16.mxu0 0
    %5220 = vmatpush2.bf16.msra.mxu0 0
    %5221 = vmatprep.subr.bf16.mxu0 0
    %5222 = vmatpush2.bf16.msra.mxu0 0
    %5223 = vmatprep.subr.bf16.mxu0 0
    %5224 = vmatpush2.bf16.msra.mxu0 0
    %5225 = vmatprep.mubr.bf16.mxu0 0
    %5226 = vmatmul.mubr.bf16.gmra.mxu0 %v5151
    %v5227 = vpop.f32.mrf.mxu0
    %v5228 = vadd.f32 0.0, %v5227
    %v5229 = vpop.f32.mrf.mxu0
    %v5230 = vadd.f32 0.0, %v5229
    %v5231 = vpop.f32.mrf.mxu0
    %v5232 = vpop.f32.mrf.mxu0
    %5233 = vdwg.mxu0
    %v5234 = vadd.f32 %v5147, %v5187
    %v5235 = vadd.f32 %v5148, %v5189
    %v5236 = vadd.f32 %v5149, %v5228
    %v5237 = vadd.f32 %v5150, %v5230
    %v5238 = vpack.c.bf16 %v5234, %v5234
    %v5239 = vpack.c.bf16 %v5235, %v5235
    %v5240 = vpack.c.bf16 %v5236, %v5236
    %v5241 = vpack.c.bf16 %v5237, %v5237
    %v5242 = vxor.u32 %v5238, 2147516416
    %v5244 = vmul.bf16 %v5242, 1069105081
    %v5245 = vpow.bf16.pop %v5244
    %v5246 = vadd.bf16 %v5245, 1065369472
    %v5247 = vrcp.bf16.pop %v5246
    %v5248 = vmul.bf16 1065369472, %v5247
    %v5249 = vunpack.c.l.bf16 %v5248
    %v5250 = vxor.u32 %v5239, 2147516416
    %v5252 = vmul.bf16 %v5250, 1069105081
    %v5253 = vpow.bf16.pop %v5252
    %v5254 = vadd.bf16 %v5253, 1065369472
    %v5255 = vrcp.bf16.pop %v5254
    %v5256 = vmul.bf16 1065369472, %v5255
    %v5257 = vunpack.c.l.bf16 %v5256
    %v5258 = vtanh.bf16.pop %v5240
    %v5259 = vunpack.c.l.bf16 %v5258
    %v5260 = vxor.u32 %v5241, 2147516416
    %v5262 = vmul.bf16 %v5260, 1069105081
    %v5263 = vpow.bf16.pop %v5262
    %v5264 = vadd.bf16 %v5263, 1065369472
    %v5265 = vrcp.bf16.pop %v5264
    %v5266 = vmul.bf16 1065369472, %v5265
    %v5267 = vunpack.c.l.bf16 %v5266
    %v5268 = vmul.f32 %v5257, %v5140
    %v5269 = vmul.f32 %v5249, %v5259
    %v5270 = vadd.f32 %v5268, %v5269
    %v5271 = vtanh.pop %v5270
    %v5272 = vmul.f32 %v5267, %v5271
    %vm5273 = vcmp.gt.s32.totalorder %v24, 10
    %v5274 = vsel %vm5273, 1, 0
    %5275 = vset.pattern.permute.xlu0 0
    %5276 = vperm.xlu0 %5275, %v5274
    %v5277 = vpop.permute.xlu0 %5276
    %vm5278 = vcmp.eq.s32.totalorder %v5277, 1
    %v5279 = vsel %vm5278, %v5272, %v5139
    %v5280 = vsel %vm5278, %v5270, %v5140
    %v5281 = vsel %vm5278, %v5272, 0.0
    %s5282 = scalar_lea.vmem %s6, 80
    %5283 = vst [vmem:[%s5282] sm:$0xff] %v5281
    %s5284 = smul.u32 11, 4
    %s5285 = smul.addr %s5284, 8
    %s5286 = scalar_lea.vmem [#allocation3], %s5285
    %v5287 = vld [vmem:[%s5286] sm:$0xff]
    %v5288 = vld [vmem:[%s5286 + $0x8] sm:$0xff]
    %v5289 = vld [vmem:[%s5286 + $0x10] sm:$0xff]
    %v5290 = vld [vmem:[%s5286 + $0x18] sm:$0xff]
    %v5291 = vpack.c.bf16 %v5279, %v5279
    %5292 = vmatprep.subr.bf16.mxu0 %v3718
    %5293 = vmatpush1.bf16.msra.mxu0 %v3717
    %5294 = vmatprep.subr.bf16.mxu0 %v3714
    %5295 = vmatpush1.bf16.msra.mxu0 %v3713
    %5296 = vmatprep.subr.bf16.mxu0 %v3710
    %5297 = vmatpush1.bf16.msra.mxu0 %v3709
    %5298 = vmatprep.subr.bf16.mxu0 %v3706
    %5299 = vmatpush1.bf16.msra.mxu0 %v3705
    %5300 = vmatprep.subr.bf16.mxu0 %v3702
    %5301 = vmatpush1.bf16.msra.mxu0 %v3701
    %5302 = vmatprep.subr.bf16.mxu0 %v3698
    %5303 = vmatpush1.bf16.msra.mxu0 %v3697
    %5304 = vmatprep.subr.bf16.mxu0 %v3694
    %5305 = vmatpush1.bf16.msra.mxu0 %v3693
    %5306 = vmatprep.subr.bf16.mxu0 %v3690
    %5307 = vmatpush1.bf16.msra.mxu0 %v3689
    %5308 = vmatprep.subr.bf16.mxu0 0
    %5309 = vmatpush2.bf16.msra.mxu0 0
    %5310 = vmatprep.subr.bf16.mxu0 0
    %5311 = vmatpush2.bf16.msra.mxu0 0
    %5312 = vmatprep.subr.bf16.mxu0 0
    %5313 = vmatpush2.bf16.msra.mxu0 0
    %5314 = vmatprep.subr.bf16.mxu0 0
    %5315 = vmatpush2.bf16.msra.mxu0 0
    %5316 = vmatprep.subr.bf16.mxu0 0
    %5317 = vmatpush2.bf16.msra.mxu0 0
    %5318 = vmatprep.subr.bf16.mxu0 0
    %5319 = vmatpush2.bf16.msra.mxu0 0
    %5320 = vmatprep.subr.bf16.mxu0 0
    %5321 = vmatpush2.bf16.msra.mxu0 0
    %5322 = vmatprep.subr.bf16.mxu0 0
    %5323 = vmatpush2.bf16.msra.mxu0 0
    %5324 = vmatprep.mubr.bf16.mxu0 0
    %5325 = vmatmul.mubr.bf16.gmra.mxu0 %v5291
    %v5326 = vpop.f32.mrf.mxu0
    %v5327 = vadd.f32 0.0, %v5326
    %v5328 = vpop.f32.mrf.mxu0
    %v5329 = vadd.f32 0.0, %v5328
    %v5330 = vpop.f32.mrf.mxu0
    %v5331 = vpop.f32.mrf.mxu0
    %5332 = vdwg.mxu0
    %5333 = vmatprep.subr.bf16.mxu0 %v3720
    %5334 = vmatpush1.bf16.msra.mxu0 %v3719
    %5335 = vmatprep.subr.bf16.mxu0 %v3716
    %5336 = vmatpush1.bf16.msra.mxu0 %v3715
    %5337 = vmatprep.subr.bf16.mxu0 %v3712
    %5338 = vmatpush1.bf16.msra.mxu0 %v3711
    %5339 = vmatprep.subr.bf16.mxu0 %v3708
    %5340 = vmatpush1.bf16.msra.mxu0 %v3707
    %5341 = vmatprep.subr.bf16.mxu0 %v3704
    %5342 = vmatpush1.bf16.msra.mxu0 %v3703
    %5343 = vmatprep.subr.bf16.mxu0 %v3700
    %5344 = vmatpush1.bf16.msra.mxu0 %v3699
    %5345 = vmatprep.subr.bf16.mxu0 %v3696
    %5346 = vmatpush1.bf16.msra.mxu0 %v3695
    %5347 = vmatprep.subr.bf16.mxu0 %v3692
    %5348 = vmatpush1.bf16.msra.mxu0 %v3691
    %5349 = vmatprep.subr.bf16.mxu0 0
    %5350 = vmatpush2.bf16.msra.mxu0 0
    %5351 = vmatprep.subr.bf16.mxu0 0
    %5352 = vmatpush2.bf16.msra.mxu0 0
    %5353 = vmatprep.subr.bf16.mxu0 0
    %5354 = vmatpush2.bf16.msra.mxu0 0
    %5355 = vmatprep.subr.bf16.mxu0 0
    %5356 = vmatpush2.bf16.msra.mxu0 0
    %5357 = vmatprep.subr.bf16.mxu0 0
    %5358 = vmatpush2.bf16.msra.mxu0 0
    %5359 = vmatprep.subr.bf16.mxu0 0
    %5360 = vmatpush2.bf16.msra.mxu0 0
    %5361 = vmatprep.subr.bf16.mxu0 0
    %5362 = vmatpush2.bf16.msra.mxu0 0
    %5363 = vmatprep.subr.bf16.mxu0 0
    %5364 = vmatpush2.bf16.msra.mxu0 0
    %5365 = vmatprep.mubr.bf16.mxu0 0
    %5366 = vmatmul.mubr.bf16.gmra.mxu0 %v5291
    %v5367 = vpop.f32.mrf.mxu0
    %v5368 = vadd.f32 0.0, %v5367
    %v5369 = vpop.f32.mrf.mxu0
    %v5370 = vadd.f32 0.0, %v5369
    %v5371 = vpop.f32.mrf.mxu0
    %v5372 = vpop.f32.mrf.mxu0
    %5373 = vdwg.mxu0
    %v5374 = vadd.f32 %v5287, %v5327
    %v5375 = vadd.f32 %v5288, %v5329
    %v5376 = vadd.f32 %v5289, %v5368
    %v5377 = vadd.f32 %v5290, %v5370
    %v5378 = vpack.c.bf16 %v5374, %v5374
    %v5379 = vpack.c.bf16 %v5375, %v5375
    %v5380 = vpack.c.bf16 %v5376, %v5376
    %v5381 = vpack.c.bf16 %v5377, %v5377
    %v5382 = vxor.u32 %v5378, 2147516416
    %v5384 = vmul.bf16 %v5382, 1069105081
    %v5385 = vpow.bf16.pop %v5384
    %v5386 = vadd.bf16 %v5385, 1065369472
    %v5387 = vrcp.bf16.pop %v5386
    %v5388 = vmul.bf16 1065369472, %v5387
    %v5389 = vunpack.c.l.bf16 %v5388
    %v5390 = vxor.u32 %v5379, 2147516416
    %v5392 = vmul.bf16 %v5390, 1069105081
    %v5393 = vpow.bf16.pop %v5392
    %v5394 = vadd.bf16 %v5393, 1065369472
    %v5395 = vrcp.bf16.pop %v5394
    %v5396 = vmul.bf16 1065369472, %v5395
    %v5397 = vunpack.c.l.bf16 %v5396
    %v5398 = vtanh.bf16.pop %v5380
    %v5399 = vunpack.c.l.bf16 %v5398
    %v5400 = vxor.u32 %v5381, 2147516416
    %v5402 = vmul.bf16 %v5400, 1069105081
    %v5403 = vpow.bf16.pop %v5402
    %v5404 = vadd.bf16 %v5403, 1065369472
    %v5405 = vrcp.bf16.pop %v5404
    %v5406 = vmul.bf16 1065369472, %v5405
    %v5407 = vunpack.c.l.bf16 %v5406
    %v5408 = vmul.f32 %v5397, %v5280
    %v5409 = vmul.f32 %v5389, %v5399
    %v5410 = vadd.f32 %v5408, %v5409
    %v5411 = vtanh.pop %v5410
    %v5412 = vmul.f32 %v5407, %v5411
    %vm5413 = vcmp.gt.s32.totalorder %v24, 11
    %v5414 = vsel %vm5413, 1, 0
    %5415 = vset.pattern.permute.xlu0 0
    %5416 = vperm.xlu0 %5415, %v5414
    %v5417 = vpop.permute.xlu0 %5416
    %vm5418 = vcmp.eq.s32.totalorder %v5417, 1
    %v5419 = vsel %vm5418, %v5412, %v5279
    %v5420 = vsel %vm5418, %v5410, %v5280
    %v5421 = vsel %vm5418, %v5412, 0.0
    %s5422 = scalar_lea.vmem %s6, 88
    %5423 = vst [vmem:[%s5422] sm:$0xff] %v5421
    %s5424 = smul.u32 12, 4
    %s5425 = smul.addr %s5424, 8
    %s5426 = scalar_lea.vmem [#allocation3], %s5425
    %v5427 = vld [vmem:[%s5426] sm:$0xff]
    %v5428 = vld [vmem:[%s5426 + $0x8] sm:$0xff]
    %v5429 = vld [vmem:[%s5426 + $0x10] sm:$0xff]
    %v5430 = vld [vmem:[%s5426 + $0x18] sm:$0xff]
    %v5431 = vpack.c.bf16 %v5419, %v5419
    %5432 = vmatprep.subr.bf16.mxu0 %v3718
    %5433 = vmatpush1.bf16.msra.mxu0 %v3717
    %5434 = vmatprep.subr.bf16.mxu0 %v3714
    %5435 = vmatpush1.bf16.msra.mxu0 %v3713
    %5436 = vmatprep.subr.bf16.mxu0 %v3710
    %5437 = vmatpush1.bf16.msra.mxu0 %v3709
    %5438 = vmatprep.subr.bf16.mxu0 %v3706
    %5439 = vmatpush1.bf16.msra.mxu0 %v3705
    %5440 = vmatprep.subr.bf16.mxu0 %v3702
    %5441 = vmatpush1.bf16.msra.mxu0 %v3701
    %5442 = vmatprep.subr.bf16.mxu0 %v3698
    %5443 = vmatpush1.bf16.msra.mxu0 %v3697
    %5444 = vmatprep.subr.bf16.mxu0 %v3694
    %5445 = vmatpush1.bf16.msra.mxu0 %v3693
    %5446 = vmatprep.subr.bf16.mxu0 %v3690
    %5447 = vmatpush1.bf16.msra.mxu0 %v3689
    %5448 = vmatprep.subr.bf16.mxu0 0
    %5449 = vmatpush2.bf16.msra.mxu0 0
    %5450 = vmatprep.subr.bf16.mxu0 0
    %5451 = vmatpush2.bf16.msra.mxu0 0
    %5452 = vmatprep.subr.bf16.mxu0 0
    %5453 = vmatpush2.bf16.msra.mxu0 0
    %5454 = vmatprep.subr.bf16.mxu0 0
    %5455 = vmatpush2.bf16.msra.mxu0 0
    %5456 = vmatprep.subr.bf16.mxu0 0
    %5457 = vmatpush2.bf16.msra.mxu0 0
    %5458 = vmatprep.subr.bf16.mxu0 0
    %5459 = vmatpush2.bf16.msra.mxu0 0
    %5460 = vmatprep.subr.bf16.mxu0 0
    %5461 = vmatpush2.bf16.msra.mxu0 0
    %5462 = vmatprep.subr.bf16.mxu0 0
    %5463 = vmatpush2.bf16.msra.mxu0 0
    %5464 = vmatprep.mubr.bf16.mxu0 0
    %5465 = vmatmul.mubr.bf16.gmra.mxu0 %v5431
    %v5466 = vpop.f32.mrf.mxu0
    %v5467 = vadd.f32 0.0, %v5466
    %v5468 = vpop.f32.mrf.mxu0
    %v5469 = vadd.f32 0.0, %v5468
    %v5470 = vpop.f32.mrf.mxu0
    %v5471 = vpop.f32.mrf.mxu0
    %5472 = vdwg.mxu0
    %5473 = vmatprep.subr.bf16.mxu0 %v3720
    %5474 = vmatpush1.bf16.msra.mxu0 %v3719
    %5475 = vmatprep.subr.bf16.mxu0 %v3716
    %5476 = vmatpush1.bf16.msra.mxu0 %v3715
    %5477 = vmatprep.subr.bf16.mxu0 %v3712
    %5478 = vmatpush1.bf16.msra.mxu0 %v3711
    %5479 = vmatprep.subr.bf16.mxu0 %v3708
    %5480 = vmatpush1.bf16.msra.mxu0 %v3707
    %5481 = vmatprep.subr.bf16.mxu0 %v3704
    %5482 = vmatpush1.bf16.msra.mxu0 %v3703
    %5483 = vmatprep.subr.bf16.mxu0 %v3700
    %5484 = vmatpush1.bf16.msra.mxu0 %v3699
    %5485 = vmatprep.subr.bf16.mxu0 %v3696
    %5486 = vmatpush1.bf16.msra.mxu0 %v3695
    %5487 = vmatprep.subr.bf16.mxu0 %v3692
    %5488 = vmatpush1.bf16.msra.mxu0 %v3691
    %5489 = vmatprep.subr.bf16.mxu0 0
    %5490 = vmatpush2.bf16.msra.mxu0 0
    %5491 = vmatprep.subr.bf16.mxu0 0
    %5492 = vmatpush2.bf16.msra.mxu0 0
    %5493 = vmatprep.subr.bf16.mxu0 0
    %5494 = vmatpush2.bf16.msra.mxu0 0
    %5495 = vmatprep.subr.bf16.mxu0 0
    %5496 = vmatpush2.bf16.msra.mxu0 0
    %5497 = vmatprep.subr.bf16.mxu0 0
    %5498 = vmatpush2.bf16.msra.mxu0 0
    %5499 = vmatprep.subr.bf16.mxu0 0
    %5500 = vmatpush2.bf16.msra.mxu0 0
    %5501 = vmatprep.subr.bf16.mxu0 0
    %5502 = vmatpush2.bf16.msra.mxu0 0
    %5503 = vmatprep.subr.bf16.mxu0 0
    %5504 = vmatpush2.bf16.msra.mxu0 0
    %5505 = vmatprep.mubr.bf16.mxu0 0
    %5506 = vmatmul.mubr.bf16.gmra.mxu0 %v5431
    %v5507 = vpop.f32.mrf.mxu0
    %v5508 = vadd.f32 0.0, %v5507
    %v5509 = vpop.f32.mrf.mxu0
    %v5510 = vadd.f32 0.0, %v5509
    %v5511 = vpop.f32.mrf.mxu0
    %v5512 = vpop.f32.mrf.mxu0
    %5513 = vdwg.mxu0
    %v5514 = vadd.f32 %v5427, %v5467
    %v5515 = vadd.f32 %v5428, %v5469
    %v5516 = vadd.f32 %v5429, %v5508
    %v5517 = vadd.f32 %v5430, %v5510
    %v5518 = vpack.c.bf16 %v5514, %v5514
    %v5519 = vpack.c.bf16 %v5515, %v5515
    %v5520 = vpack.c.bf16 %v5516, %v5516
    %v5521 = vpack.c.bf16 %v5517, %v5517
    %v5522 = vxor.u32 %v5518, 2147516416
    %v5524 = vmul.bf16 %v5522, 1069105081
    %v5525 = vpow.bf16.pop %v5524
    %v5526 = vadd.bf16 %v5525, 1065369472
    %v5527 = vrcp.bf16.pop %v5526
    %v5528 = vmul.bf16 1065369472, %v5527
    %v5529 = vunpack.c.l.bf16 %v5528
    %v5530 = vxor.u32 %v5519, 2147516416
    %v5532 = vmul.bf16 %v5530, 1069105081
    %v5533 = vpow.bf16.pop %v5532
    %v5534 = vadd.bf16 %v5533, 1065369472
    %v5535 = vrcp.bf16.pop %v5534
    %v5536 = vmul.bf16 1065369472, %v5535
    %v5537 = vunpack.c.l.bf16 %v5536
    %v5538 = vtanh.bf16.pop %v5520
    %v5539 = vunpack.c.l.bf16 %v5538
    %v5540 = vxor.u32 %v5521, 2147516416
    %v5542 = vmul.bf16 %v5540, 1069105081
    %v5543 = vpow.bf16.pop %v5542
    %v5544 = vadd.bf16 %v5543, 1065369472
    %v5545 = vrcp.bf16.pop %v5544
    %v5546 = vmul.bf16 1065369472, %v5545
    %v5547 = vunpack.c.l.bf16 %v5546
    %v5548 = vmul.f32 %v5537, %v5420
    %v5549 = vmul.f32 %v5529, %v5539
    %v5550 = vadd.f32 %v5548, %v5549
    %v5551 = vtanh.pop %v5550
    %v5552 = vmul.f32 %v5547, %v5551
    %vm5553 = vcmp.gt.s32.totalorder %v24, 12
    %v5554 = vsel %vm5553, 1, 0
    %5555 = vset.pattern.permute.xlu0 0
    %5556 = vperm.xlu0 %5555, %v5554
    %v5557 = vpop.permute.xlu0 %5556
    %vm5558 = vcmp.eq.s32.totalorder %v5557, 1
    %v5559 = vsel %vm5558, %v5552, %v5419
    %v5560 = vsel %vm5558, %v5550, %v5420
    %v5561 = vsel %vm5558, %v5552, 0.0
    %s5562 = scalar_lea.vmem %s6, 96
    %5563 = vst [vmem:[%s5562] sm:$0xff] %v5561
    %s5564 = smul.u32 13, 4
    %s5565 = smul.addr %s5564, 8
    %s5566 = scalar_lea.vmem [#allocation3], %s5565
    %v5567 = vld [vmem:[%s5566] sm:$0xff]
    %v5568 = vld [vmem:[%s5566 + $0x8] sm:$0xff]
    %v5569 = vld [vmem:[%s5566 + $0x10] sm:$0xff]
    %v5570 = vld [vmem:[%s5566 + $0x18] sm:$0xff]
    %v5571 = vpack.c.bf16 %v5559, %v5559
    %5572 = vmatprep.subr.bf16.mxu0 %v3718
    %5573 = vmatpush1.bf16.msra.mxu0 %v3717
    %5574 = vmatprep.subr.bf16.mxu0 %v3714
    %5575 = vmatpush1.bf16.msra.mxu0 %v3713
    %5576 = vmatprep.subr.bf16.mxu0 %v3710
    %5577 = vmatpush1.bf16.msra.mxu0 %v3709
    %5578 = vmatprep.subr.bf16.mxu0 %v3706
    %5579 = vmatpush1.bf16.msra.mxu0 %v3705
    %5580 = vmatprep.subr.bf16.mxu0 %v3702
    %5581 = vmatpush1.bf16.msra.mxu0 %v3701
    %5582 = vmatprep.subr.bf16.mxu0 %v3698
    %5583 = vmatpush1.bf16.msra.mxu0 %v3697
    %5584 = vmatprep.subr.bf16.mxu0 %v3694
    %5585 = vmatpush1.bf16.msra.mxu0 %v3693
    %5586 = vmatprep.subr.bf16.mxu0 %v3690
    %5587 = vmatpush1.bf16.msra.mxu0 %v3689
    %5588 = vmatprep.subr.bf16.mxu0 0
    %5589 = vmatpush2.bf16.msra.mxu0 0
    %5590 = vmatprep.subr.bf16.mxu0 0
    %5591 = vmatpush2.bf16.msra.mxu0 0
    %5592 = vmatprep.subr.bf16.mxu0 0
    %5593 = vmatpush2.bf16.msra.mxu0 0
    %5594 = vmatprep.subr.bf16.mxu0 0
    %5595 = vmatpush2.bf16.msra.mxu0 0
    %5596 = vmatprep.subr.bf16.mxu0 0
    %5597 = vmatpush2.bf16.msra.mxu0 0
    %5598 = vmatprep.subr.bf16.mxu0 0
    %5599 = vmatpush2.bf16.msra.mxu0 0
    %5600 = vmatprep.subr.bf16.mxu0 0
    %5601 = vmatpush2.bf16.msra.mxu0 0
    %5602 = vmatprep.subr.bf16.mxu0 0
    %5603 = vmatpush2.bf16.msra.mxu0 0
    %5604 = vmatprep.mubr.bf16.mxu0 0
    %5605 = vmatmul.mubr.bf16.gmra.mxu0 %v5571
    %v5606 = vpop.f32.mrf.mxu0
    %v5607 = vadd.f32 0.0, %v5606
    %v5608 = vpop.f32.mrf.mxu0
    %v5609 = vadd.f32 0.0, %v5608
    %v5610 = vpop.f32.mrf.mxu0
    %v5611 = vpop.f32.mrf.mxu0
    %5612 = vdwg.mxu0
    %5613 = vmatprep.subr.bf16.mxu0 %v3720
    %5614 = vmatpush1.bf16.msra.mxu0 %v3719
    %5615 = vmatprep.subr.bf16.mxu0 %v3716
    %5616 = vmatpush1.bf16.msra.mxu0 %v3715
    %5617 = vmatprep.subr.bf16.mxu0 %v3712
    %5618 = vmatpush1.bf16.msra.mxu0 %v3711
    %5619 = vmatprep.subr.bf16.mxu0 %v3708
    %5620 = vmatpush1.bf16.msra.mxu0 %v3707
    %5621 = vmatprep.subr.bf16.mxu0 %v3704
    %5622 = vmatpush1.bf16.msra.mxu0 %v3703
    %5623 = vmatprep.subr.bf16.mxu0 %v3700
    %5624 = vmatpush1.bf16.msra.mxu0 %v3699
    %5625 = vmatprep.subr.bf16.mxu0 %v3696
    %5626 = vmatpush1.bf16.msra.mxu0 %v3695
    %5627 = vmatprep.subr.bf16.mxu0 %v3692
    %5628 = vmatpush1.bf16.msra.mxu0 %v3691
    %5629 = vmatprep.subr.bf16.mxu0 0
    %5630 = vmatpush2.bf16.msra.mxu0 0
    %5631 = vmatprep.subr.bf16.mxu0 0
    %5632 = vmatpush2.bf16.msra.mxu0 0
    %5633 = vmatprep.subr.bf16.mxu0 0
    %5634 = vmatpush2.bf16.msra.mxu0 0
    %5635 = vmatprep.subr.bf16.mxu0 0
    %5636 = vmatpush2.bf16.msra.mxu0 0
    %5637 = vmatprep.subr.bf16.mxu0 0
    %5638 = vmatpush2.bf16.msra.mxu0 0
    %5639 = vmatprep.subr.bf16.mxu0 0
    %5640 = vmatpush2.bf16.msra.mxu0 0
    %5641 = vmatprep.subr.bf16.mxu0 0
    %5642 = vmatpush2.bf16.msra.mxu0 0
    %5643 = vmatprep.subr.bf16.mxu0 0
    %5644 = vmatpush2.bf16.msra.mxu0 0
    %5645 = vmatprep.mubr.bf16.mxu0 0
    %5646 = vmatmul.mubr.bf16.gmra.mxu0 %v5571
    %v5647 = vpop.f32.mrf.mxu0
    %v5648 = vadd.f32 0.0, %v5647
    %v5649 = vpop.f32.mrf.mxu0
    %v5650 = vadd.f32 0.0, %v5649
    %v5651 = vpop.f32.mrf.mxu0
    %v5652 = vpop.f32.mrf.mxu0
    %5653 = vdwg.mxu0
    %v5654 = vadd.f32 %v5567, %v5607
    %v5655 = vadd.f32 %v5568, %v5609
    %v5656 = vadd.f32 %v5569, %v5648
    %v5657 = vadd.f32 %v5570, %v5650
    %v5658 = vpack.c.bf16 %v5654, %v5654
    %v5659 = vpack.c.bf16 %v5655, %v5655
    %v5660 = vpack.c.bf16 %v5656, %v5656
    %v5661 = vpack.c.bf16 %v5657, %v5657
    %v5662 = vxor.u32 %v5658, 2147516416
    %v5664 = vmul.bf16 %v5662, 1069105081
    %v5665 = vpow.bf16.pop %v5664
    %v5666 = vadd.bf16 %v5665, 1065369472
    %v5667 = vrcp.bf16.pop %v5666
    %v5668 = vmul.bf16 1065369472, %v5667
    %v5669 = vunpack.c.l.bf16 %v5668
    %v5670 = vxor.u32 %v5659, 2147516416
    %v5672 = vmul.bf16 %v5670, 1069105081
    %v5673 = vpow.bf16.pop %v5672
    %v5674 = vadd.bf16 %v5673, 1065369472
    %v5675 = vrcp.bf16.pop %v5674
    %v5676 = vmul.bf16 1065369472, %v5675
    %v5677 = vunpack.c.l.bf16 %v5676
    %v5678 = vtanh.bf16.pop %v5660
    %v5679 = vunpack.c.l.bf16 %v5678
    %v5680 = vxor.u32 %v5661, 2147516416
    %v5682 = vmul.bf16 %v5680, 1069105081
    %v5683 = vpow.bf16.pop %v5682
    %v5684 = vadd.bf16 %v5683, 1065369472
    %v5685 = vrcp.bf16.pop %v5684
    %v5686 = vmul.bf16 1065369472, %v5685
    %v5687 = vunpack.c.l.bf16 %v5686
    %v5688 = vmul.f32 %v5677, %v5560
    %v5689 = vmul.f32 %v5669, %v5679
    %v5690 = vadd.f32 %v5688, %v5689
    %v5691 = vtanh.pop %v5690
    %v5692 = vmul.f32 %v5687, %v5691
    %vm5693 = vcmp.gt.s32.totalorder %v24, 13
    %v5694 = vsel %vm5693, 1, 0
    %5695 = vset.pattern.permute.xlu0 0
    %5696 = vperm.xlu0 %5695, %v5694
    %v5697 = vpop.permute.xlu0 %5696
    %vm5698 = vcmp.eq.s32.totalorder %v5697, 1
    %v5699 = vsel %vm5698, %v5692, %v5559
    %v5700 = vsel %vm5698, %v5690, %v5560
    %v5701 = vsel %vm5698, %v5692, 0.0
    %s5702 = scalar_lea.vmem %s6, 104
    %5703 = vst [vmem:[%s5702] sm:$0xff] %v5701
    %s5704 = smul.u32 14, 4
    %s5705 = smul.addr %s5704, 8
    %s5706 = scalar_lea.vmem [#allocation3], %s5705
    %v5707 = vld [vmem:[%s5706] sm:$0xff]
    %v5708 = vld [vmem:[%s5706 + $0x8] sm:$0xff]
    %v5709 = vld [vmem:[%s5706 + $0x10] sm:$0xff]
    %v5710 = vld [vmem:[%s5706 + $0x18] sm:$0xff]
    %v5711 = vpack.c.bf16 %v5699, %v5699
    %5712 = vmatprep.subr.bf16.mxu0 %v3718
    %5713 = vmatpush1.bf16.msra.mxu0 %v3717
    %5714 = vmatprep.subr.bf16.mxu0 %v3714
    %5715 = vmatpush1.bf16.msra.mxu0 %v3713
    %5716 = vmatprep.subr.bf16.mxu0 %v3710
    %5717 = vmatpush1.bf16.msra.mxu0 %v3709
    %5718 = vmatprep.subr.bf16.mxu0 %v3706
    %5719 = vmatpush1.bf16.msra.mxu0 %v3705
    %5720 = vmatprep.subr.bf16.mxu0 %v3702
    %5721 = vmatpush1.bf16.msra.mxu0 %v3701
    %5722 = vmatprep.subr.bf16.mxu0 %v3698
    %5723 = vmatpush1.bf16.msra.mxu0 %v3697
    %5724 = vmatprep.subr.bf16.mxu0 %v3694
    %5725 = vmatpush1.bf16.msra.mxu0 %v3693
    %5726 = vmatprep.subr.bf16.mxu0 %v3690
    %5727 = vmatpush1.bf16.msra.mxu0 %v3689
    %5728 = vmatprep.subr.bf16.mxu0 0
    %5729 = vmatpush2.bf16.msra.mxu0 0
    %5730 = vmatprep.subr.bf16.mxu0 0
    %5731 = vmatpush2.bf16.msra.mxu0 0
    %5732 = vmatprep.subr.bf16.mxu0 0
    %5733 = vmatpush2.bf16.msra.mxu0 0
    %5734 = vmatprep.subr.bf16.mxu0 0
    %5735 = vmatpush2.bf16.msra.mxu0 0
    %5736 = vmatprep.subr.bf16.mxu0 0
    %5737 = vmatpush2.bf16.msra.mxu0 0
    %5738 = vmatprep.subr.bf16.mxu0 0
    %5739 = vmatpush2.bf16.msra.mxu0 0
    %5740 = vmatprep.subr.bf16.mxu0 0
    %5741 = vmatpush2.bf16.msra.mxu0 0
    %5742 = vmatprep.subr.bf16.mxu0 0
    %5743 = vmatpush2.bf16.msra.mxu0 0
    %5744 = vmatprep.mubr.bf16.mxu0 0
    %5745 = vmatmul.mubr.bf16.gmra.mxu0 %v5711
    %v5746 = vpop.f32.mrf.mxu0
    %v5747 = vadd.f32 0.0, %v5746
    %v5748 = vpop.f32.mrf.mxu0
    %v5749 = vadd.f32 0.0, %v5748
    %v5750 = vpop.f32.mrf.mxu0
    %v5751 = vpop.f32.mrf.mxu0
    %5752 = vdwg.mxu0
    %5753 = vmatprep.subr.bf16.mxu0 %v3720
    %5754 = vmatpush1.bf16.msra.mxu0 %v3719
    %5755 = vmatprep.subr.bf16.mxu0 %v3716
    %5756 = vmatpush1.bf16.msra.mxu0 %v3715
    %5757 = vmatprep.subr.bf16.mxu0 %v3712
    %5758 = vmatpush1.bf16.msra.mxu0 %v3711
    %5759 = vmatprep.subr.bf16.mxu0 %v3708
    %5760 = vmatpush1.bf16.msra.mxu0 %v3707
    %5761 = vmatprep.subr.bf16.mxu0 %v3704
    %5762 = vmatpush1.bf16.msra.mxu0 %v3703
    %5763 = vmatprep.subr.bf16.mxu0 %v3700
    %5764 = vmatpush1.bf16.msra.mxu0 %v3699
    %5765 = vmatprep.subr.bf16.mxu0 %v3696
    %5766 = vmatpush1.bf16.msra.mxu0 %v3695
    %5767 = vmatprep.subr.bf16.mxu0 %v3692
    %5768 = vmatpush1.bf16.msra.mxu0 %v3691
    %5769 = vmatprep.subr.bf16.mxu0 0
    %5770 = vmatpush2.bf16.msra.mxu0 0
    %5771 = vmatprep.subr.bf16.mxu0 0
    %5772 = vmatpush2.bf16.msra.mxu0 0
    %5773 = vmatprep.subr.bf16.mxu0 0
    %5774 = vmatpush2.bf16.msra.mxu0 0
    %5775 = vmatprep.subr.bf16.mxu0 0
    %5776 = vmatpush2.bf16.msra.mxu0 0
    %5777 = vmatprep.subr.bf16.mxu0 0
    %5778 = vmatpush2.bf16.msra.mxu0 0
    %5779 = vmatprep.subr.bf16.mxu0 0
    %5780 = vmatpush2.bf16.msra.mxu0 0
    %5781 = vmatprep.subr.bf16.mxu0 0
    %5782 = vmatpush2.bf16.msra.mxu0 0
    %5783 = vmatprep.subr.bf16.mxu0 0
    %5784 = vmatpush2.bf16.msra.mxu0 0
    %5785 = vmatprep.mubr.bf16.mxu0 0
    %5786 = vmatmul.mubr.bf16.gmra.mxu0 %v5711
    %v5787 = vpop.f32.mrf.mxu0
    %v5788 = vadd.f32 0.0, %v5787
    %v5789 = vpop.f32.mrf.mxu0
    %v5790 = vadd.f32 0.0, %v5789
    %v5791 = vpop.f32.mrf.mxu0
    %v5792 = vpop.f32.mrf.mxu0
    %5793 = vdwg.mxu0
    %v5794 = vadd.f32 %v5707, %v5747
    %v5795 = vadd.f32 %v5708, %v5749
    %v5796 = vadd.f32 %v5709, %v5788
    %v5797 = vadd.f32 %v5710, %v5790
    %v5798 = vpack.c.bf16 %v5794, %v5794
    %v5799 = vpack.c.bf16 %v5795, %v5795
    %v5800 = vpack.c.bf16 %v5796, %v5796
    %v5801 = vpack.c.bf16 %v5797, %v5797
    %v5802 = vxor.u32 %v5798, 2147516416
    %v5804 = vmul.bf16 %v5802, 1069105081
    %v5805 = vpow.bf16.pop %v5804
    %v5806 = vadd.bf16 %v5805, 1065369472
    %v5807 = vrcp.bf16.pop %v5806
    %v5808 = vmul.bf16 1065369472, %v5807
    %v5809 = vunpack.c.l.bf16 %v5808
    %v5810 = vxor.u32 %v5799, 2147516416
    %v5812 = vmul.bf16 %v5810, 1069105081
    %v5813 = vpow.bf16.pop %v5812
    %v5814 = vadd.bf16 %v5813, 1065369472
    %v5815 = vrcp.bf16.pop %v5814
    %v5816 = vmul.bf16 1065369472, %v5815
    %v5817 = vunpack.c.l.bf16 %v5816
    %v5818 = vtanh.bf16.pop %v5800
    %v5819 = vunpack.c.l.bf16 %v5818
    %v5820 = vxor.u32 %v5801, 2147516416
    %v5822 = vmul.bf16 %v5820, 1069105081
    %v5823 = vpow.bf16.pop %v5822
    %v5824 = vadd.bf16 %v5823, 1065369472
    %v5825 = vrcp.bf16.pop %v5824
    %v5826 = vmul.bf16 1065369472, %v5825
    %v5827 = vunpack.c.l.bf16 %v5826
    %v5828 = vmul.f32 %v5817, %v5700
    %v5829 = vmul.f32 %v5809, %v5819
    %v5830 = vadd.f32 %v5828, %v5829
    %v5831 = vtanh.pop %v5830
    %v5832 = vmul.f32 %v5827, %v5831
    %vm5833 = vcmp.gt.s32.totalorder %v24, 14
    %v5834 = vsel %vm5833, 1, 0
    %5835 = vset.pattern.permute.xlu0 0
    %5836 = vperm.xlu0 %5835, %v5834
    %v5837 = vpop.permute.xlu0 %5836
    %vm5838 = vcmp.eq.s32.totalorder %v5837, 1
    %v5839 = vsel %vm5838, %v5832, %v5699
    %v5840 = vsel %vm5838, %v5830, %v5700
    %v5841 = vsel %vm5838, %v5832, 0.0
    %s5842 = scalar_lea.vmem %s6, 112
    %5843 = vst [vmem:[%s5842] sm:$0xff] %v5841
    %s5844 = smul.u32 15, 4
    %s5845 = smul.addr %s5844, 8
    %s5846 = scalar_lea.vmem [#allocation3], %s5845
    %v5847 = vld [vmem:[%s5846] sm:$0xff]
    %v5848 = vld [vmem:[%s5846 + $0x8] sm:$0xff]
    %v5849 = vld [vmem:[%s5846 + $0x10] sm:$0xff]
    %v5850 = vld [vmem:[%s5846 + $0x18] sm:$0xff]
    %v5851 = vpack.c.bf16 %v5839, %v5839
    %5852 = vmatprep.subr.bf16.mxu0 %v3718
    %5853 = vmatpush1.bf16.msra.mxu0 %v3717
    %5854 = vmatprep.subr.bf16.mxu0 %v3714
    %5855 = vmatpush1.bf16.msra.mxu0 %v3713
    %5856 = vmatprep.subr.bf16.mxu0 %v3710
    %5857 = vmatpush1.bf16.msra.mxu0 %v3709
    %5858 = vmatprep.subr.bf16.mxu0 %v3706
    %5859 = vmatpush1.bf16.msra.mxu0 %v3705
    %5860 = vmatprep.subr.bf16.mxu0 %v3702
    %5861 = vmatpush1.bf16.msra.mxu0 %v3701
    %5862 = vmatprep.subr.bf16.mxu0 %v3698
    %5863 = vmatpush1.bf16.msra.mxu0 %v3697
    %5864 = vmatprep.subr.bf16.mxu0 %v3694
    %5865 = vmatpush1.bf16.msra.mxu0 %v3693
    %5866 = vmatprep.subr.bf16.mxu0 %v3690
    %5867 = vmatpush1.bf16.msra.mxu0 %v3689
    %5868 = vmatprep.subr.bf16.mxu0 0
    %5869 = vmatpush2.bf16.msra.mxu0 0
    %5870 = vmatprep.subr.bf16.mxu0 0
    %5871 = vmatpush2.bf16.msra.mxu0 0
    %5872 = vmatprep.subr.bf16.mxu0 0
    %5873 = vmatpush2.bf16.msra.mxu0 0
    %5874 = vmatprep.subr.bf16.mxu0 0
    %5875 = vmatpush2.bf16.msra.mxu0 0
    %5876 = vmatprep.subr.bf16.mxu0 0
    %5877 = vmatpush2.bf16.msra.mxu0 0
    %5878 = vmatprep.subr.bf16.mxu0 0
    %5879 = vmatpush2.bf16.msra.mxu0 0
    %5880 = vmatprep.subr.bf16.mxu0 0
    %5881 = vmatpush2.bf16.msra.mxu0 0
    %5882 = vmatprep.subr.bf16.mxu0 0
    %5883 = vmatpush2.bf16.msra.mxu0 0
    %5884 = vmatprep.mubr.bf16.mxu0 0
    %5885 = vmatmul.mubr.bf16.gmra.mxu0 %v5851
    %v5886 = vpop.f32.mrf.mxu0
    %v5887 = vadd.f32 0.0, %v5886
    %v5888 = vpop.f32.mrf.mxu0
    %v5889 = vadd.f32 0.0, %v5888
    %v5890 = vpop.f32.mrf.mxu0
    %v5891 = vpop.f32.mrf.mxu0
    %5892 = vdwg.mxu0
    %5893 = vmatprep.subr.bf16.mxu0 %v3720
    %5894 = vmatpush1.bf16.msra.mxu0 %v3719
    %5895 = vmatprep.subr.bf16.mxu0 %v3716
    %5896 = vmatpush1.bf16.msra.mxu0 %v3715
    %5897 = vmatprep.subr.bf16.mxu0 %v3712
    %5898 = vmatpush1.bf16.msra.mxu0 %v3711
    %5899 = vmatprep.subr.bf16.mxu0 %v3708
    %5900 = vmatpush1.bf16.msra.mxu0 %v3707
    %5901 = vmatprep.subr.bf16.mxu0 %v3704
    %5902 = vmatpush1.bf16.msra.mxu0 %v3703
    %5903 = vmatprep.subr.bf16.mxu0 %v3700
    %5904 = vmatpush1.bf16.msra.mxu0 %v3699
    %5905 = vmatprep.subr.bf16.mxu0 %v3696
    %5906 = vmatpush1.bf16.msra.mxu0 %v3695
    %5907 = vmatprep.subr.bf16.mxu0 %v3692
    %5908 = vmatpush1.bf16.msra.mxu0 %v3691
    %5909 = vmatprep.subr.bf16.mxu0 0
    %5910 = vmatpush2.bf16.msra.mxu0 0
    %5911 = vmatprep.subr.bf16.mxu0 0
    %5912 = vmatpush2.bf16.msra.mxu0 0
    %5913 = vmatprep.subr.bf16.mxu0 0
    %5914 = vmatpush2.bf16.msra.mxu0 0
    %5915 = vmatprep.subr.bf16.mxu0 0
    %5916 = vmatpush2.bf16.msra.mxu0 0
    %5917 = vmatprep.subr.bf16.mxu0 0
    %5918 = vmatpush2.bf16.msra.mxu0 0
    %5919 = vmatprep.subr.bf16.mxu0 0
    %5920 = vmatpush2.bf16.msra.mxu0 0
    %5921 = vmatprep.subr.bf16.mxu0 0
    %5922 = vmatpush2.bf16.msra.mxu0 0
    %5923 = vmatprep.subr.bf16.mxu0 0
    %5924 = vmatpush2.bf16.msra.mxu0 0
    %5925 = vmatprep.mubr.bf16.mxu0 0
    %5926 = vmatmul.mubr.bf16.gmra.mxu0 %v5851
    %v5927 = vpop.f32.mrf.mxu0
    %v5928 = vadd.f32 0.0, %v5927
    %v5929 = vpop.f32.mrf.mxu0
    %v5930 = vadd.f32 0.0, %v5929
    %v5931 = vpop.f32.mrf.mxu0
    %v5932 = vpop.f32.mrf.mxu0
    %5933 = vdwg.mxu0
    %v5934 = vadd.f32 %v5847, %v5887
    %v5935 = vadd.f32 %v5848, %v5889
    %v5936 = vadd.f32 %v5849, %v5928
    %v5937 = vadd.f32 %v5850, %v5930
    %v5938 = vpack.c.bf16 %v5934, %v5934
    %v5939 = vpack.c.bf16 %v5935, %v5935
    %v5940 = vpack.c.bf16 %v5936, %v5936
    %v5941 = vpack.c.bf16 %v5937, %v5937
    %v5942 = vxor.u32 %v5938, 2147516416
    %v5944 = vmul.bf16 %v5942, 1069105081
    %v5945 = vpow.bf16.pop %v5944
    %v5946 = vadd.bf16 %v5945, 1065369472
    %v5947 = vrcp.bf16.pop %v5946
    %v5948 = vmul.bf16 1065369472, %v5947
    %v5949 = vunpack.c.l.bf16 %v5948
    %v5950 = vxor.u32 %v5939, 2147516416
    %v5952 = vmul.bf16 %v5950, 1069105081
    %v5953 = vpow.bf16.pop %v5952
    %v5954 = vadd.bf16 %v5953, 1065369472
    %v5955 = vrcp.bf16.pop %v5954
    %v5956 = vmul.bf16 1065369472, %v5955
    %v5957 = vunpack.c.l.bf16 %v5956
    %v5958 = vtanh.bf16.pop %v5940
    %v5959 = vunpack.c.l.bf16 %v5958
    %v5960 = vxor.u32 %v5941, 2147516416
    %v5962 = vmul.bf16 %v5960, 1069105081
    %v5963 = vpow.bf16.pop %v5962
    %v5964 = vadd.bf16 %v5963, 1065369472
    %v5965 = vrcp.bf16.pop %v5964
    %v5966 = vmul.bf16 1065369472, %v5965
    %v5967 = vunpack.c.l.bf16 %v5966
    %v5968 = vmul.f32 %v5957, %v5840
    %v5969 = vmul.f32 %v5949, %v5959
    %v5970 = vadd.f32 %v5968, %v5969
    %v5971 = vtanh.pop %v5970
    %v5972 = vmul.f32 %v5967, %v5971
    %vm5973 = vcmp.gt.s32.totalorder %v24, 15
    %v5974 = vsel %vm5973, 1, 0
    %5975 = vset.pattern.permute.xlu0 0
    %5976 = vperm.xlu0 %5975, %v5974
    %v5977 = vpop.permute.xlu0 %5976
    %vm5978 = vcmp.eq.s32.totalorder %v5977, 1
    %v5979 = vsel %vm5978, %v5972, %v5839
    %v5980 = vsel %vm5978, %v5970, %v5840
    %v5981 = vsel %vm5978, %v5972, 0.0
    %s5982 = scalar_lea.vmem %s6, 120
    %5983 = vst [vmem:[%s5982] sm:$0xff] %v5981
    %5984 = vst [vmem:[#allocation4] sm:$0xff] %v5979
    %5985 = vst [vmem:[#allocation5] sm:$0xff] %v5980
  $region33: #{lstm_model_forward.2} parent=0 // pred_fallthru
    _
  // Predicated region
  $region34: #{lstm_model_forward.2} parent=0 // pred_check
    _
  $region35: #{lstm_model_forward.2} parent=0 // pred_check_branch
    %5987 = sbr.rel (0) target = $region37
  $region36: #{lstm_model_forward.2} parent=0 // pred_region
    _
  $region37: #{lstm_model_forward.2} parent=0 // pred_fallthru
    _
  // Predicated region
  $region38: #{lstm_model_forward.2} parent=0 // pred_check
    _
  $region39: #{lstm_model_forward.2} parent=0 // pred_check_branch
    %5989 = sbr.rel (0) target = $region41
  $region40: #{lstm_model_forward.2} parent=0 // pred_region
    _
  $region41: #{lstm_model_forward.2} parent=0 // pred_fallthru
    _

</llo_original>
